<compile_context>
chip_gen: v5e
topology: v5e:2x2
jax: 0.10.0
libtpu: 0.0.40
codegen_flags: <defaults>
</compile_context>

<pallas_src>
import random

import jax
import jax.numpy as jnp
from jax.experimental import pallas as pl
from jax.experimental.pallas import tpu as pltpu


# ------------------------------ padding helpers -------------------------------

def _ceil_to(n, m):
    return ((n + m - 1) // m) * m


def _pad2(x, rows, cols):
    out = jnp.zeros((rows, cols), x.dtype)
    return out.at[: x.shape[0], : x.shape[1]].set(x)


def _pad_gates(w, h, h_pad):
    """[In, 4*h] -> [In, 4*h_pad]; each (i,f,g,o) gate block lands at k*h_pad."""
    n_in = w.shape[0]
    w4 = w.reshape(n_in, 4, h)
    out = jnp.zeros((n_in, 4, h_pad), w.dtype).at[:, :, :h].set(w4)
    return out.reshape(n_in, 4 * h_pad)


# ------------------------------- fused kernel ---------------------------------

def _seq2seq_kernel(tf_ref,                       # scalar prefetch (SMEM): TF flags
                    xg_ref, enc_whh_ref,          # encoder (x-gates hoisted, W_hh)
                    temb_ref, emb_tbl_ref,        # teacher embeds, dec emb table
                    dec_w_ref, dec_b_ref,         # stacked decoder LSTM weights
                    wout_ref, bo_ref,             # stacked output projection
                    logits_ref,                   # output: [T-1, Bp, Vp]
                    enc_scr):                     # VMEM scratch: encoder outputs
    s = xg_ref.shape[0]
    tm1 = temb_ref.shape[0]
    bp = xg_ref.shape[1]
    hp = enc_whh_ref.shape[0]
    vp = bo_ref.shape[1]

    def lstm_gates(gates, c_prev):
        i_g = jax.nn.sigmoid(gates[:, 0 * hp:1 * hp])
        f_g = jax.nn.sigmoid(gates[:, 1 * hp:2 * hp])
        g_g = jnp.tanh(gates[:, 2 * hp:3 * hp])
        o_g = jax.nn.sigmoid(gates[:, 3 * hp:4 * hp])
        c_new = f_g * c_prev + i_g * g_g
        h_new = o_g * jnp.tanh(c_new)
        return h_new, c_new

    # -------- encoder: sequential h @ W_hh (input part hoisted to XLA) --------
    def enc_step(t, carry):
        h, c = carry
        gates = xg_ref[t] + jnp.dot(h, enc_whh_ref[...],
                                    preferred_element_type=jnp.float32)
        h_new, c_new = lstm_gates(gates, c)
        enc_scr[t] = h_new                          # time-major, stays in VMEM
        return h_new, c_new

    zeros_bh = jnp.zeros((bp, hp), jnp.float32)
    h_n, c_n = jax.lax.fori_loop(0, s, enc_step, (zeros_bh, zeros_bh),
                                 unroll=True)

    # -------- decoder: input select, fused LSTM, attention, projection --------
    def dec_step(i, carry):
        h, c, prev_onehot = carry

        # input embedding: teacher-forced vs previous-step greedy argmax
        w_tf = (tf_ref[i] != 0).astype(jnp.float32)
        # TODO(synk): at production vocab sizes replace the one-hot matmul with
        # an SMEM argmax index + embedding-table row gather.
        greedy_emb = jnp.dot(prev_onehot, emb_tbl_ref[...],
                             preferred_element_type=jnp.float32)          # [Bp, Ep]
        emb = w_tf * temb_ref[i] + (1.0 - w_tf) * greedy_emb              # [Bp, Ep]

        # LSTM cell with stacked [W_ih; W_hh] -> single MXU push
        x = jnp.concatenate([emb, h], axis=-1)                            # [Bp, Ep+Hp]
        gates = (jnp.dot(x, dec_w_ref[...], preferred_element_type=jnp.float32)
                 + dec_b_ref[...])
        h_new, c_new = lstm_gates(gates, c)

        # dot-product attention over VMEM-resident, time-major encoder outputs
        enc = enc_scr[...]                                                # [S, Bp, Hp]
        scores = jnp.sum(enc * h_new[None, :, :], axis=-1, keepdims=True) # [S, Bp, 1]
        m = jnp.max(scores, axis=0, keepdims=True)
        e = jnp.exp(scores - m)
        attn = e / jnp.sum(e, axis=0, keepdims=True)   # exact div (reference parity)
        ctx = jnp.sum(enc * attn, axis=0)                                 # [Bp, Hp]

        # output projection with stacked [W_oh; W_oc; W_oe] -> single MXU push
        feat = jnp.concatenate([h_new, ctx, emb], axis=-1)                # [Bp, 2Hp+Ep]
        logits = (jnp.dot(feat, wout_ref[...], preferred_element_type=jnp.float32)
                  + bo_ref[...])                                          # [Bp, Vp]
        logits_ref[i] = logits

        # greedy argmax (first occurrence) as one-hot feedback for next step
        col = jax.lax.broadcasted_iota(jnp.int32, logits.shape, 1)
        maxv = jnp.max(logits, axis=-1, keepdims=True)
        first = jnp.min(jnp.where(logits == maxv, col, vp), axis=-1,
                        keepdims=True)
        onehot = (col == first).astype(jnp.float32)
        return h_new, c_new, onehot

    init_onehot = jnp.zeros((bp, vp), jnp.float32)
    jax.lax.fori_loop(0, tm1, dec_step, (h_n, c_n, init_onehot), unroll=True)


# ---------------------------- pallas_call wrapper ------------------------------

def _run_seq2seq(tf_i32, x_gates, enc_whh, temb, emb_tbl, dec_w, dec_b, wout, bo):
    s, bp, g = x_gates.shape
    tm1, _, ep = temb.shape
    hp = enc_whh.shape[0]
    vp = bo.shape[1]

    grid_spec = pltpu.PrefetchScalarGridSpec(
        num_scalar_prefetch=1,                      # teacher-forcing flags -> SMEM
        grid=(1,),                                  # single step; time loops in-kernel
        in_specs=[
            pl.BlockSpec((s, bp, g), lambda i, tf: (0, 0, 0)),       # hoisted x-gates
            pl.BlockSpec((hp, g), lambda i, tf: (0, 0)),             # enc W_hh
            pl.BlockSpec((tm1, bp, ep), lambda i, tf: (0, 0, 0)),    # teacher embeds
            pl.BlockSpec((vp, ep), lambda i, tf: (0, 0)),            # dec emb table
            pl.BlockSpec((ep + hp, g), lambda i, tf: (0, 0)),        # stacked dec W
            pl.BlockSpec((1, g), lambda i, tf: (0, 0)),              # dec bias
            pl.BlockSpec((2 * hp + ep, vp), lambda i, tf: (0, 0)),   # stacked W_out
            pl.BlockSpec((1, vp), lambda i, tf: (0, 0)),             # b_out (-1e9 pad)
        ],
        out_specs=pl.BlockSpec((tm1, bp, vp), lambda i, tf: (0, 0, 0)),
        scratch_shapes=[pltpu.VMEM((s, bp, hp), jnp.float32)],       # encoder outputs
    )
    return pl.pallas_call(
        _seq2seq_kernel,
        grid_spec=grid_spec,
        out_shape=jax.ShapeDtypeStruct((tm1, bp, vp), jnp.float32),
        compiler_params=pltpu.CompilerParams(
            dimension_semantics=("arbitrary",),
            vmem_limit_bytes=64 * 1024 * 1024),
    )(tf_i32, x_gates, enc_whh, temb, emb_tbl, dec_w, dec_b, wout, bo)


# ------------------------------- jitted forward --------------------------------

def _seq2seq_forward(params, src_pad, trg_pad, tf_i32):
    t = trg_pad.shape[0]
    # Encoder input-to-hidden projection hoisted out of the recurrence (one matmul).
    src_emb = jnp.take(params["enc_emb"], src_pad, axis=0)                 # [S, Bp, Ep]
    x_gates = jnp.einsum("sbe,eg->sbg", src_emb, params["enc_wih"],
                         preferred_element_type=jnp.float32) + params["enc_b"]
    # Teacher-forced decoder embeddings (glue); greedy path stays in-kernel.
    teach_emb = jnp.take(params["dec_emb"], trg_pad[: t - 1], axis=0)      # [T-1, Bp, Ep]
    return _run_seq2seq(tf_i32, x_gates, params["enc_whh"], teach_emb,
                        params["dec_emb"], params["dec_w"], params["dec_b"],
                        params["wout"], params["bo"])                      # [T-1, Bp, Vp]


# --------------------------------- model glue -----------------------------------

class Seq2SeqPallas:
    def __init__(self, input_dim, output_dim, emb_dim, hid_dim, key):
        self.input_dim = input_dim
        self.output_dim = output_dim
        self.emb_dim = emb_dim
        self.hid_dim = hid_dim
        ep = _ceil_to(emb_dim, 128)
        hp = _ceil_to(hid_dim, 128)
        vp = _ceil_to(output_dim, 128)

        ks = jax.random.split(key, 12)
        sc = 0.1

        def rnd(k, shape):
            return (sc * jax.random.normal(k, shape)).astype(jnp.float32)

        h, e, v = hid_dim, emb_dim, output_dim
        enc_emb = rnd(ks[0], (input_dim, e))
        enc_wih = rnd(ks[1], (e, 4 * h))
        enc_whh = rnd(ks[2], (h, 4 * h))
        enc_b = rnd(ks[3], (1, 4 * h))
        dec_emb = rnd(ks[4], (v, e))
        dec_wih = rnd(ks[5], (e, 4 * h))
        dec_whh = rnd(ks[6], (h, 4 * h))
        dec_b = rnd(ks[7], (1, 4 * h))
        woh = rnd(ks[8], (h, v))
        woc = rnd(ks[9], (h, v))
        woe = rnd(ks[10], (e, v))
        bo = rnd(ks[11], (1, v))

        # Lane-padded & pre-stacked parameters (zero padding preserves real
        # rows/cols; padded vocab logits get -1e9 so the in-kernel argmax never
        # picks them).
        self.params = {
            "enc_emb": _pad2(enc_emb, input_dim, ep),
            "enc_wih": _pad2(_pad_gates(enc_wih, h, hp), ep, 4 * hp),
            "enc_whh": _pad2(_pad_gates(enc_whh, h, hp), hp, 4 * hp),
            "enc_b": _pad_gates(enc_b, h, hp),
            "dec_emb": _pad2(dec_emb, vp, ep),
            # stacked [W_ih; W_hh] -> applied to concat([emb, h_prev])
            "dec_w": jnp.concatenate(
                [_pad2(_pad_gates(dec_wih, h, hp), ep, 4 * hp),
                 _pad2(_pad_gates(dec_whh, h, hp), hp, 4 * hp)], axis=0),
            "dec_b": _pad_gates(dec_b, h, hp),
            # stacked [W_oh; W_oc; W_oe] -> applied to concat([h, ctx, emb])
            "wout": jnp.concatenate(
                [_pad2(woh, hp, vp), _pad2(woc, hp, vp), _pad2(woe, ep, vp)],
                axis=0),
            "bo": jnp.full((1, vp), -1e9, jnp.float32).at[:, :v].set(bo),
        }
        self._fwd = jax.jit(_seq2seq_forward)

    def forward(self, src, trg, teacher_forcing_ratio=0.5):
        """Mirrors PyTorch Seq2Seq.forward; returns outputs [T, B, V] (outputs[0]=0)."""
        trg_len, batch = trg.shape
        if trg_len < 2:
            return jnp.zeros((trg_len, batch, self.output_dim), jnp.float32)
        b_pad = _ceil_to(max(batch, 8), 8)
        src_pad = jnp.zeros((src.shape[0], b_pad), jnp.int32).at[:, :batch].set(
            src.astype(jnp.int32))
        trg_pad = jnp.zeros((trg_len, b_pad), jnp.int32).at[:, :batch].set(
            trg.astype(jnp.int32))
        # Host-side coin flips, same draw order as the PyTorch loop (one per
        # step t=1..T-1); the flip drawn at step t gates the input of step t+1
        # and the input of step 1 is always trg[0].
        flips = [random.random() < teacher_forcing_ratio for _ in range(trg_len - 1)]
        tf_arr = [1] + [int(f) for f in flips[: trg_len - 2]]
        tf_i32 = jnp.asarray(tf_arr, dtype=jnp.int32)

        logits = self._fwd(self.params, src_pad, trg_pad, tf_i32)     # [T-1, Bp, Vp]
        head = jnp.zeros((1, batch, self.output_dim), jnp.float32)
        return jnp.concatenate(
            [head, logits[:, :batch, : self.output_dim]], axis=0)     # [T, B, V]


# ------------------------------------ main ---------------------------------------

if __name__ == "__main__":
    random.seed(0)  # deterministic teacher-forcing coin flips
    key = jax.random.PRNGKey(0)
    k_params, k_src, k_trg = jax.random.split(key, 3)

    INPUT_DIM = 12    # src vocab
    OUTPUT_DIM = 10   # trg vocab
    EMB_DIM = 16
    HID_DIM = 32
    SRC_LEN = 8
    TRG_LEN = 6
    BATCH = 2

    model = Seq2SeqPallas(INPUT_DIM, OUTPUT_DIM, EMB_DIM, HID_DIM, k_params)

    src = jax.random.randint(k_src, (SRC_LEN, BATCH), 0, INPUT_DIM, dtype=jnp.int32)
    trg = jax.random.randint(k_trg, (TRG_LEN, BATCH), 0, OUTPUT_DIM, dtype=jnp.int32)

    outputs = model.forward(src, trg, teacher_forcing_ratio=0.5)
    outputs = jax.block_until_ready(outputs)

    assert outputs.shape == (TRG_LEN, BATCH, OUTPUT_DIM)
    assert bool(jnp.all(outputs[0] == 0.0))
    assert bool(jnp.all(jnp.isfinite(outputs)))
    print("KERNEL_OK")
</pallas_src>

<mosaic_0001>
module attributes {stable_mosaic.version = 11 : i64} {
  func.func @_seq2seq_kernel(%arg0: i32, %arg1: memref<5xi32, #tpu.memory_space<smem>>, %arg2: memref<8x8x512xf32, #tpu.memory_space<vmem>>, %arg3: memref<128x512xf32, #tpu.memory_space<vmem>>, %arg4: memref<5x8x128xf32, #tpu.memory_space<vmem>>, %arg5: memref<128x128xf32, #tpu.memory_space<vmem>>, %arg6: memref<256x512xf32, #tpu.memory_space<vmem>>, %arg7: memref<1x512xf32, #tpu.memory_space<vmem>>, %arg8: memref<384x128xf32, #tpu.memory_space<vmem>>, %arg9: memref<1x128xf32, #tpu.memory_space<vmem>>, %arg10: memref<5x8x128xf32, #tpu.memory_space<vmem>>, %arg11: memref<8x8x128xf32, #tpu.memory_space<vmem>>) attributes {dimension_semantics = [#tpu.dimension_semantics<arbitrary>], iteration_bounds = array<i64: 1>, scalar_prefetch = 1 : i64, scratch_operands = 1 : i64, tpu.core_type = #tpu.core_type<tc>, window_params = [{pipeline_mode = #tpu.pipeline_mode<synchronous>, transform_indices = @transform_0, window_bounds = array<i64: 8, 8, 512>}, {pipeline_mode = #tpu.pipeline_mode<synchronous>, transform_indices = @transform_1, window_bounds = array<i64: 128, 512>}, {pipeline_mode = #tpu.pipeline_mode<synchronous>, transform_indices = @transform_2, window_bounds = array<i64: 5, 8, 128>}, {pipeline_mode = #tpu.pipeline_mode<synchronous>, transform_indices = @transform_3, window_bounds = array<i64: 128, 128>}, {pipeline_mode = #tpu.pipeline_mode<synchronous>, transform_indices = @transform_4, window_bounds = array<i64: 256, 512>}, {pipeline_mode = #tpu.pipeline_mode<synchronous>, transform_indices = @transform_5, window_bounds = array<i64: 1, 512>}, {pipeline_mode = #tpu.pipeline_mode<synchronous>, transform_indices = @transform_6, window_bounds = array<i64: 384, 128>}, {pipeline_mode = #tpu.pipeline_mode<synchronous>, transform_indices = @transform_7, window_bounds = array<i64: 1, 128>}, {pipeline_mode = #tpu.pipeline_mode<synchronous>, transform_indices = @transform_8, window_bounds = array<i64: 5, 8, 128>}]} {
    %cst = arith.constant 0.000000e+00 : f32
    %0 = vector.broadcast %cst : f32 to vector<8x128xf32>
    %c0_i32 = arith.constant 0 : i32
    %1 = arith.index_cast %c0_i32 : i32 to index
    %c0 = arith.constant 0 : index
    %c0_0 = arith.constant 0 : index
    %2 = vector.load %arg2[%1, %c0, %c0_0] : memref<8x8x512xf32, #tpu.memory_space<vmem>>, vector<1x8x512xf32>
    %3 = vector.shape_cast %2 : vector<1x8x512xf32> to vector<8x512xf32>
    %c0_1 = arith.constant 0 : index
    %c0_2 = arith.constant 0 : index
    %4 = vector.load %arg3[%c0_1, %c0_2] : memref<128x512xf32, #tpu.memory_space<vmem>>, vector<128x512xf32>
    %cst_3 = arith.constant dense<0.000000e+00> : vector<8x512xf32>
    %5 = tpu.matmul %0, %4, %cst_3 {dimension_numbers = #tpu.dot_dimension_numbers<[1], [0], [0], [1], [0, 0, 1, 1], [], []>} : vector<8x128xf32>, vector<128x512xf32>, vector<8x512xf32> -> vector<8x512xf32>
    %6 = arith.addf %3, %5 : vector<8x512xf32>
    %7 = vector.extract_strided_slice %6 {offsets = [0, 0], sizes = [8, 128], strides = [1, 1]} : vector<8x512xf32> to vector<8x128xf32>
    %8 = arith.negf %7 : vector<8x128xf32>
    %9 = math.exp %8 : vector<8x128xf32>
    %cst_4 = arith.constant 1.000000e+00 : f32
    %10 = vector.broadcast %cst_4 : f32 to vector<8x128xf32>
    %11 = arith.addf %10, %9 : vector<8x128xf32>
    %12 = arith.divf %10, %11 : vector<8x128xf32>
    %13 = vector.extract_strided_slice %6 {offsets = [0, 128], sizes = [8, 128], strides = [1, 1]} : vector<8x512xf32> to vector<8x128xf32>
    %14 = arith.negf %13 : vector<8x128xf32>
    %15 = math.exp %14 : vector<8x128xf32>
    %cst_5 = arith.constant 1.000000e+00 : f32
    %16 = vector.broadcast %cst_5 : f32 to vector<8x128xf32>
    %17 = arith.addf %16, %15 : vector<8x128xf32>
    %18 = arith.divf %16, %17 : vector<8x128xf32>
    %19 = vector.extract_strided_slice %6 {offsets = [0, 256], sizes = [8, 128], strides = [1, 1]} : vector<8x512xf32> to vector<8x128xf32>
    %20 = math.tanh %19 : vector<8x128xf32>
    %21 = vector.extract_strided_slice %6 {offsets = [0, 384], sizes = [8, 128], strides = [1, 1]} : vector<8x512xf32> to vector<8x128xf32>
    %22 = arith.negf %21 : vector<8x128xf32>
    %23 = math.exp %22 : vector<8x128xf32>
    %cst_6 = arith.constant 1.000000e+00 : f32
    %24 = vector.broadcast %cst_6 : f32 to vector<8x128xf32>
    %25 = arith.addf %24, %23 : vector<8x128xf32>
    %26 = arith.divf %24, %25 : vector<8x128xf32>
    %27 = arith.mulf %18, %0 : vector<8x128xf32>
    %28 = arith.mulf %12, %20 : vector<8x128xf32>
    %29 = arith.addf %27, %28 : vector<8x128xf32>
    %30 = math.tanh %29 : vector<8x128xf32>
    %31 = arith.mulf %26, %30 : vector<8x128xf32>
    %32 = arith.index_cast %c0_i32 : i32 to index
    %c0_7 = arith.constant 0 : index
    %c0_8 = arith.constant 0 : index
    %33 = vector.load %arg11[%32, %c0_7, %c0_8] : memref<8x8x128xf32, #tpu.memory_space<vmem>>, vector<1x8x128xf32>
    %34 = vector.shape_cast %33 : vector<1x8x128xf32> to vector<8x128xf32>
    %35 = vector.shape_cast %31 : vector<8x128xf32> to vector<1x8x128xf32>
    tpu.vector_store %arg11[%32, %c0_7, %c0_8], %35 {strides = array<i32>} : memref<8x8x128xf32, #tpu.memory_space<vmem>>, vector<1x8x128xf32>,
    %c1_i32 = arith.constant 1 : i32
    %36 = arith.index_cast %c1_i32 : i32 to index
    %c0_9 = arith.constant 0 : index
    %c0_10 = arith.constant 0 : index
    %37 = vector.load %arg2[%36, %c0_9, %c0_10] : memref<8x8x512xf32, #tpu.memory_space<vmem>>, vector<1x8x512xf32>
    %38 = vector.shape_cast %37 : vector<1x8x512xf32> to vector<8x512xf32>
    %c0_11 = arith.constant 0 : index
    %c0_12 = arith.constant 0 : index
    %39 = vector.load %arg3[%c0_11, %c0_12] : memref<128x512xf32, #tpu.memory_space<vmem>>, vector<128x512xf32>
    %cst_13 = arith.constant dense<0.000000e+00> : vector<8x512xf32>
    %40 = tpu.matmul %31, %39, %cst_13 {dimension_numbers = #tpu.dot_dimension_numbers<[1], [0], [0], [1], [0, 0, 1, 1], [], []>} : vector<8x128xf32>, vector<128x512xf32>, vector<8x512xf32> -> vector<8x512xf32>
    %41 = arith.addf %38, %40 : vector<8x512xf32>
    %42 = vector.extract_strided_slice %41 {offsets = [0, 0], sizes = [8, 128], strides = [1, 1]} : vector<8x512xf32> to vector<8x128xf32>
    %43 = arith.negf %42 : vector<8x128xf32>
    %44 = math.exp %43 : vector<8x128xf32>
    %cst_14 = arith.constant 1.000000e+00 : f32
    %45 = vector.broadcast %cst_14 : f32 to vector<8x128xf32>
    %46 = arith.addf %45, %44 : vector<8x128xf32>
    %47 = arith.divf %45, %46 : vector<8x128xf32>
    %48 = vector.extract_strided_slice %41 {offsets = [0, 128], sizes = [8, 128], strides = [1, 1]} : vector<8x512xf32> to vector<8x128xf32>
    %49 = arith.negf %48 : vector<8x128xf32>
    %50 = math.exp %49 : vector<8x128xf32>
    %cst_15 = arith.constant 1.000000e+00 : f32
    %51 = vector.broadcast %cst_15 : f32 to vector<8x128xf32>
    %52 = arith.addf %51, %50 : vector<8x128xf32>
    %53 = arith.divf %51, %52 : vector<8x128xf32>
    %54 = vector.extract_strided_slice %41 {offsets = [0, 256], sizes = [8, 128], strides = [1, 1]} : vector<8x512xf32> to vector<8x128xf32>
    %55 = math.tanh %54 : vector<8x128xf32>
    %56 = vector.extract_strided_slice %41 {offsets = [0, 384], sizes = [8, 128], strides = [1, 1]} : vector<8x512xf32> to vector<8x128xf32>
    %57 = arith.negf %56 : vector<8x128xf32>
    %58 = math.exp %57 : vector<8x128xf32>
    %cst_16 = arith.constant 1.000000e+00 : f32
    %59 = vector.broadcast %cst_16 : f32 to vector<8x128xf32>
    %60 = arith.addf %59, %58 : vector<8x128xf32>
    %61 = arith.divf %59, %60 : vector<8x128xf32>
    %62 = arith.mulf %53, %29 : vector<8x128xf32>
    %63 = arith.mulf %47, %55 : vector<8x128xf32>
    %64 = arith.addf %62, %63 : vector<8x128xf32>
    %65 = math.tanh %64 : vector<8x128xf32>
    %66 = arith.mulf %61, %65 : vector<8x128xf32>
    %67 = arith.index_cast %c1_i32 : i32 to index
    %c0_17 = arith.constant 0 : index
    %c0_18 = arith.constant 0 : index
    %68 = vector.load %arg11[%67, %c0_17, %c0_18] : memref<8x8x128xf32, #tpu.memory_space<vmem>>, vector<1x8x128xf32>
    %69 = vector.shape_cast %68 : vector<1x8x128xf32> to vector<8x128xf32>
    %70 = vector.shape_cast %66 : vector<8x128xf32> to vector<1x8x128xf32>
    tpu.vector_store %arg11[%67, %c0_17, %c0_18], %70 {strides = array<i32>} : memref<8x8x128xf32, #tpu.memory_space<vmem>>, vector<1x8x128xf32>,
    %c2_i32 = arith.constant 2 : i32
    %71 = arith.index_cast %c2_i32 : i32 to index
    %c0_19 = arith.constant 0 : index
    %c0_20 = arith.constant 0 : index
    %72 = vector.load %arg2[%71, %c0_19, %c0_20] : memref<8x8x512xf32, #tpu.memory_space<vmem>>, vector<1x8x512xf32>
    %73 = vector.shape_cast %72 : vector<1x8x512xf32> to vector<8x512xf32>
    %c0_21 = arith.constant 0 : index
    %c0_22 = arith.constant 0 : index
    %74 = vector.load %arg3[%c0_21, %c0_22] : memref<128x512xf32, #tpu.memory_space<vmem>>, vector<128x512xf32>
    %cst_23 = arith.constant dense<0.000000e+00> : vector<8x512xf32>
    %75 = tpu.matmul %66, %74, %cst_23 {dimension_numbers = #tpu.dot_dimension_numbers<[1], [0], [0], [1], [0, 0, 1, 1], [], []>} : vector<8x128xf32>, vector<128x512xf32>, vector<8x512xf32> -> vector<8x512xf32>
    %76 = arith.addf %73, %75 : vector<8x512xf32>
    %77 = vector.extract_strided_slice %76 {offsets = [0, 0], sizes = [8, 128], strides = [1, 1]} : vector<8x512xf32> to vector<8x128xf32>
    %78 = arith.negf %77 : vector<8x128xf32>
    %79 = math.exp %78 : vector<8x128xf32>
    %cst_24 = arith.constant 1.000000e+00 : f32
    %80 = vector.broadcast %cst_24 : f32 to vector<8x128xf32>
    %81 = arith.addf %80, %79 : vector<8x128xf32>
    %82 = arith.divf %80, %81 : vector<8x128xf32>
    %83 = vector.extract_strided_slice %76 {offsets = [0, 128], sizes = [8, 128], strides = [1, 1]} : vector<8x512xf32> to vector<8x128xf32>
    %84 = arith.negf %83 : vector<8x128xf32>
    %85 = math.exp %84 : vector<8x128xf32>
    %cst_25 = arith.constant 1.000000e+00 : f32
    %86 = vector.broadcast %cst_25 : f32 to vector<8x128xf32>
    %87 = arith.addf %86, %85 : vector<8x128xf32>
    %88 = arith.divf %86, %87 : vector<8x128xf32>
    %89 = vector.extract_strided_slice %76 {offsets = [0, 256], sizes = [8, 128], strides = [1, 1]} : vector<8x512xf32> to vector<8x128xf32>
    %90 = math.tanh %89 : vector<8x128xf32>
    %91 = vector.extract_strided_slice %76 {offsets = [0, 384], sizes = [8, 128], strides = [1, 1]} : vector<8x512xf32> to vector<8x128xf32>
    %92 = arith.negf %91 : vector<8x128xf32>
    %93 = math.exp %92 : vector<8x128xf32>
    %cst_26 = arith.constant 1.000000e+00 : f32
    %94 = vector.broadcast %cst_26 : f32 to vector<8x128xf32>
    %95 = arith.addf %94, %93 : vector<8x128xf32>
    %96 = arith.divf %94, %95 : vector<8x128xf32>
    %97 = arith.mulf %88, %64 : vector<8x128xf32>
    %98 = arith.mulf %82, %90 : vector<8x128xf32>
    %99 = arith.addf %97, %98 : vector<8x128xf32>
    %100 = math.tanh %99 : vector<8x128xf32>
    %101 = arith.mulf %96, %100 : vector<8x128xf32>
    %102 = arith.index_cast %c2_i32 : i32 to index
    %c0_27 = arith.constant 0 : index
    %c0_28 = arith.constant 0 : index
    %103 = vector.load %arg11[%102, %c0_27, %c0_28] : memref<8x8x128xf32, #tpu.memory_space<vmem>>, vector<1x8x128xf32>
    %104 = vector.shape_cast %103 : vector<1x8x128xf32> to vector<8x128xf32>
    %105 = vector.shape_cast %101 : vector<8x128xf32> to vector<1x8x128xf32>
    tpu.vector_store %arg11[%102, %c0_27, %c0_28], %105 {strides = array<i32>} : memref<8x8x128xf32, #tpu.memory_space<vmem>>, vector<1x8x128xf32>,
    %c3_i32 = arith.constant 3 : i32
    %106 = arith.index_cast %c3_i32 : i32 to index
    %c0_29 = arith.constant 0 : index
    %c0_30 = arith.constant 0 : index
    %107 = vector.load %arg2[%106, %c0_29, %c0_30] : memref<8x8x512xf32, #tpu.memory_space<vmem>>, vector<1x8x512xf32>
    %108 = vector.shape_cast %107 : vector<1x8x512xf32> to vector<8x512xf32>
    %c0_31 = arith.constant 0 : index
    %c0_32 = arith.constant 0 : index
    %109 = vector.load %arg3[%c0_31, %c0_32] : memref<128x512xf32, #tpu.memory_space<vmem>>, vector<128x512xf32>
    %cst_33 = arith.constant dense<0.000000e+00> : vector<8x512xf32>
    %110 = tpu.matmul %101, %109, %cst_33 {dimension_numbers = #tpu.dot_dimension_numbers<[1], [0], [0], [1], [0, 0, 1, 1], [], []>} : vector<8x128xf32>, vector<128x512xf32>, vector<8x512xf32> -> vector<8x512xf32>
    %111 = arith.addf %108, %110 : vector<8x512xf32>
    %112 = vector.extract_strided_slice %111 {offsets = [0, 0], sizes = [8, 128], strides = [1, 1]} : vector<8x512xf32> to vector<8x128xf32>
    %113 = arith.negf %112 : vector<8x128xf32>
    %114 = math.exp %113 : vector<8x128xf32>
    %cst_34 = arith.constant 1.000000e+00 : f32
    %115 = vector.broadcast %cst_34 : f32 to vector<8x128xf32>
    %116 = arith.addf %115, %114 : vector<8x128xf32>
    %117 = arith.divf %115, %116 : vector<8x128xf32>
    %118 = vector.extract_strided_slice %111 {offsets = [0, 128], sizes = [8, 128], strides = [1, 1]} : vector<8x512xf32> to vector<8x128xf32>
    %119 = arith.negf %118 : vector<8x128xf32>
    %120 = math.exp %119 : vector<8x128xf32>
    %cst_35 = arith.constant 1.000000e+00 : f32
    %121 = vector.broadcast %cst_35 : f32 to vector<8x128xf32>
    %122 = arith.addf %121, %120 : vector<8x128xf32>
    %123 = arith.divf %121, %122 : vector<8x128xf32>
    %124 = vector.extract_strided_slice %111 {offsets = [0, 256], sizes = [8, 128], strides = [1, 1]} : vector<8x512xf32> to vector<8x128xf32>
    %125 = math.tanh %124 : vector<8x128xf32>
    %126 = vector.extract_strided_slice %111 {offsets = [0, 384], sizes = [8, 128], strides = [1, 1]} : vector<8x512xf32> to vector<8x128xf32>
    %127 = arith.negf %126 : vector<8x128xf32>
    %128 = math.exp %127 : vector<8x128xf32>
    %cst_36 = arith.constant 1.000000e+00 : f32
    %129 = vector.broadcast %cst_36 : f32 to vector<8x128xf32>
    %130 = arith.addf %129, %128 : vector<8x128xf32>
    %131 = arith.divf %129, %130 : vector<8x128xf32>
    %132 = arith.mulf %123, %99 : vector<8x128xf32>
    %133 = arith.mulf %117, %125 : vector<8x128xf32>
    %134 = arith.addf %132, %133 : vector<8x128xf32>
    %135 = math.tanh %134 : vector<8x128xf32>
    %136 = arith.mulf %131, %135 : vector<8x128xf32>
    %137 = arith.index_cast %c3_i32 : i32 to index
    %c0_37 = arith.constant 0 : index
    %c0_38 = arith.constant 0 : index
    %138 = vector.load %arg11[%137, %c0_37, %c0_38] : memref<8x8x128xf32, #tpu.memory_space<vmem>>, vector<1x8x128xf32>
    %139 = vector.shape_cast %138 : vector<1x8x128xf32> to vector<8x128xf32>
    %140 = vector.shape_cast %136 : vector<8x128xf32> to vector<1x8x128xf32>
    tpu.vector_store %arg11[%137, %c0_37, %c0_38], %140 {strides = array<i32>} : memref<8x8x128xf32, #tpu.memory_space<vmem>>, vector<1x8x128xf32>,
    %c4_i32 = arith.constant 4 : i32
    %141 = arith.index_cast %c4_i32 : i32 to index
    %c0_39 = arith.constant 0 : index
    %c0_40 = arith.constant 0 : index
    %142 = vector.load %arg2[%141, %c0_39, %c0_40] : memref<8x8x512xf32, #tpu.memory_space<vmem>>, vector<1x8x512xf32>
    %143 = vector.shape_cast %142 : vector<1x8x512xf32> to vector<8x512xf32>
    %c0_41 = arith.constant 0 : index
    %c0_42 = arith.constant 0 : index
    %144 = vector.load %arg3[%c0_41, %c0_42] : memref<128x512xf32, #tpu.memory_space<vmem>>, vector<128x512xf32>
    %cst_43 = arith.constant dense<0.000000e+00> : vector<8x512xf32>
    %145 = tpu.matmul %136, %144, %cst_43 {dimension_numbers = #tpu.dot_dimension_numbers<[1], [0], [0], [1], [0, 0, 1, 1], [], []>} : vector<8x128xf32>, vector<128x512xf32>, vector<8x512xf32> -> vector<8x512xf32>
    %146 = arith.addf %143, %145 : vector<8x512xf32>
    %147 = vector.extract_strided_slice %146 {offsets = [0, 0], sizes = [8, 128], strides = [1, 1]} : vector<8x512xf32> to vector<8x128xf32>
    %148 = arith.negf %147 : vector<8x128xf32>
    %149 = math.exp %148 : vector<8x128xf32>
    %cst_44 = arith.constant 1.000000e+00 : f32
    %150 = vector.broadcast %cst_44 : f32 to vector<8x128xf32>
    %151 = arith.addf %150, %149 : vector<8x128xf32>
    %152 = arith.divf %150, %151 : vector<8x128xf32>
    %153 = vector.extract_strided_slice %146 {offsets = [0, 128], sizes = [8, 128], strides = [1, 1]} : vector<8x512xf32> to vector<8x128xf32>
    %154 = arith.negf %153 : vector<8x128xf32>
    %155 = math.exp %154 : vector<8x128xf32>
    %cst_45 = arith.constant 1.000000e+00 : f32
    %156 = vector.broadcast %cst_45 : f32 to vector<8x128xf32>
    %157 = arith.addf %156, %155 : vector<8x128xf32>
    %158 = arith.divf %156, %157 : vector<8x128xf32>
    %159 = vector.extract_strided_slice %146 {offsets = [0, 256], sizes = [8, 128], strides = [1, 1]} : vector<8x512xf32> to vector<8x128xf32>
    %160 = math.tanh %159 : vector<8x128xf32>
    %161 = vector.extract_strided_slice %146 {offsets = [0, 384], sizes = [8, 128], strides = [1, 1]} : vector<8x512xf32> to vector<8x128xf32>
    %162 = arith.negf %161 : vector<8x128xf32>
    %163 = math.exp %162 : vector<8x128xf32>
    %cst_46 = arith.constant 1.000000e+00 : f32
    %164 = vector.broadcast %cst_46 : f32 to vector<8x128xf32>
    %165 = arith.addf %164, %163 : vector<8x128xf32>
    %166 = arith.divf %164, %165 : vector<8x128xf32>
    %167 = arith.mulf %158, %134 : vector<8x128xf32>
    %168 = arith.mulf %152, %160 : vector<8x128xf32>
    %169 = arith.addf %167, %168 : vector<8x128xf32>
    %170 = math.tanh %169 : vector<8x128xf32>
    %171 = arith.mulf %166, %170 : vector<8x128xf32>
    %172 = arith.index_cast %c4_i32 : i32 to index
    %c0_47 = arith.constant 0 : index
    %c0_48 = arith.constant 0 : index
    %173 = vector.load %arg11[%172, %c0_47, %c0_48] : memref<8x8x128xf32, #tpu.memory_space<vmem>>, vector<1x8x128xf32>
    %174 = vector.shape_cast %173 : vector<1x8x128xf32> to vector<8x128xf32>
    %175 = vector.shape_cast %171 : vector<8x128xf32> to vector<1x8x128xf32>
    tpu.vector_store %arg11[%172, %c0_47, %c0_48], %175 {strides = array<i32>} : memref<8x8x128xf32, #tpu.memory_space<vmem>>, vector<1x8x128xf32>,
    %c5_i32 = arith.constant 5 : i32
    %176 = arith.index_cast %c5_i32 : i32 to index
    %c0_49 = arith.constant 0 : index
    %c0_50 = arith.constant 0 : index
    %177 = vector.load %arg2[%176, %c0_49, %c0_50] : memref<8x8x512xf32, #tpu.memory_space<vmem>>, vector<1x8x512xf32>
    %178 = vector.shape_cast %177 : vector<1x8x512xf32> to vector<8x512xf32>
    %c0_51 = arith.constant 0 : index
    %c0_52 = arith.constant 0 : index
    %179 = vector.load %arg3[%c0_51, %c0_52] : memref<128x512xf32, #tpu.memory_space<vmem>>, vector<128x512xf32>
    %cst_53 = arith.constant dense<0.000000e+00> : vector<8x512xf32>
    %180 = tpu.matmul %171, %179, %cst_53 {dimension_numbers = #tpu.dot_dimension_numbers<[1], [0], [0], [1], [0, 0, 1, 1], [], []>} : vector<8x128xf32>, vector<128x512xf32>, vector<8x512xf32> -> vector<8x512xf32>
    %181 = arith.addf %178, %180 : vector<8x512xf32>
    %182 = vector.extract_strided_slice %181 {offsets = [0, 0], sizes = [8, 128], strides = [1, 1]} : vector<8x512xf32> to vector<8x128xf32>
    %183 = arith.negf %182 : vector<8x128xf32>
    %184 = math.exp %183 : vector<8x128xf32>
    %cst_54 = arith.constant 1.000000e+00 : f32
    %185 = vector.broadcast %cst_54 : f32 to vector<8x128xf32>
    %186 = arith.addf %185, %184 : vector<8x128xf32>
    %187 = arith.divf %185, %186 : vector<8x128xf32>
    %188 = vector.extract_strided_slice %181 {offsets = [0, 128], sizes = [8, 128], strides = [1, 1]} : vector<8x512xf32> to vector<8x128xf32>
    %189 = arith.negf %188 : vector<8x128xf32>
    %190 = math.exp %189 : vector<8x128xf32>
    %cst_55 = arith.constant 1.000000e+00 : f32
    %191 = vector.broadcast %cst_55 : f32 to vector<8x128xf32>
    %192 = arith.addf %191, %190 : vector<8x128xf32>
    %193 = arith.divf %191, %192 : vector<8x128xf32>
    %194 = vector.extract_strided_slice %181 {offsets = [0, 256], sizes = [8, 128], strides = [1, 1]} : vector<8x512xf32> to vector<8x128xf32>
    %195 = math.tanh %194 : vector<8x128xf32>
    %196 = vector.extract_strided_slice %181 {offsets = [0, 384], sizes = [8, 128], strides = [1, 1]} : vector<8x512xf32> to vector<8x128xf32>
    %197 = arith.negf %196 : vector<8x128xf32>
    %198 = math.exp %197 : vector<8x128xf32>
    %cst_56 = arith.constant 1.000000e+00 : f32
    %199 = vector.broadcast %cst_56 : f32 to vector<8x128xf32>
    %200 = arith.addf %199, %198 : vector<8x128xf32>
    %201 = arith.divf %199, %200 : vector<8x128xf32>
    %202 = arith.mulf %193, %169 : vector<8x128xf32>
    %203 = arith.mulf %187, %195 : vector<8x128xf32>
    %204 = arith.addf %202, %203 : vector<8x128xf32>
    %205 = math.tanh %204 : vector<8x128xf32>
    %206 = arith.mulf %201, %205 : vector<8x128xf32>
    %207 = arith.index_cast %c5_i32 : i32 to index
    %c0_57 = arith.constant 0 : index
    %c0_58 = arith.constant 0 : index
    %208 = vector.load %arg11[%207, %c0_57, %c0_58] : memref<8x8x128xf32, #tpu.memory_space<vmem>>, vector<1x8x128xf32>
    %209 = vector.shape_cast %208 : vector<1x8x128xf32> to vector<8x128xf32>
    %210 = vector.shape_cast %206 : vector<8x128xf32> to vector<1x8x128xf32>
    tpu.vector_store %arg11[%207, %c0_57, %c0_58], %210 {strides = array<i32>} : memref<8x8x128xf32, #tpu.memory_space<vmem>>, vector<1x8x128xf32>,
    %c6_i32 = arith.constant 6 : i32
    %211 = arith.index_cast %c6_i32 : i32 to index
    %c0_59 = arith.constant 0 : index
    %c0_60 = arith.constant 0 : index
    %212 = vector.load %arg2[%211, %c0_59, %c0_60] : memref<8x8x512xf32, #tpu.memory_space<vmem>>, vector<1x8x512xf32>
    %213 = vector.shape_cast %212 : vector<1x8x512xf32> to vector<8x512xf32>
    %c0_61 = arith.constant 0 : index
    %c0_62 = arith.constant 0 : index
    %214 = vector.load %arg3[%c0_61, %c0_62] : memref<128x512xf32, #tpu.memory_space<vmem>>, vector<128x512xf32>
    %cst_63 = arith.constant dense<0.000000e+00> : vector<8x512xf32>
    %215 = tpu.matmul %206, %214, %cst_63 {dimension_numbers = #tpu.dot_dimension_numbers<[1], [0], [0], [1], [0, 0, 1, 1], [], []>} : vector<8x128xf32>, vector<128x512xf32>, vector<8x512xf32> -> vector<8x512xf32>
    %216 = arith.addf %213, %215 : vector<8x512xf32>
    %217 = vector.extract_strided_slice %216 {offsets = [0, 0], sizes = [8, 128], strides = [1, 1]} : vector<8x512xf32> to vector<8x128xf32>
    %218 = arith.negf %217 : vector<8x128xf32>
    %219 = math.exp %218 : vector<8x128xf32>
    %cst_64 = arith.constant 1.000000e+00 : f32
    %220 = vector.broadcast %cst_64 : f32 to vector<8x128xf32>
    %221 = arith.addf %220, %219 : vector<8x128xf32>
    %222 = arith.divf %220, %221 : vector<8x128xf32>
    %223 = vector.extract_strided_slice %216 {offsets = [0, 128], sizes = [8, 128], strides = [1, 1]} : vector<8x512xf32> to vector<8x128xf32>
    %224 = arith.negf %223 : vector<8x128xf32>
    %225 = math.exp %224 : vector<8x128xf32>
    %cst_65 = arith.constant 1.000000e+00 : f32
    %226 = vector.broadcast %cst_65 : f32 to vector<8x128xf32>
    %227 = arith.addf %226, %225 : vector<8x128xf32>
    %228 = arith.divf %226, %227 : vector<8x128xf32>
    %229 = vector.extract_strided_slice %216 {offsets = [0, 256], sizes = [8, 128], strides = [1, 1]} : vector<8x512xf32> to vector<8x128xf32>
    %230 = math.tanh %229 : vector<8x128xf32>
    %231 = vector.extract_strided_slice %216 {offsets = [0, 384], sizes = [8, 128], strides = [1, 1]} : vector<8x512xf32> to vector<8x128xf32>
    %232 = arith.negf %231 : vector<8x128xf32>
    %233 = math.exp %232 : vector<8x128xf32>
    %cst_66 = arith.constant 1.000000e+00 : f32
    %234 = vector.broadcast %cst_66 : f32 to vector<8x128xf32>
    %235 = arith.addf %234, %233 : vector<8x128xf32>
    %236 = arith.divf %234, %235 : vector<8x128xf32>
    %237 = arith.mulf %228, %204 : vector<8x128xf32>
    %238 = arith.mulf %222, %230 : vector<8x128xf32>
    %239 = arith.addf %237, %238 : vector<8x128xf32>
    %240 = math.tanh %239 : vector<8x128xf32>
    %241 = arith.mulf %236, %240 : vector<8x128xf32>
    %242 = arith.index_cast %c6_i32 : i32 to index
    %c0_67 = arith.constant 0 : index
    %c0_68 = arith.constant 0 : index
    %243 = vector.load %arg11[%242, %c0_67, %c0_68] : memref<8x8x128xf32, #tpu.memory_space<vmem>>, vector<1x8x128xf32>
    %244 = vector.shape_cast %243 : vector<1x8x128xf32> to vector<8x128xf32>
    %245 = vector.shape_cast %241 : vector<8x128xf32> to vector<1x8x128xf32>
    tpu.vector_store %arg11[%242, %c0_67, %c0_68], %245 {strides = array<i32>} : memref<8x8x128xf32, #tpu.memory_space<vmem>>, vector<1x8x128xf32>,
    %c7_i32 = arith.constant 7 : i32
    %246 = arith.index_cast %c7_i32 : i32 to index
    %c0_69 = arith.constant 0 : index
    %c0_70 = arith.constant 0 : index
    %247 = vector.load %arg2[%246, %c0_69, %c0_70] : memref<8x8x512xf32, #tpu.memory_space<vmem>>, vector<1x8x512xf32>
    %248 = vector.shape_cast %247 : vector<1x8x512xf32> to vector<8x512xf32>
    %c0_71 = arith.constant 0 : index
    %c0_72 = arith.constant 0 : index
    %249 = vector.load %arg3[%c0_71, %c0_72] : memref<128x512xf32, #tpu.memory_space<vmem>>, vector<128x512xf32>
    %cst_73 = arith.constant dense<0.000000e+00> : vector<8x512xf32>
    %250 = tpu.matmul %241, %249, %cst_73 {dimension_numbers = #tpu.dot_dimension_numbers<[1], [0], [0], [1], [0, 0, 1, 1], [], []>} : vector<8x128xf32>, vector<128x512xf32>, vector<8x512xf32> -> vector<8x512xf32>
    %251 = arith.addf %248, %250 : vector<8x512xf32>
    %252 = vector.extract_strided_slice %251 {offsets = [0, 0], sizes = [8, 128], strides = [1, 1]} : vector<8x512xf32> to vector<8x128xf32>
    %253 = arith.negf %252 : vector<8x128xf32>
    %254 = math.exp %253 : vector<8x128xf32>
    %cst_74 = arith.constant 1.000000e+00 : f32
    %255 = vector.broadcast %cst_74 : f32 to vector<8x128xf32>
    %256 = arith.addf %255, %254 : vector<8x128xf32>
    %257 = arith.divf %255, %256 : vector<8x128xf32>
    %258 = vector.extract_strided_slice %251 {offsets = [0, 128], sizes = [8, 128], strides = [1, 1]} : vector<8x512xf32> to vector<8x128xf32>
    %259 = arith.negf %258 : vector<8x128xf32>
    %260 = math.exp %259 : vector<8x128xf32>
    %cst_75 = arith.constant 1.000000e+00 : f32
    %261 = vector.broadcast %cst_75 : f32 to vector<8x128xf32>
    %262 = arith.addf %261, %260 : vector<8x128xf32>
    %263 = arith.divf %261, %262 : vector<8x128xf32>
    %264 = vector.extract_strided_slice %251 {offsets = [0, 256], sizes = [8, 128], strides = [1, 1]} : vector<8x512xf32> to vector<8x128xf32>
    %265 = math.tanh %264 : vector<8x128xf32>
    %266 = vector.extract_strided_slice %251 {offsets = [0, 384], sizes = [8, 128], strides = [1, 1]} : vector<8x512xf32> to vector<8x128xf32>
    %267 = arith.negf %266 : vector<8x128xf32>
    %268 = math.exp %267 : vector<8x128xf32>
    %cst_76 = arith.constant 1.000000e+00 : f32
    %269 = vector.broadcast %cst_76 : f32 to vector<8x128xf32>
    %270 = arith.addf %269, %268 : vector<8x128xf32>
    %271 = arith.divf %269, %270 : vector<8x128xf32>
    %272 = arith.mulf %263, %239 : vector<8x128xf32>
    %273 = arith.mulf %257, %265 : vector<8x128xf32>
    %274 = arith.addf %272, %273 : vector<8x128xf32>
    %275 = math.tanh %274 : vector<8x128xf32>
    %276 = arith.mulf %271, %275 : vector<8x128xf32>
    %277 = arith.index_cast %c7_i32 : i32 to index
    %c0_77 = arith.constant 0 : index
    %c0_78 = arith.constant 0 : index
    %278 = vector.load %arg11[%277, %c0_77, %c0_78] : memref<8x8x128xf32, #tpu.memory_space<vmem>>, vector<1x8x128xf32>
    %279 = vector.shape_cast %278 : vector<1x8x128xf32> to vector<8x128xf32>
    %280 = vector.shape_cast %276 : vector<8x128xf32> to vector<1x8x128xf32>
    tpu.vector_store %arg11[%277, %c0_77, %c0_78], %280 {strides = array<i32>} : memref<8x8x128xf32, #tpu.memory_space<vmem>>, vector<1x8x128xf32>,
    %c8_i32 = arith.constant 8 : i32
    %cst_79 = arith.constant 0.000000e+00 : f32
    %281 = vector.broadcast %cst_79 : f32 to vector<8x128xf32>
    %c0_i32_80 = arith.constant 0 : i32
    %282 = arith.index_cast %c0_i32_80 : i32 to index
    %283 = memref.load %arg1[%282] : memref<5xi32, #tpu.memory_space<smem>>
    %c0_i32_81 = arith.constant 0 : i32
    %284 = arith.cmpi ne, %283, %c0_i32_81 : i32
    %285 = arith.extui %284 : i1 to i32
    %286 = arith.sitofp %285 : i32 to f32
    %c0_82 = arith.constant 0 : index
    %c0_83 = arith.constant 0 : index
    %287 = vector.load %arg5[%c0_82, %c0_83] : memref<128x128xf32, #tpu.memory_space<vmem>>, vector<128x128xf32>
    %cst_84 = arith.constant dense<0.000000e+00> : vector<8x128xf32>
    %288 = tpu.matmul %281, %287, %cst_84 {dimension_numbers = #tpu.dot_dimension_numbers<[1], [0], [0], [1], [0, 0, 1, 1], [], []>} : vector<8x128xf32>, vector<128x128xf32>, vector<8x128xf32> -> vector<8x128xf32>
    %289 = arith.index_cast %c0_i32_80 : i32 to index
    %c0_85 = arith.constant 0 : index
    %c0_86 = arith.constant 0 : index
    %290 = vector.load %arg4[%289, %c0_85, %c0_86] : memref<5x8x128xf32, #tpu.memory_space<vmem>>, vector<1x8x128xf32>
    %291 = vector.shape_cast %290 : vector<1x8x128xf32> to vector<8x128xf32>
    %292 = vector.broadcast %286 : f32 to vector<8x128xf32>
    %293 = arith.mulf %292, %291 : vector<8x128xf32>
    %cst_87 = arith.constant 1.000000e+00 : f32
    %294 = arith.subf %cst_87, %286 : f32
    %295 = vector.broadcast %294 : f32 to vector<8x128xf32>
    %296 = arith.mulf %295, %288 : vector<8x128xf32>
    %297 = arith.addf %293, %296 : vector<8x128xf32>
    %298 = tpu.concatenate %297, %276 in 1 : vector<8x128xf32>, vector<8x128xf32> -> vector<8x256xf32>
    %c0_88 = arith.constant 0 : index
    %c0_89 = arith.constant 0 : index
    %299 = vector.load %arg6[%c0_88, %c0_89] : memref<256x512xf32, #tpu.memory_space<vmem>>, vector<256x512xf32>
    %cst_90 = arith.constant dense<0.000000e+00> : vector<8x512xf32>
    %300 = tpu.matmul %298, %299, %cst_90 {dimension_numbers = #tpu.dot_dimension_numbers<[1], [0], [0], [1], [0, 0, 1, 1], [], []>} : vector<8x256xf32>, vector<256x512xf32>, vector<8x512xf32> -> vector<8x512xf32>
    %c0_91 = arith.constant 0 : index
    %c0_92 = arith.constant 0 : index
    %301 = vector.load %arg7[%c0_91, %c0_92] : memref<1x512xf32, #tpu.memory_space<vmem>>, vector<1x512xf32>
    %302 = vector.broadcast %301 : vector<1x512xf32> to vector<8x512xf32>
    %303 = arith.addf %300, %302 : vector<8x512xf32>
    %304 = vector.extract_strided_slice %303 {offsets = [0, 0], sizes = [8, 128], strides = [1, 1]} : vector<8x512xf32> to vector<8x128xf32>
    %305 = arith.negf %304 : vector<8x128xf32>
    %306 = math.exp %305 : vector<8x128xf32>
    %cst_93 = arith.constant 1.000000e+00 : f32
    %307 = vector.broadcast %cst_93 : f32 to vector<8x128xf32>
    %308 = arith.addf %307, %306 : vector<8x128xf32>
    %309 = arith.divf %307, %308 : vector<8x128xf32>
    %310 = vector.extract_strided_slice %303 {offsets = [0, 128], sizes = [8, 128], strides = [1, 1]} : vector<8x512xf32> to vector<8x128xf32>
    %311 = arith.negf %310 : vector<8x128xf32>
    %312 = math.exp %311 : vector<8x128xf32>
    %cst_94 = arith.constant 1.000000e+00 : f32
    %313 = vector.broadcast %cst_94 : f32 to vector<8x128xf32>
    %314 = arith.addf %313, %312 : vector<8x128xf32>
    %315 = arith.divf %313, %314 : vector<8x128xf32>
    %316 = vector.extract_strided_slice %303 {offsets = [0, 256], sizes = [8, 128], strides = [1, 1]} : vector<8x512xf32> to vector<8x128xf32>
    %317 = math.tanh %316 : vector<8x128xf32>
    %318 = vector.extract_strided_slice %303 {offsets = [0, 384], sizes = [8, 128], strides = [1, 1]} : vector<8x512xf32> to vector<8x128xf32>
    %319 = arith.negf %318 : vector<8x128xf32>
    %320 = math.exp %319 : vector<8x128xf32>
    %cst_95 = arith.constant 1.000000e+00 : f32
    %321 = vector.broadcast %cst_95 : f32 to vector<8x128xf32>
    %322 = arith.addf %321, %320 : vector<8x128xf32>
    %323 = arith.divf %321, %322 : vector<8x128xf32>
    %324 = arith.mulf %315, %274 : vector<8x128xf32>
    %325 = arith.mulf %309, %317 : vector<8x128xf32>
    %326 = arith.addf %324, %325 : vector<8x128xf32>
    %327 = math.tanh %326 : vector<8x128xf32>
    %328 = arith.mulf %323, %327 : vector<8x128xf32>
    %c0_96 = arith.constant 0 : index
    %c0_97 = arith.constant 0 : index
    %c0_98 = arith.constant 0 : index
    %329 = vector.load %arg11[%c0_96, %c0_97, %c0_98] : memref<8x8x128xf32, #tpu.memory_space<vmem>>, vector<8x8x128xf32>
    %330 = vector.shape_cast %328 : vector<8x128xf32> to vector<1x8x128xf32>
    %331 = vector.broadcast %330 : vector<1x8x128xf32> to vector<8x8x128xf32>
    %332 = arith.mulf %329, %331 : vector<8x8x128xf32>
    %cst_99 = arith.constant dense<0.000000e+00> : vector<8x8xf32>
    %333 = vector.multi_reduction <add>, %332, %cst_99 [2] : vector<8x8x128xf32> to vector<8x8xf32>
    %334 = vector.shape_cast %333 : vector<8x8xf32> to vector<8x8x1xf32>
    %cst_100 = arith.constant dense<0xFF800000> : vector<8x1xf32>
    %335 = vector.multi_reduction <maximumf>, %334, %cst_100 [0] : vector<8x8x1xf32> to vector<8x1xf32>
    %336 = vector.shape_cast %335 : vector<8x1xf32> to vector<1x8x1xf32>
    %337 = vector.broadcast %336 : vector<1x8x1xf32> to vector<8x8x1xf32>
    %338 = arith.subf %334, %337 : vector<8x8x1xf32>
    %339 = math.exp %338 : vector<8x8x1xf32>
    %cst_101 = arith.constant dense<0.000000e+00> : vector<8x1xf32>
    %340 = vector.multi_reduction <add>, %339, %cst_101 [0] : vector<8x8x1xf32> to vector<8x1xf32>
    %341 = vector.shape_cast %340 : vector<8x1xf32> to vector<1x8x1xf32>
    %342 = vector.broadcast %341 : vector<1x8x1xf32> to vector<8x8x1xf32>
    %343 = arith.divf %339, %342 : vector<8x8x1xf32>
    %344 = vector.broadcast %343 : vector<8x8x1xf32> to vector<8x8x128xf32>
    %345 = arith.mulf %329, %344 : vector<8x8x128xf32>
    %cst_102 = arith.constant dense<0.000000e+00> : vector<8x128xf32>
    %346 = vector.multi_reduction <add>, %345, %cst_102 [0] : vector<8x8x128xf32> to vector<8x128xf32>
    %347 = tpu.concatenate %328, %346, %297 in 1 : vector<8x128xf32>, vector<8x128xf32>, vector<8x128xf32> -> vector<8x384xf32>
    %c0_103 = arith.constant 0 : index
    %c0_104 = arith.constant 0 : index
    %348 = vector.load %arg8[%c0_103, %c0_104] : memref<384x128xf32, #tpu.memory_space<vmem>>, vector<384x128xf32>
    %cst_105 = arith.constant dense<0.000000e+00> : vector<8x128xf32>
    %349 = tpu.matmul %347, %348, %cst_105 {dimension_numbers = #tpu.dot_dimension_numbers<[1], [0], [0], [1], [0, 0, 1, 1], [], []>} : vector<8x384xf32>, vector<384x128xf32>, vector<8x128xf32> -> vector<8x128xf32>
    %c0_106 = arith.constant 0 : index
    %c0_107 = arith.constant 0 : index
    %350 = vector.load %arg9[%c0_106, %c0_107] : memref<1x128xf32, #tpu.memory_space<vmem>>, vector<1x128xf32>
    %351 = vector.broadcast %350 : vector<1x128xf32> to vector<8x128xf32>
    %352 = arith.addf %349, %351 : vector<8x128xf32>
    %353 = arith.index_cast %c0_i32_80 : i32 to index
    %c0_108 = arith.constant 0 : index
    %c0_109 = arith.constant 0 : index
    %354 = vector.load %arg10[%353, %c0_108, %c0_109] : memref<5x8x128xf32, #tpu.memory_space<vmem>>, vector<1x8x128xf32>
    %355 = vector.shape_cast %354 : vector<1x8x128xf32> to vector<8x128xf32>
    %356 = vector.shape_cast %352 : vector<8x128xf32> to vector<1x8x128xf32>
    tpu.vector_store %arg10[%353, %c0_108, %c0_109], %356 {strides = array<i32>} : memref<5x8x128xf32, #tpu.memory_space<vmem>>, vector<1x8x128xf32>,
    %357 = tpu.iota {dimensions = array<i32: 1>} : vector<8x128xi32>
    %cst_110 = arith.constant dense<0xFF800000> : vector<8xf32>
    %358 = vector.multi_reduction <maximumf>, %352, %cst_110 [1] : vector<8x128xf32> to vector<8xf32>
    %359 = vector.shape_cast %358 : vector<8xf32> to vector<8x1xf32>
    %360 = vector.broadcast %359 : vector<8x1xf32> to vector<8x128xf32>
    %361 = arith.cmpf oeq, %352, %360 : vector<8x128xf32>
    %c128_i32 = arith.constant 128 : i32
    %362 = vector.broadcast %c128_i32 : i32 to vector<8x128xi32>
    %363 = arith.select %361, %357, %362 : vector<8x128xi1>, vector<8x128xi32>
    %cst_111 = arith.constant dense<2147483647> : vector<8xi32>
    %364 = vector.multi_reduction <minsi>, %363, %cst_111 [1] : vector<8x128xi32> to vector<8xi32>
    %365 = vector.shape_cast %364 : vector<8xi32> to vector<8x1xi32>
    %366 = vector.broadcast %365 : vector<8x1xi32> to vector<8x128xi32>
    %367 = arith.cmpi eq, %357, %366 : vector<8x128xi32>
    %368 = arith.extui %367 : vector<8x128xi1> to vector<8x128xi32>
    %369 = arith.sitofp %368 : vector<8x128xi32> to vector<8x128xf32>
    %c1_i32_112 = arith.constant 1 : i32
    %370 = arith.index_cast %c1_i32_112 : i32 to index
    %371 = memref.load %arg1[%370] : memref<5xi32, #tpu.memory_space<smem>>
    %c0_i32_113 = arith.constant 0 : i32
    %372 = arith.cmpi ne, %371, %c0_i32_113 : i32
    %373 = arith.extui %372 : i1 to i32
    %374 = arith.sitofp %373 : i32 to f32
    %c0_114 = arith.constant 0 : index
    %c0_115 = arith.constant 0 : index
    %375 = vector.load %arg5[%c0_114, %c0_115] : memref<128x128xf32, #tpu.memory_space<vmem>>, vector<128x128xf32>
    %cst_116 = arith.constant dense<0.000000e+00> : vector<8x128xf32>
    %376 = tpu.matmul %369, %375, %cst_116 {dimension_numbers = #tpu.dot_dimension_numbers<[1], [0], [0], [1], [0, 0, 1, 1], [], []>} : vector<8x128xf32>, vector<128x128xf32>, vector<8x128xf32> -> vector<8x128xf32>
    %377 = arith.index_cast %c1_i32_112 : i32 to index
    %c0_117 = arith.constant 0 : index
    %c0_118 = arith.constant 0 : index
    %378 = vector.load %arg4[%377, %c0_117, %c0_118] : memref<5x8x128xf32, #tpu.memory_space<vmem>>, vector<1x8x128xf32>
    %379 = vector.shape_cast %378 : vector<1x8x128xf32> to vector<8x128xf32>
    %380 = vector.broadcast %374 : f32 to vector<8x128xf32>
    %381 = arith.mulf %380, %379 : vector<8x128xf32>
    %cst_119 = arith.constant 1.000000e+00 : f32
    %382 = arith.subf %cst_119, %374 : f32
    %383 = vector.broadcast %382 : f32 to vector<8x128xf32>
    %384 = arith.mulf %383, %376 : vector<8x128xf32>
    %385 = arith.addf %381, %384 : vector<8x128xf32>
    %386 = tpu.concatenate %385, %328 in 1 : vector<8x128xf32>, vector<8x128xf32> -> vector<8x256xf32>
    %c0_120 = arith.constant 0 : index
    %c0_121 = arith.constant 0 : index
    %387 = vector.load %arg6[%c0_120, %c0_121] : memref<256x512xf32, #tpu.memory_space<vmem>>, vector<256x512xf32>
    %cst_122 = arith.constant dense<0.000000e+00> : vector<8x512xf32>
    %388 = tpu.matmul %386, %387, %cst_122 {dimension_numbers = #tpu.dot_dimension_numbers<[1], [0], [0], [1], [0, 0, 1, 1], [], []>} : vector<8x256xf32>, vector<256x512xf32>, vector<8x512xf32> -> vector<8x512xf32>
    %c0_123 = arith.constant 0 : index
    %c0_124 = arith.constant 0 : index
    %389 = vector.load %arg7[%c0_123, %c0_124] : memref<1x512xf32, #tpu.memory_space<vmem>>, vector<1x512xf32>
    %390 = vector.broadcast %389 : vector<1x512xf32> to vector<8x512xf32>
    %391 = arith.addf %388, %390 : vector<8x512xf32>
    %392 = vector.extract_strided_slice %391 {offsets = [0, 0], sizes = [8, 128], strides = [1, 1]} : vector<8x512xf32> to vector<8x128xf32>
    %393 = arith.negf %392 : vector<8x128xf32>
    %394 = math.exp %393 : vector<8x128xf32>
    %cst_125 = arith.constant 1.000000e+00 : f32
    %395 = vector.broadcast %cst_125 : f32 to vector<8x128xf32>
    %396 = arith.addf %395, %394 : vector<8x128xf32>
    %397 = arith.divf %395, %396 : vector<8x128xf32>
    %398 = vector.extract_strided_slice %391 {offsets = [0, 128], sizes = [8, 128], strides = [1, 1]} : vector<8x512xf32> to vector<8x128xf32>
    %399 = arith.negf %398 : vector<8x128xf32>
    %400 = math.exp %399 : vector<8x128xf32>
    %cst_126 = arith.constant 1.000000e+00 : f32
    %401 = vector.broadcast %cst_126 : f32 to vector<8x128xf32>
    %402 = arith.addf %401, %400 : vector<8x128xf32>
    %403 = arith.divf %401, %402 : vector<8x128xf32>
    %404 = vector.extract_strided_slice %391 {offsets = [0, 256], sizes = [8, 128], strides = [1, 1]} : vector<8x512xf32> to vector<8x128xf32>
    %405 = math.tanh %404 : vector<8x128xf32>
    %406 = vector.extract_strided_slice %391 {offsets = [0, 384], sizes = [8, 128], strides = [1, 1]} : vector<8x512xf32> to vector<8x128xf32>
    %407 = arith.negf %406 : vector<8x128xf32>
    %408 = math.exp %407 : vector<8x128xf32>
    %cst_127 = arith.constant 1.000000e+00 : f32
    %409 = vector.broadcast %cst_127 : f32 to vector<8x128xf32>
    %410 = arith.addf %409, %408 : vector<8x128xf32>
    %411 = arith.divf %409, %410 : vector<8x128xf32>
    %412 = arith.mulf %403, %326 : vector<8x128xf32>
    %413 = arith.mulf %397, %405 : vector<8x128xf32>
    %414 = arith.addf %412, %413 : vector<8x128xf32>
    %415 = math.tanh %414 : vector<8x128xf32>
    %416 = arith.mulf %411, %415 : vector<8x128xf32>
    %c0_128 = arith.constant 0 : index
    %c0_129 = arith.constant 0 : index
    %c0_130 = arith.constant 0 : index
    %417 = vector.load %arg11[%c0_128, %c0_129, %c0_130] : memref<8x8x128xf32, #tpu.memory_space<vmem>>, vector<8x8x128xf32>
    %418 = vector.shape_cast %416 : vector<8x128xf32> to vector<1x8x128xf32>
    %419 = vector.broadcast %418 : vector<1x8x128xf32> to vector<8x8x128xf32>
    %420 = arith.mulf %417, %419 : vector<8x8x128xf32>
    %cst_131 = arith.constant dense<0.000000e+00> : vector<8x8xf32>
    %421 = vector.multi_reduction <add>, %420, %cst_131 [2] : vector<8x8x128xf32> to vector<8x8xf32>
    %422 = vector.shape_cast %421 : vector<8x8xf32> to vector<8x8x1xf32>
    %cst_132 = arith.constant dense<0xFF800000> : vector<8x1xf32>
    %423 = vector.multi_reduction <maximumf>, %422, %cst_132 [0] : vector<8x8x1xf32> to vector<8x1xf32>
    %424 = vector.shape_cast %423 : vector<8x1xf32> to vector<1x8x1xf32>
    %425 = vector.broadcast %424 : vector<1x8x1xf32> to vector<8x8x1xf32>
    %426 = arith.subf %422, %425 : vector<8x8x1xf32>
    %427 = math.exp %426 : vector<8x8x1xf32>
    %cst_133 = arith.constant dense<0.000000e+00> : vector<8x1xf32>
    %428 = vector.multi_reduction <add>, %427, %cst_133 [0] : vector<8x8x1xf32> to vector<8x1xf32>
    %429 = vector.shape_cast %428 : vector<8x1xf32> to vector<1x8x1xf32>
    %430 = vector.broadcast %429 : vector<1x8x1xf32> to vector<8x8x1xf32>
    %431 = arith.divf %427, %430 : vector<8x8x1xf32>
    %432 = vector.broadcast %431 : vector<8x8x1xf32> to vector<8x8x128xf32>
    %433 = arith.mulf %417, %432 : vector<8x8x128xf32>
    %cst_134 = arith.constant dense<0.000000e+00> : vector<8x128xf32>
    %434 = vector.multi_reduction <add>, %433, %cst_134 [0] : vector<8x8x128xf32> to vector<8x128xf32>
    %435 = tpu.concatenate %416, %434, %385 in 1 : vector<8x128xf32>, vector<8x128xf32>, vector<8x128xf32> -> vector<8x384xf32>
    %c0_135 = arith.constant 0 : index
    %c0_136 = arith.constant 0 : index
    %436 = vector.load %arg8[%c0_135, %c0_136] : memref<384x128xf32, #tpu.memory_space<vmem>>, vector<384x128xf32>
    %cst_137 = arith.constant dense<0.000000e+00> : vector<8x128xf32>
    %437 = tpu.matmul %435, %436, %cst_137 {dimension_numbers = #tpu.dot_dimension_numbers<[1], [0], [0], [1], [0, 0, 1, 1], [], []>} : vector<8x384xf32>, vector<384x128xf32>, vector<8x128xf32> -> vector<8x128xf32>
    %c0_138 = arith.constant 0 : index
    %c0_139 = arith.constant 0 : index
    %438 = vector.load %arg9[%c0_138, %c0_139] : memref<1x128xf32, #tpu.memory_space<vmem>>, vector<1x128xf32>
    %439 = vector.broadcast %438 : vector<1x128xf32> to vector<8x128xf32>
    %440 = arith.addf %437, %439 : vector<8x128xf32>
    %441 = arith.index_cast %c1_i32_112 : i32 to index
    %c0_140 = arith.constant 0 : index
    %c0_141 = arith.constant 0 : index
    %442 = vector.load %arg10[%441, %c0_140, %c0_141] : memref<5x8x128xf32, #tpu.memory_space<vmem>>, vector<1x8x128xf32>
    %443 = vector.shape_cast %442 : vector<1x8x128xf32> to vector<8x128xf32>
    %444 = vector.shape_cast %440 : vector<8x128xf32> to vector<1x8x128xf32>
    tpu.vector_store %arg10[%441, %c0_140, %c0_141], %444 {strides = array<i32>} : memref<5x8x128xf32, #tpu.memory_space<vmem>>, vector<1x8x128xf32>,
    %445 = tpu.iota {dimensions = array<i32: 1>} : vector<8x128xi32>
    %cst_142 = arith.constant dense<0xFF800000> : vector<8xf32>
    %446 = vector.multi_reduction <maximumf>, %440, %cst_142 [1] : vector<8x128xf32> to vector<8xf32>
    %447 = vector.shape_cast %446 : vector<8xf32> to vector<8x1xf32>
    %448 = vector.broadcast %447 : vector<8x1xf32> to vector<8x128xf32>
    %449 = arith.cmpf oeq, %440, %448 : vector<8x128xf32>
    %c128_i32_143 = arith.constant 128 : i32
    %450 = vector.broadcast %c128_i32_143 : i32 to vector<8x128xi32>
    %451 = arith.select %449, %445, %450 : vector<8x128xi1>, vector<8x128xi32>
    %cst_144 = arith.constant dense<2147483647> : vector<8xi32>
    %452 = vector.multi_reduction <minsi>, %451, %cst_144 [1] : vector<8x128xi32> to vector<8xi32>
    %453 = vector.shape_cast %452 : vector<8xi32> to vector<8x1xi32>
    %454 = vector.broadcast %453 : vector<8x1xi32> to vector<8x128xi32>
    %455 = arith.cmpi eq, %445, %454 : vector<8x128xi32>
    %456 = arith.extui %455 : vector<8x128xi1> to vector<8x128xi32>
    %457 = arith.sitofp %456 : vector<8x128xi32> to vector<8x128xf32>
    %c2_i32_145 = arith.constant 2 : i32
    %458 = arith.index_cast %c2_i32_145 : i32 to index
    %459 = memref.load %arg1[%458] : memref<5xi32, #tpu.memory_space<smem>>
    %c0_i32_146 = arith.constant 0 : i32
    %460 = arith.cmpi ne, %459, %c0_i32_146 : i32
    %461 = arith.extui %460 : i1 to i32
    %462 = arith.sitofp %461 : i32 to f32
    %c0_147 = arith.constant 0 : index
    %c0_148 = arith.constant 0 : index
    %463 = vector.load %arg5[%c0_147, %c0_148] : memref<128x128xf32, #tpu.memory_space<vmem>>, vector<128x128xf32>
    %cst_149 = arith.constant dense<0.000000e+00> : vector<8x128xf32>
    %464 = tpu.matmul %457, %463, %cst_149 {dimension_numbers = #tpu.dot_dimension_numbers<[1], [0], [0], [1], [0, 0, 1, 1], [], []>} : vector<8x128xf32>, vector<128x128xf32>, vector<8x128xf32> -> vector<8x128xf32>
    %465 = arith.index_cast %c2_i32_145 : i32 to index
    %c0_150 = arith.constant 0 : index
    %c0_151 = arith.constant 0 : index
    %466 = vector.load %arg4[%465, %c0_150, %c0_151] : memref<5x8x128xf32, #tpu.memory_space<vmem>>, vector<1x8x128xf32>
    %467 = vector.shape_cast %466 : vector<1x8x128xf32> to vector<8x128xf32>
    %468 = vector.broadcast %462 : f32 to vector<8x128xf32>
    %469 = arith.mulf %468, %467 : vector<8x128xf32>
    %cst_152 = arith.constant 1.000000e+00 : f32
    %470 = arith.subf %cst_152, %462 : f32
    %471 = vector.broadcast %470 : f32 to vector<8x128xf32>
    %472 = arith.mulf %471, %464 : vector<8x128xf32>
    %473 = arith.addf %469, %472 : vector<8x128xf32>
    %474 = tpu.concatenate %473, %416 in 1 : vector<8x128xf32>, vector<8x128xf32> -> vector<8x256xf32>
    %c0_153 = arith.constant 0 : index
    %c0_154 = arith.constant 0 : index
    %475 = vector.load %arg6[%c0_153, %c0_154] : memref<256x512xf32, #tpu.memory_space<vmem>>, vector<256x512xf32>
    %cst_155 = arith.constant dense<0.000000e+00> : vector<8x512xf32>
    %476 = tpu.matmul %474, %475, %cst_155 {dimension_numbers = #tpu.dot_dimension_numbers<[1], [0], [0], [1], [0, 0, 1, 1], [], []>} : vector<8x256xf32>, vector<256x512xf32>, vector<8x512xf32> -> vector<8x512xf32>
    %c0_156 = arith.constant 0 : index
    %c0_157 = arith.constant 0 : index
    %477 = vector.load %arg7[%c0_156, %c0_157] : memref<1x512xf32, #tpu.memory_space<vmem>>, vector<1x512xf32>
    %478 = vector.broadcast %477 : vector<1x512xf32> to vector<8x512xf32>
    %479 = arith.addf %476, %478 : vector<8x512xf32>
    %480 = vector.extract_strided_slice %479 {offsets = [0, 0], sizes = [8, 128], strides = [1, 1]} : vector<8x512xf32> to vector<8x128xf32>
    %481 = arith.negf %480 : vector<8x128xf32>
    %482 = math.exp %481 : vector<8x128xf32>
    %cst_158 = arith.constant 1.000000e+00 : f32
    %483 = vector.broadcast %cst_158 : f32 to vector<8x128xf32>
    %484 = arith.addf %483, %482 : vector<8x128xf32>
    %485 = arith.divf %483, %484 : vector<8x128xf32>
    %486 = vector.extract_strided_slice %479 {offsets = [0, 128], sizes = [8, 128], strides = [1, 1]} : vector<8x512xf32> to vector<8x128xf32>
    %487 = arith.negf %486 : vector<8x128xf32>
    %488 = math.exp %487 : vector<8x128xf32>
    %cst_159 = arith.constant 1.000000e+00 : f32
    %489 = vector.broadcast %cst_159 : f32 to vector<8x128xf32>
    %490 = arith.addf %489, %488 : vector<8x128xf32>
    %491 = arith.divf %489, %490 : vector<8x128xf32>
    %492 = vector.extract_strided_slice %479 {offsets = [0, 256], sizes = [8, 128], strides = [1, 1]} : vector<8x512xf32> to vector<8x128xf32>
    %493 = math.tanh %492 : vector<8x128xf32>
    %494 = vector.extract_strided_slice %479 {offsets = [0, 384], sizes = [8, 128], strides = [1, 1]} : vector<8x512xf32> to vector<8x128xf32>
    %495 = arith.negf %494 : vector<8x128xf32>
    %496 = math.exp %495 : vector<8x128xf32>
    %cst_160 = arith.constant 1.000000e+00 : f32
    %497 = vector.broadcast %cst_160 : f32 to vector<8x128xf32>
    %498 = arith.addf %497, %496 : vector<8x128xf32>
    %499 = arith.divf %497, %498 : vector<8x128xf32>
    %500 = arith.mulf %491, %414 : vector<8x128xf32>
    %501 = arith.mulf %485, %493 : vector<8x128xf32>
    %502 = arith.addf %500, %501 : vector<8x128xf32>
    %503 = math.tanh %502 : vector<8x128xf32>
    %504 = arith.mulf %499, %503 : vector<8x128xf32>
    %c0_161 = arith.constant 0 : index
    %c0_162 = arith.constant 0 : index
    %c0_163 = arith.constant 0 : index
    %505 = vector.load %arg11[%c0_161, %c0_162, %c0_163] : memref<8x8x128xf32, #tpu.memory_space<vmem>>, vector<8x8x128xf32>
    %506 = vector.shape_cast %504 : vector<8x128xf32> to vector<1x8x128xf32>
    %507 = vector.broadcast %506 : vector<1x8x128xf32> to vector<8x8x128xf32>
    %508 = arith.mulf %505, %507 : vector<8x8x128xf32>
    %cst_164 = arith.constant dense<0.000000e+00> : vector<8x8xf32>
    %509 = vector.multi_reduction <add>, %508, %cst_164 [2] : vector<8x8x128xf32> to vector<8x8xf32>
    %510 = vector.shape_cast %509 : vector<8x8xf32> to vector<8x8x1xf32>
    %cst_165 = arith.constant dense<0xFF800000> : vector<8x1xf32>
    %511 = vector.multi_reduction <maximumf>, %510, %cst_165 [0] : vector<8x8x1xf32> to vector<8x1xf32>
    %512 = vector.shape_cast %511 : vector<8x1xf32> to vector<1x8x1xf32>
    %513 = vector.broadcast %512 : vector<1x8x1xf32> to vector<8x8x1xf32>
    %514 = arith.subf %510, %513 : vector<8x8x1xf32>
    %515 = math.exp %514 : vector<8x8x1xf32>
    %cst_166 = arith.constant dense<0.000000e+00> : vector<8x1xf32>
    %516 = vector.multi_reduction <add>, %515, %cst_166 [0] : vector<8x8x1xf32> to vector<8x1xf32>
    %517 = vector.shape_cast %516 : vector<8x1xf32> to vector<1x8x1xf32>
    %518 = vector.broadcast %517 : vector<1x8x1xf32> to vector<8x8x1xf32>
    %519 = arith.divf %515, %518 : vector<8x8x1xf32>
    %520 = vector.broadcast %519 : vector<8x8x1xf32> to vector<8x8x128xf32>
    %521 = arith.mulf %505, %520 : vector<8x8x128xf32>
    %cst_167 = arith.constant dense<0.000000e+00> : vector<8x128xf32>
    %522 = vector.multi_reduction <add>, %521, %cst_167 [0] : vector<8x8x128xf32> to vector<8x128xf32>
    %523 = tpu.concatenate %504, %522, %473 in 1 : vector<8x128xf32>, vector<8x128xf32>, vector<8x128xf32> -> vector<8x384xf32>
    %c0_168 = arith.constant 0 : index
    %c0_169 = arith.constant 0 : index
    %524 = vector.load %arg8[%c0_168, %c0_169] : memref<384x128xf32, #tpu.memory_space<vmem>>, vector<384x128xf32>
    %cst_170 = arith.constant dense<0.000000e+00> : vector<8x128xf32>
    %525 = tpu.matmul %523, %524, %cst_170 {dimension_numbers = #tpu.dot_dimension_numbers<[1], [0], [0], [1], [0, 0, 1, 1], [], []>} : vector<8x384xf32>, vector<384x128xf32>, vector<8x128xf32> -> vector<8x128xf32>
    %c0_171 = arith.constant 0 : index
    %c0_172 = arith.constant 0 : index
    %526 = vector.load %arg9[%c0_171, %c0_172] : memref<1x128xf32, #tpu.memory_space<vmem>>, vector<1x128xf32>
    %527 = vector.broadcast %526 : vector<1x128xf32> to vector<8x128xf32>
    %528 = arith.addf %525, %527 : vector<8x128xf32>
    %529 = arith.index_cast %c2_i32_145 : i32 to index
    %c0_173 = arith.constant 0 : index
    %c0_174 = arith.constant 0 : index
    %530 = vector.load %arg10[%529, %c0_173, %c0_174] : memref<5x8x128xf32, #tpu.memory_space<vmem>>, vector<1x8x128xf32>
    %531 = vector.shape_cast %530 : vector<1x8x128xf32> to vector<8x128xf32>
    %532 = vector.shape_cast %528 : vector<8x128xf32> to vector<1x8x128xf32>
    tpu.vector_store %arg10[%529, %c0_173, %c0_174], %532 {strides = array<i32>} : memref<5x8x128xf32, #tpu.memory_space<vmem>>, vector<1x8x128xf32>,
    %533 = tpu.iota {dimensions = array<i32: 1>} : vector<8x128xi32>
    %cst_175 = arith.constant dense<0xFF800000> : vector<8xf32>
    %534 = vector.multi_reduction <maximumf>, %528, %cst_175 [1] : vector<8x128xf32> to vector<8xf32>
    %535 = vector.shape_cast %534 : vector<8xf32> to vector<8x1xf32>
    %536 = vector.broadcast %535 : vector<8x1xf32> to vector<8x128xf32>
    %537 = arith.cmpf oeq, %528, %536 : vector<8x128xf32>
    %c128_i32_176 = arith.constant 128 : i32
    %538 = vector.broadcast %c128_i32_176 : i32 to vector<8x128xi32>
    %539 = arith.select %537, %533, %538 : vector<8x128xi1>, vector<8x128xi32>
    %cst_177 = arith.constant dense<2147483647> : vector<8xi32>
    %540 = vector.multi_reduction <minsi>, %539, %cst_177 [1] : vector<8x128xi32> to vector<8xi32>
    %541 = vector.shape_cast %540 : vector<8xi32> to vector<8x1xi32>
    %542 = vector.broadcast %541 : vector<8x1xi32> to vector<8x128xi32>
    %543 = arith.cmpi eq, %533, %542 : vector<8x128xi32>
    %544 = arith.extui %543 : vector<8x128xi1> to vector<8x128xi32>
    %545 = arith.sitofp %544 : vector<8x128xi32> to vector<8x128xf32>
    %c3_i32_178 = arith.constant 3 : i32
    %546 = arith.index_cast %c3_i32_178 : i32 to index
    %547 = memref.load %arg1[%546] : memref<5xi32, #tpu.memory_space<smem>>
    %c0_i32_179 = arith.constant 0 : i32
    %548 = arith.cmpi ne, %547, %c0_i32_179 : i32
    %549 = arith.extui %548 : i1 to i32
    %550 = arith.sitofp %549 : i32 to f32
    %c0_180 = arith.constant 0 : index
    %c0_181 = arith.constant 0 : index
    %551 = vector.load %arg5[%c0_180, %c0_181] : memref<128x128xf32, #tpu.memory_space<vmem>>, vector<128x128xf32>
    %cst_182 = arith.constant dense<0.000000e+00> : vector<8x128xf32>
    %552 = tpu.matmul %545, %551, %cst_182 {dimension_numbers = #tpu.dot_dimension_numbers<[1], [0], [0], [1], [0, 0, 1, 1], [], []>} : vector<8x128xf32>, vector<128x128xf32>, vector<8x128xf32> -> vector<8x128xf32>
    %553 = arith.index_cast %c3_i32_178 : i32 to index
    %c0_183 = arith.constant 0 : index
    %c0_184 = arith.constant 0 : index
    %554 = vector.load %arg4[%553, %c0_183, %c0_184] : memref<5x8x128xf32, #tpu.memory_space<vmem>>, vector<1x8x128xf32>
    %555 = vector.shape_cast %554 : vector<1x8x128xf32> to vector<8x128xf32>
    %556 = vector.broadcast %550 : f32 to vector<8x128xf32>
    %557 = arith.mulf %556, %555 : vector<8x128xf32>
    %cst_185 = arith.constant 1.000000e+00 : f32
    %558 = arith.subf %cst_185, %550 : f32
    %559 = vector.broadcast %558 : f32 to vector<8x128xf32>
    %560 = arith.mulf %559, %552 : vector<8x128xf32>
    %561 = arith.addf %557, %560 : vector<8x128xf32>
    %562 = tpu.concatenate %561, %504 in 1 : vector<8x128xf32>, vector<8x128xf32> -> vector<8x256xf32>
    %c0_186 = arith.constant 0 : index
    %c0_187 = arith.constant 0 : index
    %563 = vector.load %arg6[%c0_186, %c0_187] : memref<256x512xf32, #tpu.memory_space<vmem>>, vector<256x512xf32>
    %cst_188 = arith.constant dense<0.000000e+00> : vector<8x512xf32>
    %564 = tpu.matmul %562, %563, %cst_188 {dimension_numbers = #tpu.dot_dimension_numbers<[1], [0], [0], [1], [0, 0, 1, 1], [], []>} : vector<8x256xf32>, vector<256x512xf32>, vector<8x512xf32> -> vector<8x512xf32>
    %c0_189 = arith.constant 0 : index
    %c0_190 = arith.constant 0 : index
    %565 = vector.load %arg7[%c0_189, %c0_190] : memref<1x512xf32, #tpu.memory_space<vmem>>, vector<1x512xf32>
    %566 = vector.broadcast %565 : vector<1x512xf32> to vector<8x512xf32>
    %567 = arith.addf %564, %566 : vector<8x512xf32>
    %568 = vector.extract_strided_slice %567 {offsets = [0, 0], sizes = [8, 128], strides = [1, 1]} : vector<8x512xf32> to vector<8x128xf32>
    %569 = arith.negf %568 : vector<8x128xf32>
    %570 = math.exp %569 : vector<8x128xf32>
    %cst_191 = arith.constant 1.000000e+00 : f32
    %571 = vector.broadcast %cst_191 : f32 to vector<8x128xf32>
    %572 = arith.addf %571, %570 : vector<8x128xf32>
    %573 = arith.divf %571, %572 : vector<8x128xf32>
    %574 = vector.extract_strided_slice %567 {offsets = [0, 128], sizes = [8, 128], strides = [1, 1]} : vector<8x512xf32> to vector<8x128xf32>
    %575 = arith.negf %574 : vector<8x128xf32>
    %576 = math.exp %575 : vector<8x128xf32>
    %cst_192 = arith.constant 1.000000e+00 : f32
    %577 = vector.broadcast %cst_192 : f32 to vector<8x128xf32>
    %578 = arith.addf %577, %576 : vector<8x128xf32>
    %579 = arith.divf %577, %578 : vector<8x128xf32>
    %580 = vector.extract_strided_slice %567 {offsets = [0, 256], sizes = [8, 128], strides = [1, 1]} : vector<8x512xf32> to vector<8x128xf32>
    %581 = math.tanh %580 : vector<8x128xf32>
    %582 = vector.extract_strided_slice %567 {offsets = [0, 384], sizes = [8, 128], strides = [1, 1]} : vector<8x512xf32> to vector<8x128xf32>
    %583 = arith.negf %582 : vector<8x128xf32>
    %584 = math.exp %583 : vector<8x128xf32>
    %cst_193 = arith.constant 1.000000e+00 : f32
    %585 = vector.broadcast %cst_193 : f32 to vector<8x128xf32>
    %586 = arith.addf %585, %584 : vector<8x128xf32>
    %587 = arith.divf %585, %586 : vector<8x128xf32>
    %588 = arith.mulf %579, %502 : vector<8x128xf32>
    %589 = arith.mulf %573, %581 : vector<8x128xf32>
    %590 = arith.addf %588, %589 : vector<8x128xf32>
    %591 = math.tanh %590 : vector<8x128xf32>
    %592 = arith.mulf %587, %591 : vector<8x128xf32>
    %c0_194 = arith.constant 0 : index
    %c0_195 = arith.constant 0 : index
    %c0_196 = arith.constant 0 : index
    %593 = vector.load %arg11[%c0_194, %c0_195, %c0_196] : memref<8x8x128xf32, #tpu.memory_space<vmem>>, vector<8x8x128xf32>
    %594 = vector.shape_cast %592 : vector<8x128xf32> to vector<1x8x128xf32>
    %595 = vector.broadcast %594 : vector<1x8x128xf32> to vector<8x8x128xf32>
    %596 = arith.mulf %593, %595 : vector<8x8x128xf32>
    %cst_197 = arith.constant dense<0.000000e+00> : vector<8x8xf32>
    %597 = vector.multi_reduction <add>, %596, %cst_197 [2] : vector<8x8x128xf32> to vector<8x8xf32>
    %598 = vector.shape_cast %597 : vector<8x8xf32> to vector<8x8x1xf32>
    %cst_198 = arith.constant dense<0xFF800000> : vector<8x1xf32>
    %599 = vector.multi_reduction <maximumf>, %598, %cst_198 [0] : vector<8x8x1xf32> to vector<8x1xf32>
    %600 = vector.shape_cast %599 : vector<8x1xf32> to vector<1x8x1xf32>
    %601 = vector.broadcast %600 : vector<1x8x1xf32> to vector<8x8x1xf32>
    %602 = arith.subf %598, %601 : vector<8x8x1xf32>
    %603 = math.exp %602 : vector<8x8x1xf32>
    %cst_199 = arith.constant dense<0.000000e+00> : vector<8x1xf32>
    %604 = vector.multi_reduction <add>, %603, %cst_199 [0] : vector<8x8x1xf32> to vector<8x1xf32>
    %605 = vector.shape_cast %604 : vector<8x1xf32> to vector<1x8x1xf32>
    %606 = vector.broadcast %605 : vector<1x8x1xf32> to vector<8x8x1xf32>
    %607 = arith.divf %603, %606 : vector<8x8x1xf32>
    %608 = vector.broadcast %607 : vector<8x8x1xf32> to vector<8x8x128xf32>
    %609 = arith.mulf %593, %608 : vector<8x8x128xf32>
    %cst_200 = arith.constant dense<0.000000e+00> : vector<8x128xf32>
    %610 = vector.multi_reduction <add>, %609, %cst_200 [0] : vector<8x8x128xf32> to vector<8x128xf32>
    %611 = tpu.concatenate %592, %610, %561 in 1 : vector<8x128xf32>, vector<8x128xf32>, vector<8x128xf32> -> vector<8x384xf32>
    %c0_201 = arith.constant 0 : index
    %c0_202 = arith.constant 0 : index
    %612 = vector.load %arg8[%c0_201, %c0_202] : memref<384x128xf32, #tpu.memory_space<vmem>>, vector<384x128xf32>
    %cst_203 = arith.constant dense<0.000000e+00> : vector<8x128xf32>
    %613 = tpu.matmul %611, %612, %cst_203 {dimension_numbers = #tpu.dot_dimension_numbers<[1], [0], [0], [1], [0, 0, 1, 1], [], []>} : vector<8x384xf32>, vector<384x128xf32>, vector<8x128xf32> -> vector<8x128xf32>
    %c0_204 = arith.constant 0 : index
    %c0_205 = arith.constant 0 : index
    %614 = vector.load %arg9[%c0_204, %c0_205] : memref<1x128xf32, #tpu.memory_space<vmem>>, vector<1x128xf32>
    %615 = vector.broadcast %614 : vector<1x128xf32> to vector<8x128xf32>
    %616 = arith.addf %613, %615 : vector<8x128xf32>
    %617 = arith.index_cast %c3_i32_178 : i32 to index
    %c0_206 = arith.constant 0 : index
    %c0_207 = arith.constant 0 : index
    %618 = vector.load %arg10[%617, %c0_206, %c0_207] : memref<5x8x128xf32, #tpu.memory_space<vmem>>, vector<1x8x128xf32>
    %619 = vector.shape_cast %618 : vector<1x8x128xf32> to vector<8x128xf32>
    %620 = vector.shape_cast %616 : vector<8x128xf32> to vector<1x8x128xf32>
    tpu.vector_store %arg10[%617, %c0_206, %c0_207], %620 {strides = array<i32>} : memref<5x8x128xf32, #tpu.memory_space<vmem>>, vector<1x8x128xf32>,
    %621 = tpu.iota {dimensions = array<i32: 1>} : vector<8x128xi32>
    %cst_208 = arith.constant dense<0xFF800000> : vector<8xf32>
    %622 = vector.multi_reduction <maximumf>, %616, %cst_208 [1] : vector<8x128xf32> to vector<8xf32>
    %623 = vector.shape_cast %622 : vector<8xf32> to vector<8x1xf32>
    %624 = vector.broadcast %623 : vector<8x1xf32> to vector<8x128xf32>
    %625 = arith.cmpf oeq, %616, %624 : vector<8x128xf32>
    %c128_i32_209 = arith.constant 128 : i32
    %626 = vector.broadcast %c128_i32_209 : i32 to vector<8x128xi32>
    %627 = arith.select %625, %621, %626 : vector<8x128xi1>, vector<8x128xi32>
    %cst_210 = arith.constant dense<2147483647> : vector<8xi32>
    %628 = vector.multi_reduction <minsi>, %627, %cst_210 [1] : vector<8x128xi32> to vector<8xi32>
    %629 = vector.shape_cast %628 : vector<8xi32> to vector<8x1xi32>
    %630 = vector.broadcast %629 : vector<8x1xi32> to vector<8x128xi32>
    %631 = arith.cmpi eq, %621, %630 : vector<8x128xi32>
    %632 = arith.extui %631 : vector<8x128xi1> to vector<8x128xi32>
    %633 = arith.sitofp %632 : vector<8x128xi32> to vector<8x128xf32>
    %c4_i32_211 = arith.constant 4 : i32
    %634 = arith.index_cast %c4_i32_211 : i32 to index
    %635 = memref.load %arg1[%634] : memref<5xi32, #tpu.memory_space<smem>>
    %c0_i32_212 = arith.constant 0 : i32
    %636 = arith.cmpi ne, %635, %c0_i32_212 : i32
    %637 = arith.extui %636 : i1 to i32
    %638 = arith.sitofp %637 : i32 to f32
    %c0_213 = arith.constant 0 : index
    %c0_214 = arith.constant 0 : index
    %639 = vector.load %arg5[%c0_213, %c0_214] : memref<128x128xf32, #tpu.memory_space<vmem>>, vector<128x128xf32>
    %cst_215 = arith.constant dense<0.000000e+00> : vector<8x128xf32>
    %640 = tpu.matmul %633, %639, %cst_215 {dimension_numbers = #tpu.dot_dimension_numbers<[1], [0], [0], [1], [0, 0, 1, 1], [], []>} : vector<8x128xf32>, vector<128x128xf32>, vector<8x128xf32> -> vector<8x128xf32>
    %641 = arith.index_cast %c4_i32_211 : i32 to index
    %c0_216 = arith.constant 0 : index
    %c0_217 = arith.constant 0 : index
    %642 = vector.load %arg4[%641, %c0_216, %c0_217] : memref<5x8x128xf32, #tpu.memory_space<vmem>>, vector<1x8x128xf32>
    %643 = vector.shape_cast %642 : vector<1x8x128xf32> to vector<8x128xf32>
    %644 = vector.broadcast %638 : f32 to vector<8x128xf32>
    %645 = arith.mulf %644, %643 : vector<8x128xf32>
    %cst_218 = arith.constant 1.000000e+00 : f32
    %646 = arith.subf %cst_218, %638 : f32
    %647 = vector.broadcast %646 : f32 to vector<8x128xf32>
    %648 = arith.mulf %647, %640 : vector<8x128xf32>
    %649 = arith.addf %645, %648 : vector<8x128xf32>
    %650 = tpu.concatenate %649, %592 in 1 : vector<8x128xf32>, vector<8x128xf32> -> vector<8x256xf32>
    %c0_219 = arith.constant 0 : index
    %c0_220 = arith.constant 0 : index
    %651 = vector.load %arg6[%c0_219, %c0_220] : memref<256x512xf32, #tpu.memory_space<vmem>>, vector<256x512xf32>
    %cst_221 = arith.constant dense<0.000000e+00> : vector<8x512xf32>
    %652 = tpu.matmul %650, %651, %cst_221 {dimension_numbers = #tpu.dot_dimension_numbers<[1], [0], [0], [1], [0, 0, 1, 1], [], []>} : vector<8x256xf32>, vector<256x512xf32>, vector<8x512xf32> -> vector<8x512xf32>
    %c0_222 = arith.constant 0 : index
    %c0_223 = arith.constant 0 : index
    %653 = vector.load %arg7[%c0_222, %c0_223] : memref<1x512xf32, #tpu.memory_space<vmem>>, vector<1x512xf32>
    %654 = vector.broadcast %653 : vector<1x512xf32> to vector<8x512xf32>
    %655 = arith.addf %652, %654 : vector<8x512xf32>
    %656 = vector.extract_strided_slice %655 {offsets = [0, 0], sizes = [8, 128], strides = [1, 1]} : vector<8x512xf32> to vector<8x128xf32>
    %657 = arith.negf %656 : vector<8x128xf32>
    %658 = math.exp %657 : vector<8x128xf32>
    %cst_224 = arith.constant 1.000000e+00 : f32
    %659 = vector.broadcast %cst_224 : f32 to vector<8x128xf32>
    %660 = arith.addf %659, %658 : vector<8x128xf32>
    %661 = arith.divf %659, %660 : vector<8x128xf32>
    %662 = vector.extract_strided_slice %655 {offsets = [0, 128], sizes = [8, 128], strides = [1, 1]} : vector<8x512xf32> to vector<8x128xf32>
    %663 = arith.negf %662 : vector<8x128xf32>
    %664 = math.exp %663 : vector<8x128xf32>
    %cst_225 = arith.constant 1.000000e+00 : f32
    %665 = vector.broadcast %cst_225 : f32 to vector<8x128xf32>
    %666 = arith.addf %665, %664 : vector<8x128xf32>
    %667 = arith.divf %665, %666 : vector<8x128xf32>
    %668 = vector.extract_strided_slice %655 {offsets = [0, 256], sizes = [8, 128], strides = [1, 1]} : vector<8x512xf32> to vector<8x128xf32>
    %669 = math.tanh %668 : vector<8x128xf32>
    %670 = vector.extract_strided_slice %655 {offsets = [0, 384], sizes = [8, 128], strides = [1, 1]} : vector<8x512xf32> to vector<8x128xf32>
    %671 = arith.negf %670 : vector<8x128xf32>
    %672 = math.exp %671 : vector<8x128xf32>
    %cst_226 = arith.constant 1.000000e+00 : f32
    %673 = vector.broadcast %cst_226 : f32 to vector<8x128xf32>
    %674 = arith.addf %673, %672 : vector<8x128xf32>
    %675 = arith.divf %673, %674 : vector<8x128xf32>
    %676 = arith.mulf %667, %590 : vector<8x128xf32>
    %677 = arith.mulf %661, %669 : vector<8x128xf32>
    %678 = arith.addf %676, %677 : vector<8x128xf32>
    %679 = math.tanh %678 : vector<8x128xf32>
    %680 = arith.mulf %675, %679 : vector<8x128xf32>
    %c0_227 = arith.constant 0 : index
    %c0_228 = arith.constant 0 : index
    %c0_229 = arith.constant 0 : index
    %681 = vector.load %arg11[%c0_227, %c0_228, %c0_229] : memref<8x8x128xf32, #tpu.memory_space<vmem>>, vector<8x8x128xf32>
    %682 = vector.shape_cast %680 : vector<8x128xf32> to vector<1x8x128xf32>
    %683 = vector.broadcast %682 : vector<1x8x128xf32> to vector<8x8x128xf32>
    %684 = arith.mulf %681, %683 : vector<8x8x128xf32>
    %cst_230 = arith.constant dense<0.000000e+00> : vector<8x8xf32>
    %685 = vector.multi_reduction <add>, %684, %cst_230 [2] : vector<8x8x128xf32> to vector<8x8xf32>
    %686 = vector.shape_cast %685 : vector<8x8xf32> to vector<8x8x1xf32>
    %cst_231 = arith.constant dense<0xFF800000> : vector<8x1xf32>
    %687 = vector.multi_reduction <maximumf>, %686, %cst_231 [0] : vector<8x8x1xf32> to vector<8x1xf32>
    %688 = vector.shape_cast %687 : vector<8x1xf32> to vector<1x8x1xf32>
    %689 = vector.broadcast %688 : vector<1x8x1xf32> to vector<8x8x1xf32>
    %690 = arith.subf %686, %689 : vector<8x8x1xf32>
    %691 = math.exp %690 : vector<8x8x1xf32>
    %cst_232 = arith.constant dense<0.000000e+00> : vector<8x1xf32>
    %692 = vector.multi_reduction <add>, %691, %cst_232 [0] : vector<8x8x1xf32> to vector<8x1xf32>
    %693 = vector.shape_cast %692 : vector<8x1xf32> to vector<1x8x1xf32>
    %694 = vector.broadcast %693 : vector<1x8x1xf32> to vector<8x8x1xf32>
    %695 = arith.divf %691, %694 : vector<8x8x1xf32>
    %696 = vector.broadcast %695 : vector<8x8x1xf32> to vector<8x8x128xf32>
    %697 = arith.mulf %681, %696 : vector<8x8x128xf32>
    %cst_233 = arith.constant dense<0.000000e+00> : vector<8x128xf32>
    %698 = vector.multi_reduction <add>, %697, %cst_233 [0] : vector<8x8x128xf32> to vector<8x128xf32>
    %699 = tpu.concatenate %680, %698, %649 in 1 : vector<8x128xf32>, vector<8x128xf32>, vector<8x128xf32> -> vector<8x384xf32>
    %c0_234 = arith.constant 0 : index
    %c0_235 = arith.constant 0 : index
    %700 = vector.load %arg8[%c0_234, %c0_235] : memref<384x128xf32, #tpu.memory_space<vmem>>, vector<384x128xf32>
    %cst_236 = arith.constant dense<0.000000e+00> : vector<8x128xf32>
    %701 = tpu.matmul %699, %700, %cst_236 {dimension_numbers = #tpu.dot_dimension_numbers<[1], [0], [0], [1], [0, 0, 1, 1], [], []>} : vector<8x384xf32>, vector<384x128xf32>, vector<8x128xf32> -> vector<8x128xf32>
    %c0_237 = arith.constant 0 : index
    %c0_238 = arith.constant 0 : index
    %702 = vector.load %arg9[%c0_237, %c0_238] : memref<1x128xf32, #tpu.memory_space<vmem>>, vector<1x128xf32>
    %703 = vector.broadcast %702 : vector<1x128xf32> to vector<8x128xf32>
    %704 = arith.addf %701, %703 : vector<8x128xf32>
    %705 = arith.index_cast %c4_i32_211 : i32 to index
    %c0_239 = arith.constant 0 : index
    %c0_240 = arith.constant 0 : index
    %706 = vector.load %arg10[%705, %c0_239, %c0_240] : memref<5x8x128xf32, #tpu.memory_space<vmem>>, vector<1x8x128xf32>
    %707 = vector.shape_cast %706 : vector<1x8x128xf32> to vector<8x128xf32>
    %708 = vector.shape_cast %704 : vector<8x128xf32> to vector<1x8x128xf32>
    tpu.vector_store %arg10[%705, %c0_239, %c0_240], %708 {strides = array<i32>} : memref<5x8x128xf32, #tpu.memory_space<vmem>>, vector<1x8x128xf32>,
    %709 = tpu.iota {dimensions = array<i32: 1>} : vector<8x128xi32>
    %cst_241 = arith.constant dense<0xFF800000> : vector<8xf32>
    %710 = vector.multi_reduction <maximumf>, %704, %cst_241 [1] : vector<8x128xf32> to vector<8xf32>
    %711 = vector.shape_cast %710 : vector<8xf32> to vector<8x1xf32>
    %712 = vector.broadcast %711 : vector<8x1xf32> to vector<8x128xf32>
    %713 = arith.cmpf oeq, %704, %712 : vector<8x128xf32>
    %c128_i32_242 = arith.constant 128 : i32
    %714 = vector.broadcast %c128_i32_242 : i32 to vector<8x128xi32>
    %715 = arith.select %713, %709, %714 : vector<8x128xi1>, vector<8x128xi32>
    %cst_243 = arith.constant dense<2147483647> : vector<8xi32>
    %716 = vector.multi_reduction <minsi>, %715, %cst_243 [1] : vector<8x128xi32> to vector<8xi32>
    %717 = vector.shape_cast %716 : vector<8xi32> to vector<8x1xi32>
    %718 = vector.broadcast %717 : vector<8x1xi32> to vector<8x128xi32>
    %719 = arith.cmpi eq, %709, %718 : vector<8x128xi32>
    %720 = arith.extui %719 : vector<8x128xi1> to vector<8x128xi32>
    %721 = arith.sitofp %720 : vector<8x128xi32> to vector<8x128xf32>
    %c5_i32_244 = arith.constant 5 : i32
    return
  }
  func.func @transform_0(%arg0: i32, %arg1: memref<5xi32, #tpu.memory_space<smem>>) -> (i32, i32, i32) {
    %c0_i32 = arith.constant 0 : i32
    %c0_i32_0 = arith.constant 0 : i32
    %c0_i32_1 = arith.constant 0 : i32
    %c0_i32_2 = arith.constant 0 : i32
    return %c0_i32, %c0_i32_0, %c0_i32_1 : i32, i32, i32
  }
  func.func @transform_1(%arg0: i32, %arg1: memref<5xi32, #tpu.memory_space<smem>>) -> (i32, i32) {
    %c0_i32 = arith.constant 0 : i32
    %c0_i32_0 = arith.constant 0 : i32
    %c0_i32_1 = arith.constant 0 : i32
    return %c0_i32, %c0_i32_0 : i32, i32
  }
  func.func @transform_2(%arg0: i32, %arg1: memref<5xi32, #tpu.memory_space<smem>>) -> (i32, i32, i32) {
    %c0_i32 = arith.constant 0 : i32
    %c0_i32_0 = arith.constant 0 : i32
    %c0_i32_1 = arith.constant 0 : i32
    %c0_i32_2 = arith.constant 0 : i32
    return %c0_i32, %c0_i32_0, %c0_i32_1 : i32, i32, i32
  }
  func.func @transform_3(%arg0: i32, %arg1: memref<5xi32, #tpu.memory_space<smem>>) -> (i32, i32) {
    %c0_i32 = arith.constant 0 : i32
    %c0_i32_0 = arith.constant 0 : i32
    %c0_i32_1 = arith.constant 0 : i32
    return %c0_i32, %c0_i32_0 : i32, i32
  }
  func.func @transform_4(%arg0: i32, %arg1: memref<5xi32, #tpu.memory_space<smem>>) -> (i32, i32) {
    %c0_i32 = arith.constant 0 : i32
    %c0_i32_0 = arith.constant 0 : i32
    %c0_i32_1 = arith.constant 0 : i32
    return %c0_i32, %c0_i32_0 : i32, i32
  }
  func.func @transform_5(%arg0: i32, %arg1: memref<5xi32, #tpu.memory_space<smem>>) -> (i32, i32) {
    %c0_i32 = arith.constant 0 : i32
    %c0_i32_0 = arith.constant 0 : i32
    %c0_i32_1 = arith.constant 0 : i32
    return %c0_i32, %c0_i32_0 : i32, i32
  }
  func.func @transform_6(%arg0: i32, %arg1: memref<5xi32, #tpu.memory_space<smem>>) -> (i32, i32) {
    %c0_i32 = arith.constant 0 : i32
    %c0_i32_0 = arith.constant 0 : i32
    %c0_i32_1 = arith.constant 0 : i32
    return %c0_i32, %c0_i32_0 : i32, i32
  }
  func.func @transform_7(%arg0: i32, %arg1: memref<5xi32, #tpu.memory_space<smem>>) -> (i32, i32) {
    %c0_i32 = arith.constant 0 : i32
    %c0_i32_0 = arith.constant 0 : i32
    %c0_i32_1 = arith.constant 0 : i32
    return %c0_i32, %c0_i32_0 : i32, i32
  }
  func.func @transform_8(%arg0: i32, %arg1: memref<5xi32, #tpu.memory_space<smem>>) -> (i32, i32, i32) {
    %c0_i32 = arith.constant 0 : i32
    %c0_i32_0 = arith.constant 0 : i32
    %c0_i32_1 = arith.constant 0 : i32
    %c0_i32_2 = arith.constant 0 : i32
    return %c0_i32, %c0_i32_0, %c0_i32_1 : i32, i32, i32
  }
}

</mosaic_0001>

<llo_original>
// kernel: _seq2seq_forward.1
$region0: #{_seq2seq_forward.1}
  #allocation0 [shape = 'u32[]', space=smem, size = 0x4, offset = 0x4, fixed_abs, tag = 'smem constant byte address 0x4 - core index']
  #allocation1 [shape = 'u32[72,128]{1,0:T(1,128)}', space=vmem, size = 0x9000, scoped, tag = 'internal scratch']
  #allocation2 [shape = 'f32[8,8,128]{2,1,0:T(8,128)}', space=vmem, size = 0x8000, scoped, tag = 'scratch operand']
  #allocation3 [shape = 's32[1]{0}', space=sflag, size = 0x4, scoped, tag = 'scoped memory for _seq2seq_forward.1']
  #allocation4 [shape = 'u8[512]{0}', space=smem, size = 0x200, scoped, tag = 'prefetched SMEM operand 0']
  %s0 = inlined_call_operand.vmem [shape: s32[5], index: 0, kind: input, shape index: {}]
  %s1 = inlined_call_operand.vmem [shape: f32[8,8,512], index: 1, kind: input, shape index: {}]
  %s2 = inlined_call_operand.vmem [shape: f32[128,512], index: 2, kind: input, shape index: {}]
  %s3 = inlined_call_operand.vmem [shape: f32[5,8,128], index: 3, kind: input, shape index: {}]
  %s4 = inlined_call_operand.vmem [shape: f32[128,128], index: 4, kind: input, shape index: {}]
  %s5 = inlined_call_operand.hbm [shape: f32[256,512], index: 5, kind: input, shape index: {}]
  %s6 = inlined_call_operand.vmem [shape: f32[1,512], index: 6, kind: input, shape index: {}]
  %s7 = inlined_call_operand.vmem [shape: f32[384,128], index: 7, kind: input, shape index: {}]
  %s8 = inlined_call_operand.vmem [shape: f32[1,128], index: 8, kind: input, shape index: {}]
  %s9 = inlined_call_operand.hbm [shape: f32[5,8,128], index: 9, kind: output, shape index: {}]
  %s10 = sld [smem:[#allocation0]]
  $region46: #{_seq2seq_forward.1} parent=0
    _
  %s12 = ssub.s32 1, %s10
  %s13 = scalar_select 0, %s12, %s10
  %s15 = sshll.u32 %s0, 4
  %s16 = int_to_ptr.vmem [resolvable:$true] %s15
  %18 = dma.vmem_to_smem %s16, 16, [#allocation4], [#allocation3]
  %20 = dma.done [#allocation3], 16
  %21 = sfence
  $region1: #{_seq2seq_forward.1} parent=0
    #allocation5 [shape = 'u8[524288]{0}', space=vmem, size = 0x80000, scoped, tag = 'input window, operand 5, single buffered']
    #allocation6 [shape = 's32[1]{0}', space=sflag, size = 0x4, scoped, tag = 'scoped memory for _seq2seq_forward.1']
    #allocation7 [shape = 's32[1]{0}', space=sflag, size = 0x4, scoped, tag = 'scoped memory for _seq2seq_forward.1']
    #allocation8 [shape = 'u8[20480]{0}', space=vmem, size = 0x5000, scoped, tag = 'output window, operand 0, single buffered']
    %22 = vsyncpa [#allocation6], 0
    %23 = vsyncpa [#allocation7], 0
    // Predicated region
    $region2: #{_seq2seq_forward.1} parent=1 // pred_check
      _
    $region3: #{_seq2seq_forward.1} parent=1 // pred_check_branch
      %25 = sbr.rel (0) target = $region5
    $region4: #{_seq2seq_forward.1} parent=1 // pred_region
      _
    $region5: #{_seq2seq_forward.1} parent=1 // pred_fallthru
      _
    // Predicated region
    $region6: #{_seq2seq_forward.1} parent=1 // pred_check
      _
    $region7: #{_seq2seq_forward.1} parent=1 // pred_check_branch
      %27 = sbr.rel (0) target = $region9
    $region8: #{_seq2seq_forward.1} parent=1 // pred_region
      _
    $region9: #{_seq2seq_forward.1} parent=1 // pred_fallthru
      _
    // Predicated region
    $region10: #{_seq2seq_forward.1} parent=1 // pred_check
      _
    $region11: #{_seq2seq_forward.1} parent=1 // pred_check_branch
      %29 = sbr.rel (0) target = $region13
    $region12: #{_seq2seq_forward.1} parent=1 // pred_region
      _
    $region13: #{_seq2seq_forward.1} parent=1 // pred_fallthru
      _
    // Predicated region
    $region14: #{_seq2seq_forward.1} parent=1 // pred_check
      _
    $region15: #{_seq2seq_forward.1} parent=1 // pred_check_branch
      %31 = sbr.rel (0) target = $region17
    $region16: #{_seq2seq_forward.1} parent=1 // pred_region
      _
    $region17: #{_seq2seq_forward.1} parent=1 // pred_fallthru
      _
    // Predicated region
    $region18: #{_seq2seq_forward.1} parent=1 // pred_check
      _
    $region19: #{_seq2seq_forward.1} parent=1 // pred_check_branch
      %33 = sbr.rel (0) target = $region21
    $region20: #{_seq2seq_forward.1} parent=1 // pred_region
      %35 = vsyncadd [#allocation6], 0
      %s36 = sshll.u32 %s5, 4
      %s37 = int_to_ptr.hbm [resolvable:$true] %s36
      %s38 = sshll.u32 [#allocation5], 4
      %s39 = int_to_ptr.vmem [resolvable:$true] %s38
      %44 = dma.hbm_to_vmem [thread:$0]  %s37, 16384, %s39, [#allocation6], 512, 512, 32
    $region21: #{_seq2seq_forward.1} parent=1 // pred_fallthru
      _
    // Predicated region
    $region22: #{_seq2seq_forward.1} parent=1 // pred_check
      _
    $region23: #{_seq2seq_forward.1} parent=1 // pred_check_branch
      %46 = sbr.rel (0) target = $region25
    $region24: #{_seq2seq_forward.1} parent=1 // pred_region
      _
    $region25: #{_seq2seq_forward.1} parent=1 // pred_fallthru
      _
    // Predicated region
    $region26: #{_seq2seq_forward.1} parent=1 // pred_check
      _
    $region27: #{_seq2seq_forward.1} parent=1 // pred_check_branch
      %48 = sbr.rel (0) target = $region29
    $region28: #{_seq2seq_forward.1} parent=1 // pred_region
      _
    $region29: #{_seq2seq_forward.1} parent=1 // pred_fallthru
      _
    // Predicated region
    $region30: #{_seq2seq_forward.1} parent=1 // pred_check
      _
    $region31: #{_seq2seq_forward.1} parent=1 // pred_check_branch
      %50 = sbr.rel (0) target = $region33
    $region32: #{_seq2seq_forward.1} parent=1 // pred_region
      _
    $region33: #{_seq2seq_forward.1} parent=1 // pred_fallthru
      _
    // Predicated region
    $region34: #{_seq2seq_forward.1} parent=1 // pred_check
      _
    $region35: #{_seq2seq_forward.1} parent=1 // pred_check_branch
      %52 = sbr.rel (0) target = $region37
    $region36: #{_seq2seq_forward.1} parent=1 // pred_region
      %54 = dma.done [#allocation6], 16384
    $region37: #{_seq2seq_forward.1} parent=1 // pred_fallthru
      _
    %v55 = vld [vmem:[%s1] sm:$0xff]
    %v56 = vld [vmem:[%s1 + $0x8] sm:$0xff]
    %v57 = vld [vmem:[%s1 + $0x10] sm:$0xff]
    %v58 = vld [vmem:[%s1 + $0x18] sm:$0xff]
    %v59 = vld [vmem:[%s2] sm:$0xff]
    %v60 = vld [vmem:[%s2 + $0x8] sm:$0xff]
    %v61 = vld [vmem:[%s2 + $0x10] sm:$0xff]
    %v62 = vld [vmem:[%s2 + $0x18] sm:$0xff]
    %v63 = vld [vmem:[%s2 + $0x20] sm:$0xff]
    %v64 = vld [vmem:[%s2 + $0x28] sm:$0xff]
    %v65 = vld [vmem:[%s2 + $0x30] sm:$0xff]
    %v66 = vld [vmem:[%s2 + $0x38] sm:$0xff]
    %v67 = vld [vmem:[%s2 + $0x40] sm:$0xff]
    %v68 = vld [vmem:[%s2 + $0x48] sm:$0xff]
    %v69 = vld [vmem:[%s2 + $0x50] sm:$0xff]
    %v70 = vld [vmem:[%s2 + $0x58] sm:$0xff]
    %v71 = vld [vmem:[%s2 + $0x60] sm:$0xff]
    %v72 = vld [vmem:[%s2 + $0x68] sm:$0xff]
    %v73 = vld [vmem:[%s2 + $0x70] sm:$0xff]
    %v74 = vld [vmem:[%s2 + $0x78] sm:$0xff]
    %v75 = vld [vmem:[%s2 + $0x80] sm:$0xff]
    %v76 = vld [vmem:[%s2 + $0x88] sm:$0xff]
    %v77 = vld [vmem:[%s2 + $0x90] sm:$0xff]
    %v78 = vld [vmem:[%s2 + $0x98] sm:$0xff]
    %v79 = vld [vmem:[%s2 + $0xa0] sm:$0xff]
    %v80 = vld [vmem:[%s2 + $0xa8] sm:$0xff]
    %v81 = vld [vmem:[%s2 + $0xb0] sm:$0xff]
    %v82 = vld [vmem:[%s2 + $0xb8] sm:$0xff]
    %v83 = vld [vmem:[%s2 + $0xc0] sm:$0xff]
    %v84 = vld [vmem:[%s2 + $0xc8] sm:$0xff]
    %v85 = vld [vmem:[%s2 + $0xd0] sm:$0xff]
    %v86 = vld [vmem:[%s2 + $0xd8] sm:$0xff]
    %v87 = vld [vmem:[%s2 + $0xe0] sm:$0xff]
    %v88 = vld [vmem:[%s2 + $0xe8] sm:$0xff]
    %v89 = vld [vmem:[%s2 + $0xf0] sm:$0xff]
    %v90 = vld [vmem:[%s2 + $0xf8] sm:$0xff]
    %v91 = vld [vmem:[%s2 + $0x100] sm:$0xff]
    %v92 = vld [vmem:[%s2 + $0x108] sm:$0xff]
    %v93 = vld [vmem:[%s2 + $0x110] sm:$0xff]
    %v94 = vld [vmem:[%s2 + $0x118] sm:$0xff]
    %v95 = vld [vmem:[%s2 + $0x120] sm:$0xff]
    %v96 = vld [vmem:[%s2 + $0x128] sm:$0xff]
    %v97 = vld [vmem:[%s2 + $0x130] sm:$0xff]
    %v98 = vld [vmem:[%s2 + $0x138] sm:$0xff]
    %v99 = vld [vmem:[%s2 + $0x140] sm:$0xff]
    %v100 = vld [vmem:[%s2 + $0x148] sm:$0xff]
    %v101 = vld [vmem:[%s2 + $0x150] sm:$0xff]
    %v102 = vld [vmem:[%s2 + $0x158] sm:$0xff]
    %v103 = vld [vmem:[%s2 + $0x160] sm:$0xff]
    %v104 = vld [vmem:[%s2 + $0x168] sm:$0xff]
    %v105 = vld [vmem:[%s2 + $0x170] sm:$0xff]
    %v106 = vld [vmem:[%s2 + $0x178] sm:$0xff]
    %v107 = vld [vmem:[%s2 + $0x180] sm:$0xff]
    %v108 = vld [vmem:[%s2 + $0x188] sm:$0xff]
    %v109 = vld [vmem:[%s2 + $0x190] sm:$0xff]
    %v110 = vld [vmem:[%s2 + $0x198] sm:$0xff]
    %v111 = vld [vmem:[%s2 + $0x1a0] sm:$0xff]
    %v112 = vld [vmem:[%s2 + $0x1a8] sm:$0xff]
    %v113 = vld [vmem:[%s2 + $0x1b0] sm:$0xff]
    %v114 = vld [vmem:[%s2 + $0x1b8] sm:$0xff]
    %v115 = vld [vmem:[%s2 + $0x1c0] sm:$0xff]
    %v116 = vld [vmem:[%s2 + $0x1c8] sm:$0xff]
    %v117 = vld [vmem:[%s2 + $0x1d0] sm:$0xff]
    %v118 = vld [vmem:[%s2 + $0x1d8] sm:$0xff]
    %v119 = vld [vmem:[%s2 + $0x1e0] sm:$0xff]
    %v120 = vld [vmem:[%s2 + $0x1e8] sm:$0xff]
    %v121 = vld [vmem:[%s2 + $0x1f0] sm:$0xff]
    %v122 = vld [vmem:[%s2 + $0x1f8] sm:$0xff]
    %123 = vmatpush.msra.mxu0 %v119
    %124 = vmatpush.msra.mxu0 %v115
    %125 = vmatpush.msra.mxu0 %v111
    %126 = vmatpush.msra.mxu0 %v107
    %127 = vmatpush.msra.mxu0 %v103
    %128 = vmatpush.msra.mxu0 %v99
    %129 = vmatpush.msra.mxu0 %v95
    %130 = vmatpush.msra.mxu0 %v91
    %131 = vmatpush.msra.mxu0 %v87
    %132 = vmatpush.msra.mxu0 %v83
    %133 = vmatpush.msra.mxu0 %v79
    %134 = vmatpush.msra.mxu0 %v75
    %135 = vmatpush.msra.mxu0 %v71
    %136 = vmatpush.msra.mxu0 %v67
    %137 = vmatpush.msra.mxu0 %v63
    %138 = vmatpush.msra.mxu0 %v59
    %139 = vmatmul.f32.gmra.mxu0 0.0
    %v140 = vpop.f32.mrf.mxu0
    %v141 = vadd.f32 0.0, %v140
    %142 = vdwg.mxu0
    %143 = vmatpush.msra.mxu0 %v120
    %144 = vmatpush.msra.mxu0 %v116
    %145 = vmatpush.msra.mxu0 %v112
    %146 = vmatpush.msra.mxu0 %v108
    %147 = vmatpush.msra.mxu0 %v104
    %148 = vmatpush.msra.mxu0 %v100
    %149 = vmatpush.msra.mxu0 %v96
    %150 = vmatpush.msra.mxu0 %v92
    %151 = vmatpush.msra.mxu0 %v88
    %152 = vmatpush.msra.mxu0 %v84
    %153 = vmatpush.msra.mxu0 %v80
    %154 = vmatpush.msra.mxu0 %v76
    %155 = vmatpush.msra.mxu0 %v72
    %156 = vmatpush.msra.mxu0 %v68
    %157 = vmatpush.msra.mxu0 %v64
    %158 = vmatpush.msra.mxu0 %v60
    %159 = vmatmul.f32.gmra.mxu0 0.0
    %v160 = vpop.f32.mrf.mxu0
    %v161 = vadd.f32 0.0, %v160
    %162 = vdwg.mxu0
    %163 = vmatpush.msra.mxu0 %v121
    %164 = vmatpush.msra.mxu0 %v117
    %165 = vmatpush.msra.mxu0 %v113
    %166 = vmatpush.msra.mxu0 %v109
    %167 = vmatpush.msra.mxu0 %v105
    %168 = vmatpush.msra.mxu0 %v101
    %169 = vmatpush.msra.mxu0 %v97
    %170 = vmatpush.msra.mxu0 %v93
    %171 = vmatpush.msra.mxu0 %v89
    %172 = vmatpush.msra.mxu0 %v85
    %173 = vmatpush.msra.mxu0 %v81
    %174 = vmatpush.msra.mxu0 %v77
    %175 = vmatpush.msra.mxu0 %v73
    %176 = vmatpush.msra.mxu0 %v69
    %177 = vmatpush.msra.mxu0 %v65
    %178 = vmatpush.msra.mxu0 %v61
    %179 = vmatmul.f32.gmra.mxu0 0.0
    %v180 = vpop.f32.mrf.mxu0
    %v181 = vadd.f32 0.0, %v180
    %182 = vdwg.mxu0
    %183 = vmatpush.msra.mxu0 %v122
    %184 = vmatpush.msra.mxu0 %v118
    %185 = vmatpush.msra.mxu0 %v114
    %186 = vmatpush.msra.mxu0 %v110
    %187 = vmatpush.msra.mxu0 %v106
    %188 = vmatpush.msra.mxu0 %v102
    %189 = vmatpush.msra.mxu0 %v98
    %190 = vmatpush.msra.mxu0 %v94
    %191 = vmatpush.msra.mxu0 %v90
    %192 = vmatpush.msra.mxu0 %v86
    %193 = vmatpush.msra.mxu0 %v82
    %194 = vmatpush.msra.mxu0 %v78
    %195 = vmatpush.msra.mxu0 %v74
    %196 = vmatpush.msra.mxu0 %v70
    %197 = vmatpush.msra.mxu0 %v66
    %198 = vmatpush.msra.mxu0 %v62
    %199 = vmatmul.f32.gmra.mxu0 0.0
    %v200 = vpop.f32.mrf.mxu0
    %v201 = vadd.f32 0.0, %v200
    %202 = vdwg.mxu0
    %v203 = vadd.f32 %v55, %v141
    %v204 = vadd.f32 %v56, %v161
    %v205 = vadd.f32 %v57, %v181
    %v206 = vadd.f32 %v58, %v201
    %v207 = vxor.u32 %v203, 2147483648
    %v208 = vmul.f32 %v207, 1.442695
    %v209 = vpow.pop %v208
    %v210 = vadd.f32 %v209, 1.0
    %v211 = vrcp.pop %v210
    %v212 = vmul.f32 %v210, %v211
    %v213 = vsub.f32 1.0, %v212
    %v214 = vmul.f32 %v211, %v213
    %v215 = vadd.f32 %v211, %v214
    %vm216 = vweird.f32 %v210
    %vm217 = vweird.f32 %v211
    %vm218 = vmor %vm216, %vm217
    %v219 = vsel %vm218, %v211, %v215
    %v220 = vand.u32 2147483647, %v210
    %vm221 = vcmp.eq.f32.partialorder %v220, 8.507059e+37
    %v222 = vand.u32 %v210, 2147483648
    %v223 = vor.u32 1.1754944e-38, %v222
    %v224 = vsel %vm221, %v223, %v219
    %v225 = vmul.f32 1.0, %v224
    %v226 = vxor.u32 %v204, 2147483648
    %v227 = vmul.f32 %v226, 1.442695
    %v228 = vpow.pop %v227
    %v229 = vadd.f32 %v228, 1.0
    %v230 = vrcp.pop %v229
    %v231 = vmul.f32 %v229, %v230
    %v232 = vsub.f32 1.0, %v231
    %v233 = vmul.f32 %v230, %v232
    %v234 = vadd.f32 %v230, %v233
    %vm235 = vweird.f32 %v229
    %vm236 = vweird.f32 %v230
    %vm237 = vmor %vm235, %vm236
    %v238 = vsel %vm237, %v230, %v234
    %v239 = vand.u32 2147483647, %v229
    %vm240 = vcmp.eq.f32.partialorder %v239, 8.507059e+37
    %v241 = vand.u32 %v229, 2147483648
    %v242 = vor.u32 1.1754944e-38, %v241
    %v243 = vsel %vm240, %v242, %v238
    %v244 = vmul.f32 1.0, %v243
    %v245 = vtanh.pop %v205
    %v246 = vxor.u32 %v206, 2147483648
    %v247 = vmul.f32 %v246, 1.442695
    %v248 = vpow.pop %v247
    %v249 = vadd.f32 %v248, 1.0
    %v250 = vrcp.pop %v249
    %v251 = vmul.f32 %v249, %v250
    %v252 = vsub.f32 1.0, %v251
    %v253 = vmul.f32 %v250, %v252
    %v254 = vadd.f32 %v250, %v253
    %vm255 = vweird.f32 %v249
    %vm256 = vweird.f32 %v250
    %vm257 = vmor %vm255, %vm256
    %v258 = vsel %vm257, %v250, %v254
    %v259 = vand.u32 2147483647, %v249
    %vm260 = vcmp.eq.f32.partialorder %v259, 8.507059e+37
    %v261 = vand.u32 %v249, 2147483648
    %v262 = vor.u32 1.1754944e-38, %v261
    %v263 = vsel %vm260, %v262, %v258
    %v264 = vmul.f32 1.0, %v263
    %v265 = vmul.f32 %v244, 0.0
    %v266 = vmul.f32 %v225, %v245
    %v267 = vadd.f32 %v265, %v266
    %v268 = vtanh.pop %v267
    %v269 = vmul.f32 %v264, %v268
    %270 = vst [vmem:[#allocation2] sm:$0xff] %v269
    %s271 = scalar_lea.vmem %s1, 32
    %v272 = vld [vmem:[%s271] sm:$0xff]
    %v273 = vld [vmem:[%s271 + $0x8] sm:$0xff]
    %v274 = vld [vmem:[%s271 + $0x10] sm:$0xff]
    %v275 = vld [vmem:[%s271 + $0x18] sm:$0xff]
    %v276 = vld [vmem:[%s2] sm:$0xff]
    %v277 = vld [vmem:[%s2 + $0x8] sm:$0xff]
    %v278 = vld [vmem:[%s2 + $0x10] sm:$0xff]
    %v279 = vld [vmem:[%s2 + $0x18] sm:$0xff]
    %v280 = vld [vmem:[%s2 + $0x20] sm:$0xff]
    %v281 = vld [vmem:[%s2 + $0x28] sm:$0xff]
    %v282 = vld [vmem:[%s2 + $0x30] sm:$0xff]
    %v283 = vld [vmem:[%s2 + $0x38] sm:$0xff]
    %v284 = vld [vmem:[%s2 + $0x40] sm:$0xff]
    %v285 = vld [vmem:[%s2 + $0x48] sm:$0xff]
    %v286 = vld [vmem:[%s2 + $0x50] sm:$0xff]
    %v287 = vld [vmem:[%s2 + $0x58] sm:$0xff]
    %v288 = vld [vmem:[%s2 + $0x60] sm:$0xff]
    %v289 = vld [vmem:[%s2 + $0x68] sm:$0xff]
    %v290 = vld [vmem:[%s2 + $0x70] sm:$0xff]
    %v291 = vld [vmem:[%s2 + $0x78] sm:$0xff]
    %v292 = vld [vmem:[%s2 + $0x80] sm:$0xff]
    %v293 = vld [vmem:[%s2 + $0x88] sm:$0xff]
    %v294 = vld [vmem:[%s2 + $0x90] sm:$0xff]
    %v295 = vld [vmem:[%s2 + $0x98] sm:$0xff]
    %v296 = vld [vmem:[%s2 + $0xa0] sm:$0xff]
    %v297 = vld [vmem:[%s2 + $0xa8] sm:$0xff]
    %v298 = vld [vmem:[%s2 + $0xb0] sm:$0xff]
    %v299 = vld [vmem:[%s2 + $0xb8] sm:$0xff]
    %v300 = vld [vmem:[%s2 + $0xc0] sm:$0xff]
    %v301 = vld [vmem:[%s2 + $0xc8] sm:$0xff]
    %v302 = vld [vmem:[%s2 + $0xd0] sm:$0xff]
    %v303 = vld [vmem:[%s2 + $0xd8] sm:$0xff]
    %v304 = vld [vmem:[%s2 + $0xe0] sm:$0xff]
    %v305 = vld [vmem:[%s2 + $0xe8] sm:$0xff]
    %v306 = vld [vmem:[%s2 + $0xf0] sm:$0xff]
    %v307 = vld [vmem:[%s2 + $0xf8] sm:$0xff]
    %v308 = vld [vmem:[%s2 + $0x100] sm:$0xff]
    %v309 = vld [vmem:[%s2 + $0x108] sm:$0xff]
    %v310 = vld [vmem:[%s2 + $0x110] sm:$0xff]
    %v311 = vld [vmem:[%s2 + $0x118] sm:$0xff]
    %v312 = vld [vmem:[%s2 + $0x120] sm:$0xff]
    %v313 = vld [vmem:[%s2 + $0x128] sm:$0xff]
    %v314 = vld [vmem:[%s2 + $0x130] sm:$0xff]
    %v315 = vld [vmem:[%s2 + $0x138] sm:$0xff]
    %v316 = vld [vmem:[%s2 + $0x140] sm:$0xff]
    %v317 = vld [vmem:[%s2 + $0x148] sm:$0xff]
    %v318 = vld [vmem:[%s2 + $0x150] sm:$0xff]
    %v319 = vld [vmem:[%s2 + $0x158] sm:$0xff]
    %v320 = vld [vmem:[%s2 + $0x160] sm:$0xff]
    %v321 = vld [vmem:[%s2 + $0x168] sm:$0xff]
    %v322 = vld [vmem:[%s2 + $0x170] sm:$0xff]
    %v323 = vld [vmem:[%s2 + $0x178] sm:$0xff]
    %v324 = vld [vmem:[%s2 + $0x180] sm:$0xff]
    %v325 = vld [vmem:[%s2 + $0x188] sm:$0xff]
    %v326 = vld [vmem:[%s2 + $0x190] sm:$0xff]
    %v327 = vld [vmem:[%s2 + $0x198] sm:$0xff]
    %v328 = vld [vmem:[%s2 + $0x1a0] sm:$0xff]
    %v329 = vld [vmem:[%s2 + $0x1a8] sm:$0xff]
    %v330 = vld [vmem:[%s2 + $0x1b0] sm:$0xff]
    %v331 = vld [vmem:[%s2 + $0x1b8] sm:$0xff]
    %v332 = vld [vmem:[%s2 + $0x1c0] sm:$0xff]
    %v333 = vld [vmem:[%s2 + $0x1c8] sm:$0xff]
    %v334 = vld [vmem:[%s2 + $0x1d0] sm:$0xff]
    %v335 = vld [vmem:[%s2 + $0x1d8] sm:$0xff]
    %v336 = vld [vmem:[%s2 + $0x1e0] sm:$0xff]
    %v337 = vld [vmem:[%s2 + $0x1e8] sm:$0xff]
    %v338 = vld [vmem:[%s2 + $0x1f0] sm:$0xff]
    %v339 = vld [vmem:[%s2 + $0x1f8] sm:$0xff]
    %340 = vmatpush.msra.mxu0 %v336
    %341 = vmatpush.msra.mxu0 %v332
    %342 = vmatpush.msra.mxu0 %v328
    %343 = vmatpush.msra.mxu0 %v324
    %344 = vmatpush.msra.mxu0 %v320
    %345 = vmatpush.msra.mxu0 %v316
    %346 = vmatpush.msra.mxu0 %v312
    %347 = vmatpush.msra.mxu0 %v308
    %348 = vmatpush.msra.mxu0 %v304
    %349 = vmatpush.msra.mxu0 %v300
    %350 = vmatpush.msra.mxu0 %v296
    %351 = vmatpush.msra.mxu0 %v292
    %352 = vmatpush.msra.mxu0 %v288
    %353 = vmatpush.msra.mxu0 %v284
    %354 = vmatpush.msra.mxu0 %v280
    %355 = vmatpush.msra.mxu0 %v276
    %356 = vmatmul.f32.gmra.mxu0 %v269
    %v357 = vpop.f32.mrf.mxu0
    %v358 = vadd.f32 0.0, %v357
    %359 = vdwg.mxu0
    %360 = vmatpush.msra.mxu0 %v337
    %361 = vmatpush.msra.mxu0 %v333
    %362 = vmatpush.msra.mxu0 %v329
    %363 = vmatpush.msra.mxu0 %v325
    %364 = vmatpush.msra.mxu0 %v321
    %365 = vmatpush.msra.mxu0 %v317
    %366 = vmatpush.msra.mxu0 %v313
    %367 = vmatpush.msra.mxu0 %v309
    %368 = vmatpush.msra.mxu0 %v305
    %369 = vmatpush.msra.mxu0 %v301
    %370 = vmatpush.msra.mxu0 %v297
    %371 = vmatpush.msra.mxu0 %v293
    %372 = vmatpush.msra.mxu0 %v289
    %373 = vmatpush.msra.mxu0 %v285
    %374 = vmatpush.msra.mxu0 %v281
    %375 = vmatpush.msra.mxu0 %v277
    %376 = vmatmul.f32.gmra.mxu0 %v269
    %v377 = vpop.f32.mrf.mxu0
    %v378 = vadd.f32 0.0, %v377
    %379 = vdwg.mxu0
    %380 = vmatpush.msra.mxu0 %v338
    %381 = vmatpush.msra.mxu0 %v334
    %382 = vmatpush.msra.mxu0 %v330
    %383 = vmatpush.msra.mxu0 %v326
    %384 = vmatpush.msra.mxu0 %v322
    %385 = vmatpush.msra.mxu0 %v318
    %386 = vmatpush.msra.mxu0 %v314
    %387 = vmatpush.msra.mxu0 %v310
    %388 = vmatpush.msra.mxu0 %v306
    %389 = vmatpush.msra.mxu0 %v302
    %390 = vmatpush.msra.mxu0 %v298
    %391 = vmatpush.msra.mxu0 %v294
    %392 = vmatpush.msra.mxu0 %v290
    %393 = vmatpush.msra.mxu0 %v286
    %394 = vmatpush.msra.mxu0 %v282
    %395 = vmatpush.msra.mxu0 %v278
    %396 = vmatmul.f32.gmra.mxu0 %v269
    %v397 = vpop.f32.mrf.mxu0
    %v398 = vadd.f32 0.0, %v397
    %399 = vdwg.mxu0
    %400 = vmatpush.msra.mxu0 %v339
    %401 = vmatpush.msra.mxu0 %v335
    %402 = vmatpush.msra.mxu0 %v331
    %403 = vmatpush.msra.mxu0 %v327
    %404 = vmatpush.msra.mxu0 %v323
    %405 = vmatpush.msra.mxu0 %v319
    %406 = vmatpush.msra.mxu0 %v315
    %407 = vmatpush.msra.mxu0 %v311
    %408 = vmatpush.msra.mxu0 %v307
    %409 = vmatpush.msra.mxu0 %v303
    %410 = vmatpush.msra.mxu0 %v299
    %411 = vmatpush.msra.mxu0 %v295
    %412 = vmatpush.msra.mxu0 %v291
    %413 = vmatpush.msra.mxu0 %v287
    %414 = vmatpush.msra.mxu0 %v283
    %415 = vmatpush.msra.mxu0 %v279
    %416 = vmatmul.f32.gmra.mxu0 %v269
    %v417 = vpop.f32.mrf.mxu0
    %v418 = vadd.f32 0.0, %v417
    %419 = vdwg.mxu0
    %v420 = vadd.f32 %v272, %v358
    %v421 = vadd.f32 %v273, %v378
    %v422 = vadd.f32 %v274, %v398
    %v423 = vadd.f32 %v275, %v418
    %v424 = vxor.u32 %v420, 2147483648
    %v425 = vmul.f32 %v424, 1.442695
    %v426 = vpow.pop %v425
    %v427 = vadd.f32 %v426, 1.0
    %v428 = vrcp.pop %v427
    %v429 = vmul.f32 %v427, %v428
    %v430 = vsub.f32 1.0, %v429
    %v431 = vmul.f32 %v428, %v430
    %v432 = vadd.f32 %v428, %v431
    %vm433 = vweird.f32 %v427
    %vm434 = vweird.f32 %v428
    %vm435 = vmor %vm433, %vm434
    %v436 = vsel %vm435, %v428, %v432
    %v437 = vand.u32 2147483647, %v427
    %vm438 = vcmp.eq.f32.partialorder %v437, 8.507059e+37
    %v439 = vand.u32 %v427, 2147483648
    %v440 = vor.u32 1.1754944e-38, %v439
    %v441 = vsel %vm438, %v440, %v436
    %v442 = vmul.f32 1.0, %v441
    %v443 = vxor.u32 %v421, 2147483648
    %v444 = vmul.f32 %v443, 1.442695
    %v445 = vpow.pop %v444
    %v446 = vadd.f32 %v445, 1.0
    %v447 = vrcp.pop %v446
    %v448 = vmul.f32 %v446, %v447
    %v449 = vsub.f32 1.0, %v448
    %v450 = vmul.f32 %v447, %v449
    %v451 = vadd.f32 %v447, %v450
    %vm452 = vweird.f32 %v446
    %vm453 = vweird.f32 %v447
    %vm454 = vmor %vm452, %vm453
    %v455 = vsel %vm454, %v447, %v451
    %v456 = vand.u32 2147483647, %v446
    %vm457 = vcmp.eq.f32.partialorder %v456, 8.507059e+37
    %v458 = vand.u32 %v446, 2147483648
    %v459 = vor.u32 1.1754944e-38, %v458
    %v460 = vsel %vm457, %v459, %v455
    %v461 = vmul.f32 1.0, %v460
    %v462 = vtanh.pop %v422
    %v463 = vxor.u32 %v423, 2147483648
    %v464 = vmul.f32 %v463, 1.442695
    %v465 = vpow.pop %v464
    %v466 = vadd.f32 %v465, 1.0
    %v467 = vrcp.pop %v466
    %v468 = vmul.f32 %v466, %v467
    %v469 = vsub.f32 1.0, %v468
    %v470 = vmul.f32 %v467, %v469
    %v471 = vadd.f32 %v467, %v470
    %vm472 = vweird.f32 %v466
    %vm473 = vweird.f32 %v467
    %vm474 = vmor %vm472, %vm473
    %v475 = vsel %vm474, %v467, %v471
    %v476 = vand.u32 2147483647, %v466
    %vm477 = vcmp.eq.f32.partialorder %v476, 8.507059e+37
    %v478 = vand.u32 %v466, 2147483648
    %v479 = vor.u32 1.1754944e-38, %v478
    %v480 = vsel %vm477, %v479, %v475
    %v481 = vmul.f32 1.0, %v480
    %v482 = vmul.f32 %v461, %v267
    %v483 = vmul.f32 %v442, %v462
    %v484 = vadd.f32 %v482, %v483
    %v485 = vtanh.pop %v484
    %v486 = vmul.f32 %v481, %v485
    %s487 = scalar_lea.vmem [#allocation2], 8
    %488 = vst [vmem:[%s487] sm:$0xff] %v486
    %s489 = scalar_lea.vmem %s1, 64
    %v490 = vld [vmem:[%s489] sm:$0xff]
    %v491 = vld [vmem:[%s489 + $0x8] sm:$0xff]
    %v492 = vld [vmem:[%s489 + $0x10] sm:$0xff]
    %v493 = vld [vmem:[%s489 + $0x18] sm:$0xff]
    %v494 = vld [vmem:[%s2] sm:$0xff]
    %v495 = vld [vmem:[%s2 + $0x8] sm:$0xff]
    %v496 = vld [vmem:[%s2 + $0x10] sm:$0xff]
    %v497 = vld [vmem:[%s2 + $0x18] sm:$0xff]
    %v498 = vld [vmem:[%s2 + $0x20] sm:$0xff]
    %v499 = vld [vmem:[%s2 + $0x28] sm:$0xff]
    %v500 = vld [vmem:[%s2 + $0x30] sm:$0xff]
    %v501 = vld [vmem:[%s2 + $0x38] sm:$0xff]
    %v502 = vld [vmem:[%s2 + $0x40] sm:$0xff]
    %v503 = vld [vmem:[%s2 + $0x48] sm:$0xff]
    %v504 = vld [vmem:[%s2 + $0x50] sm:$0xff]
    %v505 = vld [vmem:[%s2 + $0x58] sm:$0xff]
    %v506 = vld [vmem:[%s2 + $0x60] sm:$0xff]
    %v507 = vld [vmem:[%s2 + $0x68] sm:$0xff]
    %v508 = vld [vmem:[%s2 + $0x70] sm:$0xff]
    %v509 = vld [vmem:[%s2 + $0x78] sm:$0xff]
    %v510 = vld [vmem:[%s2 + $0x80] sm:$0xff]
    %v511 = vld [vmem:[%s2 + $0x88] sm:$0xff]
    %v512 = vld [vmem:[%s2 + $0x90] sm:$0xff]
    %v513 = vld [vmem:[%s2 + $0x98] sm:$0xff]
    %v514 = vld [vmem:[%s2 + $0xa0] sm:$0xff]
    %v515 = vld [vmem:[%s2 + $0xa8] sm:$0xff]
    %v516 = vld [vmem:[%s2 + $0xb0] sm:$0xff]
    %v517 = vld [vmem:[%s2 + $0xb8] sm:$0xff]
    %v518 = vld [vmem:[%s2 + $0xc0] sm:$0xff]
    %v519 = vld [vmem:[%s2 + $0xc8] sm:$0xff]
    %v520 = vld [vmem:[%s2 + $0xd0] sm:$0xff]
    %v521 = vld [vmem:[%s2 + $0xd8] sm:$0xff]
    %v522 = vld [vmem:[%s2 + $0xe0] sm:$0xff]
    %v523 = vld [vmem:[%s2 + $0xe8] sm:$0xff]
    %v524 = vld [vmem:[%s2 + $0xf0] sm:$0xff]
    %v525 = vld [vmem:[%s2 + $0xf8] sm:$0xff]
    %v526 = vld [vmem:[%s2 + $0x100] sm:$0xff]
    %v527 = vld [vmem:[%s2 + $0x108] sm:$0xff]
    %v528 = vld [vmem:[%s2 + $0x110] sm:$0xff]
    %v529 = vld [vmem:[%s2 + $0x118] sm:$0xff]
    %v530 = vld [vmem:[%s2 + $0x120] sm:$0xff]
    %v531 = vld [vmem:[%s2 + $0x128] sm:$0xff]
    %v532 = vld [vmem:[%s2 + $0x130] sm:$0xff]
    %v533 = vld [vmem:[%s2 + $0x138] sm:$0xff]
    %v534 = vld [vmem:[%s2 + $0x140] sm:$0xff]
    %v535 = vld [vmem:[%s2 + $0x148] sm:$0xff]
    %v536 = vld [vmem:[%s2 + $0x150] sm:$0xff]
    %v537 = vld [vmem:[%s2 + $0x158] sm:$0xff]
    %v538 = vld [vmem:[%s2 + $0x160] sm:$0xff]
    %v539 = vld [vmem:[%s2 + $0x168] sm:$0xff]
    %v540 = vld [vmem:[%s2 + $0x170] sm:$0xff]
    %v541 = vld [vmem:[%s2 + $0x178] sm:$0xff]
    %v542 = vld [vmem:[%s2 + $0x180] sm:$0xff]
    %v543 = vld [vmem:[%s2 + $0x188] sm:$0xff]
    %v544 = vld [vmem:[%s2 + $0x190] sm:$0xff]
    %v545 = vld [vmem:[%s2 + $0x198] sm:$0xff]
    %v546 = vld [vmem:[%s2 + $0x1a0] sm:$0xff]
    %v547 = vld [vmem:[%s2 + $0x1a8] sm:$0xff]
    %v548 = vld [vmem:[%s2 + $0x1b0] sm:$0xff]
    %v549 = vld [vmem:[%s2 + $0x1b8] sm:$0xff]
    %v550 = vld [vmem:[%s2 + $0x1c0] sm:$0xff]
    %v551 = vld [vmem:[%s2 + $0x1c8] sm:$0xff]
    %v552 = vld [vmem:[%s2 + $0x1d0] sm:$0xff]
    %v553 = vld [vmem:[%s2 + $0x1d8] sm:$0xff]
    %v554 = vld [vmem:[%s2 + $0x1e0] sm:$0xff]
    %v555 = vld [vmem:[%s2 + $0x1e8] sm:$0xff]
    %v556 = vld [vmem:[%s2 + $0x1f0] sm:$0xff]
    %v557 = vld [vmem:[%s2 + $0x1f8] sm:$0xff]
    %558 = vmatpush.msra.mxu0 %v554
    %559 = vmatpush.msra.mxu0 %v550
    %560 = vmatpush.msra.mxu0 %v546
    %561 = vmatpush.msra.mxu0 %v542
    %562 = vmatpush.msra.mxu0 %v538
    %563 = vmatpush.msra.mxu0 %v534
    %564 = vmatpush.msra.mxu0 %v530
    %565 = vmatpush.msra.mxu0 %v526
    %566 = vmatpush.msra.mxu0 %v522
    %567 = vmatpush.msra.mxu0 %v518
    %568 = vmatpush.msra.mxu0 %v514
    %569 = vmatpush.msra.mxu0 %v510
    %570 = vmatpush.msra.mxu0 %v506
    %571 = vmatpush.msra.mxu0 %v502
    %572 = vmatpush.msra.mxu0 %v498
    %573 = vmatpush.msra.mxu0 %v494
    %574 = vmatmul.f32.gmra.mxu0 %v486
    %v575 = vpop.f32.mrf.mxu0
    %v576 = vadd.f32 0.0, %v575
    %577 = vdwg.mxu0
    %578 = vmatpush.msra.mxu0 %v555
    %579 = vmatpush.msra.mxu0 %v551
    %580 = vmatpush.msra.mxu0 %v547
    %581 = vmatpush.msra.mxu0 %v543
    %582 = vmatpush.msra.mxu0 %v539
    %583 = vmatpush.msra.mxu0 %v535
    %584 = vmatpush.msra.mxu0 %v531
    %585 = vmatpush.msra.mxu0 %v527
    %586 = vmatpush.msra.mxu0 %v523
    %587 = vmatpush.msra.mxu0 %v519
    %588 = vmatpush.msra.mxu0 %v515
    %589 = vmatpush.msra.mxu0 %v511
    %590 = vmatpush.msra.mxu0 %v507
    %591 = vmatpush.msra.mxu0 %v503
    %592 = vmatpush.msra.mxu0 %v499
    %593 = vmatpush.msra.mxu0 %v495
    %594 = vmatmul.f32.gmra.mxu0 %v486
    %v595 = vpop.f32.mrf.mxu0
    %v596 = vadd.f32 0.0, %v595
    %597 = vdwg.mxu0
    %598 = vmatpush.msra.mxu0 %v556
    %599 = vmatpush.msra.mxu0 %v552
    %600 = vmatpush.msra.mxu0 %v548
    %601 = vmatpush.msra.mxu0 %v544
    %602 = vmatpush.msra.mxu0 %v540
    %603 = vmatpush.msra.mxu0 %v536
    %604 = vmatpush.msra.mxu0 %v532
    %605 = vmatpush.msra.mxu0 %v528
    %606 = vmatpush.msra.mxu0 %v524
    %607 = vmatpush.msra.mxu0 %v520
    %608 = vmatpush.msra.mxu0 %v516
    %609 = vmatpush.msra.mxu0 %v512
    %610 = vmatpush.msra.mxu0 %v508
    %611 = vmatpush.msra.mxu0 %v504
    %612 = vmatpush.msra.mxu0 %v500
    %613 = vmatpush.msra.mxu0 %v496
    %614 = vmatmul.f32.gmra.mxu0 %v486
    %v615 = vpop.f32.mrf.mxu0
    %v616 = vadd.f32 0.0, %v615
    %617 = vdwg.mxu0
    %618 = vmatpush.msra.mxu0 %v557
    %619 = vmatpush.msra.mxu0 %v553
    %620 = vmatpush.msra.mxu0 %v549
    %621 = vmatpush.msra.mxu0 %v545
    %622 = vmatpush.msra.mxu0 %v541
    %623 = vmatpush.msra.mxu0 %v537
    %624 = vmatpush.msra.mxu0 %v533
    %625 = vmatpush.msra.mxu0 %v529
    %626 = vmatpush.msra.mxu0 %v525
    %627 = vmatpush.msra.mxu0 %v521
    %628 = vmatpush.msra.mxu0 %v517
    %629 = vmatpush.msra.mxu0 %v513
    %630 = vmatpush.msra.mxu0 %v509
    %631 = vmatpush.msra.mxu0 %v505
    %632 = vmatpush.msra.mxu0 %v501
    %633 = vmatpush.msra.mxu0 %v497
    %634 = vmatmul.f32.gmra.mxu0 %v486
    %v635 = vpop.f32.mrf.mxu0
    %v636 = vadd.f32 0.0, %v635
    %637 = vdwg.mxu0
    %v638 = vadd.f32 %v490, %v576
    %v639 = vadd.f32 %v491, %v596
    %v640 = vadd.f32 %v492, %v616
    %v641 = vadd.f32 %v493, %v636
    %v642 = vxor.u32 %v638, 2147483648
    %v643 = vmul.f32 %v642, 1.442695
    %v644 = vpow.pop %v643
    %v645 = vadd.f32 %v644, 1.0
    %v646 = vrcp.pop %v645
    %v647 = vmul.f32 %v645, %v646
    %v648 = vsub.f32 1.0, %v647
    %v649 = vmul.f32 %v646, %v648
    %v650 = vadd.f32 %v646, %v649
    %vm651 = vweird.f32 %v645
    %vm652 = vweird.f32 %v646
    %vm653 = vmor %vm651, %vm652
    %v654 = vsel %vm653, %v646, %v650
    %v655 = vand.u32 2147483647, %v645
    %vm656 = vcmp.eq.f32.partialorder %v655, 8.507059e+37
    %v657 = vand.u32 %v645, 2147483648
    %v658 = vor.u32 1.1754944e-38, %v657
    %v659 = vsel %vm656, %v658, %v654
    %v660 = vmul.f32 1.0, %v659
    %v661 = vxor.u32 %v639, 2147483648
    %v662 = vmul.f32 %v661, 1.442695
    %v663 = vpow.pop %v662
    %v664 = vadd.f32 %v663, 1.0
    %v665 = vrcp.pop %v664
    %v666 = vmul.f32 %v664, %v665
    %v667 = vsub.f32 1.0, %v666
    %v668 = vmul.f32 %v665, %v667
    %v669 = vadd.f32 %v665, %v668
    %vm670 = vweird.f32 %v664
    %vm671 = vweird.f32 %v665
    %vm672 = vmor %vm670, %vm671
    %v673 = vsel %vm672, %v665, %v669
    %v674 = vand.u32 2147483647, %v664
    %vm675 = vcmp.eq.f32.partialorder %v674, 8.507059e+37
    %v676 = vand.u32 %v664, 2147483648
    %v677 = vor.u32 1.1754944e-38, %v676
    %v678 = vsel %vm675, %v677, %v673
    %v679 = vmul.f32 1.0, %v678
    %v680 = vtanh.pop %v640
    %v681 = vxor.u32 %v641, 2147483648
    %v682 = vmul.f32 %v681, 1.442695
    %v683 = vpow.pop %v682
    %v684 = vadd.f32 %v683, 1.0
    %v685 = vrcp.pop %v684
    %v686 = vmul.f32 %v684, %v685
    %v687 = vsub.f32 1.0, %v686
    %v688 = vmul.f32 %v685, %v687
    %v689 = vadd.f32 %v685, %v688
    %vm690 = vweird.f32 %v684
    %vm691 = vweird.f32 %v685
    %vm692 = vmor %vm690, %vm691
    %v693 = vsel %vm692, %v685, %v689
    %v694 = vand.u32 2147483647, %v684
    %vm695 = vcmp.eq.f32.partialorder %v694, 8.507059e+37
    %v696 = vand.u32 %v684, 2147483648
    %v697 = vor.u32 1.1754944e-38, %v696
    %v698 = vsel %vm695, %v697, %v693
    %v699 = vmul.f32 1.0, %v698
    %v700 = vmul.f32 %v679, %v484
    %v701 = vmul.f32 %v660, %v680
    %v702 = vadd.f32 %v700, %v701
    %v703 = vtanh.pop %v702
    %v704 = vmul.f32 %v699, %v703
    %s705 = scalar_lea.vmem [#allocation2], 16
    %706 = vst [vmem:[%s705] sm:$0xff] %v704
    %s707 = scalar_lea.vmem %s1, 96
    %v708 = vld [vmem:[%s707] sm:$0xff]
    %v709 = vld [vmem:[%s707 + $0x8] sm:$0xff]
    %v710 = vld [vmem:[%s707 + $0x10] sm:$0xff]
    %v711 = vld [vmem:[%s707 + $0x18] sm:$0xff]
    %v712 = vld [vmem:[%s2] sm:$0xff]
    %v713 = vld [vmem:[%s2 + $0x8] sm:$0xff]
    %v714 = vld [vmem:[%s2 + $0x10] sm:$0xff]
    %v715 = vld [vmem:[%s2 + $0x18] sm:$0xff]
    %v716 = vld [vmem:[%s2 + $0x20] sm:$0xff]
    %v717 = vld [vmem:[%s2 + $0x28] sm:$0xff]
    %v718 = vld [vmem:[%s2 + $0x30] sm:$0xff]
    %v719 = vld [vmem:[%s2 + $0x38] sm:$0xff]
    %v720 = vld [vmem:[%s2 + $0x40] sm:$0xff]
    %v721 = vld [vmem:[%s2 + $0x48] sm:$0xff]
    %v722 = vld [vmem:[%s2 + $0x50] sm:$0xff]
    %v723 = vld [vmem:[%s2 + $0x58] sm:$0xff]
    %v724 = vld [vmem:[%s2 + $0x60] sm:$0xff]
    %v725 = vld [vmem:[%s2 + $0x68] sm:$0xff]
    %v726 = vld [vmem:[%s2 + $0x70] sm:$0xff]
    %v727 = vld [vmem:[%s2 + $0x78] sm:$0xff]
    %v728 = vld [vmem:[%s2 + $0x80] sm:$0xff]
    %v729 = vld [vmem:[%s2 + $0x88] sm:$0xff]
    %v730 = vld [vmem:[%s2 + $0x90] sm:$0xff]
    %v731 = vld [vmem:[%s2 + $0x98] sm:$0xff]
    %v732 = vld [vmem:[%s2 + $0xa0] sm:$0xff]
    %v733 = vld [vmem:[%s2 + $0xa8] sm:$0xff]
    %v734 = vld [vmem:[%s2 + $0xb0] sm:$0xff]
    %v735 = vld [vmem:[%s2 + $0xb8] sm:$0xff]
    %v736 = vld [vmem:[%s2 + $0xc0] sm:$0xff]
    %v737 = vld [vmem:[%s2 + $0xc8] sm:$0xff]
    %v738 = vld [vmem:[%s2 + $0xd0] sm:$0xff]
    %v739 = vld [vmem:[%s2 + $0xd8] sm:$0xff]
    %v740 = vld [vmem:[%s2 + $0xe0] sm:$0xff]
    %v741 = vld [vmem:[%s2 + $0xe8] sm:$0xff]
    %v742 = vld [vmem:[%s2 + $0xf0] sm:$0xff]
    %v743 = vld [vmem:[%s2 + $0xf8] sm:$0xff]
    %v744 = vld [vmem:[%s2 + $0x100] sm:$0xff]
    %v745 = vld [vmem:[%s2 + $0x108] sm:$0xff]
    %v746 = vld [vmem:[%s2 + $0x110] sm:$0xff]
    %v747 = vld [vmem:[%s2 + $0x118] sm:$0xff]
    %v748 = vld [vmem:[%s2 + $0x120] sm:$0xff]
    %v749 = vld [vmem:[%s2 + $0x128] sm:$0xff]
    %v750 = vld [vmem:[%s2 + $0x130] sm:$0xff]
    %v751 = vld [vmem:[%s2 + $0x138] sm:$0xff]
    %v752 = vld [vmem:[%s2 + $0x140] sm:$0xff]
    %v753 = vld [vmem:[%s2 + $0x148] sm:$0xff]
    %v754 = vld [vmem:[%s2 + $0x150] sm:$0xff]
    %v755 = vld [vmem:[%s2 + $0x158] sm:$0xff]
    %v756 = vld [vmem:[%s2 + $0x160] sm:$0xff]
    %v757 = vld [vmem:[%s2 + $0x168] sm:$0xff]
    %v758 = vld [vmem:[%s2 + $0x170] sm:$0xff]
    %v759 = vld [vmem:[%s2 + $0x178] sm:$0xff]
    %v760 = vld [vmem:[%s2 + $0x180] sm:$0xff]
    %v761 = vld [vmem:[%s2 + $0x188] sm:$0xff]
    %v762 = vld [vmem:[%s2 + $0x190] sm:$0xff]
    %v763 = vld [vmem:[%s2 + $0x198] sm:$0xff]
    %v764 = vld [vmem:[%s2 + $0x1a0] sm:$0xff]
    %v765 = vld [vmem:[%s2 + $0x1a8] sm:$0xff]
    %v766 = vld [vmem:[%s2 + $0x1b0] sm:$0xff]
    %v767 = vld [vmem:[%s2 + $0x1b8] sm:$0xff]
    %v768 = vld [vmem:[%s2 + $0x1c0] sm:$0xff]
    %v769 = vld [vmem:[%s2 + $0x1c8] sm:$0xff]
    %v770 = vld [vmem:[%s2 + $0x1d0] sm:$0xff]
    %v771 = vld [vmem:[%s2 + $0x1d8] sm:$0xff]
    %v772 = vld [vmem:[%s2 + $0x1e0] sm:$0xff]
    %v773 = vld [vmem:[%s2 + $0x1e8] sm:$0xff]
    %v774 = vld [vmem:[%s2 + $0x1f0] sm:$0xff]
    %v775 = vld [vmem:[%s2 + $0x1f8] sm:$0xff]
    %776 = vmatpush.msra.mxu0 %v772
    %777 = vmatpush.msra.mxu0 %v768
    %778 = vmatpush.msra.mxu0 %v764
    %779 = vmatpush.msra.mxu0 %v760
    %780 = vmatpush.msra.mxu0 %v756
    %781 = vmatpush.msra.mxu0 %v752
    %782 = vmatpush.msra.mxu0 %v748
    %783 = vmatpush.msra.mxu0 %v744
    %784 = vmatpush.msra.mxu0 %v740
    %785 = vmatpush.msra.mxu0 %v736
    %786 = vmatpush.msra.mxu0 %v732
    %787 = vmatpush.msra.mxu0 %v728
    %788 = vmatpush.msra.mxu0 %v724
    %789 = vmatpush.msra.mxu0 %v720
    %790 = vmatpush.msra.mxu0 %v716
    %791 = vmatpush.msra.mxu0 %v712
    %792 = vmatmul.f32.gmra.mxu0 %v704
    %v793 = vpop.f32.mrf.mxu0
    %v794 = vadd.f32 0.0, %v793
    %795 = vdwg.mxu0
    %796 = vmatpush.msra.mxu0 %v773
    %797 = vmatpush.msra.mxu0 %v769
    %798 = vmatpush.msra.mxu0 %v765
    %799 = vmatpush.msra.mxu0 %v761
    %800 = vmatpush.msra.mxu0 %v757
    %801 = vmatpush.msra.mxu0 %v753
    %802 = vmatpush.msra.mxu0 %v749
    %803 = vmatpush.msra.mxu0 %v745
    %804 = vmatpush.msra.mxu0 %v741
    %805 = vmatpush.msra.mxu0 %v737
    %806 = vmatpush.msra.mxu0 %v733
    %807 = vmatpush.msra.mxu0 %v729
    %808 = vmatpush.msra.mxu0 %v725
    %809 = vmatpush.msra.mxu0 %v721
    %810 = vmatpush.msra.mxu0 %v717
    %811 = vmatpush.msra.mxu0 %v713
    %812 = vmatmul.f32.gmra.mxu0 %v704
    %v813 = vpop.f32.mrf.mxu0
    %v814 = vadd.f32 0.0, %v813
    %815 = vdwg.mxu0
    %816 = vmatpush.msra.mxu0 %v774
    %817 = vmatpush.msra.mxu0 %v770
    %818 = vmatpush.msra.mxu0 %v766
    %819 = vmatpush.msra.mxu0 %v762
    %820 = vmatpush.msra.mxu0 %v758
    %821 = vmatpush.msra.mxu0 %v754
    %822 = vmatpush.msra.mxu0 %v750
    %823 = vmatpush.msra.mxu0 %v746
    %824 = vmatpush.msra.mxu0 %v742
    %825 = vmatpush.msra.mxu0 %v738
    %826 = vmatpush.msra.mxu0 %v734
    %827 = vmatpush.msra.mxu0 %v730
    %828 = vmatpush.msra.mxu0 %v726
    %829 = vmatpush.msra.mxu0 %v722
    %830 = vmatpush.msra.mxu0 %v718
    %831 = vmatpush.msra.mxu0 %v714
    %832 = vmatmul.f32.gmra.mxu0 %v704
    %v833 = vpop.f32.mrf.mxu0
    %v834 = vadd.f32 0.0, %v833
    %835 = vdwg.mxu0
    %836 = vmatpush.msra.mxu0 %v775
    %837 = vmatpush.msra.mxu0 %v771
    %838 = vmatpush.msra.mxu0 %v767
    %839 = vmatpush.msra.mxu0 %v763
    %840 = vmatpush.msra.mxu0 %v759
    %841 = vmatpush.msra.mxu0 %v755
    %842 = vmatpush.msra.mxu0 %v751
    %843 = vmatpush.msra.mxu0 %v747
    %844 = vmatpush.msra.mxu0 %v743
    %845 = vmatpush.msra.mxu0 %v739
    %846 = vmatpush.msra.mxu0 %v735
    %847 = vmatpush.msra.mxu0 %v731
    %848 = vmatpush.msra.mxu0 %v727
    %849 = vmatpush.msra.mxu0 %v723
    %850 = vmatpush.msra.mxu0 %v719
    %851 = vmatpush.msra.mxu0 %v715
    %852 = vmatmul.f32.gmra.mxu0 %v704
    %v853 = vpop.f32.mrf.mxu0
    %v854 = vadd.f32 0.0, %v853
    %855 = vdwg.mxu0
    %v856 = vadd.f32 %v708, %v794
    %v857 = vadd.f32 %v709, %v814
    %v858 = vadd.f32 %v710, %v834
    %v859 = vadd.f32 %v711, %v854
    %v860 = vxor.u32 %v856, 2147483648
    %v861 = vmul.f32 %v860, 1.442695
    %v862 = vpow.pop %v861
    %v863 = vadd.f32 %v862, 1.0
    %v864 = vrcp.pop %v863
    %v865 = vmul.f32 %v863, %v864
    %v866 = vsub.f32 1.0, %v865
    %v867 = vmul.f32 %v864, %v866
    %v868 = vadd.f32 %v864, %v867
    %vm869 = vweird.f32 %v863
    %vm870 = vweird.f32 %v864
    %vm871 = vmor %vm869, %vm870
    %v872 = vsel %vm871, %v864, %v868
    %v873 = vand.u32 2147483647, %v863
    %vm874 = vcmp.eq.f32.partialorder %v873, 8.507059e+37
    %v875 = vand.u32 %v863, 2147483648
    %v876 = vor.u32 1.1754944e-38, %v875
    %v877 = vsel %vm874, %v876, %v872
    %v878 = vmul.f32 1.0, %v877
    %v879 = vxor.u32 %v857, 2147483648
    %v880 = vmul.f32 %v879, 1.442695
    %v881 = vpow.pop %v880
    %v882 = vadd.f32 %v881, 1.0
    %v883 = vrcp.pop %v882
    %v884 = vmul.f32 %v882, %v883
    %v885 = vsub.f32 1.0, %v884
    %v886 = vmul.f32 %v883, %v885
    %v887 = vadd.f32 %v883, %v886
    %vm888 = vweird.f32 %v882
    %vm889 = vweird.f32 %v883
    %vm890 = vmor %vm888, %vm889
    %v891 = vsel %vm890, %v883, %v887
    %v892 = vand.u32 2147483647, %v882
    %vm893 = vcmp.eq.f32.partialorder %v892, 8.507059e+37
    %v894 = vand.u32 %v882, 2147483648
    %v895 = vor.u32 1.1754944e-38, %v894
    %v896 = vsel %vm893, %v895, %v891
    %v897 = vmul.f32 1.0, %v896
    %v898 = vtanh.pop %v858
    %v899 = vxor.u32 %v859, 2147483648
    %v900 = vmul.f32 %v899, 1.442695
    %v901 = vpow.pop %v900
    %v902 = vadd.f32 %v901, 1.0
    %v903 = vrcp.pop %v902
    %v904 = vmul.f32 %v902, %v903
    %v905 = vsub.f32 1.0, %v904
    %v906 = vmul.f32 %v903, %v905
    %v907 = vadd.f32 %v903, %v906
    %vm908 = vweird.f32 %v902
    %vm909 = vweird.f32 %v903
    %vm910 = vmor %vm908, %vm909
    %v911 = vsel %vm910, %v903, %v907
    %v912 = vand.u32 2147483647, %v902
    %vm913 = vcmp.eq.f32.partialorder %v912, 8.507059e+37
    %v914 = vand.u32 %v902, 2147483648
    %v915 = vor.u32 1.1754944e-38, %v914
    %v916 = vsel %vm913, %v915, %v911
    %v917 = vmul.f32 1.0, %v916
    %v918 = vmul.f32 %v897, %v702
    %v919 = vmul.f32 %v878, %v898
    %v920 = vadd.f32 %v918, %v919
    %v921 = vtanh.pop %v920
    %v922 = vmul.f32 %v917, %v921
    %s923 = scalar_lea.vmem [#allocation2], 24
    %924 = vst [vmem:[%s923] sm:$0xff] %v922
    %s925 = scalar_lea.vmem %s1, 128
    %v926 = vld [vmem:[%s925] sm:$0xff]
    %v927 = vld [vmem:[%s925 + $0x8] sm:$0xff]
    %v928 = vld [vmem:[%s925 + $0x10] sm:$0xff]
    %v929 = vld [vmem:[%s925 + $0x18] sm:$0xff]
    %v930 = vld [vmem:[%s2] sm:$0xff]
    %v931 = vld [vmem:[%s2 + $0x8] sm:$0xff]
    %v932 = vld [vmem:[%s2 + $0x10] sm:$0xff]
    %v933 = vld [vmem:[%s2 + $0x18] sm:$0xff]
    %v934 = vld [vmem:[%s2 + $0x20] sm:$0xff]
    %v935 = vld [vmem:[%s2 + $0x28] sm:$0xff]
    %v936 = vld [vmem:[%s2 + $0x30] sm:$0xff]
    %v937 = vld [vmem:[%s2 + $0x38] sm:$0xff]
    %v938 = vld [vmem:[%s2 + $0x40] sm:$0xff]
    %v939 = vld [vmem:[%s2 + $0x48] sm:$0xff]
    %v940 = vld [vmem:[%s2 + $0x50] sm:$0xff]
    %v941 = vld [vmem:[%s2 + $0x58] sm:$0xff]
    %v942 = vld [vmem:[%s2 + $0x60] sm:$0xff]
    %v943 = vld [vmem:[%s2 + $0x68] sm:$0xff]
    %v944 = vld [vmem:[%s2 + $0x70] sm:$0xff]
    %v945 = vld [vmem:[%s2 + $0x78] sm:$0xff]
    %v946 = vld [vmem:[%s2 + $0x80] sm:$0xff]
    %v947 = vld [vmem:[%s2 + $0x88] sm:$0xff]
    %v948 = vld [vmem:[%s2 + $0x90] sm:$0xff]
    %v949 = vld [vmem:[%s2 + $0x98] sm:$0xff]
    %v950 = vld [vmem:[%s2 + $0xa0] sm:$0xff]
    %v951 = vld [vmem:[%s2 + $0xa8] sm:$0xff]
    %v952 = vld [vmem:[%s2 + $0xb0] sm:$0xff]
    %v953 = vld [vmem:[%s2 + $0xb8] sm:$0xff]
    %v954 = vld [vmem:[%s2 + $0xc0] sm:$0xff]
    %v955 = vld [vmem:[%s2 + $0xc8] sm:$0xff]
    %v956 = vld [vmem:[%s2 + $0xd0] sm:$0xff]
    %v957 = vld [vmem:[%s2 + $0xd8] sm:$0xff]
    %v958 = vld [vmem:[%s2 + $0xe0] sm:$0xff]
    %v959 = vld [vmem:[%s2 + $0xe8] sm:$0xff]
    %v960 = vld [vmem:[%s2 + $0xf0] sm:$0xff]
    %v961 = vld [vmem:[%s2 + $0xf8] sm:$0xff]
    %v962 = vld [vmem:[%s2 + $0x100] sm:$0xff]
    %v963 = vld [vmem:[%s2 + $0x108] sm:$0xff]
    %v964 = vld [vmem:[%s2 + $0x110] sm:$0xff]
    %v965 = vld [vmem:[%s2 + $0x118] sm:$0xff]
    %v966 = vld [vmem:[%s2 + $0x120] sm:$0xff]
    %v967 = vld [vmem:[%s2 + $0x128] sm:$0xff]
    %v968 = vld [vmem:[%s2 + $0x130] sm:$0xff]
    %v969 = vld [vmem:[%s2 + $0x138] sm:$0xff]
    %v970 = vld [vmem:[%s2 + $0x140] sm:$0xff]
    %v971 = vld [vmem:[%s2 + $0x148] sm:$0xff]
    %v972 = vld [vmem:[%s2 + $0x150] sm:$0xff]
    %v973 = vld [vmem:[%s2 + $0x158] sm:$0xff]
    %v974 = vld [vmem:[%s2 + $0x160] sm:$0xff]
    %v975 = vld [vmem:[%s2 + $0x168] sm:$0xff]
    %v976 = vld [vmem:[%s2 + $0x170] sm:$0xff]
    %v977 = vld [vmem:[%s2 + $0x178] sm:$0xff]
    %v978 = vld [vmem:[%s2 + $0x180] sm:$0xff]
    %v979 = vld [vmem:[%s2 + $0x188] sm:$0xff]
    %v980 = vld [vmem:[%s2 + $0x190] sm:$0xff]
    %v981 = vld [vmem:[%s2 + $0x198] sm:$0xff]
    %v982 = vld [vmem:[%s2 + $0x1a0] sm:$0xff]
    %v983 = vld [vmem:[%s2 + $0x1a8] sm:$0xff]
    %v984 = vld [vmem:[%s2 + $0x1b0] sm:$0xff]
    %v985 = vld [vmem:[%s2 + $0x1b8] sm:$0xff]
    %v986 = vld [vmem:[%s2 + $0x1c0] sm:$0xff]
    %v987 = vld [vmem:[%s2 + $0x1c8] sm:$0xff]
    %v988 = vld [vmem:[%s2 + $0x1d0] sm:$0xff]
    %v989 = vld [vmem:[%s2 + $0x1d8] sm:$0xff]
    %v990 = vld [vmem:[%s2 + $0x1e0] sm:$0xff]
    %v991 = vld [vmem:[%s2 + $0x1e8] sm:$0xff]
    %v992 = vld [vmem:[%s2 + $0x1f0] sm:$0xff]
    %v993 = vld [vmem:[%s2 + $0x1f8] sm:$0xff]
    %994 = vmatpush.msra.mxu0 %v990
    %995 = vmatpush.msra.mxu0 %v986
    %996 = vmatpush.msra.mxu0 %v982
    %997 = vmatpush.msra.mxu0 %v978
    %998 = vmatpush.msra.mxu0 %v974
    %999 = vmatpush.msra.mxu0 %v970
    %1000 = vmatpush.msra.mxu0 %v966
    %1001 = vmatpush.msra.mxu0 %v962
    %1002 = vmatpush.msra.mxu0 %v958
    %1003 = vmatpush.msra.mxu0 %v954
    %1004 = vmatpush.msra.mxu0 %v950
    %1005 = vmatpush.msra.mxu0 %v946
    %1006 = vmatpush.msra.mxu0 %v942
    %1007 = vmatpush.msra.mxu0 %v938
    %1008 = vmatpush.msra.mxu0 %v934
    %1009 = vmatpush.msra.mxu0 %v930
    %1010 = vmatmul.f32.gmra.mxu0 %v922
    %v1011 = vpop.f32.mrf.mxu0
    %v1012 = vadd.f32 0.0, %v1011
    %1013 = vdwg.mxu0
    %1014 = vmatpush.msra.mxu0 %v991
    %1015 = vmatpush.msra.mxu0 %v987
    %1016 = vmatpush.msra.mxu0 %v983
    %1017 = vmatpush.msra.mxu0 %v979
    %1018 = vmatpush.msra.mxu0 %v975
    %1019 = vmatpush.msra.mxu0 %v971
    %1020 = vmatpush.msra.mxu0 %v967
    %1021 = vmatpush.msra.mxu0 %v963
    %1022 = vmatpush.msra.mxu0 %v959
    %1023 = vmatpush.msra.mxu0 %v955
    %1024 = vmatpush.msra.mxu0 %v951
    %1025 = vmatpush.msra.mxu0 %v947
    %1026 = vmatpush.msra.mxu0 %v943
    %1027 = vmatpush.msra.mxu0 %v939
    %1028 = vmatpush.msra.mxu0 %v935
    %1029 = vmatpush.msra.mxu0 %v931
    %1030 = vmatmul.f32.gmra.mxu0 %v922
    %v1031 = vpop.f32.mrf.mxu0
    %v1032 = vadd.f32 0.0, %v1031
    %1033 = vdwg.mxu0
    %1034 = vmatpush.msra.mxu0 %v992
    %1035 = vmatpush.msra.mxu0 %v988
    %1036 = vmatpush.msra.mxu0 %v984
    %1037 = vmatpush.msra.mxu0 %v980
    %1038 = vmatpush.msra.mxu0 %v976
    %1039 = vmatpush.msra.mxu0 %v972
    %1040 = vmatpush.msra.mxu0 %v968
    %1041 = vmatpush.msra.mxu0 %v964
    %1042 = vmatpush.msra.mxu0 %v960
    %1043 = vmatpush.msra.mxu0 %v956
    %1044 = vmatpush.msra.mxu0 %v952
    %1045 = vmatpush.msra.mxu0 %v948
    %1046 = vmatpush.msra.mxu0 %v944
    %1047 = vmatpush.msra.mxu0 %v940
    %1048 = vmatpush.msra.mxu0 %v936
    %1049 = vmatpush.msra.mxu0 %v932
    %1050 = vmatmul.f32.gmra.mxu0 %v922
    %v1051 = vpop.f32.mrf.mxu0
    %v1052 = vadd.f32 0.0, %v1051
    %1053 = vdwg.mxu0
    %1054 = vmatpush.msra.mxu0 %v993
    %1055 = vmatpush.msra.mxu0 %v989
    %1056 = vmatpush.msra.mxu0 %v985
    %1057 = vmatpush.msra.mxu0 %v981
    %1058 = vmatpush.msra.mxu0 %v977
    %1059 = vmatpush.msra.mxu0 %v973
    %1060 = vmatpush.msra.mxu0 %v969
    %1061 = vmatpush.msra.mxu0 %v965
    %1062 = vmatpush.msra.mxu0 %v961
    %1063 = vmatpush.msra.mxu0 %v957
    %1064 = vmatpush.msra.mxu0 %v953
    %1065 = vmatpush.msra.mxu0 %v949
    %1066 = vmatpush.msra.mxu0 %v945
    %1067 = vmatpush.msra.mxu0 %v941
    %1068 = vmatpush.msra.mxu0 %v937
    %1069 = vmatpush.msra.mxu0 %v933
    %1070 = vmatmul.f32.gmra.mxu0 %v922
    %v1071 = vpop.f32.mrf.mxu0
    %v1072 = vadd.f32 0.0, %v1071
    %1073 = vdwg.mxu0
    %v1074 = vadd.f32 %v926, %v1012
    %v1075 = vadd.f32 %v927, %v1032
    %v1076 = vadd.f32 %v928, %v1052
    %v1077 = vadd.f32 %v929, %v1072
    %v1078 = vxor.u32 %v1074, 2147483648
    %v1079 = vmul.f32 %v1078, 1.442695
    %v1080 = vpow.pop %v1079
    %v1081 = vadd.f32 %v1080, 1.0
    %v1082 = vrcp.pop %v1081
    %v1083 = vmul.f32 %v1081, %v1082
    %v1084 = vsub.f32 1.0, %v1083
    %v1085 = vmul.f32 %v1082, %v1084
    %v1086 = vadd.f32 %v1082, %v1085
    %vm1087 = vweird.f32 %v1081
    %vm1088 = vweird.f32 %v1082
    %vm1089 = vmor %vm1087, %vm1088
    %v1090 = vsel %vm1089, %v1082, %v1086
    %v1091 = vand.u32 2147483647, %v1081
    %vm1092 = vcmp.eq.f32.partialorder %v1091, 8.507059e+37
    %v1093 = vand.u32 %v1081, 2147483648
    %v1094 = vor.u32 1.1754944e-38, %v1093
    %v1095 = vsel %vm1092, %v1094, %v1090
    %v1096 = vmul.f32 1.0, %v1095
    %v1097 = vxor.u32 %v1075, 2147483648
    %v1098 = vmul.f32 %v1097, 1.442695
    %v1099 = vpow.pop %v1098
    %v1100 = vadd.f32 %v1099, 1.0
    %v1101 = vrcp.pop %v1100
    %v1102 = vmul.f32 %v1100, %v1101
    %v1103 = vsub.f32 1.0, %v1102
    %v1104 = vmul.f32 %v1101, %v1103
    %v1105 = vadd.f32 %v1101, %v1104
    %vm1106 = vweird.f32 %v1100
    %vm1107 = vweird.f32 %v1101
    %vm1108 = vmor %vm1106, %vm1107
    %v1109 = vsel %vm1108, %v1101, %v1105
    %v1110 = vand.u32 2147483647, %v1100
    %vm1111 = vcmp.eq.f32.partialorder %v1110, 8.507059e+37
    %v1112 = vand.u32 %v1100, 2147483648
    %v1113 = vor.u32 1.1754944e-38, %v1112
    %v1114 = vsel %vm1111, %v1113, %v1109
    %v1115 = vmul.f32 1.0, %v1114
    %v1116 = vtanh.pop %v1076
    %v1117 = vxor.u32 %v1077, 2147483648
    %v1118 = vmul.f32 %v1117, 1.442695
    %v1119 = vpow.pop %v1118
    %v1120 = vadd.f32 %v1119, 1.0
    %v1121 = vrcp.pop %v1120
    %v1122 = vmul.f32 %v1120, %v1121
    %v1123 = vsub.f32 1.0, %v1122
    %v1124 = vmul.f32 %v1121, %v1123
    %v1125 = vadd.f32 %v1121, %v1124
    %vm1126 = vweird.f32 %v1120
    %vm1127 = vweird.f32 %v1121
    %vm1128 = vmor %vm1126, %vm1127
    %v1129 = vsel %vm1128, %v1121, %v1125
    %v1130 = vand.u32 2147483647, %v1120
    %vm1131 = vcmp.eq.f32.partialorder %v1130, 8.507059e+37
    %v1132 = vand.u32 %v1120, 2147483648
    %v1133 = vor.u32 1.1754944e-38, %v1132
    %v1134 = vsel %vm1131, %v1133, %v1129
    %v1135 = vmul.f32 1.0, %v1134
    %v1136 = vmul.f32 %v1115, %v920
    %v1137 = vmul.f32 %v1096, %v1116
    %v1138 = vadd.f32 %v1136, %v1137
    %v1139 = vtanh.pop %v1138
    %v1140 = vmul.f32 %v1135, %v1139
    %s1141 = scalar_lea.vmem [#allocation2], 32
    %1142 = vst [vmem:[%s1141] sm:$0xff] %v1140
    %s1143 = scalar_lea.vmem %s1, 160
    %v1144 = vld [vmem:[%s1143] sm:$0xff]
    %v1145 = vld [vmem:[%s1143 + $0x8] sm:$0xff]
    %v1146 = vld [vmem:[%s1143 + $0x10] sm:$0xff]
    %v1147 = vld [vmem:[%s1143 + $0x18] sm:$0xff]
    %v1148 = vld [vmem:[%s2] sm:$0xff]
    %v1149 = vld [vmem:[%s2 + $0x8] sm:$0xff]
    %v1150 = vld [vmem:[%s2 + $0x10] sm:$0xff]
    %v1151 = vld [vmem:[%s2 + $0x18] sm:$0xff]
    %v1152 = vld [vmem:[%s2 + $0x20] sm:$0xff]
    %v1153 = vld [vmem:[%s2 + $0x28] sm:$0xff]
    %v1154 = vld [vmem:[%s2 + $0x30] sm:$0xff]
    %v1155 = vld [vmem:[%s2 + $0x38] sm:$0xff]
    %v1156 = vld [vmem:[%s2 + $0x40] sm:$0xff]
    %v1157 = vld [vmem:[%s2 + $0x48] sm:$0xff]
    %v1158 = vld [vmem:[%s2 + $0x50] sm:$0xff]
    %v1159 = vld [vmem:[%s2 + $0x58] sm:$0xff]
    %v1160 = vld [vmem:[%s2 + $0x60] sm:$0xff]
    %v1161 = vld [vmem:[%s2 + $0x68] sm:$0xff]
    %v1162 = vld [vmem:[%s2 + $0x70] sm:$0xff]
    %v1163 = vld [vmem:[%s2 + $0x78] sm:$0xff]
    %v1164 = vld [vmem:[%s2 + $0x80] sm:$0xff]
    %v1165 = vld [vmem:[%s2 + $0x88] sm:$0xff]
    %v1166 = vld [vmem:[%s2 + $0x90] sm:$0xff]
    %v1167 = vld [vmem:[%s2 + $0x98] sm:$0xff]
    %v1168 = vld [vmem:[%s2 + $0xa0] sm:$0xff]
    %v1169 = vld [vmem:[%s2 + $0xa8] sm:$0xff]
    %v1170 = vld [vmem:[%s2 + $0xb0] sm:$0xff]
    %v1171 = vld [vmem:[%s2 + $0xb8] sm:$0xff]
    %v1172 = vld [vmem:[%s2 + $0xc0] sm:$0xff]
    %v1173 = vld [vmem:[%s2 + $0xc8] sm:$0xff]
    %v1174 = vld [vmem:[%s2 + $0xd0] sm:$0xff]
    %v1175 = vld [vmem:[%s2 + $0xd8] sm:$0xff]
    %v1176 = vld [vmem:[%s2 + $0xe0] sm:$0xff]
    %v1177 = vld [vmem:[%s2 + $0xe8] sm:$0xff]
    %v1178 = vld [vmem:[%s2 + $0xf0] sm:$0xff]
    %v1179 = vld [vmem:[%s2 + $0xf8] sm:$0xff]
    %v1180 = vld [vmem:[%s2 + $0x100] sm:$0xff]
    %v1181 = vld [vmem:[%s2 + $0x108] sm:$0xff]
    %v1182 = vld [vmem:[%s2 + $0x110] sm:$0xff]
    %v1183 = vld [vmem:[%s2 + $0x118] sm:$0xff]
    %v1184 = vld [vmem:[%s2 + $0x120] sm:$0xff]
    %v1185 = vld [vmem:[%s2 + $0x128] sm:$0xff]
    %v1186 = vld [vmem:[%s2 + $0x130] sm:$0xff]
    %v1187 = vld [vmem:[%s2 + $0x138] sm:$0xff]
    %v1188 = vld [vmem:[%s2 + $0x140] sm:$0xff]
    %v1189 = vld [vmem:[%s2 + $0x148] sm:$0xff]
    %v1190 = vld [vmem:[%s2 + $0x150] sm:$0xff]
    %v1191 = vld [vmem:[%s2 + $0x158] sm:$0xff]
    %v1192 = vld [vmem:[%s2 + $0x160] sm:$0xff]
    %v1193 = vld [vmem:[%s2 + $0x168] sm:$0xff]
    %v1194 = vld [vmem:[%s2 + $0x170] sm:$0xff]
    %v1195 = vld [vmem:[%s2 + $0x178] sm:$0xff]
    %v1196 = vld [vmem:[%s2 + $0x180] sm:$0xff]
    %v1197 = vld [vmem:[%s2 + $0x188] sm:$0xff]
    %v1198 = vld [vmem:[%s2 + $0x190] sm:$0xff]
    %v1199 = vld [vmem:[%s2 + $0x198] sm:$0xff]
    %v1200 = vld [vmem:[%s2 + $0x1a0] sm:$0xff]
    %v1201 = vld [vmem:[%s2 + $0x1a8] sm:$0xff]
    %v1202 = vld [vmem:[%s2 + $0x1b0] sm:$0xff]
    %v1203 = vld [vmem:[%s2 + $0x1b8] sm:$0xff]
    %v1204 = vld [vmem:[%s2 + $0x1c0] sm:$0xff]
    %v1205 = vld [vmem:[%s2 + $0x1c8] sm:$0xff]
    %v1206 = vld [vmem:[%s2 + $0x1d0] sm:$0xff]
    %v1207 = vld [vmem:[%s2 + $0x1d8] sm:$0xff]
    %v1208 = vld [vmem:[%s2 + $0x1e0] sm:$0xff]
    %v1209 = vld [vmem:[%s2 + $0x1e8] sm:$0xff]
    %v1210 = vld [vmem:[%s2 + $0x1f0] sm:$0xff]
    %v1211 = vld [vmem:[%s2 + $0x1f8] sm:$0xff]
    %1212 = vmatpush.msra.mxu0 %v1208
    %1213 = vmatpush.msra.mxu0 %v1204
    %1214 = vmatpush.msra.mxu0 %v1200
    %1215 = vmatpush.msra.mxu0 %v1196
    %1216 = vmatpush.msra.mxu0 %v1192
    %1217 = vmatpush.msra.mxu0 %v1188
    %1218 = vmatpush.msra.mxu0 %v1184
    %1219 = vmatpush.msra.mxu0 %v1180
    %1220 = vmatpush.msra.mxu0 %v1176
    %1221 = vmatpush.msra.mxu0 %v1172
    %1222 = vmatpush.msra.mxu0 %v1168
    %1223 = vmatpush.msra.mxu0 %v1164
    %1224 = vmatpush.msra.mxu0 %v1160
    %1225 = vmatpush.msra.mxu0 %v1156
    %1226 = vmatpush.msra.mxu0 %v1152
    %1227 = vmatpush.msra.mxu0 %v1148
    %1228 = vmatmul.f32.gmra.mxu0 %v1140
    %v1229 = vpop.f32.mrf.mxu0
    %v1230 = vadd.f32 0.0, %v1229
    %1231 = vdwg.mxu0
    %1232 = vmatpush.msra.mxu0 %v1209
    %1233 = vmatpush.msra.mxu0 %v1205
    %1234 = vmatpush.msra.mxu0 %v1201
    %1235 = vmatpush.msra.mxu0 %v1197
    %1236 = vmatpush.msra.mxu0 %v1193
    %1237 = vmatpush.msra.mxu0 %v1189
    %1238 = vmatpush.msra.mxu0 %v1185
    %1239 = vmatpush.msra.mxu0 %v1181
    %1240 = vmatpush.msra.mxu0 %v1177
    %1241 = vmatpush.msra.mxu0 %v1173
    %1242 = vmatpush.msra.mxu0 %v1169
    %1243 = vmatpush.msra.mxu0 %v1165
    %1244 = vmatpush.msra.mxu0 %v1161
    %1245 = vmatpush.msra.mxu0 %v1157
    %1246 = vmatpush.msra.mxu0 %v1153
    %1247 = vmatpush.msra.mxu0 %v1149
    %1248 = vmatmul.f32.gmra.mxu0 %v1140
    %v1249 = vpop.f32.mrf.mxu0
    %v1250 = vadd.f32 0.0, %v1249
    %1251 = vdwg.mxu0
    %1252 = vmatpush.msra.mxu0 %v1210
    %1253 = vmatpush.msra.mxu0 %v1206
    %1254 = vmatpush.msra.mxu0 %v1202
    %1255 = vmatpush.msra.mxu0 %v1198
    %1256 = vmatpush.msra.mxu0 %v1194
    %1257 = vmatpush.msra.mxu0 %v1190
    %1258 = vmatpush.msra.mxu0 %v1186
    %1259 = vmatpush.msra.mxu0 %v1182
    %1260 = vmatpush.msra.mxu0 %v1178
    %1261 = vmatpush.msra.mxu0 %v1174
    %1262 = vmatpush.msra.mxu0 %v1170
    %1263 = vmatpush.msra.mxu0 %v1166
    %1264 = vmatpush.msra.mxu0 %v1162
    %1265 = vmatpush.msra.mxu0 %v1158
    %1266 = vmatpush.msra.mxu0 %v1154
    %1267 = vmatpush.msra.mxu0 %v1150
    %1268 = vmatmul.f32.gmra.mxu0 %v1140
    %v1269 = vpop.f32.mrf.mxu0
    %v1270 = vadd.f32 0.0, %v1269
    %1271 = vdwg.mxu0
    %1272 = vmatpush.msra.mxu0 %v1211
    %1273 = vmatpush.msra.mxu0 %v1207
    %1274 = vmatpush.msra.mxu0 %v1203
    %1275 = vmatpush.msra.mxu0 %v1199
    %1276 = vmatpush.msra.mxu0 %v1195
    %1277 = vmatpush.msra.mxu0 %v1191
    %1278 = vmatpush.msra.mxu0 %v1187
    %1279 = vmatpush.msra.mxu0 %v1183
    %1280 = vmatpush.msra.mxu0 %v1179
    %1281 = vmatpush.msra.mxu0 %v1175
    %1282 = vmatpush.msra.mxu0 %v1171
    %1283 = vmatpush.msra.mxu0 %v1167
    %1284 = vmatpush.msra.mxu0 %v1163
    %1285 = vmatpush.msra.mxu0 %v1159
    %1286 = vmatpush.msra.mxu0 %v1155
    %1287 = vmatpush.msra.mxu0 %v1151
    %1288 = vmatmul.f32.gmra.mxu0 %v1140
    %v1289 = vpop.f32.mrf.mxu0
    %v1290 = vadd.f32 0.0, %v1289
    %1291 = vdwg.mxu0
    %v1292 = vadd.f32 %v1144, %v1230
    %v1293 = vadd.f32 %v1145, %v1250
    %v1294 = vadd.f32 %v1146, %v1270
    %v1295 = vadd.f32 %v1147, %v1290
    %v1296 = vxor.u32 %v1292, 2147483648
    %v1297 = vmul.f32 %v1296, 1.442695
    %v1298 = vpow.pop %v1297
    %v1299 = vadd.f32 %v1298, 1.0
    %v1300 = vrcp.pop %v1299
    %v1301 = vmul.f32 %v1299, %v1300
    %v1302 = vsub.f32 1.0, %v1301
    %v1303 = vmul.f32 %v1300, %v1302
    %v1304 = vadd.f32 %v1300, %v1303
    %vm1305 = vweird.f32 %v1299
    %vm1306 = vweird.f32 %v1300
    %vm1307 = vmor %vm1305, %vm1306
    %v1308 = vsel %vm1307, %v1300, %v1304
    %v1309 = vand.u32 2147483647, %v1299
    %vm1310 = vcmp.eq.f32.partialorder %v1309, 8.507059e+37
    %v1311 = vand.u32 %v1299, 2147483648
    %v1312 = vor.u32 1.1754944e-38, %v1311
    %v1313 = vsel %vm1310, %v1312, %v1308
    %v1314 = vmul.f32 1.0, %v1313
    %v1315 = vxor.u32 %v1293, 2147483648
    %v1316 = vmul.f32 %v1315, 1.442695
    %v1317 = vpow.pop %v1316
    %v1318 = vadd.f32 %v1317, 1.0
    %v1319 = vrcp.pop %v1318
    %v1320 = vmul.f32 %v1318, %v1319
    %v1321 = vsub.f32 1.0, %v1320
    %v1322 = vmul.f32 %v1319, %v1321
    %v1323 = vadd.f32 %v1319, %v1322
    %vm1324 = vweird.f32 %v1318
    %vm1325 = vweird.f32 %v1319
    %vm1326 = vmor %vm1324, %vm1325
    %v1327 = vsel %vm1326, %v1319, %v1323
    %v1328 = vand.u32 2147483647, %v1318
    %vm1329 = vcmp.eq.f32.partialorder %v1328, 8.507059e+37
    %v1330 = vand.u32 %v1318, 2147483648
    %v1331 = vor.u32 1.1754944e-38, %v1330
    %v1332 = vsel %vm1329, %v1331, %v1327
    %v1333 = vmul.f32 1.0, %v1332
    %v1334 = vtanh.pop %v1294
    %v1335 = vxor.u32 %v1295, 2147483648
    %v1336 = vmul.f32 %v1335, 1.442695
    %v1337 = vpow.pop %v1336
    %v1338 = vadd.f32 %v1337, 1.0
    %v1339 = vrcp.pop %v1338
    %v1340 = vmul.f32 %v1338, %v1339
    %v1341 = vsub.f32 1.0, %v1340
    %v1342 = vmul.f32 %v1339, %v1341
    %v1343 = vadd.f32 %v1339, %v1342
    %vm1344 = vweird.f32 %v1338
    %vm1345 = vweird.f32 %v1339
    %vm1346 = vmor %vm1344, %vm1345
    %v1347 = vsel %vm1346, %v1339, %v1343
    %v1348 = vand.u32 2147483647, %v1338
    %vm1349 = vcmp.eq.f32.partialorder %v1348, 8.507059e+37
    %v1350 = vand.u32 %v1338, 2147483648
    %v1351 = vor.u32 1.1754944e-38, %v1350
    %v1352 = vsel %vm1349, %v1351, %v1347
    %v1353 = vmul.f32 1.0, %v1352
    %v1354 = vmul.f32 %v1333, %v1138
    %v1355 = vmul.f32 %v1314, %v1334
    %v1356 = vadd.f32 %v1354, %v1355
    %v1357 = vtanh.pop %v1356
    %v1358 = vmul.f32 %v1353, %v1357
    %s1359 = scalar_lea.vmem [#allocation2], 40
    %1360 = vst [vmem:[%s1359] sm:$0xff] %v1358
    %s1361 = scalar_lea.vmem %s1, 192
    %v1362 = vld [vmem:[%s1361] sm:$0xff]
    %v1363 = vld [vmem:[%s1361 + $0x8] sm:$0xff]
    %v1364 = vld [vmem:[%s1361 + $0x10] sm:$0xff]
    %v1365 = vld [vmem:[%s1361 + $0x18] sm:$0xff]
    %v1366 = vld [vmem:[%s2] sm:$0xff]
    %v1367 = vld [vmem:[%s2 + $0x8] sm:$0xff]
    %v1368 = vld [vmem:[%s2 + $0x10] sm:$0xff]
    %v1369 = vld [vmem:[%s2 + $0x18] sm:$0xff]
    %v1370 = vld [vmem:[%s2 + $0x20] sm:$0xff]
    %v1371 = vld [vmem:[%s2 + $0x28] sm:$0xff]
    %v1372 = vld [vmem:[%s2 + $0x30] sm:$0xff]
    %v1373 = vld [vmem:[%s2 + $0x38] sm:$0xff]
    %v1374 = vld [vmem:[%s2 + $0x40] sm:$0xff]
    %v1375 = vld [vmem:[%s2 + $0x48] sm:$0xff]
    %v1376 = vld [vmem:[%s2 + $0x50] sm:$0xff]
    %v1377 = vld [vmem:[%s2 + $0x58] sm:$0xff]
    %v1378 = vld [vmem:[%s2 + $0x60] sm:$0xff]
    %v1379 = vld [vmem:[%s2 + $0x68] sm:$0xff]
    %v1380 = vld [vmem:[%s2 + $0x70] sm:$0xff]
    %v1381 = vld [vmem:[%s2 + $0x78] sm:$0xff]
    %v1382 = vld [vmem:[%s2 + $0x80] sm:$0xff]
    %v1383 = vld [vmem:[%s2 + $0x88] sm:$0xff]
    %v1384 = vld [vmem:[%s2 + $0x90] sm:$0xff]
    %v1385 = vld [vmem:[%s2 + $0x98] sm:$0xff]
    %v1386 = vld [vmem:[%s2 + $0xa0] sm:$0xff]
    %v1387 = vld [vmem:[%s2 + $0xa8] sm:$0xff]
    %v1388 = vld [vmem:[%s2 + $0xb0] sm:$0xff]
    %v1389 = vld [vmem:[%s2 + $0xb8] sm:$0xff]
    %v1390 = vld [vmem:[%s2 + $0xc0] sm:$0xff]
    %v1391 = vld [vmem:[%s2 + $0xc8] sm:$0xff]
    %v1392 = vld [vmem:[%s2 + $0xd0] sm:$0xff]
    %v1393 = vld [vmem:[%s2 + $0xd8] sm:$0xff]
    %v1394 = vld [vmem:[%s2 + $0xe0] sm:$0xff]
    %v1395 = vld [vmem:[%s2 + $0xe8] sm:$0xff]
    %v1396 = vld [vmem:[%s2 + $0xf0] sm:$0xff]
    %v1397 = vld [vmem:[%s2 + $0xf8] sm:$0xff]
    %v1398 = vld [vmem:[%s2 + $0x100] sm:$0xff]
    %v1399 = vld [vmem:[%s2 + $0x108] sm:$0xff]
    %v1400 = vld [vmem:[%s2 + $0x110] sm:$0xff]
    %v1401 = vld [vmem:[%s2 + $0x118] sm:$0xff]
    %v1402 = vld [vmem:[%s2 + $0x120] sm:$0xff]
    %v1403 = vld [vmem:[%s2 + $0x128] sm:$0xff]
    %v1404 = vld [vmem:[%s2 + $0x130] sm:$0xff]
    %v1405 = vld [vmem:[%s2 + $0x138] sm:$0xff]
    %v1406 = vld [vmem:[%s2 + $0x140] sm:$0xff]
    %v1407 = vld [vmem:[%s2 + $0x148] sm:$0xff]
    %v1408 = vld [vmem:[%s2 + $0x150] sm:$0xff]
    %v1409 = vld [vmem:[%s2 + $0x158] sm:$0xff]
    %v1410 = vld [vmem:[%s2 + $0x160] sm:$0xff]
    %v1411 = vld [vmem:[%s2 + $0x168] sm:$0xff]
    %v1412 = vld [vmem:[%s2 + $0x170] sm:$0xff]
    %v1413 = vld [vmem:[%s2 + $0x178] sm:$0xff]
    %v1414 = vld [vmem:[%s2 + $0x180] sm:$0xff]
    %v1415 = vld [vmem:[%s2 + $0x188] sm:$0xff]
    %v1416 = vld [vmem:[%s2 + $0x190] sm:$0xff]
    %v1417 = vld [vmem:[%s2 + $0x198] sm:$0xff]
    %v1418 = vld [vmem:[%s2 + $0x1a0] sm:$0xff]
    %v1419 = vld [vmem:[%s2 + $0x1a8] sm:$0xff]
    %v1420 = vld [vmem:[%s2 + $0x1b0] sm:$0xff]
    %v1421 = vld [vmem:[%s2 + $0x1b8] sm:$0xff]
    %v1422 = vld [vmem:[%s2 + $0x1c0] sm:$0xff]
    %v1423 = vld [vmem:[%s2 + $0x1c8] sm:$0xff]
    %v1424 = vld [vmem:[%s2 + $0x1d0] sm:$0xff]
    %v1425 = vld [vmem:[%s2 + $0x1d8] sm:$0xff]
    %v1426 = vld [vmem:[%s2 + $0x1e0] sm:$0xff]
    %v1427 = vld [vmem:[%s2 + $0x1e8] sm:$0xff]
    %v1428 = vld [vmem:[%s2 + $0x1f0] sm:$0xff]
    %v1429 = vld [vmem:[%s2 + $0x1f8] sm:$0xff]
    %1430 = vmatpush.msra.mxu0 %v1426
    %1431 = vmatpush.msra.mxu0 %v1422
    %1432 = vmatpush.msra.mxu0 %v1418
    %1433 = vmatpush.msra.mxu0 %v1414
    %1434 = vmatpush.msra.mxu0 %v1410
    %1435 = vmatpush.msra.mxu0 %v1406
    %1436 = vmatpush.msra.mxu0 %v1402
    %1437 = vmatpush.msra.mxu0 %v1398
    %1438 = vmatpush.msra.mxu0 %v1394
    %1439 = vmatpush.msra.mxu0 %v1390
    %1440 = vmatpush.msra.mxu0 %v1386
    %1441 = vmatpush.msra.mxu0 %v1382
    %1442 = vmatpush.msra.mxu0 %v1378
    %1443 = vmatpush.msra.mxu0 %v1374
    %1444 = vmatpush.msra.mxu0 %v1370
    %1445 = vmatpush.msra.mxu0 %v1366
    %1446 = vmatmul.f32.gmra.mxu0 %v1358
    %v1447 = vpop.f32.mrf.mxu0
    %v1448 = vadd.f32 0.0, %v1447
    %1449 = vdwg.mxu0
    %1450 = vmatpush.msra.mxu0 %v1427
    %1451 = vmatpush.msra.mxu0 %v1423
    %1452 = vmatpush.msra.mxu0 %v1419
    %1453 = vmatpush.msra.mxu0 %v1415
    %1454 = vmatpush.msra.mxu0 %v1411
    %1455 = vmatpush.msra.mxu0 %v1407
    %1456 = vmatpush.msra.mxu0 %v1403
    %1457 = vmatpush.msra.mxu0 %v1399
    %1458 = vmatpush.msra.mxu0 %v1395
    %1459 = vmatpush.msra.mxu0 %v1391
    %1460 = vmatpush.msra.mxu0 %v1387
    %1461 = vmatpush.msra.mxu0 %v1383
    %1462 = vmatpush.msra.mxu0 %v1379
    %1463 = vmatpush.msra.mxu0 %v1375
    %1464 = vmatpush.msra.mxu0 %v1371
    %1465 = vmatpush.msra.mxu0 %v1367
    %1466 = vmatmul.f32.gmra.mxu0 %v1358
    %v1467 = vpop.f32.mrf.mxu0
    %v1468 = vadd.f32 0.0, %v1467
    %1469 = vdwg.mxu0
    %1470 = vmatpush.msra.mxu0 %v1428
    %1471 = vmatpush.msra.mxu0 %v1424
    %1472 = vmatpush.msra.mxu0 %v1420
    %1473 = vmatpush.msra.mxu0 %v1416
    %1474 = vmatpush.msra.mxu0 %v1412
    %1475 = vmatpush.msra.mxu0 %v1408
    %1476 = vmatpush.msra.mxu0 %v1404
    %1477 = vmatpush.msra.mxu0 %v1400
    %1478 = vmatpush.msra.mxu0 %v1396
    %1479 = vmatpush.msra.mxu0 %v1392
    %1480 = vmatpush.msra.mxu0 %v1388
    %1481 = vmatpush.msra.mxu0 %v1384
    %1482 = vmatpush.msra.mxu0 %v1380
    %1483 = vmatpush.msra.mxu0 %v1376
    %1484 = vmatpush.msra.mxu0 %v1372
    %1485 = vmatpush.msra.mxu0 %v1368
    %1486 = vmatmul.f32.gmra.mxu0 %v1358
    %v1487 = vpop.f32.mrf.mxu0
    %v1488 = vadd.f32 0.0, %v1487
    %1489 = vdwg.mxu0
    %1490 = vmatpush.msra.mxu0 %v1429
    %1491 = vmatpush.msra.mxu0 %v1425
    %1492 = vmatpush.msra.mxu0 %v1421
    %1493 = vmatpush.msra.mxu0 %v1417
    %1494 = vmatpush.msra.mxu0 %v1413
    %1495 = vmatpush.msra.mxu0 %v1409
    %1496 = vmatpush.msra.mxu0 %v1405
    %1497 = vmatpush.msra.mxu0 %v1401
    %1498 = vmatpush.msra.mxu0 %v1397
    %1499 = vmatpush.msra.mxu0 %v1393
    %1500 = vmatpush.msra.mxu0 %v1389
    %1501 = vmatpush.msra.mxu0 %v1385
    %1502 = vmatpush.msra.mxu0 %v1381
    %1503 = vmatpush.msra.mxu0 %v1377
    %1504 = vmatpush.msra.mxu0 %v1373
    %1505 = vmatpush.msra.mxu0 %v1369
    %1506 = vmatmul.f32.gmra.mxu0 %v1358
    %v1507 = vpop.f32.mrf.mxu0
    %v1508 = vadd.f32 0.0, %v1507
    %1509 = vdwg.mxu0
    %v1510 = vadd.f32 %v1362, %v1448
    %v1511 = vadd.f32 %v1363, %v1468
    %v1512 = vadd.f32 %v1364, %v1488
    %v1513 = vadd.f32 %v1365, %v1508
    %v1514 = vxor.u32 %v1510, 2147483648
    %v1515 = vmul.f32 %v1514, 1.442695
    %v1516 = vpow.pop %v1515
    %v1517 = vadd.f32 %v1516, 1.0
    %v1518 = vrcp.pop %v1517
    %v1519 = vmul.f32 %v1517, %v1518
    %v1520 = vsub.f32 1.0, %v1519
    %v1521 = vmul.f32 %v1518, %v1520
    %v1522 = vadd.f32 %v1518, %v1521
    %vm1523 = vweird.f32 %v1517
    %vm1524 = vweird.f32 %v1518
    %vm1525 = vmor %vm1523, %vm1524
    %v1526 = vsel %vm1525, %v1518, %v1522
    %v1527 = vand.u32 2147483647, %v1517
    %vm1528 = vcmp.eq.f32.partialorder %v1527, 8.507059e+37
    %v1529 = vand.u32 %v1517, 2147483648
    %v1530 = vor.u32 1.1754944e-38, %v1529
    %v1531 = vsel %vm1528, %v1530, %v1526
    %v1532 = vmul.f32 1.0, %v1531
    %v1533 = vxor.u32 %v1511, 2147483648
    %v1534 = vmul.f32 %v1533, 1.442695
    %v1535 = vpow.pop %v1534
    %v1536 = vadd.f32 %v1535, 1.0
    %v1537 = vrcp.pop %v1536
    %v1538 = vmul.f32 %v1536, %v1537
    %v1539 = vsub.f32 1.0, %v1538
    %v1540 = vmul.f32 %v1537, %v1539
    %v1541 = vadd.f32 %v1537, %v1540
    %vm1542 = vweird.f32 %v1536
    %vm1543 = vweird.f32 %v1537
    %vm1544 = vmor %vm1542, %vm1543
    %v1545 = vsel %vm1544, %v1537, %v1541
    %v1546 = vand.u32 2147483647, %v1536
    %vm1547 = vcmp.eq.f32.partialorder %v1546, 8.507059e+37
    %v1548 = vand.u32 %v1536, 2147483648
    %v1549 = vor.u32 1.1754944e-38, %v1548
    %v1550 = vsel %vm1547, %v1549, %v1545
    %v1551 = vmul.f32 1.0, %v1550
    %v1552 = vtanh.pop %v1512
    %v1553 = vxor.u32 %v1513, 2147483648
    %v1554 = vmul.f32 %v1553, 1.442695
    %v1555 = vpow.pop %v1554
    %v1556 = vadd.f32 %v1555, 1.0
    %v1557 = vrcp.pop %v1556
    %v1558 = vmul.f32 %v1556, %v1557
    %v1559 = vsub.f32 1.0, %v1558
    %v1560 = vmul.f32 %v1557, %v1559
    %v1561 = vadd.f32 %v1557, %v1560
    %vm1562 = vweird.f32 %v1556
    %vm1563 = vweird.f32 %v1557
    %vm1564 = vmor %vm1562, %vm1563
    %v1565 = vsel %vm1564, %v1557, %v1561
    %v1566 = vand.u32 2147483647, %v1556
    %vm1567 = vcmp.eq.f32.partialorder %v1566, 8.507059e+37
    %v1568 = vand.u32 %v1556, 2147483648
    %v1569 = vor.u32 1.1754944e-38, %v1568
    %v1570 = vsel %vm1567, %v1569, %v1565
    %v1571 = vmul.f32 1.0, %v1570
    %v1572 = vmul.f32 %v1551, %v1356
    %v1573 = vmul.f32 %v1532, %v1552
    %v1574 = vadd.f32 %v1572, %v1573
    %v1575 = vtanh.pop %v1574
    %v1576 = vmul.f32 %v1571, %v1575
    %s1577 = scalar_lea.vmem [#allocation2], 48
    %1578 = vst [vmem:[%s1577] sm:$0xff] %v1576
    %s1579 = scalar_lea.vmem %s1, 224
    %v1580 = vld [vmem:[%s1579] sm:$0xff]
    %v1581 = vld [vmem:[%s1579 + $0x8] sm:$0xff]
    %v1582 = vld [vmem:[%s1579 + $0x10] sm:$0xff]
    %v1583 = vld [vmem:[%s1579 + $0x18] sm:$0xff]
    %v1584 = vld [vmem:[%s2] sm:$0xff]
    %v1585 = vld [vmem:[%s2 + $0x8] sm:$0xff]
    %v1586 = vld [vmem:[%s2 + $0x10] sm:$0xff]
    %v1587 = vld [vmem:[%s2 + $0x18] sm:$0xff]
    %v1588 = vld [vmem:[%s2 + $0x20] sm:$0xff]
    %v1589 = vld [vmem:[%s2 + $0x28] sm:$0xff]
    %v1590 = vld [vmem:[%s2 + $0x30] sm:$0xff]
    %v1591 = vld [vmem:[%s2 + $0x38] sm:$0xff]
    %v1592 = vld [vmem:[%s2 + $0x40] sm:$0xff]
    %v1593 = vld [vmem:[%s2 + $0x48] sm:$0xff]
    %v1594 = vld [vmem:[%s2 + $0x50] sm:$0xff]
    %v1595 = vld [vmem:[%s2 + $0x58] sm:$0xff]
    %v1596 = vld [vmem:[%s2 + $0x60] sm:$0xff]
    %v1597 = vld [vmem:[%s2 + $0x68] sm:$0xff]
    %v1598 = vld [vmem:[%s2 + $0x70] sm:$0xff]
    %v1599 = vld [vmem:[%s2 + $0x78] sm:$0xff]
    %v1600 = vld [vmem:[%s2 + $0x80] sm:$0xff]
    %v1601 = vld [vmem:[%s2 + $0x88] sm:$0xff]
    %v1602 = vld [vmem:[%s2 + $0x90] sm:$0xff]
    %v1603 = vld [vmem:[%s2 + $0x98] sm:$0xff]
    %v1604 = vld [vmem:[%s2 + $0xa0] sm:$0xff]
    %v1605 = vld [vmem:[%s2 + $0xa8] sm:$0xff]
    %v1606 = vld [vmem:[%s2 + $0xb0] sm:$0xff]
    %v1607 = vld [vmem:[%s2 + $0xb8] sm:$0xff]
    %v1608 = vld [vmem:[%s2 + $0xc0] sm:$0xff]
    %v1609 = vld [vmem:[%s2 + $0xc8] sm:$0xff]
    %v1610 = vld [vmem:[%s2 + $0xd0] sm:$0xff]
    %v1611 = vld [vmem:[%s2 + $0xd8] sm:$0xff]
    %v1612 = vld [vmem:[%s2 + $0xe0] sm:$0xff]
    %v1613 = vld [vmem:[%s2 + $0xe8] sm:$0xff]
    %v1614 = vld [vmem:[%s2 + $0xf0] sm:$0xff]
    %v1615 = vld [vmem:[%s2 + $0xf8] sm:$0xff]
    %v1616 = vld [vmem:[%s2 + $0x100] sm:$0xff]
    %v1617 = vld [vmem:[%s2 + $0x108] sm:$0xff]
    %v1618 = vld [vmem:[%s2 + $0x110] sm:$0xff]
    %v1619 = vld [vmem:[%s2 + $0x118] sm:$0xff]
    %v1620 = vld [vmem:[%s2 + $0x120] sm:$0xff]
    %v1621 = vld [vmem:[%s2 + $0x128] sm:$0xff]
    %v1622 = vld [vmem:[%s2 + $0x130] sm:$0xff]
    %v1623 = vld [vmem:[%s2 + $0x138] sm:$0xff]
    %v1624 = vld [vmem:[%s2 + $0x140] sm:$0xff]
    %v1625 = vld [vmem:[%s2 + $0x148] sm:$0xff]
    %v1626 = vld [vmem:[%s2 + $0x150] sm:$0xff]
    %v1627 = vld [vmem:[%s2 + $0x158] sm:$0xff]
    %v1628 = vld [vmem:[%s2 + $0x160] sm:$0xff]
    %v1629 = vld [vmem:[%s2 + $0x168] sm:$0xff]
    %v1630 = vld [vmem:[%s2 + $0x170] sm:$0xff]
    %v1631 = vld [vmem:[%s2 + $0x178] sm:$0xff]
    %v1632 = vld [vmem:[%s2 + $0x180] sm:$0xff]
    %v1633 = vld [vmem:[%s2 + $0x188] sm:$0xff]
    %v1634 = vld [vmem:[%s2 + $0x190] sm:$0xff]
    %v1635 = vld [vmem:[%s2 + $0x198] sm:$0xff]
    %v1636 = vld [vmem:[%s2 + $0x1a0] sm:$0xff]
    %v1637 = vld [vmem:[%s2 + $0x1a8] sm:$0xff]
    %v1638 = vld [vmem:[%s2 + $0x1b0] sm:$0xff]
    %v1639 = vld [vmem:[%s2 + $0x1b8] sm:$0xff]
    %v1640 = vld [vmem:[%s2 + $0x1c0] sm:$0xff]
    %v1641 = vld [vmem:[%s2 + $0x1c8] sm:$0xff]
    %v1642 = vld [vmem:[%s2 + $0x1d0] sm:$0xff]
    %v1643 = vld [vmem:[%s2 + $0x1d8] sm:$0xff]
    %v1644 = vld [vmem:[%s2 + $0x1e0] sm:$0xff]
    %v1645 = vld [vmem:[%s2 + $0x1e8] sm:$0xff]
    %v1646 = vld [vmem:[%s2 + $0x1f0] sm:$0xff]
    %v1647 = vld [vmem:[%s2 + $0x1f8] sm:$0xff]
    %1648 = vmatpush.msra.mxu0 %v1644
    %1649 = vmatpush.msra.mxu0 %v1640
    %1650 = vmatpush.msra.mxu0 %v1636
    %1651 = vmatpush.msra.mxu0 %v1632
    %1652 = vmatpush.msra.mxu0 %v1628
    %1653 = vmatpush.msra.mxu0 %v1624
    %1654 = vmatpush.msra.mxu0 %v1620
    %1655 = vmatpush.msra.mxu0 %v1616
    %1656 = vmatpush.msra.mxu0 %v1612
    %1657 = vmatpush.msra.mxu0 %v1608
    %1658 = vmatpush.msra.mxu0 %v1604
    %1659 = vmatpush.msra.mxu0 %v1600
    %1660 = vmatpush.msra.mxu0 %v1596
    %1661 = vmatpush.msra.mxu0 %v1592
    %1662 = vmatpush.msra.mxu0 %v1588
    %1663 = vmatpush.msra.mxu0 %v1584
    %1664 = vmatmul.f32.gmra.mxu0 %v1576
    %v1665 = vpop.f32.mrf.mxu0
    %v1666 = vadd.f32 0.0, %v1665
    %1667 = vdwg.mxu0
    %1668 = vmatpush.msra.mxu0 %v1645
    %1669 = vmatpush.msra.mxu0 %v1641
    %1670 = vmatpush.msra.mxu0 %v1637
    %1671 = vmatpush.msra.mxu0 %v1633
    %1672 = vmatpush.msra.mxu0 %v1629
    %1673 = vmatpush.msra.mxu0 %v1625
    %1674 = vmatpush.msra.mxu0 %v1621
    %1675 = vmatpush.msra.mxu0 %v1617
    %1676 = vmatpush.msra.mxu0 %v1613
    %1677 = vmatpush.msra.mxu0 %v1609
    %1678 = vmatpush.msra.mxu0 %v1605
    %1679 = vmatpush.msra.mxu0 %v1601
    %1680 = vmatpush.msra.mxu0 %v1597
    %1681 = vmatpush.msra.mxu0 %v1593
    %1682 = vmatpush.msra.mxu0 %v1589
    %1683 = vmatpush.msra.mxu0 %v1585
    %1684 = vmatmul.f32.gmra.mxu0 %v1576
    %v1685 = vpop.f32.mrf.mxu0
    %v1686 = vadd.f32 0.0, %v1685
    %1687 = vdwg.mxu0
    %1688 = vmatpush.msra.mxu0 %v1646
    %1689 = vmatpush.msra.mxu0 %v1642
    %1690 = vmatpush.msra.mxu0 %v1638
    %1691 = vmatpush.msra.mxu0 %v1634
    %1692 = vmatpush.msra.mxu0 %v1630
    %1693 = vmatpush.msra.mxu0 %v1626
    %1694 = vmatpush.msra.mxu0 %v1622
    %1695 = vmatpush.msra.mxu0 %v1618
    %1696 = vmatpush.msra.mxu0 %v1614
    %1697 = vmatpush.msra.mxu0 %v1610
    %1698 = vmatpush.msra.mxu0 %v1606
    %1699 = vmatpush.msra.mxu0 %v1602
    %1700 = vmatpush.msra.mxu0 %v1598
    %1701 = vmatpush.msra.mxu0 %v1594
    %1702 = vmatpush.msra.mxu0 %v1590
    %1703 = vmatpush.msra.mxu0 %v1586
    %1704 = vmatmul.f32.gmra.mxu0 %v1576
    %v1705 = vpop.f32.mrf.mxu0
    %v1706 = vadd.f32 0.0, %v1705
    %1707 = vdwg.mxu0
    %1708 = vmatpush.msra.mxu0 %v1647
    %1709 = vmatpush.msra.mxu0 %v1643
    %1710 = vmatpush.msra.mxu0 %v1639
    %1711 = vmatpush.msra.mxu0 %v1635
    %1712 = vmatpush.msra.mxu0 %v1631
    %1713 = vmatpush.msra.mxu0 %v1627
    %1714 = vmatpush.msra.mxu0 %v1623
    %1715 = vmatpush.msra.mxu0 %v1619
    %1716 = vmatpush.msra.mxu0 %v1615
    %1717 = vmatpush.msra.mxu0 %v1611
    %1718 = vmatpush.msra.mxu0 %v1607
    %1719 = vmatpush.msra.mxu0 %v1603
    %1720 = vmatpush.msra.mxu0 %v1599
    %1721 = vmatpush.msra.mxu0 %v1595
    %1722 = vmatpush.msra.mxu0 %v1591
    %1723 = vmatpush.msra.mxu0 %v1587
    %1724 = vmatmul.f32.gmra.mxu0 %v1576
    %v1725 = vpop.f32.mrf.mxu0
    %v1726 = vadd.f32 0.0, %v1725
    %1727 = vdwg.mxu0
    %v1728 = vadd.f32 %v1580, %v1666
    %v1729 = vadd.f32 %v1581, %v1686
    %v1730 = vadd.f32 %v1582, %v1706
    %v1731 = vadd.f32 %v1583, %v1726
    %v1732 = vxor.u32 %v1728, 2147483648
    %v1733 = vmul.f32 %v1732, 1.442695
    %v1734 = vpow.pop %v1733
    %v1735 = vadd.f32 %v1734, 1.0
    %v1736 = vrcp.pop %v1735
    %v1737 = vmul.f32 %v1735, %v1736
    %v1738 = vsub.f32 1.0, %v1737
    %v1739 = vmul.f32 %v1736, %v1738
    %v1740 = vadd.f32 %v1736, %v1739
    %vm1741 = vweird.f32 %v1735
    %vm1742 = vweird.f32 %v1736
    %vm1743 = vmor %vm1741, %vm1742
    %v1744 = vsel %vm1743, %v1736, %v1740
    %v1745 = vand.u32 2147483647, %v1735
    %vm1746 = vcmp.eq.f32.partialorder %v1745, 8.507059e+37
    %v1747 = vand.u32 %v1735, 2147483648
    %v1748 = vor.u32 1.1754944e-38, %v1747
    %v1749 = vsel %vm1746, %v1748, %v1744
    %v1750 = vmul.f32 1.0, %v1749
    %v1751 = vxor.u32 %v1729, 2147483648
    %v1752 = vmul.f32 %v1751, 1.442695
    %v1753 = vpow.pop %v1752
    %v1754 = vadd.f32 %v1753, 1.0
    %v1755 = vrcp.pop %v1754
    %v1756 = vmul.f32 %v1754, %v1755
    %v1757 = vsub.f32 1.0, %v1756
    %v1758 = vmul.f32 %v1755, %v1757
    %v1759 = vadd.f32 %v1755, %v1758
    %vm1760 = vweird.f32 %v1754
    %vm1761 = vweird.f32 %v1755
    %vm1762 = vmor %vm1760, %vm1761
    %v1763 = vsel %vm1762, %v1755, %v1759
    %v1764 = vand.u32 2147483647, %v1754
    %vm1765 = vcmp.eq.f32.partialorder %v1764, 8.507059e+37
    %v1766 = vand.u32 %v1754, 2147483648
    %v1767 = vor.u32 1.1754944e-38, %v1766
    %v1768 = vsel %vm1765, %v1767, %v1763
    %v1769 = vmul.f32 1.0, %v1768
    %v1770 = vtanh.pop %v1730
    %v1771 = vxor.u32 %v1731, 2147483648
    %v1772 = vmul.f32 %v1771, 1.442695
    %v1773 = vpow.pop %v1772
    %v1774 = vadd.f32 %v1773, 1.0
    %v1775 = vrcp.pop %v1774
    %v1776 = vmul.f32 %v1774, %v1775
    %v1777 = vsub.f32 1.0, %v1776
    %v1778 = vmul.f32 %v1775, %v1777
    %v1779 = vadd.f32 %v1775, %v1778
    %vm1780 = vweird.f32 %v1774
    %vm1781 = vweird.f32 %v1775
    %vm1782 = vmor %vm1780, %vm1781
    %v1783 = vsel %vm1782, %v1775, %v1779
    %v1784 = vand.u32 2147483647, %v1774
    %vm1785 = vcmp.eq.f32.partialorder %v1784, 8.507059e+37
    %v1786 = vand.u32 %v1774, 2147483648
    %v1787 = vor.u32 1.1754944e-38, %v1786
    %v1788 = vsel %vm1785, %v1787, %v1783
    %v1789 = vmul.f32 1.0, %v1788
    %v1790 = vmul.f32 %v1769, %v1574
    %v1791 = vmul.f32 %v1750, %v1770
    %v1792 = vadd.f32 %v1790, %v1791
    %v1793 = vtanh.pop %v1792
    %v1794 = vmul.f32 %v1789, %v1793
    %s1795 = scalar_lea.vmem [#allocation2], 56
    %1796 = vst [vmem:[%s1795] sm:$0xff] %v1794
    %s1797 = sld [smem:[#allocation4]]
    %p1798 = scmp.ne.s32.totalorder %s1797, 0
    %s1799 = scalar_select %p1798, 1, 0
    %s1800 = scvt.s32.f32 %s1799
    %v1801 = vld [vmem:[%s4] sm:$0xff]
    %v1802 = vld [vmem:[%s4 + $0x8] sm:$0xff]
    %v1803 = vld [vmem:[%s4 + $0x10] sm:$0xff]
    %v1804 = vld [vmem:[%s4 + $0x18] sm:$0xff]
    %v1805 = vld [vmem:[%s4 + $0x20] sm:$0xff]
    %v1806 = vld [vmem:[%s4 + $0x28] sm:$0xff]
    %v1807 = vld [vmem:[%s4 + $0x30] sm:$0xff]
    %v1808 = vld [vmem:[%s4 + $0x38] sm:$0xff]
    %v1809 = vld [vmem:[%s4 + $0x40] sm:$0xff]
    %v1810 = vld [vmem:[%s4 + $0x48] sm:$0xff]
    %v1811 = vld [vmem:[%s4 + $0x50] sm:$0xff]
    %v1812 = vld [vmem:[%s4 + $0x58] sm:$0xff]
    %v1813 = vld [vmem:[%s4 + $0x60] sm:$0xff]
    %v1814 = vld [vmem:[%s4 + $0x68] sm:$0xff]
    %v1815 = vld [vmem:[%s4 + $0x70] sm:$0xff]
    %v1816 = vld [vmem:[%s4 + $0x78] sm:$0xff]
    %1817 = vmatpush.msra.mxu0 %v1816
    %1818 = vmatpush.msra.mxu0 %v1815
    %1819 = vmatpush.msra.mxu0 %v1814
    %1820 = vmatpush.msra.mxu0 %v1813
    %1821 = vmatpush.msra.mxu0 %v1812
    %1822 = vmatpush.msra.mxu0 %v1811
    %1823 = vmatpush.msra.mxu0 %v1810
    %1824 = vmatpush.msra.mxu0 %v1809
    %1825 = vmatpush.msra.mxu0 %v1808
    %1826 = vmatpush.msra.mxu0 %v1807
    %1827 = vmatpush.msra.mxu0 %v1806
    %1828 = vmatpush.msra.mxu0 %v1805
    %1829 = vmatpush.msra.mxu0 %v1804
    %1830 = vmatpush.msra.mxu0 %v1803
    %1831 = vmatpush.msra.mxu0 %v1802
    %1832 = vmatpush.msra.mxu0 %v1801
    %1833 = vmatmul.f32.gmra.mxu0 0.0
    %v1834 = vpop.f32.mrf.mxu0
    %v1835 = vadd.f32 0.0, %v1834
    %1836 = vdwg.mxu0
    %v1837 = vld [vmem:[%s3] sm:$0xff]
    %v1838 = vstv %s1800
    %v1839 = vmul.f32 %v1838, %v1837
    %s1840 = ssub.f32 1.0, %s1800
    %v1841 = vstv %s1840
    %v1842 = vmul.f32 %v1841, %v1835
    %v1843 = vadd.f32 %v1839, %v1842
    %v1844 = vld [vmem:[#allocation5] sm:$0xff]
    %v1845 = vld [vmem:[#allocation5 + $0x8] sm:$0xff]
    %v1846 = vld [vmem:[#allocation5 + $0x10] sm:$0xff]
    %v1847 = vld [vmem:[#allocation5 + $0x18] sm:$0xff]
    %v1848 = vld [vmem:[#allocation5 + $0x20] sm:$0xff]
    %v1849 = vld [vmem:[#allocation5 + $0x28] sm:$0xff]
    %v1850 = vld [vmem:[#allocation5 + $0x30] sm:$0xff]
    %v1851 = vld [vmem:[#allocation5 + $0x38] sm:$0xff]
    %v1852 = vld [vmem:[#allocation5 + $0x40] sm:$0xff]
    %v1853 = vld [vmem:[#allocation5 + $0x48] sm:$0xff]
    %v1854 = vld [vmem:[#allocation5 + $0x50] sm:$0xff]
    %v1855 = vld [vmem:[#allocation5 + $0x58] sm:$0xff]
    %v1856 = vld [vmem:[#allocation5 + $0x60] sm:$0xff]
    %v1857 = vld [vmem:[#allocation5 + $0x68] sm:$0xff]
    %v1858 = vld [vmem:[#allocation5 + $0x70] sm:$0xff]
    %v1859 = vld [vmem:[#allocation5 + $0x78] sm:$0xff]
    %v1860 = vld [vmem:[#allocation5 + $0x80] sm:$0xff]
    %v1861 = vld [vmem:[#allocation5 + $0x88] sm:$0xff]
    %v1862 = vld [vmem:[#allocation5 + $0x90] sm:$0xff]
    %v1863 = vld [vmem:[#allocation5 + $0x98] sm:$0xff]
    %v1864 = vld [vmem:[#allocation5 + $0xa0] sm:$0xff]
    %v1865 = vld [vmem:[#allocation5 + $0xa8] sm:$0xff]
    %v1866 = vld [vmem:[#allocation5 + $0xb0] sm:$0xff]
    %v1867 = vld [vmem:[#allocation5 + $0xb8] sm:$0xff]
    %v1868 = vld [vmem:[#allocation5 + $0xc0] sm:$0xff]
    %v1869 = vld [vmem:[#allocation5 + $0xc8] sm:$0xff]
    %v1870 = vld [vmem:[#allocation5 + $0xd0] sm:$0xff]
    %v1871 = vld [vmem:[#allocation5 + $0xd8] sm:$0xff]
    %v1872 = vld [vmem:[#allocation5 + $0xe0] sm:$0xff]
    %v1873 = vld [vmem:[#allocation5 + $0xe8] sm:$0xff]
    %v1874 = vld [vmem:[#allocation5 + $0xf0] sm:$0xff]
    %v1875 = vld [vmem:[#allocation5 + $0xf8] sm:$0xff]
    %v1876 = vld [vmem:[#allocation5 + $0x100] sm:$0xff]
    %v1877 = vld [vmem:[#allocation5 + $0x108] sm:$0xff]
    %v1878 = vld [vmem:[#allocation5 + $0x110] sm:$0xff]
    %v1879 = vld [vmem:[#allocation5 + $0x118] sm:$0xff]
    %v1880 = vld [vmem:[#allocation5 + $0x120] sm:$0xff]
    %v1881 = vld [vmem:[#allocation5 + $0x128] sm:$0xff]
    %v1882 = vld [vmem:[#allocation5 + $0x130] sm:$0xff]
    %v1883 = vld [vmem:[#allocation5 + $0x138] sm:$0xff]
    %v1884 = vld [vmem:[#allocation5 + $0x140] sm:$0xff]
    %v1885 = vld [vmem:[#allocation5 + $0x148] sm:$0xff]
    %v1886 = vld [vmem:[#allocation5 + $0x150] sm:$0xff]
    %v1887 = vld [vmem:[#allocation5 + $0x158] sm:$0xff]
    %v1888 = vld [vmem:[#allocation5 + $0x160] sm:$0xff]
    %v1889 = vld [vmem:[#allocation5 + $0x168] sm:$0xff]
    %v1890 = vld [vmem:[#allocation5 + $0x170] sm:$0xff]
    %v1891 = vld [vmem:[#allocation5 + $0x178] sm:$0xff]
    %v1892 = vld [vmem:[#allocation5 + $0x180] sm:$0xff]
    %v1893 = vld [vmem:[#allocation5 + $0x188] sm:$0xff]
    %v1894 = vld [vmem:[#allocation5 + $0x190] sm:$0xff]
    %v1895 = vld [vmem:[#allocation5 + $0x198] sm:$0xff]
    %v1896 = vld [vmem:[#allocation5 + $0x1a0] sm:$0xff]
    %v1897 = vld [vmem:[#allocation5 + $0x1a8] sm:$0xff]
    %v1898 = vld [vmem:[#allocation5 + $0x1b0] sm:$0xff]
    %v1899 = vld [vmem:[#allocation5 + $0x1b8] sm:$0xff]
    %v1900 = vld [vmem:[#allocation5 + $0x1c0] sm:$0xff]
    %v1901 = vld [vmem:[#allocation5 + $0x1c8] sm:$0xff]
    %v1902 = vld [vmem:[#allocation5 + $0x1d0] sm:$0xff]
    %v1903 = vld [vmem:[#allocation5 + $0x1d8] sm:$0xff]
    %v1904 = vld [vmem:[#allocation5 + $0x1e0] sm:$0xff]
    %v1905 = vld [vmem:[#allocation5 + $0x1e8] sm:$0xff]
    %v1906 = vld [vmem:[#allocation5 + $0x1f0] sm:$0xff]
    %v1907 = vld [vmem:[#allocation5 + $0x1f8] sm:$0xff]
    %v1908 = vld [vmem:[#allocation5 + $0x200] sm:$0xff]
    %v1909 = vld [vmem:[#allocation5 + $0x208] sm:$0xff]
    %v1910 = vld [vmem:[#allocation5 + $0x210] sm:$0xff]
    %v1911 = vld [vmem:[#allocation5 + $0x218] sm:$0xff]
    %v1912 = vld [vmem:[#allocation5 + $0x220] sm:$0xff]
    %v1913 = vld [vmem:[#allocation5 + $0x228] sm:$0xff]
    %v1914 = vld [vmem:[#allocation5 + $0x230] sm:$0xff]
    %v1915 = vld [vmem:[#allocation5 + $0x238] sm:$0xff]
    %v1916 = vld [vmem:[#allocation5 + $0x240] sm:$0xff]
    %v1917 = vld [vmem:[#allocation5 + $0x248] sm:$0xff]
    %v1918 = vld [vmem:[#allocation5 + $0x250] sm:$0xff]
    %v1919 = vld [vmem:[#allocation5 + $0x258] sm:$0xff]
    %v1920 = vld [vmem:[#allocation5 + $0x260] sm:$0xff]
    %v1921 = vld [vmem:[#allocation5 + $0x268] sm:$0xff]
    %v1922 = vld [vmem:[#allocation5 + $0x270] sm:$0xff]
    %v1923 = vld [vmem:[#allocation5 + $0x278] sm:$0xff]
    %v1924 = vld [vmem:[#allocation5 + $0x280] sm:$0xff]
    %v1925 = vld [vmem:[#allocation5 + $0x288] sm:$0xff]
    %v1926 = vld [vmem:[#allocation5 + $0x290] sm:$0xff]
    %v1927 = vld [vmem:[#allocation5 + $0x298] sm:$0xff]
    %v1928 = vld [vmem:[#allocation5 + $0x2a0] sm:$0xff]
    %v1929 = vld [vmem:[#allocation5 + $0x2a8] sm:$0xff]
    %v1930 = vld [vmem:[#allocation5 + $0x2b0] sm:$0xff]
    %v1931 = vld [vmem:[#allocation5 + $0x2b8] sm:$0xff]
    %v1932 = vld [vmem:[#allocation5 + $0x2c0] sm:$0xff]
    %v1933 = vld [vmem:[#allocation5 + $0x2c8] sm:$0xff]
    %v1934 = vld [vmem:[#allocation5 + $0x2d0] sm:$0xff]
    %v1935 = vld [vmem:[#allocation5 + $0x2d8] sm:$0xff]
    %v1936 = vld [vmem:[#allocation5 + $0x2e0] sm:$0xff]
    %v1937 = vld [vmem:[#allocation5 + $0x2e8] sm:$0xff]
    %v1938 = vld [vmem:[#allocation5 + $0x2f0] sm:$0xff]
    %v1939 = vld [vmem:[#allocation5 + $0x2f8] sm:$0xff]
    %v1940 = vld [vmem:[#allocation5 + $0x300] sm:$0xff]
    %v1941 = vld [vmem:[#allocation5 + $0x308] sm:$0xff]
    %v1942 = vld [vmem:[#allocation5 + $0x310] sm:$0xff]
    %v1943 = vld [vmem:[#allocation5 + $0x318] sm:$0xff]
    %v1944 = vld [vmem:[#allocation5 + $0x320] sm:$0xff]
    %v1945 = vld [vmem:[#allocation5 + $0x328] sm:$0xff]
    %v1946 = vld [vmem:[#allocation5 + $0x330] sm:$0xff]
    %v1947 = vld [vmem:[#allocation5 + $0x338] sm:$0xff]
    %v1948 = vld [vmem:[#allocation5 + $0x340] sm:$0xff]
    %v1949 = vld [vmem:[#allocation5 + $0x348] sm:$0xff]
    %v1950 = vld [vmem:[#allocation5 + $0x350] sm:$0xff]
    %v1951 = vld [vmem:[#allocation5 + $0x358] sm:$0xff]
    %v1952 = vld [vmem:[#allocation5 + $0x360] sm:$0xff]
    %v1953 = vld [vmem:[#allocation5 + $0x368] sm:$0xff]
    %v1954 = vld [vmem:[#allocation5 + $0x370] sm:$0xff]
    %v1955 = vld [vmem:[#allocation5 + $0x378] sm:$0xff]
    %v1956 = vld [vmem:[#allocation5 + $0x380] sm:$0xff]
    %v1957 = vld [vmem:[#allocation5 + $0x388] sm:$0xff]
    %v1958 = vld [vmem:[#allocation5 + $0x390] sm:$0xff]
    %v1959 = vld [vmem:[#allocation5 + $0x398] sm:$0xff]
    %v1960 = vld [vmem:[#allocation5 + $0x3a0] sm:$0xff]
    %v1961 = vld [vmem:[#allocation5 + $0x3a8] sm:$0xff]
    %v1962 = vld [vmem:[#allocation5 + $0x3b0] sm:$0xff]
    %v1963 = vld [vmem:[#allocation5 + $0x3b8] sm:$0xff]
    %v1964 = vld [vmem:[#allocation5 + $0x3c0] sm:$0xff]
    %v1965 = vld [vmem:[#allocation5 + $0x3c8] sm:$0xff]
    %v1966 = vld [vmem:[#allocation5 + $0x3d0] sm:$0xff]
    %v1967 = vld [vmem:[#allocation5 + $0x3d8] sm:$0xff]
    %v1968 = vld [vmem:[#allocation5 + $0x3e0] sm:$0xff]
    %v1969 = vld [vmem:[#allocation5 + $0x3e8] sm:$0xff]
    %v1970 = vld [vmem:[#allocation5 + $0x3f0] sm:$0xff]
    %v1971 = vld [vmem:[#allocation5 + $0x3f8] sm:$0xff]
    %v1972 = vld [vmem:[%s6] sm:$0xf]
    %v1974 = vperm.slane %v1972, 0
    %v1975 = vperm.slane %v1972, 1
    %v1976 = vperm.slane %v1972, 2
    %v1977 = vperm.slane %v1972, 3
    %1982 = vmatpush.msra.mxu0 %v1904
    %1983 = vmatpush.msra.mxu0 %v1900
    %1984 = vmatpush.msra.mxu0 %v1896
    %1985 = vmatpush.msra.mxu0 %v1892
    %1986 = vmatpush.msra.mxu0 %v1888
    %1987 = vmatpush.msra.mxu0 %v1884
    %1988 = vmatpush.msra.mxu0 %v1880
    %1989 = vmatpush.msra.mxu0 %v1876
    %1990 = vmatpush.msra.mxu0 %v1872
    %1991 = vmatpush.msra.mxu0 %v1868
    %1992 = vmatpush.msra.mxu0 %v1864
    %1993 = vmatpush.msra.mxu0 %v1860
    %1994 = vmatpush.msra.mxu0 %v1856
    %1995 = vmatpush.msra.mxu0 %v1852
    %1996 = vmatpush.msra.mxu0 %v1848
    %1997 = vmatpush.msra.mxu0 %v1844
    %1998 = vmatmul.f32.gmra.mxu0 %v1843
    %v1999 = vpop.f32.mrf.mxu0
    %v2000 = vadd.f32 %v1974, %v1999
    %2001 = vdwg.mxu0
    %2002 = vmatpush.msra.mxu0 %v1968
    %2003 = vmatpush.msra.mxu0 %v1964
    %2004 = vmatpush.msra.mxu0 %v1960
    %2005 = vmatpush.msra.mxu0 %v1956
    %2006 = vmatpush.msra.mxu0 %v1952
    %2007 = vmatpush.msra.mxu0 %v1948
    %2008 = vmatpush.msra.mxu0 %v1944
    %2009 = vmatpush.msra.mxu0 %v1940
    %2010 = vmatpush.msra.mxu0 %v1936
    %2011 = vmatpush.msra.mxu0 %v1932
    %2012 = vmatpush.msra.mxu0 %v1928
    %2013 = vmatpush.msra.mxu0 %v1924
    %2014 = vmatpush.msra.mxu0 %v1920
    %2015 = vmatpush.msra.mxu0 %v1916
    %2016 = vmatpush.msra.mxu0 %v1912
    %2017 = vmatpush.msra.mxu0 %v1908
    %2018 = vmatmul.f32.gmra.mxu0 %v1794
    %v2019 = vpop.f32.mrf.mxu0
    %v2020 = vadd.f32 %v2000, %v2019
    %2021 = vdwg.mxu0
    %2022 = vmatpush.msra.mxu0 %v1905
    %2023 = vmatpush.msra.mxu0 %v1901
    %2024 = vmatpush.msra.mxu0 %v1897
    %2025 = vmatpush.msra.mxu0 %v1893
    %2026 = vmatpush.msra.mxu0 %v1889
    %2027 = vmatpush.msra.mxu0 %v1885
    %2028 = vmatpush.msra.mxu0 %v1881
    %2029 = vmatpush.msra.mxu0 %v1877
    %2030 = vmatpush.msra.mxu0 %v1873
    %2031 = vmatpush.msra.mxu0 %v1869
    %2032 = vmatpush.msra.mxu0 %v1865
    %2033 = vmatpush.msra.mxu0 %v1861
    %2034 = vmatpush.msra.mxu0 %v1857
    %2035 = vmatpush.msra.mxu0 %v1853
    %2036 = vmatpush.msra.mxu0 %v1849
    %2037 = vmatpush.msra.mxu0 %v1845
    %2038 = vmatmul.f32.gmra.mxu0 %v1843
    %v2039 = vpop.f32.mrf.mxu0
    %v2040 = vadd.f32 %v1975, %v2039
    %2041 = vdwg.mxu0
    %2042 = vmatpush.msra.mxu0 %v1969
    %2043 = vmatpush.msra.mxu0 %v1965
    %2044 = vmatpush.msra.mxu0 %v1961
    %2045 = vmatpush.msra.mxu0 %v1957
    %2046 = vmatpush.msra.mxu0 %v1953
    %2047 = vmatpush.msra.mxu0 %v1949
    %2048 = vmatpush.msra.mxu0 %v1945
    %2049 = vmatpush.msra.mxu0 %v1941
    %2050 = vmatpush.msra.mxu0 %v1937
    %2051 = vmatpush.msra.mxu0 %v1933
    %2052 = vmatpush.msra.mxu0 %v1929
    %2053 = vmatpush.msra.mxu0 %v1925
    %2054 = vmatpush.msra.mxu0 %v1921
    %2055 = vmatpush.msra.mxu0 %v1917
    %2056 = vmatpush.msra.mxu0 %v1913
    %2057 = vmatpush.msra.mxu0 %v1909
    %2058 = vmatmul.f32.gmra.mxu0 %v1794
    %v2059 = vpop.f32.mrf.mxu0
    %v2060 = vadd.f32 %v2040, %v2059
    %2061 = vdwg.mxu0
    %2062 = vmatpush.msra.mxu0 %v1906
    %2063 = vmatpush.msra.mxu0 %v1902
    %2064 = vmatpush.msra.mxu0 %v1898
    %2065 = vmatpush.msra.mxu0 %v1894
    %2066 = vmatpush.msra.mxu0 %v1890
    %2067 = vmatpush.msra.mxu0 %v1886
    %2068 = vmatpush.msra.mxu0 %v1882
    %2069 = vmatpush.msra.mxu0 %v1878
    %2070 = vmatpush.msra.mxu0 %v1874
    %2071 = vmatpush.msra.mxu0 %v1870
    %2072 = vmatpush.msra.mxu0 %v1866
    %2073 = vmatpush.msra.mxu0 %v1862
    %2074 = vmatpush.msra.mxu0 %v1858
    %2075 = vmatpush.msra.mxu0 %v1854
    %2076 = vmatpush.msra.mxu0 %v1850
    %2077 = vmatpush.msra.mxu0 %v1846
    %2078 = vmatmul.f32.gmra.mxu0 %v1843
    %v2079 = vpop.f32.mrf.mxu0
    %v2080 = vadd.f32 %v1976, %v2079
    %2081 = vdwg.mxu0
    %2082 = vmatpush.msra.mxu0 %v1970
    %2083 = vmatpush.msra.mxu0 %v1966
    %2084 = vmatpush.msra.mxu0 %v1962
    %2085 = vmatpush.msra.mxu0 %v1958
    %2086 = vmatpush.msra.mxu0 %v1954
    %2087 = vmatpush.msra.mxu0 %v1950
    %2088 = vmatpush.msra.mxu0 %v1946
    %2089 = vmatpush.msra.mxu0 %v1942
    %2090 = vmatpush.msra.mxu0 %v1938
    %2091 = vmatpush.msra.mxu0 %v1934
    %2092 = vmatpush.msra.mxu0 %v1930
    %2093 = vmatpush.msra.mxu0 %v1926
    %2094 = vmatpush.msra.mxu0 %v1922
    %2095 = vmatpush.msra.mxu0 %v1918
    %2096 = vmatpush.msra.mxu0 %v1914
    %2097 = vmatpush.msra.mxu0 %v1910
    %2098 = vmatmul.f32.gmra.mxu0 %v1794
    %v2099 = vpop.f32.mrf.mxu0
    %v2100 = vadd.f32 %v2080, %v2099
    %2101 = vdwg.mxu0
    %2102 = vmatpush.msra.mxu0 %v1907
    %2103 = vmatpush.msra.mxu0 %v1903
    %2104 = vmatpush.msra.mxu0 %v1899
    %2105 = vmatpush.msra.mxu0 %v1895
    %2106 = vmatpush.msra.mxu0 %v1891
    %2107 = vmatpush.msra.mxu0 %v1887
    %2108 = vmatpush.msra.mxu0 %v1883
    %2109 = vmatpush.msra.mxu0 %v1879
    %2110 = vmatpush.msra.mxu0 %v1875
    %2111 = vmatpush.msra.mxu0 %v1871
    %2112 = vmatpush.msra.mxu0 %v1867
    %2113 = vmatpush.msra.mxu0 %v1863
    %2114 = vmatpush.msra.mxu0 %v1859
    %2115 = vmatpush.msra.mxu0 %v1855
    %2116 = vmatpush.msra.mxu0 %v1851
    %2117 = vmatpush.msra.mxu0 %v1847
    %2118 = vmatmul.f32.gmra.mxu0 %v1843
    %v2119 = vpop.f32.mrf.mxu0
    %v2120 = vadd.f32 %v1977, %v2119
    %2121 = vdwg.mxu0
    %2122 = vmatpush.msra.mxu0 %v1971
    %2123 = vmatpush.msra.mxu0 %v1967
    %2124 = vmatpush.msra.mxu0 %v1963
    %2125 = vmatpush.msra.mxu0 %v1959
    %2126 = vmatpush.msra.mxu0 %v1955
    %2127 = vmatpush.msra.mxu0 %v1951
    %2128 = vmatpush.msra.mxu0 %v1947
    %2129 = vmatpush.msra.mxu0 %v1943
    %2130 = vmatpush.msra.mxu0 %v1939
    %2131 = vmatpush.msra.mxu0 %v1935
    %2132 = vmatpush.msra.mxu0 %v1931
    %2133 = vmatpush.msra.mxu0 %v1927
    %2134 = vmatpush.msra.mxu0 %v1923
    %2135 = vmatpush.msra.mxu0 %v1919
    %2136 = vmatpush.msra.mxu0 %v1915
    %2137 = vmatpush.msra.mxu0 %v1911
    %2138 = vmatmul.f32.gmra.mxu0 %v1794
    %v2139 = vpop.f32.mrf.mxu0
    %v2140 = vadd.f32 %v2120, %v2139
    %2141 = vdwg.mxu0
    %v2142 = vxor.u32 %v2020, 2147483648
    %v2143 = vmul.f32 %v2142, 1.442695
    %v2144 = vpow.pop %v2143
    %v2145 = vadd.f32 %v2144, 1.0
    %v2146 = vrcp.pop %v2145
    %v2147 = vmul.f32 %v2145, %v2146
    %v2148 = vsub.f32 1.0, %v2147
    %v2149 = vmul.f32 %v2146, %v2148
    %v2150 = vadd.f32 %v2146, %v2149
    %vm2151 = vweird.f32 %v2145
    %vm2152 = vweird.f32 %v2146
    %vm2153 = vmor %vm2151, %vm2152
    %v2154 = vsel %vm2153, %v2146, %v2150
    %v2155 = vand.u32 2147483647, %v2145
    %vm2156 = vcmp.eq.f32.partialorder %v2155, 8.507059e+37
    %v2157 = vand.u32 %v2145, 2147483648
    %v2158 = vor.u32 1.1754944e-38, %v2157
    %v2159 = vsel %vm2156, %v2158, %v2154
    %v2160 = vmul.f32 1.0, %v2159
    %v2161 = vxor.u32 %v2060, 2147483648
    %v2162 = vmul.f32 %v2161, 1.442695
    %v2163 = vpow.pop %v2162
    %v2164 = vadd.f32 %v2163, 1.0
    %v2165 = vrcp.pop %v2164
    %v2166 = vmul.f32 %v2164, %v2165
    %v2167 = vsub.f32 1.0, %v2166
    %v2168 = vmul.f32 %v2165, %v2167
    %v2169 = vadd.f32 %v2165, %v2168
    %vm2170 = vweird.f32 %v2164
    %vm2171 = vweird.f32 %v2165
    %vm2172 = vmor %vm2170, %vm2171
    %v2173 = vsel %vm2172, %v2165, %v2169
    %v2174 = vand.u32 2147483647, %v2164
    %vm2175 = vcmp.eq.f32.partialorder %v2174, 8.507059e+37
    %v2176 = vand.u32 %v2164, 2147483648
    %v2177 = vor.u32 1.1754944e-38, %v2176
    %v2178 = vsel %vm2175, %v2177, %v2173
    %v2179 = vmul.f32 1.0, %v2178
    %v2180 = vtanh.pop %v2100
    %v2181 = vxor.u32 %v2140, 2147483648
    %v2182 = vmul.f32 %v2181, 1.442695
    %v2183 = vpow.pop %v2182
    %v2184 = vadd.f32 %v2183, 1.0
    %v2185 = vrcp.pop %v2184
    %v2186 = vmul.f32 %v2184, %v2185
    %v2187 = vsub.f32 1.0, %v2186
    %v2188 = vmul.f32 %v2185, %v2187
    %v2189 = vadd.f32 %v2185, %v2188
    %vm2190 = vweird.f32 %v2184
    %vm2191 = vweird.f32 %v2185
    %vm2192 = vmor %vm2190, %vm2191
    %v2193 = vsel %vm2192, %v2185, %v2189
    %v2194 = vand.u32 2147483647, %v2184
    %vm2195 = vcmp.eq.f32.partialorder %v2194, 8.507059e+37
    %v2196 = vand.u32 %v2184, 2147483648
    %v2197 = vor.u32 1.1754944e-38, %v2196
    %v2198 = vsel %vm2195, %v2197, %v2193
    %v2199 = vmul.f32 1.0, %v2198
    %v2200 = vmul.f32 %v2179, %v1792
    %v2201 = vmul.f32 %v2160, %v2180
    %v2202 = vadd.f32 %v2200, %v2201
    %v2203 = vtanh.pop %v2202
    %v2204 = vmul.f32 %v2199, %v2203
    %v2205 = vld [vmem:[#allocation2] sm:$0xff]
    %v2206 = vld [vmem:[#allocation2 + $0x8] sm:$0xff]
    %v2207 = vld [vmem:[#allocation2 + $0x10] sm:$0xff]
    %v2208 = vld [vmem:[#allocation2 + $0x18] sm:$0xff]
    %v2209 = vld [vmem:[#allocation2 + $0x20] sm:$0xff]
    %v2210 = vld [vmem:[#allocation2 + $0x28] sm:$0xff]
    %v2211 = vld [vmem:[#allocation2 + $0x30] sm:$0xff]
    %v2212 = vld [vmem:[#allocation2 + $0x38] sm:$0xff]
    %v2213 = vmul.f32 %v2205, %v2204
    %v2214 = vmul.f32 %v2206, %v2204
    %v2215 = vmul.f32 %v2207, %v2204
    %v2216 = vmul.f32 %v2208, %v2204
    %v2217 = vmul.f32 %v2209, %v2204
    %v2218 = vmul.f32 %v2210, %v2204
    %v2219 = vmul.f32 %v2211, %v2204
    %v2220 = vmul.f32 %v2212, %v2204
    %2221 = vadd.xlane.f32.xlu0 %v2213
    %v2222 = vpop.xlane.xlu0 %2221
    %2223 = vadd.xlane.f32.xlu0 %v2214
    %v2224 = vpop.xlane.xlu0 %2223
    %2225 = vadd.xlane.f32.xlu0 %v2215
    %v2226 = vpop.xlane.xlu0 %2225
    %2227 = vadd.xlane.f32.xlu0 %v2216
    %v2228 = vpop.xlane.xlu0 %2227
    %2229 = vadd.xlane.f32.xlu0 %v2217
    %v2230 = vpop.xlane.xlu0 %2229
    %2231 = vadd.xlane.f32.xlu0 %v2218
    %v2232 = vpop.xlane.xlu0 %2231
    %2233 = vadd.xlane.f32.xlu0 %v2219
    %v2234 = vpop.xlane.xlu0 %2233
    %2235 = vadd.xlane.f32.xlu0 %v2220
    %v2236 = vpop.xlane.xlu0 %2235
    %v2237 = vmax.f32 %v2222, %v2230
    %v2238 = vmax.f32 %v2224, %v2232
    %v2239 = vmax.f32 %v2226, %v2234
    %v2240 = vmax.f32 %v2228, %v2236
    %v2241 = vmax.f32 %v2237, %v2238
    %v2242 = vmax.f32 %v2239, %v2240
    %v2243 = vmax.f32 %v2241, %v2242
    %v2244 = vsub.f32 %v2222, %v2243
    %v2245 = vsub.f32 %v2224, %v2243
    %v2246 = vsub.f32 %v2226, %v2243
    %v2247 = vsub.f32 %v2228, %v2243
    %v2248 = vsub.f32 %v2230, %v2243
    %v2249 = vsub.f32 %v2232, %v2243
    %v2250 = vsub.f32 %v2234, %v2243
    %v2251 = vsub.f32 %v2236, %v2243
    %v2252 = vmul.f32 %v2244, 1.442695
    %v2253 = vpow.pop %v2252
    %v2254 = vmul.f32 %v2245, 1.442695
    %v2255 = vpow.pop %v2254
    %v2256 = vmul.f32 %v2246, 1.442695
    %v2257 = vpow.pop %v2256
    %v2258 = vmul.f32 %v2247, 1.442695
    %v2259 = vpow.pop %v2258
    %v2260 = vmul.f32 %v2248, 1.442695
    %v2261 = vpow.pop %v2260
    %v2262 = vmul.f32 %v2249, 1.442695
    %v2263 = vpow.pop %v2262
    %v2264 = vmul.f32 %v2250, 1.442695
    %v2265 = vpow.pop %v2264
    %v2266 = vmul.f32 %v2251, 1.442695
    %v2267 = vpow.pop %v2266
    %v2268 = vadd.f32 %v2253, %v2255
    %v2269 = vadd.f32 %v2268, %v2257
    %v2270 = vadd.f32 %v2269, %v2259
    %v2271 = vadd.f32 %v2270, %v2261
    %v2272 = vadd.f32 %v2271, %v2263
    %v2273 = vadd.f32 %v2272, %v2265
    %v2274 = vadd.f32 %v2273, %v2267
    %v2275 = vrcp.pop %v2274
    %v2276 = vmul.f32 %v2274, %v2275
    %v2277 = vsub.f32 1.0, %v2276
    %v2278 = vmul.f32 %v2275, %v2277
    %v2279 = vadd.f32 %v2275, %v2278
    %vm2280 = vweird.f32 %v2274
    %vm2281 = vweird.f32 %v2275
    %vm2282 = vmor %vm2280, %vm2281
    %v2283 = vsel %vm2282, %v2275, %v2279
    %v2284 = vand.u32 2147483647, %v2274
    %vm2285 = vcmp.eq.f32.partialorder %v2284, 8.507059e+37
    %v2286 = vand.u32 %v2274, 2147483648
    %v2287 = vor.u32 1.1754944e-38, %v2286
    %v2288 = vsel %vm2285, %v2287, %v2283
    %v2289 = vmul.f32 %v2253, %v2288
    %v2290 = vmul.f32 %v2255, %v2288
    %v2291 = vmul.f32 %v2257, %v2288
    %v2292 = vmul.f32 %v2259, %v2288
    %v2293 = vmul.f32 %v2261, %v2288
    %v2294 = vmul.f32 %v2263, %v2288
    %v2295 = vmul.f32 %v2265, %v2288
    %v2296 = vmul.f32 %v2267, %v2288
    %v2297 = vmul.f32 %v2205, %v2289
    %v2298 = vmul.f32 %v2206, %v2290
    %v2299 = vmul.f32 %v2207, %v2291
    %v2300 = vmul.f32 %v2208, %v2292
    %v2301 = vmul.f32 %v2209, %v2293
    %v2302 = vmul.f32 %v2210, %v2294
    %v2303 = vmul.f32 %v2211, %v2295
    %v2304 = vmul.f32 %v2212, %v2296
    %v2305 = vadd.f32 %v2297, %v2298
    %v2306 = vadd.f32 %v2305, %v2299
    %v2307 = vadd.f32 %v2306, %v2300
    %v2308 = vadd.f32 %v2307, %v2301
    %v2309 = vadd.f32 %v2308, %v2302
    %v2310 = vadd.f32 %v2309, %v2303
    %v2311 = vadd.f32 %v2310, %v2304
    %v2312 = vld [vmem:[%s7] sm:$0xff]
    %v2313 = vld [vmem:[%s7 + $0x8] sm:$0xff]
    %v2314 = vld [vmem:[%s7 + $0x10] sm:$0xff]
    %v2315 = vld [vmem:[%s7 + $0x18] sm:$0xff]
    %v2316 = vld [vmem:[%s7 + $0x20] sm:$0xff]
    %v2317 = vld [vmem:[%s7 + $0x28] sm:$0xff]
    %v2318 = vld [vmem:[%s7 + $0x30] sm:$0xff]
    %v2319 = vld [vmem:[%s7 + $0x38] sm:$0xff]
    %v2320 = vld [vmem:[%s7 + $0x40] sm:$0xff]
    %v2321 = vld [vmem:[%s7 + $0x48] sm:$0xff]
    %v2322 = vld [vmem:[%s7 + $0x50] sm:$0xff]
    %v2323 = vld [vmem:[%s7 + $0x58] sm:$0xff]
    %v2324 = vld [vmem:[%s7 + $0x60] sm:$0xff]
    %v2325 = vld [vmem:[%s7 + $0x68] sm:$0xff]
    %v2326 = vld [vmem:[%s7 + $0x70] sm:$0xff]
    %v2327 = vld [vmem:[%s7 + $0x78] sm:$0xff]
    %v2328 = vld [vmem:[%s7 + $0x80] sm:$0xff]
    %v2329 = vld [vmem:[%s7 + $0x88] sm:$0xff]
    %v2330 = vld [vmem:[%s7 + $0x90] sm:$0xff]
    %v2331 = vld [vmem:[%s7 + $0x98] sm:$0xff]
    %v2332 = vld [vmem:[%s7 + $0xa0] sm:$0xff]
    %v2333 = vld [vmem:[%s7 + $0xa8] sm:$0xff]
    %v2334 = vld [vmem:[%s7 + $0xb0] sm:$0xff]
    %v2335 = vld [vmem:[%s7 + $0xb8] sm:$0xff]
    %v2336 = vld [vmem:[%s7 + $0xc0] sm:$0xff]
    %v2337 = vld [vmem:[%s7 + $0xc8] sm:$0xff]
    %v2338 = vld [vmem:[%s7 + $0xd0] sm:$0xff]
    %v2339 = vld [vmem:[%s7 + $0xd8] sm:$0xff]
    %v2340 = vld [vmem:[%s7 + $0xe0] sm:$0xff]
    %v2341 = vld [vmem:[%s7 + $0xe8] sm:$0xff]
    %v2342 = vld [vmem:[%s7 + $0xf0] sm:$0xff]
    %v2343 = vld [vmem:[%s7 + $0xf8] sm:$0xff]
    %v2344 = vld [vmem:[%s7 + $0x100] sm:$0xff]
    %v2345 = vld [vmem:[%s7 + $0x108] sm:$0xff]
    %v2346 = vld [vmem:[%s7 + $0x110] sm:$0xff]
    %v2347 = vld [vmem:[%s7 + $0x118] sm:$0xff]
    %v2348 = vld [vmem:[%s7 + $0x120] sm:$0xff]
    %v2349 = vld [vmem:[%s7 + $0x128] sm:$0xff]
    %v2350 = vld [vmem:[%s7 + $0x130] sm:$0xff]
    %v2351 = vld [vmem:[%s7 + $0x138] sm:$0xff]
    %v2352 = vld [vmem:[%s7 + $0x140] sm:$0xff]
    %v2353 = vld [vmem:[%s7 + $0x148] sm:$0xff]
    %v2354 = vld [vmem:[%s7 + $0x150] sm:$0xff]
    %v2355 = vld [vmem:[%s7 + $0x158] sm:$0xff]
    %v2356 = vld [vmem:[%s7 + $0x160] sm:$0xff]
    %v2357 = vld [vmem:[%s7 + $0x168] sm:$0xff]
    %v2358 = vld [vmem:[%s7 + $0x170] sm:$0xff]
    %v2359 = vld [vmem:[%s7 + $0x178] sm:$0xff]
    %v2360 = vld [vmem:[%s8] sm:$0x1]
    %v2362 = vperm.slane %v2360, 0
    %2364 = vmatpush.msra.mxu0 %v2327
    %2365 = vmatpush.msra.mxu0 %v2326
    %2366 = vmatpush.msra.mxu0 %v2325
    %2367 = vmatpush.msra.mxu0 %v2324
    %2368 = vmatpush.msra.mxu0 %v2323
    %2369 = vmatpush.msra.mxu0 %v2322
    %2370 = vmatpush.msra.mxu0 %v2321
    %2371 = vmatpush.msra.mxu0 %v2320
    %2372 = vmatpush.msra.mxu0 %v2319
    %2373 = vmatpush.msra.mxu0 %v2318
    %2374 = vmatpush.msra.mxu0 %v2317
    %2375 = vmatpush.msra.mxu0 %v2316
    %2376 = vmatpush.msra.mxu0 %v2315
    %2377 = vmatpush.msra.mxu0 %v2314
    %2378 = vmatpush.msra.mxu0 %v2313
    %2379 = vmatpush.msra.mxu0 %v2312
    %2380 = vmatmul.f32.gmra.mxu0 %v2204
    %v2381 = vpop.f32.mrf.mxu0
    %v2382 = vadd.f32 %v2362, %v2381
    %2383 = vdwg.mxu0
    %2384 = vmatpush.msra.mxu0 %v2343
    %2385 = vmatpush.msra.mxu0 %v2342
    %2386 = vmatpush.msra.mxu0 %v2341
    %2387 = vmatpush.msra.mxu0 %v2340
    %2388 = vmatpush.msra.mxu0 %v2339
    %2389 = vmatpush.msra.mxu0 %v2338
    %2390 = vmatpush.msra.mxu0 %v2337
    %2391 = vmatpush.msra.mxu0 %v2336
    %2392 = vmatpush.msra.mxu0 %v2335
    %2393 = vmatpush.msra.mxu0 %v2334
    %2394 = vmatpush.msra.mxu0 %v2333
    %2395 = vmatpush.msra.mxu0 %v2332
    %2396 = vmatpush.msra.mxu0 %v2331
    %2397 = vmatpush.msra.mxu0 %v2330
    %2398 = vmatpush.msra.mxu0 %v2329
    %2399 = vmatpush.msra.mxu0 %v2328
    %2400 = vmatmul.f32.gmra.mxu0 %v2311
    %v2401 = vpop.f32.mrf.mxu0
    %v2402 = vadd.f32 %v2382, %v2401
    %2403 = vdwg.mxu0
    %2404 = vmatpush.msra.mxu0 %v2359
    %2405 = vmatpush.msra.mxu0 %v2358
    %2406 = vmatpush.msra.mxu0 %v2357
    %2407 = vmatpush.msra.mxu0 %v2356
    %2408 = vmatpush.msra.mxu0 %v2355
    %2409 = vmatpush.msra.mxu0 %v2354
    %2410 = vmatpush.msra.mxu0 %v2353
    %2411 = vmatpush.msra.mxu0 %v2352
    %2412 = vmatpush.msra.mxu0 %v2351
    %2413 = vmatpush.msra.mxu0 %v2350
    %2414 = vmatpush.msra.mxu0 %v2349
    %2415 = vmatpush.msra.mxu0 %v2348
    %2416 = vmatpush.msra.mxu0 %v2347
    %2417 = vmatpush.msra.mxu0 %v2346
    %2418 = vmatpush.msra.mxu0 %v2345
    %2419 = vmatpush.msra.mxu0 %v2344
    %2420 = vmatmul.f32.gmra.mxu0 %v1843
    %v2421 = vpop.f32.mrf.mxu0
    %v2422 = vadd.f32 %v2402, %v2421
    %2423 = vdwg.mxu0
    %2424 = vst [vmem:[#allocation8] sm:$0xff] %v2422
    %v2425 = vlaneseq
    %v2426 = vand.u32 %v2425, 127
    %2427 = vmax.xlane.f32.xlu0 %v2422
    %v2428 = vpop.xlane.xlu0 %2427
    %vm2429 = vcmp.eq.f32.partialorder %v2422, %v2428
    %v2430 = vsel %vm2429, %v2426, 128
    %v2431 = vand.u32 %v2430, 65535
    %v2432 = vshra.s32 %v2430, 16
    %v2433 = vcvt.s32.f32 %v2431
    %v2434 = vcvt.s32.f32 %v2432
    %2435 = vmin.xlane.f32.xlu0 %v2434
    %v2436 = vpop.xlane.xlu0 %2435
    %vm2437 = vcmp.eq.f32.partialorder %v2434, %v2436
    %v2438 = vsel %vm2437, %v2433, inf
    %2439 = vmin.xlane.f32.xlu0 %v2438
    %v2440 = vpop.xlane.xlu0 %2439
    %v2441 = vcvt.f32.s32 %v2440
    %v2442 = vcvt.f32.s32 %v2436
    %v2443 = vshll.u32 %v2442, 16
    %v2444 = vadd.s32 %v2443, %v2441
    %vm2445 = vcmp.eq.s32.totalorder %v2426, %v2444
    %v2446 = vsel %vm2445, 1, 0
    %v2447 = vcvt.s32.f32 %v2446
    %s2448 = sld [smem:[#allocation4 + $0x1]]
    %p2449 = scmp.ne.s32.totalorder %s2448, 0
    %s2450 = scalar_select %p2449, 1, 0
    %s2451 = scvt.s32.f32 %s2450
    %v2452 = vld [vmem:[%s4] sm:$0xff]
    %v2453 = vld [vmem:[%s4 + $0x8] sm:$0xff]
    %v2454 = vld [vmem:[%s4 + $0x10] sm:$0xff]
    %v2455 = vld [vmem:[%s4 + $0x18] sm:$0xff]
    %v2456 = vld [vmem:[%s4 + $0x20] sm:$0xff]
    %v2457 = vld [vmem:[%s4 + $0x28] sm:$0xff]
    %v2458 = vld [vmem:[%s4 + $0x30] sm:$0xff]
    %v2459 = vld [vmem:[%s4 + $0x38] sm:$0xff]
    %v2460 = vld [vmem:[%s4 + $0x40] sm:$0xff]
    %v2461 = vld [vmem:[%s4 + $0x48] sm:$0xff]
    %v2462 = vld [vmem:[%s4 + $0x50] sm:$0xff]
    %v2463 = vld [vmem:[%s4 + $0x58] sm:$0xff]
    %v2464 = vld [vmem:[%s4 + $0x60] sm:$0xff]
    %v2465 = vld [vmem:[%s4 + $0x68] sm:$0xff]
    %v2466 = vld [vmem:[%s4 + $0x70] sm:$0xff]
    %v2467 = vld [vmem:[%s4 + $0x78] sm:$0xff]
    %2468 = vmatpush.msra.mxu0 %v2467
    %2469 = vmatpush.msra.mxu0 %v2466
    %2470 = vmatpush.msra.mxu0 %v2465
    %2471 = vmatpush.msra.mxu0 %v2464
    %2472 = vmatpush.msra.mxu0 %v2463
    %2473 = vmatpush.msra.mxu0 %v2462
    %2474 = vmatpush.msra.mxu0 %v2461
    %2475 = vmatpush.msra.mxu0 %v2460
    %2476 = vmatpush.msra.mxu0 %v2459
    %2477 = vmatpush.msra.mxu0 %v2458
    %2478 = vmatpush.msra.mxu0 %v2457
    %2479 = vmatpush.msra.mxu0 %v2456
    %2480 = vmatpush.msra.mxu0 %v2455
    %2481 = vmatpush.msra.mxu0 %v2454
    %2482 = vmatpush.msra.mxu0 %v2453
    %2483 = vmatpush.msra.mxu0 %v2452
    %2484 = vmatmul.f32.gmra.mxu0 %v2447
    %v2485 = vpop.f32.mrf.mxu0
    %v2486 = vadd.f32 0.0, %v2485
    %2487 = vdwg.mxu0
    %s2488 = scalar_lea.vmem %s3, 8
    %v2489 = vld [vmem:[%s2488] sm:$0xff]
    %v2490 = vstv %s2451
    %v2491 = vmul.f32 %v2490, %v2489
    %s2492 = ssub.f32 1.0, %s2451
    %v2493 = vstv %s2492
    %v2494 = vmul.f32 %v2493, %v2486
    %v2495 = vadd.f32 %v2491, %v2494
    %v2496 = vld [vmem:[#allocation5] sm:$0xff]
    %v2497 = vld [vmem:[#allocation5 + $0x8] sm:$0xff]
    %v2498 = vld [vmem:[#allocation5 + $0x10] sm:$0xff]
    %v2499 = vld [vmem:[#allocation5 + $0x18] sm:$0xff]
    %v2500 = vld [vmem:[#allocation5 + $0x20] sm:$0xff]
    %v2501 = vld [vmem:[#allocation5 + $0x28] sm:$0xff]
    %v2502 = vld [vmem:[#allocation5 + $0x30] sm:$0xff]
    %v2503 = vld [vmem:[#allocation5 + $0x38] sm:$0xff]
    %v2504 = vld [vmem:[#allocation5 + $0x40] sm:$0xff]
    %v2505 = vld [vmem:[#allocation5 + $0x48] sm:$0xff]
    %v2506 = vld [vmem:[#allocation5 + $0x50] sm:$0xff]
    %v2507 = vld [vmem:[#allocation5 + $0x58] sm:$0xff]
    %v2508 = vld [vmem:[#allocation5 + $0x60] sm:$0xff]
    %v2509 = vld [vmem:[#allocation5 + $0x68] sm:$0xff]
    %v2510 = vld [vmem:[#allocation5 + $0x70] sm:$0xff]
    %v2511 = vld [vmem:[#allocation5 + $0x78] sm:$0xff]
    %v2512 = vld [vmem:[#allocation5 + $0x80] sm:$0xff]
    %v2513 = vld [vmem:[#allocation5 + $0x88] sm:$0xff]
    %v2514 = vld [vmem:[#allocation5 + $0x90] sm:$0xff]
    %v2515 = vld [vmem:[#allocation5 + $0x98] sm:$0xff]
    %v2516 = vld [vmem:[#allocation5 + $0xa0] sm:$0xff]
    %v2517 = vld [vmem:[#allocation5 + $0xa8] sm:$0xff]
    %v2518 = vld [vmem:[#allocation5 + $0xb0] sm:$0xff]
    %v2519 = vld [vmem:[#allocation5 + $0xb8] sm:$0xff]
    %v2520 = vld [vmem:[#allocation5 + $0xc0] sm:$0xff]
    %v2521 = vld [vmem:[#allocation5 + $0xc8] sm:$0xff]
    %v2522 = vld [vmem:[#allocation5 + $0xd0] sm:$0xff]
    %v2523 = vld [vmem:[#allocation5 + $0xd8] sm:$0xff]
    %v2524 = vld [vmem:[#allocation5 + $0xe0] sm:$0xff]
    %v2525 = vld [vmem:[#allocation5 + $0xe8] sm:$0xff]
    %v2526 = vld [vmem:[#allocation5 + $0xf0] sm:$0xff]
    %v2527 = vld [vmem:[#allocation5 + $0xf8] sm:$0xff]
    %v2528 = vld [vmem:[#allocation5 + $0x100] sm:$0xff]
    %v2529 = vld [vmem:[#allocation5 + $0x108] sm:$0xff]
    %v2530 = vld [vmem:[#allocation5 + $0x110] sm:$0xff]
    %v2531 = vld [vmem:[#allocation5 + $0x118] sm:$0xff]
    %v2532 = vld [vmem:[#allocation5 + $0x120] sm:$0xff]
    %v2533 = vld [vmem:[#allocation5 + $0x128] sm:$0xff]
    %v2534 = vld [vmem:[#allocation5 + $0x130] sm:$0xff]
    %v2535 = vld [vmem:[#allocation5 + $0x138] sm:$0xff]
    %v2536 = vld [vmem:[#allocation5 + $0x140] sm:$0xff]
    %v2537 = vld [vmem:[#allocation5 + $0x148] sm:$0xff]
    %v2538 = vld [vmem:[#allocation5 + $0x150] sm:$0xff]
    %v2539 = vld [vmem:[#allocation5 + $0x158] sm:$0xff]
    %v2540 = vld [vmem:[#allocation5 + $0x160] sm:$0xff]
    %v2541 = vld [vmem:[#allocation5 + $0x168] sm:$0xff]
    %v2542 = vld [vmem:[#allocation5 + $0x170] sm:$0xff]
    %v2543 = vld [vmem:[#allocation5 + $0x178] sm:$0xff]
    %v2544 = vld [vmem:[#allocation5 + $0x180] sm:$0xff]
    %v2545 = vld [vmem:[#allocation5 + $0x188] sm:$0xff]
    %v2546 = vld [vmem:[#allocation5 + $0x190] sm:$0xff]
    %v2547 = vld [vmem:[#allocation5 + $0x198] sm:$0xff]
    %v2548 = vld [vmem:[#allocation5 + $0x1a0] sm:$0xff]
    %v2549 = vld [vmem:[#allocation5 + $0x1a8] sm:$0xff]
    %v2550 = vld [vmem:[#allocation5 + $0x1b0] sm:$0xff]
    %v2551 = vld [vmem:[#allocation5 + $0x1b8] sm:$0xff]
    %v2552 = vld [vmem:[#allocation5 + $0x1c0] sm:$0xff]
    %v2553 = vld [vmem:[#allocation5 + $0x1c8] sm:$0xff]
    %v2554 = vld [vmem:[#allocation5 + $0x1d0] sm:$0xff]
    %v2555 = vld [vmem:[#allocation5 + $0x1d8] sm:$0xff]
    %v2556 = vld [vmem:[#allocation5 + $0x1e0] sm:$0xff]
    %v2557 = vld [vmem:[#allocation5 + $0x1e8] sm:$0xff]
    %v2558 = vld [vmem:[#allocation5 + $0x1f0] sm:$0xff]
    %v2559 = vld [vmem:[#allocation5 + $0x1f8] sm:$0xff]
    %v2560 = vld [vmem:[#allocation5 + $0x200] sm:$0xff]
    %v2561 = vld [vmem:[#allocation5 + $0x208] sm:$0xff]
    %v2562 = vld [vmem:[#allocation5 + $0x210] sm:$0xff]
    %v2563 = vld [vmem:[#allocation5 + $0x218] sm:$0xff]
    %v2564 = vld [vmem:[#allocation5 + $0x220] sm:$0xff]
    %v2565 = vld [vmem:[#allocation5 + $0x228] sm:$0xff]
    %v2566 = vld [vmem:[#allocation5 + $0x230] sm:$0xff]
    %v2567 = vld [vmem:[#allocation5 + $0x238] sm:$0xff]
    %v2568 = vld [vmem:[#allocation5 + $0x240] sm:$0xff]
    %v2569 = vld [vmem:[#allocation5 + $0x248] sm:$0xff]
    %v2570 = vld [vmem:[#allocation5 + $0x250] sm:$0xff]
    %v2571 = vld [vmem:[#allocation5 + $0x258] sm:$0xff]
    %v2572 = vld [vmem:[#allocation5 + $0x260] sm:$0xff]
    %v2573 = vld [vmem:[#allocation5 + $0x268] sm:$0xff]
    %v2574 = vld [vmem:[#allocation5 + $0x270] sm:$0xff]
    %v2575 = vld [vmem:[#allocation5 + $0x278] sm:$0xff]
    %v2576 = vld [vmem:[#allocation5 + $0x280] sm:$0xff]
    %v2577 = vld [vmem:[#allocation5 + $0x288] sm:$0xff]
    %v2578 = vld [vmem:[#allocation5 + $0x290] sm:$0xff]
    %v2579 = vld [vmem:[#allocation5 + $0x298] sm:$0xff]
    %v2580 = vld [vmem:[#allocation5 + $0x2a0] sm:$0xff]
    %v2581 = vld [vmem:[#allocation5 + $0x2a8] sm:$0xff]
    %v2582 = vld [vmem:[#allocation5 + $0x2b0] sm:$0xff]
    %v2583 = vld [vmem:[#allocation5 + $0x2b8] sm:$0xff]
    %v2584 = vld [vmem:[#allocation5 + $0x2c0] sm:$0xff]
    %v2585 = vld [vmem:[#allocation5 + $0x2c8] sm:$0xff]
    %v2586 = vld [vmem:[#allocation5 + $0x2d0] sm:$0xff]
    %v2587 = vld [vmem:[#allocation5 + $0x2d8] sm:$0xff]
    %v2588 = vld [vmem:[#allocation5 + $0x2e0] sm:$0xff]
    %v2589 = vld [vmem:[#allocation5 + $0x2e8] sm:$0xff]
    %v2590 = vld [vmem:[#allocation5 + $0x2f0] sm:$0xff]
    %v2591 = vld [vmem:[#allocation5 + $0x2f8] sm:$0xff]
    %v2592 = vld [vmem:[#allocation5 + $0x300] sm:$0xff]
    %v2593 = vld [vmem:[#allocation5 + $0x308] sm:$0xff]
    %v2594 = vld [vmem:[#allocation5 + $0x310] sm:$0xff]
    %v2595 = vld [vmem:[#allocation5 + $0x318] sm:$0xff]
    %v2596 = vld [vmem:[#allocation5 + $0x320] sm:$0xff]
    %v2597 = vld [vmem:[#allocation5 + $0x328] sm:$0xff]
    %v2598 = vld [vmem:[#allocation5 + $0x330] sm:$0xff]
    %v2599 = vld [vmem:[#allocation5 + $0x338] sm:$0xff]
    %v2600 = vld [vmem:[#allocation5 + $0x340] sm:$0xff]
    %v2601 = vld [vmem:[#allocation5 + $0x348] sm:$0xff]
    %v2602 = vld [vmem:[#allocation5 + $0x350] sm:$0xff]
    %v2603 = vld [vmem:[#allocation5 + $0x358] sm:$0xff]
    %v2604 = vld [vmem:[#allocation5 + $0x360] sm:$0xff]
    %v2605 = vld [vmem:[#allocation5 + $0x368] sm:$0xff]
    %v2606 = vld [vmem:[#allocation5 + $0x370] sm:$0xff]
    %v2607 = vld [vmem:[#allocation5 + $0x378] sm:$0xff]
    %v2608 = vld [vmem:[#allocation5 + $0x380] sm:$0xff]
    %v2609 = vld [vmem:[#allocation5 + $0x388] sm:$0xff]
    %v2610 = vld [vmem:[#allocation5 + $0x390] sm:$0xff]
    %v2611 = vld [vmem:[#allocation5 + $0x398] sm:$0xff]
    %v2612 = vld [vmem:[#allocation5 + $0x3a0] sm:$0xff]
    %v2613 = vld [vmem:[#allocation5 + $0x3a8] sm:$0xff]
    %v2614 = vld [vmem:[#allocation5 + $0x3b0] sm:$0xff]
    %v2615 = vld [vmem:[#allocation5 + $0x3b8] sm:$0xff]
    %v2616 = vld [vmem:[#allocation5 + $0x3c0] sm:$0xff]
    %v2617 = vld [vmem:[#allocation5 + $0x3c8] sm:$0xff]
    %v2618 = vld [vmem:[#allocation5 + $0x3d0] sm:$0xff]
    %v2619 = vld [vmem:[#allocation5 + $0x3d8] sm:$0xff]
    %v2620 = vld [vmem:[#allocation5 + $0x3e0] sm:$0xff]
    %v2621 = vld [vmem:[#allocation5 + $0x3e8] sm:$0xff]
    %v2622 = vld [vmem:[#allocation5 + $0x3f0] sm:$0xff]
    %v2623 = vld [vmem:[#allocation5 + $0x3f8] sm:$0xff]
    %v2624 = vld [vmem:[%s6] sm:$0xf]
    %v2626 = vperm.slane %v2624, 0
    %v2627 = vperm.slane %v2624, 1
    %v2628 = vperm.slane %v2624, 2
    %v2629 = vperm.slane %v2624, 3
    %2634 = vmatpush.msra.mxu0 %v2556
    %2635 = vmatpush.msra.mxu0 %v2552
    %2636 = vmatpush.msra.mxu0 %v2548
    %2637 = vmatpush.msra.mxu0 %v2544
    %2638 = vmatpush.msra.mxu0 %v2540
    %2639 = vmatpush.msra.mxu0 %v2536
    %2640 = vmatpush.msra.mxu0 %v2532
    %2641 = vmatpush.msra.mxu0 %v2528
    %2642 = vmatpush.msra.mxu0 %v2524
    %2643 = vmatpush.msra.mxu0 %v2520
    %2644 = vmatpush.msra.mxu0 %v2516
    %2645 = vmatpush.msra.mxu0 %v2512
    %2646 = vmatpush.msra.mxu0 %v2508
    %2647 = vmatpush.msra.mxu0 %v2504
    %2648 = vmatpush.msra.mxu0 %v2500
    %2649 = vmatpush.msra.mxu0 %v2496
    %2650 = vmatmul.f32.gmra.mxu0 %v2495
    %v2651 = vpop.f32.mrf.mxu0
    %v2652 = vadd.f32 %v2626, %v2651
    %2653 = vdwg.mxu0
    %2654 = vmatpush.msra.mxu0 %v2620
    %2655 = vmatpush.msra.mxu0 %v2616
    %2656 = vmatpush.msra.mxu0 %v2612
    %2657 = vmatpush.msra.mxu0 %v2608
    %2658 = vmatpush.msra.mxu0 %v2604
    %2659 = vmatpush.msra.mxu0 %v2600
    %2660 = vmatpush.msra.mxu0 %v2596
    %2661 = vmatpush.msra.mxu0 %v2592
    %2662 = vmatpush.msra.mxu0 %v2588
    %2663 = vmatpush.msra.mxu0 %v2584
    %2664 = vmatpush.msra.mxu0 %v2580
    %2665 = vmatpush.msra.mxu0 %v2576
    %2666 = vmatpush.msra.mxu0 %v2572
    %2667 = vmatpush.msra.mxu0 %v2568
    %2668 = vmatpush.msra.mxu0 %v2564
    %2669 = vmatpush.msra.mxu0 %v2560
    %2670 = vmatmul.f32.gmra.mxu0 %v2204
    %v2671 = vpop.f32.mrf.mxu0
    %v2672 = vadd.f32 %v2652, %v2671
    %2673 = vdwg.mxu0
    %2674 = vmatpush.msra.mxu0 %v2557
    %2675 = vmatpush.msra.mxu0 %v2553
    %2676 = vmatpush.msra.mxu0 %v2549
    %2677 = vmatpush.msra.mxu0 %v2545
    %2678 = vmatpush.msra.mxu0 %v2541
    %2679 = vmatpush.msra.mxu0 %v2537
    %2680 = vmatpush.msra.mxu0 %v2533
    %2681 = vmatpush.msra.mxu0 %v2529
    %2682 = vmatpush.msra.mxu0 %v2525
    %2683 = vmatpush.msra.mxu0 %v2521
    %2684 = vmatpush.msra.mxu0 %v2517
    %2685 = vmatpush.msra.mxu0 %v2513
    %2686 = vmatpush.msra.mxu0 %v2509
    %2687 = vmatpush.msra.mxu0 %v2505
    %2688 = vmatpush.msra.mxu0 %v2501
    %2689 = vmatpush.msra.mxu0 %v2497
    %2690 = vmatmul.f32.gmra.mxu0 %v2495
    %v2691 = vpop.f32.mrf.mxu0
    %v2692 = vadd.f32 %v2627, %v2691
    %2693 = vdwg.mxu0
    %2694 = vmatpush.msra.mxu0 %v2621
    %2695 = vmatpush.msra.mxu0 %v2617
    %2696 = vmatpush.msra.mxu0 %v2613
    %2697 = vmatpush.msra.mxu0 %v2609
    %2698 = vmatpush.msra.mxu0 %v2605
    %2699 = vmatpush.msra.mxu0 %v2601
    %2700 = vmatpush.msra.mxu0 %v2597
    %2701 = vmatpush.msra.mxu0 %v2593
    %2702 = vmatpush.msra.mxu0 %v2589
    %2703 = vmatpush.msra.mxu0 %v2585
    %2704 = vmatpush.msra.mxu0 %v2581
    %2705 = vmatpush.msra.mxu0 %v2577
    %2706 = vmatpush.msra.mxu0 %v2573
    %2707 = vmatpush.msra.mxu0 %v2569
    %2708 = vmatpush.msra.mxu0 %v2565
    %2709 = vmatpush.msra.mxu0 %v2561
    %2710 = vmatmul.f32.gmra.mxu0 %v2204
    %v2711 = vpop.f32.mrf.mxu0
    %v2712 = vadd.f32 %v2692, %v2711
    %2713 = vdwg.mxu0
    %2714 = vmatpush.msra.mxu0 %v2558
    %2715 = vmatpush.msra.mxu0 %v2554
    %2716 = vmatpush.msra.mxu0 %v2550
    %2717 = vmatpush.msra.mxu0 %v2546
    %2718 = vmatpush.msra.mxu0 %v2542
    %2719 = vmatpush.msra.mxu0 %v2538
    %2720 = vmatpush.msra.mxu0 %v2534
    %2721 = vmatpush.msra.mxu0 %v2530
    %2722 = vmatpush.msra.mxu0 %v2526
    %2723 = vmatpush.msra.mxu0 %v2522
    %2724 = vmatpush.msra.mxu0 %v2518
    %2725 = vmatpush.msra.mxu0 %v2514
    %2726 = vmatpush.msra.mxu0 %v2510
    %2727 = vmatpush.msra.mxu0 %v2506
    %2728 = vmatpush.msra.mxu0 %v2502
    %2729 = vmatpush.msra.mxu0 %v2498
    %2730 = vmatmul.f32.gmra.mxu0 %v2495
    %v2731 = vpop.f32.mrf.mxu0
    %v2732 = vadd.f32 %v2628, %v2731
    %2733 = vdwg.mxu0
    %2734 = vmatpush.msra.mxu0 %v2622
    %2735 = vmatpush.msra.mxu0 %v2618
    %2736 = vmatpush.msra.mxu0 %v2614
    %2737 = vmatpush.msra.mxu0 %v2610
    %2738 = vmatpush.msra.mxu0 %v2606
    %2739 = vmatpush.msra.mxu0 %v2602
    %2740 = vmatpush.msra.mxu0 %v2598
    %2741 = vmatpush.msra.mxu0 %v2594
    %2742 = vmatpush.msra.mxu0 %v2590
    %2743 = vmatpush.msra.mxu0 %v2586
    %2744 = vmatpush.msra.mxu0 %v2582
    %2745 = vmatpush.msra.mxu0 %v2578
    %2746 = vmatpush.msra.mxu0 %v2574
    %2747 = vmatpush.msra.mxu0 %v2570
    %2748 = vmatpush.msra.mxu0 %v2566
    %2749 = vmatpush.msra.mxu0 %v2562
    %2750 = vmatmul.f32.gmra.mxu0 %v2204
    %v2751 = vpop.f32.mrf.mxu0
    %v2752 = vadd.f32 %v2732, %v2751
    %2753 = vdwg.mxu0
    %2754 = vmatpush.msra.mxu0 %v2559
    %2755 = vmatpush.msra.mxu0 %v2555
    %2756 = vmatpush.msra.mxu0 %v2551
    %2757 = vmatpush.msra.mxu0 %v2547
    %2758 = vmatpush.msra.mxu0 %v2543
    %2759 = vmatpush.msra.mxu0 %v2539
    %2760 = vmatpush.msra.mxu0 %v2535
    %2761 = vmatpush.msra.mxu0 %v2531
    %2762 = vmatpush.msra.mxu0 %v2527
    %2763 = vmatpush.msra.mxu0 %v2523
    %2764 = vmatpush.msra.mxu0 %v2519
    %2765 = vmatpush.msra.mxu0 %v2515
    %2766 = vmatpush.msra.mxu0 %v2511
    %2767 = vmatpush.msra.mxu0 %v2507
    %2768 = vmatpush.msra.mxu0 %v2503
    %2769 = vmatpush.msra.mxu0 %v2499
    %2770 = vmatmul.f32.gmra.mxu0 %v2495
    %v2771 = vpop.f32.mrf.mxu0
    %v2772 = vadd.f32 %v2629, %v2771
    %2773 = vdwg.mxu0
    %2774 = vmatpush.msra.mxu0 %v2623
    %2775 = vmatpush.msra.mxu0 %v2619
    %2776 = vmatpush.msra.mxu0 %v2615
    %2777 = vmatpush.msra.mxu0 %v2611
    %2778 = vmatpush.msra.mxu0 %v2607
    %2779 = vmatpush.msra.mxu0 %v2603
    %2780 = vmatpush.msra.mxu0 %v2599
    %2781 = vmatpush.msra.mxu0 %v2595
    %2782 = vmatpush.msra.mxu0 %v2591
    %2783 = vmatpush.msra.mxu0 %v2587
    %2784 = vmatpush.msra.mxu0 %v2583
    %2785 = vmatpush.msra.mxu0 %v2579
    %2786 = vmatpush.msra.mxu0 %v2575
    %2787 = vmatpush.msra.mxu0 %v2571
    %2788 = vmatpush.msra.mxu0 %v2567
    %2789 = vmatpush.msra.mxu0 %v2563
    %2790 = vmatmul.f32.gmra.mxu0 %v2204
    %v2791 = vpop.f32.mrf.mxu0
    %v2792 = vadd.f32 %v2772, %v2791
    %2793 = vdwg.mxu0
    %v2794 = vxor.u32 %v2672, 2147483648
    %v2795 = vmul.f32 %v2794, 1.442695
    %v2796 = vpow.pop %v2795
    %v2797 = vadd.f32 %v2796, 1.0
    %v2798 = vrcp.pop %v2797
    %v2799 = vmul.f32 %v2797, %v2798
    %v2800 = vsub.f32 1.0, %v2799
    %v2801 = vmul.f32 %v2798, %v2800
    %v2802 = vadd.f32 %v2798, %v2801
    %vm2803 = vweird.f32 %v2797
    %vm2804 = vweird.f32 %v2798
    %vm2805 = vmor %vm2803, %vm2804
    %v2806 = vsel %vm2805, %v2798, %v2802
    %v2807 = vand.u32 2147483647, %v2797
    %vm2808 = vcmp.eq.f32.partialorder %v2807, 8.507059e+37
    %v2809 = vand.u32 %v2797, 2147483648
    %v2810 = vor.u32 1.1754944e-38, %v2809
    %v2811 = vsel %vm2808, %v2810, %v2806
    %v2812 = vmul.f32 1.0, %v2811
    %v2813 = vxor.u32 %v2712, 2147483648
    %v2814 = vmul.f32 %v2813, 1.442695
    %v2815 = vpow.pop %v2814
    %v2816 = vadd.f32 %v2815, 1.0
    %v2817 = vrcp.pop %v2816
    %v2818 = vmul.f32 %v2816, %v2817
    %v2819 = vsub.f32 1.0, %v2818
    %v2820 = vmul.f32 %v2817, %v2819
    %v2821 = vadd.f32 %v2817, %v2820
    %vm2822 = vweird.f32 %v2816
    %vm2823 = vweird.f32 %v2817
    %vm2824 = vmor %vm2822, %vm2823
    %v2825 = vsel %vm2824, %v2817, %v2821
    %v2826 = vand.u32 2147483647, %v2816
    %vm2827 = vcmp.eq.f32.partialorder %v2826, 8.507059e+37
    %v2828 = vand.u32 %v2816, 2147483648
    %v2829 = vor.u32 1.1754944e-38, %v2828
    %v2830 = vsel %vm2827, %v2829, %v2825
    %v2831 = vmul.f32 1.0, %v2830
    %v2832 = vtanh.pop %v2752
    %v2833 = vxor.u32 %v2792, 2147483648
    %v2834 = vmul.f32 %v2833, 1.442695
    %v2835 = vpow.pop %v2834
    %v2836 = vadd.f32 %v2835, 1.0
    %v2837 = vrcp.pop %v2836
    %v2838 = vmul.f32 %v2836, %v2837
    %v2839 = vsub.f32 1.0, %v2838
    %v2840 = vmul.f32 %v2837, %v2839
    %v2841 = vadd.f32 %v2837, %v2840
    %vm2842 = vweird.f32 %v2836
    %vm2843 = vweird.f32 %v2837
    %vm2844 = vmor %vm2842, %vm2843
    %v2845 = vsel %vm2844, %v2837, %v2841
    %v2846 = vand.u32 2147483647, %v2836
    %vm2847 = vcmp.eq.f32.partialorder %v2846, 8.507059e+37
    %v2848 = vand.u32 %v2836, 2147483648
    %v2849 = vor.u32 1.1754944e-38, %v2848
    %v2850 = vsel %vm2847, %v2849, %v2845
    %v2851 = vmul.f32 1.0, %v2850
    %v2852 = vmul.f32 %v2831, %v2202
    %v2853 = vmul.f32 %v2812, %v2832
    %v2854 = vadd.f32 %v2852, %v2853
    %v2855 = vtanh.pop %v2854
    %v2856 = vmul.f32 %v2851, %v2855
    %v2857 = vld [vmem:[#allocation2] sm:$0xff]
    %v2858 = vld [vmem:[#allocation2 + $0x8] sm:$0xff]
    %v2859 = vld [vmem:[#allocation2 + $0x10] sm:$0xff]
    %v2860 = vld [vmem:[#allocation2 + $0x18] sm:$0xff]
    %v2861 = vld [vmem:[#allocation2 + $0x20] sm:$0xff]
    %v2862 = vld [vmem:[#allocation2 + $0x28] sm:$0xff]
    %v2863 = vld [vmem:[#allocation2 + $0x30] sm:$0xff]
    %v2864 = vld [vmem:[#allocation2 + $0x38] sm:$0xff]
    %v2865 = vmul.f32 %v2857, %v2856
    %v2866 = vmul.f32 %v2858, %v2856
    %v2867 = vmul.f32 %v2859, %v2856
    %v2868 = vmul.f32 %v2860, %v2856
    %v2869 = vmul.f32 %v2861, %v2856
    %v2870 = vmul.f32 %v2862, %v2856
    %v2871 = vmul.f32 %v2863, %v2856
    %v2872 = vmul.f32 %v2864, %v2856
    %2873 = vadd.xlane.f32.xlu0 %v2865
    %v2874 = vpop.xlane.xlu0 %2873
    %2875 = vadd.xlane.f32.xlu0 %v2866
    %v2876 = vpop.xlane.xlu0 %2875
    %2877 = vadd.xlane.f32.xlu0 %v2867
    %v2878 = vpop.xlane.xlu0 %2877
    %2879 = vadd.xlane.f32.xlu0 %v2868
    %v2880 = vpop.xlane.xlu0 %2879
    %2881 = vadd.xlane.f32.xlu0 %v2869
    %v2882 = vpop.xlane.xlu0 %2881
    %2883 = vadd.xlane.f32.xlu0 %v2870
    %v2884 = vpop.xlane.xlu0 %2883
    %2885 = vadd.xlane.f32.xlu0 %v2871
    %v2886 = vpop.xlane.xlu0 %2885
    %2887 = vadd.xlane.f32.xlu0 %v2872
    %v2888 = vpop.xlane.xlu0 %2887
    %v2889 = vmax.f32 %v2874, %v2882
    %v2890 = vmax.f32 %v2876, %v2884
    %v2891 = vmax.f32 %v2878, %v2886
    %v2892 = vmax.f32 %v2880, %v2888
    %v2893 = vmax.f32 %v2889, %v2890
    %v2894 = vmax.f32 %v2891, %v2892
    %v2895 = vmax.f32 %v2893, %v2894
    %v2896 = vsub.f32 %v2874, %v2895
    %v2897 = vsub.f32 %v2876, %v2895
    %v2898 = vsub.f32 %v2878, %v2895
    %v2899 = vsub.f32 %v2880, %v2895
    %v2900 = vsub.f32 %v2882, %v2895
    %v2901 = vsub.f32 %v2884, %v2895
    %v2902 = vsub.f32 %v2886, %v2895
    %v2903 = vsub.f32 %v2888, %v2895
    %v2904 = vmul.f32 %v2896, 1.442695
    %v2905 = vpow.pop %v2904
    %v2906 = vmul.f32 %v2897, 1.442695
    %v2907 = vpow.pop %v2906
    %v2908 = vmul.f32 %v2898, 1.442695
    %v2909 = vpow.pop %v2908
    %v2910 = vmul.f32 %v2899, 1.442695
    %v2911 = vpow.pop %v2910
    %v2912 = vmul.f32 %v2900, 1.442695
    %v2913 = vpow.pop %v2912
    %v2914 = vmul.f32 %v2901, 1.442695
    %v2915 = vpow.pop %v2914
    %v2916 = vmul.f32 %v2902, 1.442695
    %v2917 = vpow.pop %v2916
    %v2918 = vmul.f32 %v2903, 1.442695
    %v2919 = vpow.pop %v2918
    %v2920 = vadd.f32 %v2905, %v2907
    %v2921 = vadd.f32 %v2920, %v2909
    %v2922 = vadd.f32 %v2921, %v2911
    %v2923 = vadd.f32 %v2922, %v2913
    %v2924 = vadd.f32 %v2923, %v2915
    %v2925 = vadd.f32 %v2924, %v2917
    %v2926 = vadd.f32 %v2925, %v2919
    %v2927 = vrcp.pop %v2926
    %v2928 = vmul.f32 %v2926, %v2927
    %v2929 = vsub.f32 1.0, %v2928
    %v2930 = vmul.f32 %v2927, %v2929
    %v2931 = vadd.f32 %v2927, %v2930
    %vm2932 = vweird.f32 %v2926
    %vm2933 = vweird.f32 %v2927
    %vm2934 = vmor %vm2932, %vm2933
    %v2935 = vsel %vm2934, %v2927, %v2931
    %v2936 = vand.u32 2147483647, %v2926
    %vm2937 = vcmp.eq.f32.partialorder %v2936, 8.507059e+37
    %v2938 = vand.u32 %v2926, 2147483648
    %v2939 = vor.u32 1.1754944e-38, %v2938
    %v2940 = vsel %vm2937, %v2939, %v2935
    %v2941 = vmul.f32 %v2905, %v2940
    %v2942 = vmul.f32 %v2907, %v2940
    %v2943 = vmul.f32 %v2909, %v2940
    %v2944 = vmul.f32 %v2911, %v2940
    %v2945 = vmul.f32 %v2913, %v2940
    %v2946 = vmul.f32 %v2915, %v2940
    %v2947 = vmul.f32 %v2917, %v2940
    %v2948 = vmul.f32 %v2919, %v2940
    %v2949 = vmul.f32 %v2857, %v2941
    %v2950 = vmul.f32 %v2858, %v2942
    %v2951 = vmul.f32 %v2859, %v2943
    %v2952 = vmul.f32 %v2860, %v2944
    %v2953 = vmul.f32 %v2861, %v2945
    %v2954 = vmul.f32 %v2862, %v2946
    %v2955 = vmul.f32 %v2863, %v2947
    %v2956 = vmul.f32 %v2864, %v2948
    %v2957 = vadd.f32 %v2949, %v2950
    %v2958 = vadd.f32 %v2957, %v2951
    %v2959 = vadd.f32 %v2958, %v2952
    %v2960 = vadd.f32 %v2959, %v2953
    %v2961 = vadd.f32 %v2960, %v2954
    %v2962 = vadd.f32 %v2961, %v2955
    %v2963 = vadd.f32 %v2962, %v2956
    %v2964 = vld [vmem:[%s7] sm:$0xff]
    %v2965 = vld [vmem:[%s7 + $0x8] sm:$0xff]
    %v2966 = vld [vmem:[%s7 + $0x10] sm:$0xff]
    %v2967 = vld [vmem:[%s7 + $0x18] sm:$0xff]
    %v2968 = vld [vmem:[%s7 + $0x20] sm:$0xff]
    %v2969 = vld [vmem:[%s7 + $0x28] sm:$0xff]
    %v2970 = vld [vmem:[%s7 + $0x30] sm:$0xff]
    %v2971 = vld [vmem:[%s7 + $0x38] sm:$0xff]
    %v2972 = vld [vmem:[%s7 + $0x40] sm:$0xff]
    %v2973 = vld [vmem:[%s7 + $0x48] sm:$0xff]
    %v2974 = vld [vmem:[%s7 + $0x50] sm:$0xff]
    %v2975 = vld [vmem:[%s7 + $0x58] sm:$0xff]
    %v2976 = vld [vmem:[%s7 + $0x60] sm:$0xff]
    %v2977 = vld [vmem:[%s7 + $0x68] sm:$0xff]
    %v2978 = vld [vmem:[%s7 + $0x70] sm:$0xff]
    %v2979 = vld [vmem:[%s7 + $0x78] sm:$0xff]
    %v2980 = vld [vmem:[%s7 + $0x80] sm:$0xff]
    %v2981 = vld [vmem:[%s7 + $0x88] sm:$0xff]
    %v2982 = vld [vmem:[%s7 + $0x90] sm:$0xff]
    %v2983 = vld [vmem:[%s7 + $0x98] sm:$0xff]
    %v2984 = vld [vmem:[%s7 + $0xa0] sm:$0xff]
    %v2985 = vld [vmem:[%s7 + $0xa8] sm:$0xff]
    %v2986 = vld [vmem:[%s7 + $0xb0] sm:$0xff]
    %v2987 = vld [vmem:[%s7 + $0xb8] sm:$0xff]
    %v2988 = vld [vmem:[%s7 + $0xc0] sm:$0xff]
    %v2989 = vld [vmem:[%s7 + $0xc8] sm:$0xff]
    %v2990 = vld [vmem:[%s7 + $0xd0] sm:$0xff]
    %v2991 = vld [vmem:[%s7 + $0xd8] sm:$0xff]
    %v2992 = vld [vmem:[%s7 + $0xe0] sm:$0xff]
    %v2993 = vld [vmem:[%s7 + $0xe8] sm:$0xff]
    %v2994 = vld [vmem:[%s7 + $0xf0] sm:$0xff]
    %v2995 = vld [vmem:[%s7 + $0xf8] sm:$0xff]
    %v2996 = vld [vmem:[%s7 + $0x100] sm:$0xff]
    %v2997 = vld [vmem:[%s7 + $0x108] sm:$0xff]
    %v2998 = vld [vmem:[%s7 + $0x110] sm:$0xff]
    %v2999 = vld [vmem:[%s7 + $0x118] sm:$0xff]
    %v3000 = vld [vmem:[%s7 + $0x120] sm:$0xff]
    %v3001 = vld [vmem:[%s7 + $0x128] sm:$0xff]
    %v3002 = vld [vmem:[%s7 + $0x130] sm:$0xff]
    %v3003 = vld [vmem:[%s7 + $0x138] sm:$0xff]
    %v3004 = vld [vmem:[%s7 + $0x140] sm:$0xff]
    %v3005 = vld [vmem:[%s7 + $0x148] sm:$0xff]
    %v3006 = vld [vmem:[%s7 + $0x150] sm:$0xff]
    %v3007 = vld [vmem:[%s7 + $0x158] sm:$0xff]
    %v3008 = vld [vmem:[%s7 + $0x160] sm:$0xff]
    %v3009 = vld [vmem:[%s7 + $0x168] sm:$0xff]
    %v3010 = vld [vmem:[%s7 + $0x170] sm:$0xff]
    %v3011 = vld [vmem:[%s7 + $0x178] sm:$0xff]
    %v3012 = vld [vmem:[%s8] sm:$0x1]
    %v3014 = vperm.slane %v3012, 0
    %3016 = vmatpush.msra.mxu0 %v2979
    %3017 = vmatpush.msra.mxu0 %v2978
    %3018 = vmatpush.msra.mxu0 %v2977
    %3019 = vmatpush.msra.mxu0 %v2976
    %3020 = vmatpush.msra.mxu0 %v2975
    %3021 = vmatpush.msra.mxu0 %v2974
    %3022 = vmatpush.msra.mxu0 %v2973
    %3023 = vmatpush.msra.mxu0 %v2972
    %3024 = vmatpush.msra.mxu0 %v2971
    %3025 = vmatpush.msra.mxu0 %v2970
    %3026 = vmatpush.msra.mxu0 %v2969
    %3027 = vmatpush.msra.mxu0 %v2968
    %3028 = vmatpush.msra.mxu0 %v2967
    %3029 = vmatpush.msra.mxu0 %v2966
    %3030 = vmatpush.msra.mxu0 %v2965
    %3031 = vmatpush.msra.mxu0 %v2964
    %3032 = vmatmul.f32.gmra.mxu0 %v2856
    %v3033 = vpop.f32.mrf.mxu0
    %v3034 = vadd.f32 %v3014, %v3033
    %3035 = vdwg.mxu0
    %3036 = vmatpush.msra.mxu0 %v2995
    %3037 = vmatpush.msra.mxu0 %v2994
    %3038 = vmatpush.msra.mxu0 %v2993
    %3039 = vmatpush.msra.mxu0 %v2992
    %3040 = vmatpush.msra.mxu0 %v2991
    %3041 = vmatpush.msra.mxu0 %v2990
    %3042 = vmatpush.msra.mxu0 %v2989
    %3043 = vmatpush.msra.mxu0 %v2988
    %3044 = vmatpush.msra.mxu0 %v2987
    %3045 = vmatpush.msra.mxu0 %v2986
    %3046 = vmatpush.msra.mxu0 %v2985
    %3047 = vmatpush.msra.mxu0 %v2984
    %3048 = vmatpush.msra.mxu0 %v2983
    %3049 = vmatpush.msra.mxu0 %v2982
    %3050 = vmatpush.msra.mxu0 %v2981
    %3051 = vmatpush.msra.mxu0 %v2980
    %3052 = vmatmul.f32.gmra.mxu0 %v2963
    %v3053 = vpop.f32.mrf.mxu0
    %v3054 = vadd.f32 %v3034, %v3053
    %3055 = vdwg.mxu0
    %3056 = vmatpush.msra.mxu0 %v3011
    %3057 = vmatpush.msra.mxu0 %v3010
    %3058 = vmatpush.msra.mxu0 %v3009
    %3059 = vmatpush.msra.mxu0 %v3008
    %3060 = vmatpush.msra.mxu0 %v3007
    %3061 = vmatpush.msra.mxu0 %v3006
    %3062 = vmatpush.msra.mxu0 %v3005
    %3063 = vmatpush.msra.mxu0 %v3004
    %3064 = vmatpush.msra.mxu0 %v3003
    %3065 = vmatpush.msra.mxu0 %v3002
    %3066 = vmatpush.msra.mxu0 %v3001
    %3067 = vmatpush.msra.mxu0 %v3000
    %3068 = vmatpush.msra.mxu0 %v2999
    %3069 = vmatpush.msra.mxu0 %v2998
    %3070 = vmatpush.msra.mxu0 %v2997
    %3071 = vmatpush.msra.mxu0 %v2996
    %3072 = vmatmul.f32.gmra.mxu0 %v2495
    %v3073 = vpop.f32.mrf.mxu0
    %v3074 = vadd.f32 %v3054, %v3073
    %3075 = vdwg.mxu0
    %s3076 = scalar_lea.vmem [#allocation8], 8
    %3077 = vst [vmem:[%s3076] sm:$0xff] %v3074
    %3078 = vmax.xlane.f32.xlu0 %v3074
    %v3079 = vpop.xlane.xlu0 %3078
    %vm3080 = vcmp.eq.f32.partialorder %v3074, %v3079
    %v3081 = vsel %vm3080, %v2426, 128
    %v3082 = vand.u32 %v3081, 65535
    %v3083 = vshra.s32 %v3081, 16
    %v3084 = vcvt.s32.f32 %v3082
    %v3085 = vcvt.s32.f32 %v3083
    %3086 = vmin.xlane.f32.xlu0 %v3085
    %v3087 = vpop.xlane.xlu0 %3086
    %vm3088 = vcmp.eq.f32.partialorder %v3085, %v3087
    %v3089 = vsel %vm3088, %v3084, inf
    %3090 = vmin.xlane.f32.xlu0 %v3089
    %v3091 = vpop.xlane.xlu0 %3090
    %v3092 = vcvt.f32.s32 %v3091
    %v3093 = vcvt.f32.s32 %v3087
    %v3094 = vshll.u32 %v3093, 16
    %v3095 = vadd.s32 %v3094, %v3092
    %vm3096 = vcmp.eq.s32.totalorder %v2426, %v3095
    %v3097 = vsel %vm3096, 1, 0
    %v3098 = vcvt.s32.f32 %v3097
    %s3099 = sld [smem:[#allocation4 + $0x2]]
    %p3100 = scmp.ne.s32.totalorder %s3099, 0
    %s3101 = scalar_select %p3100, 1, 0
    %s3102 = scvt.s32.f32 %s3101
    %v3103 = vld [vmem:[%s4] sm:$0xff]
    %v3104 = vld [vmem:[%s4 + $0x8] sm:$0xff]
    %v3105 = vld [vmem:[%s4 + $0x10] sm:$0xff]
    %v3106 = vld [vmem:[%s4 + $0x18] sm:$0xff]
    %v3107 = vld [vmem:[%s4 + $0x20] sm:$0xff]
    %v3108 = vld [vmem:[%s4 + $0x28] sm:$0xff]
    %v3109 = vld [vmem:[%s4 + $0x30] sm:$0xff]
    %v3110 = vld [vmem:[%s4 + $0x38] sm:$0xff]
    %v3111 = vld [vmem:[%s4 + $0x40] sm:$0xff]
    %v3112 = vld [vmem:[%s4 + $0x48] sm:$0xff]
    %v3113 = vld [vmem:[%s4 + $0x50] sm:$0xff]
    %v3114 = vld [vmem:[%s4 + $0x58] sm:$0xff]
    %v3115 = vld [vmem:[%s4 + $0x60] sm:$0xff]
    %v3116 = vld [vmem:[%s4 + $0x68] sm:$0xff]
    %v3117 = vld [vmem:[%s4 + $0x70] sm:$0xff]
    %v3118 = vld [vmem:[%s4 + $0x78] sm:$0xff]
    %3119 = vmatpush.msra.mxu0 %v3118
    %3120 = vmatpush.msra.mxu0 %v3117
    %3121 = vmatpush.msra.mxu0 %v3116
    %3122 = vmatpush.msra.mxu0 %v3115
    %3123 = vmatpush.msra.mxu0 %v3114
    %3124 = vmatpush.msra.mxu0 %v3113
    %3125 = vmatpush.msra.mxu0 %v3112
    %3126 = vmatpush.msra.mxu0 %v3111
    %3127 = vmatpush.msra.mxu0 %v3110
    %3128 = vmatpush.msra.mxu0 %v3109
    %3129 = vmatpush.msra.mxu0 %v3108
    %3130 = vmatpush.msra.mxu0 %v3107
    %3131 = vmatpush.msra.mxu0 %v3106
    %3132 = vmatpush.msra.mxu0 %v3105
    %3133 = vmatpush.msra.mxu0 %v3104
    %3134 = vmatpush.msra.mxu0 %v3103
    %3135 = vmatmul.f32.gmra.mxu0 %v3098
    %v3136 = vpop.f32.mrf.mxu0
    %v3137 = vadd.f32 0.0, %v3136
    %3138 = vdwg.mxu0
    %s3139 = scalar_lea.vmem %s3, 16
    %v3140 = vld [vmem:[%s3139] sm:$0xff]
    %v3141 = vstv %s3102
    %v3142 = vmul.f32 %v3141, %v3140
    %s3143 = ssub.f32 1.0, %s3102
    %v3144 = vstv %s3143
    %v3145 = vmul.f32 %v3144, %v3137
    %v3146 = vadd.f32 %v3142, %v3145
    %v3147 = vld [vmem:[#allocation5] sm:$0xff]
    %v3148 = vld [vmem:[#allocation5 + $0x8] sm:$0xff]
    %v3149 = vld [vmem:[#allocation5 + $0x10] sm:$0xff]
    %v3150 = vld [vmem:[#allocation5 + $0x18] sm:$0xff]
    %v3151 = vld [vmem:[#allocation5 + $0x20] sm:$0xff]
    %v3152 = vld [vmem:[#allocation5 + $0x28] sm:$0xff]
    %v3153 = vld [vmem:[#allocation5 + $0x30] sm:$0xff]
    %v3154 = vld [vmem:[#allocation5 + $0x38] sm:$0xff]
    %v3155 = vld [vmem:[#allocation5 + $0x40] sm:$0xff]
    %v3156 = vld [vmem:[#allocation5 + $0x48] sm:$0xff]
    %v3157 = vld [vmem:[#allocation5 + $0x50] sm:$0xff]
    %v3158 = vld [vmem:[#allocation5 + $0x58] sm:$0xff]
    %v3159 = vld [vmem:[#allocation5 + $0x60] sm:$0xff]
    %v3160 = vld [vmem:[#allocation5 + $0x68] sm:$0xff]
    %v3161 = vld [vmem:[#allocation5 + $0x70] sm:$0xff]
    %v3162 = vld [vmem:[#allocation5 + $0x78] sm:$0xff]
    %v3163 = vld [vmem:[#allocation5 + $0x80] sm:$0xff]
    %v3164 = vld [vmem:[#allocation5 + $0x88] sm:$0xff]
    %v3165 = vld [vmem:[#allocation5 + $0x90] sm:$0xff]
    %v3166 = vld [vmem:[#allocation5 + $0x98] sm:$0xff]
    %v3167 = vld [vmem:[#allocation5 + $0xa0] sm:$0xff]
    %v3168 = vld [vmem:[#allocation5 + $0xa8] sm:$0xff]
    %v3169 = vld [vmem:[#allocation5 + $0xb0] sm:$0xff]
    %v3170 = vld [vmem:[#allocation5 + $0xb8] sm:$0xff]
    %v3171 = vld [vmem:[#allocation5 + $0xc0] sm:$0xff]
    %v3172 = vld [vmem:[#allocation5 + $0xc8] sm:$0xff]
    %v3173 = vld [vmem:[#allocation5 + $0xd0] sm:$0xff]
    %v3174 = vld [vmem:[#allocation5 + $0xd8] sm:$0xff]
    %v3175 = vld [vmem:[#allocation5 + $0xe0] sm:$0xff]
    %v3176 = vld [vmem:[#allocation5 + $0xe8] sm:$0xff]
    %v3177 = vld [vmem:[#allocation5 + $0xf0] sm:$0xff]
    %v3178 = vld [vmem:[#allocation5 + $0xf8] sm:$0xff]
    %v3179 = vld [vmem:[#allocation5 + $0x100] sm:$0xff]
    %v3180 = vld [vmem:[#allocation5 + $0x108] sm:$0xff]
    %v3181 = vld [vmem:[#allocation5 + $0x110] sm:$0xff]
    %v3182 = vld [vmem:[#allocation5 + $0x118] sm:$0xff]
    %v3183 = vld [vmem:[#allocation5 + $0x120] sm:$0xff]
    %v3184 = vld [vmem:[#allocation5 + $0x128] sm:$0xff]
    %v3185 = vld [vmem:[#allocation5 + $0x130] sm:$0xff]
    %v3186 = vld [vmem:[#allocation5 + $0x138] sm:$0xff]
    %v3187 = vld [vmem:[#allocation5 + $0x140] sm:$0xff]
    %v3188 = vld [vmem:[#allocation5 + $0x148] sm:$0xff]
    %v3189 = vld [vmem:[#allocation5 + $0x150] sm:$0xff]
    %v3190 = vld [vmem:[#allocation5 + $0x158] sm:$0xff]
    %v3191 = vld [vmem:[#allocation5 + $0x160] sm:$0xff]
    %v3192 = vld [vmem:[#allocation5 + $0x168] sm:$0xff]
    %v3193 = vld [vmem:[#allocation5 + $0x170] sm:$0xff]
    %v3194 = vld [vmem:[#allocation5 + $0x178] sm:$0xff]
    %v3195 = vld [vmem:[#allocation5 + $0x180] sm:$0xff]
    %v3196 = vld [vmem:[#allocation5 + $0x188] sm:$0xff]
    %v3197 = vld [vmem:[#allocation5 + $0x190] sm:$0xff]
    %v3198 = vld [vmem:[#allocation5 + $0x198] sm:$0xff]
    %v3199 = vld [vmem:[#allocation5 + $0x1a0] sm:$0xff]
    %v3200 = vld [vmem:[#allocation5 + $0x1a8] sm:$0xff]
    %v3201 = vld [vmem:[#allocation5 + $0x1b0] sm:$0xff]
    %v3202 = vld [vmem:[#allocation5 + $0x1b8] sm:$0xff]
    %v3203 = vld [vmem:[#allocation5 + $0x1c0] sm:$0xff]
    %v3204 = vld [vmem:[#allocation5 + $0x1c8] sm:$0xff]
    %v3205 = vld [vmem:[#allocation5 + $0x1d0] sm:$0xff]
    %v3206 = vld [vmem:[#allocation5 + $0x1d8] sm:$0xff]
    %v3207 = vld [vmem:[#allocation5 + $0x1e0] sm:$0xff]
    %v3208 = vld [vmem:[#allocation5 + $0x1e8] sm:$0xff]
    %v3209 = vld [vmem:[#allocation5 + $0x1f0] sm:$0xff]
    %v3210 = vld [vmem:[#allocation5 + $0x1f8] sm:$0xff]
    %v3211 = vld [vmem:[#allocation5 + $0x200] sm:$0xff]
    %v3212 = vld [vmem:[#allocation5 + $0x208] sm:$0xff]
    %v3213 = vld [vmem:[#allocation5 + $0x210] sm:$0xff]
    %v3214 = vld [vmem:[#allocation5 + $0x218] sm:$0xff]
    %v3215 = vld [vmem:[#allocation5 + $0x220] sm:$0xff]
    %v3216 = vld [vmem:[#allocation5 + $0x228] sm:$0xff]
    %v3217 = vld [vmem:[#allocation5 + $0x230] sm:$0xff]
    %v3218 = vld [vmem:[#allocation5 + $0x238] sm:$0xff]
    %v3219 = vld [vmem:[#allocation5 + $0x240] sm:$0xff]
    %v3220 = vld [vmem:[#allocation5 + $0x248] sm:$0xff]
    %v3221 = vld [vmem:[#allocation5 + $0x250] sm:$0xff]
    %v3222 = vld [vmem:[#allocation5 + $0x258] sm:$0xff]
    %v3223 = vld [vmem:[#allocation5 + $0x260] sm:$0xff]
    %v3224 = vld [vmem:[#allocation5 + $0x268] sm:$0xff]
    %v3225 = vld [vmem:[#allocation5 + $0x270] sm:$0xff]
    %v3226 = vld [vmem:[#allocation5 + $0x278] sm:$0xff]
    %v3227 = vld [vmem:[#allocation5 + $0x280] sm:$0xff]
    %v3228 = vld [vmem:[#allocation5 + $0x288] sm:$0xff]
    %v3229 = vld [vmem:[#allocation5 + $0x290] sm:$0xff]
    %v3230 = vld [vmem:[#allocation5 + $0x298] sm:$0xff]
    %v3231 = vld [vmem:[#allocation5 + $0x2a0] sm:$0xff]
    %v3232 = vld [vmem:[#allocation5 + $0x2a8] sm:$0xff]
    %v3233 = vld [vmem:[#allocation5 + $0x2b0] sm:$0xff]
    %v3234 = vld [vmem:[#allocation5 + $0x2b8] sm:$0xff]
    %v3235 = vld [vmem:[#allocation5 + $0x2c0] sm:$0xff]
    %v3236 = vld [vmem:[#allocation5 + $0x2c8] sm:$0xff]
    %v3237 = vld [vmem:[#allocation5 + $0x2d0] sm:$0xff]
    %v3238 = vld [vmem:[#allocation5 + $0x2d8] sm:$0xff]
    %v3239 = vld [vmem:[#allocation5 + $0x2e0] sm:$0xff]
    %v3240 = vld [vmem:[#allocation5 + $0x2e8] sm:$0xff]
    %v3241 = vld [vmem:[#allocation5 + $0x2f0] sm:$0xff]
    %v3242 = vld [vmem:[#allocation5 + $0x2f8] sm:$0xff]
    %v3243 = vld [vmem:[#allocation5 + $0x300] sm:$0xff]
    %v3244 = vld [vmem:[#allocation5 + $0x308] sm:$0xff]
    %v3245 = vld [vmem:[#allocation5 + $0x310] sm:$0xff]
    %v3246 = vld [vmem:[#allocation5 + $0x318] sm:$0xff]
    %v3247 = vld [vmem:[#allocation5 + $0x320] sm:$0xff]
    %v3248 = vld [vmem:[#allocation5 + $0x328] sm:$0xff]
    %v3249 = vld [vmem:[#allocation5 + $0x330] sm:$0xff]
    %v3250 = vld [vmem:[#allocation5 + $0x338] sm:$0xff]
    %v3251 = vld [vmem:[#allocation5 + $0x340] sm:$0xff]
    %v3252 = vld [vmem:[#allocation5 + $0x348] sm:$0xff]
    %v3253 = vld [vmem:[#allocation5 + $0x350] sm:$0xff]
    %v3254 = vld [vmem:[#allocation5 + $0x358] sm:$0xff]
    %v3255 = vld [vmem:[#allocation5 + $0x360] sm:$0xff]
    %v3256 = vld [vmem:[#allocation5 + $0x368] sm:$0xff]
    %v3257 = vld [vmem:[#allocation5 + $0x370] sm:$0xff]
    %v3258 = vld [vmem:[#allocation5 + $0x378] sm:$0xff]
    %v3259 = vld [vmem:[#allocation5 + $0x380] sm:$0xff]
    %v3260 = vld [vmem:[#allocation5 + $0x388] sm:$0xff]
    %v3261 = vld [vmem:[#allocation5 + $0x390] sm:$0xff]
    %v3262 = vld [vmem:[#allocation5 + $0x398] sm:$0xff]
    %v3263 = vld [vmem:[#allocation5 + $0x3a0] sm:$0xff]
    %v3264 = vld [vmem:[#allocation5 + $0x3a8] sm:$0xff]
    %v3265 = vld [vmem:[#allocation5 + $0x3b0] sm:$0xff]
    %v3266 = vld [vmem:[#allocation5 + $0x3b8] sm:$0xff]
    %v3267 = vld [vmem:[#allocation5 + $0x3c0] sm:$0xff]
    %v3268 = vld [vmem:[#allocation5 + $0x3c8] sm:$0xff]
    %v3269 = vld [vmem:[#allocation5 + $0x3d0] sm:$0xff]
    %v3270 = vld [vmem:[#allocation5 + $0x3d8] sm:$0xff]
    %v3271 = vld [vmem:[#allocation5 + $0x3e0] sm:$0xff]
    %v3272 = vld [vmem:[#allocation5 + $0x3e8] sm:$0xff]
    %v3273 = vld [vmem:[#allocation5 + $0x3f0] sm:$0xff]
    %v3274 = vld [vmem:[#allocation5 + $0x3f8] sm:$0xff]
    %v3275 = vld [vmem:[%s6] sm:$0xf]
    %v3277 = vperm.slane %v3275, 0
    %v3278 = vperm.slane %v3275, 1
    %v3279 = vperm.slane %v3275, 2
    %v3280 = vperm.slane %v3275, 3
    %3285 = vmatpush.msra.mxu0 %v3207
    %3286 = vmatpush.msra.mxu0 %v3203
    %3287 = vmatpush.msra.mxu0 %v3199
    %3288 = vmatpush.msra.mxu0 %v3195
    %3289 = vmatpush.msra.mxu0 %v3191
    %3290 = vmatpush.msra.mxu0 %v3187
    %3291 = vmatpush.msra.mxu0 %v3183
    %3292 = vmatpush.msra.mxu0 %v3179
    %3293 = vmatpush.msra.mxu0 %v3175
    %3294 = vmatpush.msra.mxu0 %v3171
    %3295 = vmatpush.msra.mxu0 %v3167
    %3296 = vmatpush.msra.mxu0 %v3163
    %3297 = vmatpush.msra.mxu0 %v3159
    %3298 = vmatpush.msra.mxu0 %v3155
    %3299 = vmatpush.msra.mxu0 %v3151
    %3300 = vmatpush.msra.mxu0 %v3147
    %3301 = vmatmul.f32.gmra.mxu0 %v3146
    %v3302 = vpop.f32.mrf.mxu0
    %v3303 = vadd.f32 %v3277, %v3302
    %3304 = vdwg.mxu0
    %3305 = vmatpush.msra.mxu0 %v3271
    %3306 = vmatpush.msra.mxu0 %v3267
    %3307 = vmatpush.msra.mxu0 %v3263
    %3308 = vmatpush.msra.mxu0 %v3259
    %3309 = vmatpush.msra.mxu0 %v3255
    %3310 = vmatpush.msra.mxu0 %v3251
    %3311 = vmatpush.msra.mxu0 %v3247
    %3312 = vmatpush.msra.mxu0 %v3243
    %3313 = vmatpush.msra.mxu0 %v3239
    %3314 = vmatpush.msra.mxu0 %v3235
    %3315 = vmatpush.msra.mxu0 %v3231
    %3316 = vmatpush.msra.mxu0 %v3227
    %3317 = vmatpush.msra.mxu0 %v3223
    %3318 = vmatpush.msra.mxu0 %v3219
    %3319 = vmatpush.msra.mxu0 %v3215
    %3320 = vmatpush.msra.mxu0 %v3211
    %3321 = vmatmul.f32.gmra.mxu0 %v2856
    %v3322 = vpop.f32.mrf.mxu0
    %v3323 = vadd.f32 %v3303, %v3322
    %3324 = vdwg.mxu0
    %3325 = vmatpush.msra.mxu0 %v3208
    %3326 = vmatpush.msra.mxu0 %v3204
    %3327 = vmatpush.msra.mxu0 %v3200
    %3328 = vmatpush.msra.mxu0 %v3196
    %3329 = vmatpush.msra.mxu0 %v3192
    %3330 = vmatpush.msra.mxu0 %v3188
    %3331 = vmatpush.msra.mxu0 %v3184
    %3332 = vmatpush.msra.mxu0 %v3180
    %3333 = vmatpush.msra.mxu0 %v3176
    %3334 = vmatpush.msra.mxu0 %v3172
    %3335 = vmatpush.msra.mxu0 %v3168
    %3336 = vmatpush.msra.mxu0 %v3164
    %3337 = vmatpush.msra.mxu0 %v3160
    %3338 = vmatpush.msra.mxu0 %v3156
    %3339 = vmatpush.msra.mxu0 %v3152
    %3340 = vmatpush.msra.mxu0 %v3148
    %3341 = vmatmul.f32.gmra.mxu0 %v3146
    %v3342 = vpop.f32.mrf.mxu0
    %v3343 = vadd.f32 %v3278, %v3342
    %3344 = vdwg.mxu0
    %3345 = vmatpush.msra.mxu0 %v3272
    %3346 = vmatpush.msra.mxu0 %v3268
    %3347 = vmatpush.msra.mxu0 %v3264
    %3348 = vmatpush.msra.mxu0 %v3260
    %3349 = vmatpush.msra.mxu0 %v3256
    %3350 = vmatpush.msra.mxu0 %v3252
    %3351 = vmatpush.msra.mxu0 %v3248
    %3352 = vmatpush.msra.mxu0 %v3244
    %3353 = vmatpush.msra.mxu0 %v3240
    %3354 = vmatpush.msra.mxu0 %v3236
    %3355 = vmatpush.msra.mxu0 %v3232
    %3356 = vmatpush.msra.mxu0 %v3228
    %3357 = vmatpush.msra.mxu0 %v3224
    %3358 = vmatpush.msra.mxu0 %v3220
    %3359 = vmatpush.msra.mxu0 %v3216
    %3360 = vmatpush.msra.mxu0 %v3212
    %3361 = vmatmul.f32.gmra.mxu0 %v2856
    %v3362 = vpop.f32.mrf.mxu0
    %v3363 = vadd.f32 %v3343, %v3362
    %3364 = vdwg.mxu0
    %3365 = vmatpush.msra.mxu0 %v3209
    %3366 = vmatpush.msra.mxu0 %v3205
    %3367 = vmatpush.msra.mxu0 %v3201
    %3368 = vmatpush.msra.mxu0 %v3197
    %3369 = vmatpush.msra.mxu0 %v3193
    %3370 = vmatpush.msra.mxu0 %v3189
    %3371 = vmatpush.msra.mxu0 %v3185
    %3372 = vmatpush.msra.mxu0 %v3181
    %3373 = vmatpush.msra.mxu0 %v3177
    %3374 = vmatpush.msra.mxu0 %v3173
    %3375 = vmatpush.msra.mxu0 %v3169
    %3376 = vmatpush.msra.mxu0 %v3165
    %3377 = vmatpush.msra.mxu0 %v3161
    %3378 = vmatpush.msra.mxu0 %v3157
    %3379 = vmatpush.msra.mxu0 %v3153
    %3380 = vmatpush.msra.mxu0 %v3149
    %3381 = vmatmul.f32.gmra.mxu0 %v3146
    %v3382 = vpop.f32.mrf.mxu0
    %v3383 = vadd.f32 %v3279, %v3382
    %3384 = vdwg.mxu0
    %3385 = vmatpush.msra.mxu0 %v3273
    %3386 = vmatpush.msra.mxu0 %v3269
    %3387 = vmatpush.msra.mxu0 %v3265
    %3388 = vmatpush.msra.mxu0 %v3261
    %3389 = vmatpush.msra.mxu0 %v3257
    %3390 = vmatpush.msra.mxu0 %v3253
    %3391 = vmatpush.msra.mxu0 %v3249
    %3392 = vmatpush.msra.mxu0 %v3245
    %3393 = vmatpush.msra.mxu0 %v3241
    %3394 = vmatpush.msra.mxu0 %v3237
    %3395 = vmatpush.msra.mxu0 %v3233
    %3396 = vmatpush.msra.mxu0 %v3229
    %3397 = vmatpush.msra.mxu0 %v3225
    %3398 = vmatpush.msra.mxu0 %v3221
    %3399 = vmatpush.msra.mxu0 %v3217
    %3400 = vmatpush.msra.mxu0 %v3213
    %3401 = vmatmul.f32.gmra.mxu0 %v2856
    %v3402 = vpop.f32.mrf.mxu0
    %v3403 = vadd.f32 %v3383, %v3402
    %3404 = vdwg.mxu0
    %3405 = vmatpush.msra.mxu0 %v3210
    %3406 = vmatpush.msra.mxu0 %v3206
    %3407 = vmatpush.msra.mxu0 %v3202
    %3408 = vmatpush.msra.mxu0 %v3198
    %3409 = vmatpush.msra.mxu0 %v3194
    %3410 = vmatpush.msra.mxu0 %v3190
    %3411 = vmatpush.msra.mxu0 %v3186
    %3412 = vmatpush.msra.mxu0 %v3182
    %3413 = vmatpush.msra.mxu0 %v3178
    %3414 = vmatpush.msra.mxu0 %v3174
    %3415 = vmatpush.msra.mxu0 %v3170
    %3416 = vmatpush.msra.mxu0 %v3166
    %3417 = vmatpush.msra.mxu0 %v3162
    %3418 = vmatpush.msra.mxu0 %v3158
    %3419 = vmatpush.msra.mxu0 %v3154
    %3420 = vmatpush.msra.mxu0 %v3150
    %3421 = vmatmul.f32.gmra.mxu0 %v3146
    %v3422 = vpop.f32.mrf.mxu0
    %v3423 = vadd.f32 %v3280, %v3422
    %3424 = vdwg.mxu0
    %3425 = vmatpush.msra.mxu0 %v3274
    %3426 = vmatpush.msra.mxu0 %v3270
    %3427 = vmatpush.msra.mxu0 %v3266
    %3428 = vmatpush.msra.mxu0 %v3262
    %3429 = vmatpush.msra.mxu0 %v3258
    %3430 = vmatpush.msra.mxu0 %v3254
    %3431 = vmatpush.msra.mxu0 %v3250
    %3432 = vmatpush.msra.mxu0 %v3246
    %3433 = vmatpush.msra.mxu0 %v3242
    %3434 = vmatpush.msra.mxu0 %v3238
    %3435 = vmatpush.msra.mxu0 %v3234
    %3436 = vmatpush.msra.mxu0 %v3230
    %3437 = vmatpush.msra.mxu0 %v3226
    %3438 = vmatpush.msra.mxu0 %v3222
    %3439 = vmatpush.msra.mxu0 %v3218
    %3440 = vmatpush.msra.mxu0 %v3214
    %3441 = vmatmul.f32.gmra.mxu0 %v2856
    %v3442 = vpop.f32.mrf.mxu0
    %v3443 = vadd.f32 %v3423, %v3442
    %3444 = vdwg.mxu0
    %v3445 = vxor.u32 %v3323, 2147483648
    %v3446 = vmul.f32 %v3445, 1.442695
    %v3447 = vpow.pop %v3446
    %v3448 = vadd.f32 %v3447, 1.0
    %v3449 = vrcp.pop %v3448
    %v3450 = vmul.f32 %v3448, %v3449
    %v3451 = vsub.f32 1.0, %v3450
    %v3452 = vmul.f32 %v3449, %v3451
    %v3453 = vadd.f32 %v3449, %v3452
    %vm3454 = vweird.f32 %v3448
    %vm3455 = vweird.f32 %v3449
    %vm3456 = vmor %vm3454, %vm3455
    %v3457 = vsel %vm3456, %v3449, %v3453
    %v3458 = vand.u32 2147483647, %v3448
    %vm3459 = vcmp.eq.f32.partialorder %v3458, 8.507059e+37
    %v3460 = vand.u32 %v3448, 2147483648
    %v3461 = vor.u32 1.1754944e-38, %v3460
    %v3462 = vsel %vm3459, %v3461, %v3457
    %v3463 = vmul.f32 1.0, %v3462
    %v3464 = vxor.u32 %v3363, 2147483648
    %v3465 = vmul.f32 %v3464, 1.442695
    %v3466 = vpow.pop %v3465
    %v3467 = vadd.f32 %v3466, 1.0
    %v3468 = vrcp.pop %v3467
    %v3469 = vmul.f32 %v3467, %v3468
    %v3470 = vsub.f32 1.0, %v3469
    %v3471 = vmul.f32 %v3468, %v3470
    %v3472 = vadd.f32 %v3468, %v3471
    %vm3473 = vweird.f32 %v3467
    %vm3474 = vweird.f32 %v3468
    %vm3475 = vmor %vm3473, %vm3474
    %v3476 = vsel %vm3475, %v3468, %v3472
    %v3477 = vand.u32 2147483647, %v3467
    %vm3478 = vcmp.eq.f32.partialorder %v3477, 8.507059e+37
    %v3479 = vand.u32 %v3467, 2147483648
    %v3480 = vor.u32 1.1754944e-38, %v3479
    %v3481 = vsel %vm3478, %v3480, %v3476
    %v3482 = vmul.f32 1.0, %v3481
    %v3483 = vtanh.pop %v3403
    %v3484 = vxor.u32 %v3443, 2147483648
    %v3485 = vmul.f32 %v3484, 1.442695
    %v3486 = vpow.pop %v3485
    %v3487 = vadd.f32 %v3486, 1.0
    %v3488 = vrcp.pop %v3487
    %v3489 = vmul.f32 %v3487, %v3488
    %v3490 = vsub.f32 1.0, %v3489
    %v3491 = vmul.f32 %v3488, %v3490
    %v3492 = vadd.f32 %v3488, %v3491
    %vm3493 = vweird.f32 %v3487
    %vm3494 = vweird.f32 %v3488
    %vm3495 = vmor %vm3493, %vm3494
    %v3496 = vsel %vm3495, %v3488, %v3492
    %v3497 = vand.u32 2147483647, %v3487
    %vm3498 = vcmp.eq.f32.partialorder %v3497, 8.507059e+37
    %v3499 = vand.u32 %v3487, 2147483648
    %v3500 = vor.u32 1.1754944e-38, %v3499
    %v3501 = vsel %vm3498, %v3500, %v3496
    %v3502 = vmul.f32 1.0, %v3501
    %v3503 = vmul.f32 %v3482, %v2854
    %v3504 = vmul.f32 %v3463, %v3483
    %v3505 = vadd.f32 %v3503, %v3504
    %v3506 = vtanh.pop %v3505
    %v3507 = vmul.f32 %v3502, %v3506
    %v3508 = vld [vmem:[#allocation2] sm:$0xff]
    %v3509 = vld [vmem:[#allocation2 + $0x8] sm:$0xff]
    %v3510 = vld [vmem:[#allocation2 + $0x10] sm:$0xff]
    %v3511 = vld [vmem:[#allocation2 + $0x18] sm:$0xff]
    %v3512 = vld [vmem:[#allocation2 + $0x20] sm:$0xff]
    %v3513 = vld [vmem:[#allocation2 + $0x28] sm:$0xff]
    %v3514 = vld [vmem:[#allocation2 + $0x30] sm:$0xff]
    %v3515 = vld [vmem:[#allocation2 + $0x38] sm:$0xff]
    %v3516 = vmul.f32 %v3508, %v3507
    %v3517 = vmul.f32 %v3509, %v3507
    %v3518 = vmul.f32 %v3510, %v3507
    %v3519 = vmul.f32 %v3511, %v3507
    %v3520 = vmul.f32 %v3512, %v3507
    %v3521 = vmul.f32 %v3513, %v3507
    %v3522 = vmul.f32 %v3514, %v3507
    %v3523 = vmul.f32 %v3515, %v3507
    %3524 = vadd.xlane.f32.xlu0 %v3516
    %v3525 = vpop.xlane.xlu0 %3524
    %3526 = vadd.xlane.f32.xlu0 %v3517
    %v3527 = vpop.xlane.xlu0 %3526
    %3528 = vadd.xlane.f32.xlu0 %v3518
    %v3529 = vpop.xlane.xlu0 %3528
    %3530 = vadd.xlane.f32.xlu0 %v3519
    %v3531 = vpop.xlane.xlu0 %3530
    %3532 = vadd.xlane.f32.xlu0 %v3520
    %v3533 = vpop.xlane.xlu0 %3532
    %3534 = vadd.xlane.f32.xlu0 %v3521
    %v3535 = vpop.xlane.xlu0 %3534
    %3536 = vadd.xlane.f32.xlu0 %v3522
    %v3537 = vpop.xlane.xlu0 %3536
    %3538 = vadd.xlane.f32.xlu0 %v3523
    %v3539 = vpop.xlane.xlu0 %3538
    %v3540 = vmax.f32 %v3525, %v3533
    %v3541 = vmax.f32 %v3527, %v3535
    %v3542 = vmax.f32 %v3529, %v3537
    %v3543 = vmax.f32 %v3531, %v3539
    %v3544 = vmax.f32 %v3540, %v3541
    %v3545 = vmax.f32 %v3542, %v3543
    %v3546 = vmax.f32 %v3544, %v3545
    %v3547 = vsub.f32 %v3525, %v3546
    %v3548 = vsub.f32 %v3527, %v3546
    %v3549 = vsub.f32 %v3529, %v3546
    %v3550 = vsub.f32 %v3531, %v3546
    %v3551 = vsub.f32 %v3533, %v3546
    %v3552 = vsub.f32 %v3535, %v3546
    %v3553 = vsub.f32 %v3537, %v3546
    %v3554 = vsub.f32 %v3539, %v3546
    %v3555 = vmul.f32 %v3547, 1.442695
    %v3556 = vpow.pop %v3555
    %v3557 = vmul.f32 %v3548, 1.442695
    %v3558 = vpow.pop %v3557
    %v3559 = vmul.f32 %v3549, 1.442695
    %v3560 = vpow.pop %v3559
    %v3561 = vmul.f32 %v3550, 1.442695
    %v3562 = vpow.pop %v3561
    %v3563 = vmul.f32 %v3551, 1.442695
    %v3564 = vpow.pop %v3563
    %v3565 = vmul.f32 %v3552, 1.442695
    %v3566 = vpow.pop %v3565
    %v3567 = vmul.f32 %v3553, 1.442695
    %v3568 = vpow.pop %v3567
    %v3569 = vmul.f32 %v3554, 1.442695
    %v3570 = vpow.pop %v3569
    %v3571 = vadd.f32 %v3556, %v3558
    %v3572 = vadd.f32 %v3571, %v3560
    %v3573 = vadd.f32 %v3572, %v3562
    %v3574 = vadd.f32 %v3573, %v3564
    %v3575 = vadd.f32 %v3574, %v3566
    %v3576 = vadd.f32 %v3575, %v3568
    %v3577 = vadd.f32 %v3576, %v3570
    %v3578 = vrcp.pop %v3577
    %v3579 = vmul.f32 %v3577, %v3578
    %v3580 = vsub.f32 1.0, %v3579
    %v3581 = vmul.f32 %v3578, %v3580
    %v3582 = vadd.f32 %v3578, %v3581
    %vm3583 = vweird.f32 %v3577
    %vm3584 = vweird.f32 %v3578
    %vm3585 = vmor %vm3583, %vm3584
    %v3586 = vsel %vm3585, %v3578, %v3582
    %v3587 = vand.u32 2147483647, %v3577
    %vm3588 = vcmp.eq.f32.partialorder %v3587, 8.507059e+37
    %v3589 = vand.u32 %v3577, 2147483648
    %v3590 = vor.u32 1.1754944e-38, %v3589
    %v3591 = vsel %vm3588, %v3590, %v3586
    %v3592 = vmul.f32 %v3556, %v3591
    %v3593 = vmul.f32 %v3558, %v3591
    %v3594 = vmul.f32 %v3560, %v3591
    %v3595 = vmul.f32 %v3562, %v3591
    %v3596 = vmul.f32 %v3564, %v3591
    %v3597 = vmul.f32 %v3566, %v3591
    %v3598 = vmul.f32 %v3568, %v3591
    %v3599 = vmul.f32 %v3570, %v3591
    %v3600 = vmul.f32 %v3508, %v3592
    %v3601 = vmul.f32 %v3509, %v3593
    %v3602 = vmul.f32 %v3510, %v3594
    %v3603 = vmul.f32 %v3511, %v3595
    %v3604 = vmul.f32 %v3512, %v3596
    %v3605 = vmul.f32 %v3513, %v3597
    %v3606 = vmul.f32 %v3514, %v3598
    %v3607 = vmul.f32 %v3515, %v3599
    %v3608 = vadd.f32 %v3600, %v3601
    %v3609 = vadd.f32 %v3608, %v3602
    %v3610 = vadd.f32 %v3609, %v3603
    %v3611 = vadd.f32 %v3610, %v3604
    %v3612 = vadd.f32 %v3611, %v3605
    %v3613 = vadd.f32 %v3612, %v3606
    %v3614 = vadd.f32 %v3613, %v3607
    %v3615 = vld [vmem:[%s7] sm:$0xff]
    %v3616 = vld [vmem:[%s7 + $0x8] sm:$0xff]
    %v3617 = vld [vmem:[%s7 + $0x10] sm:$0xff]
    %v3618 = vld [vmem:[%s7 + $0x18] sm:$0xff]
    %v3619 = vld [vmem:[%s7 + $0x20] sm:$0xff]
    %v3620 = vld [vmem:[%s7 + $0x28] sm:$0xff]
    %v3621 = vld [vmem:[%s7 + $0x30] sm:$0xff]
    %v3622 = vld [vmem:[%s7 + $0x38] sm:$0xff]
    %v3623 = vld [vmem:[%s7 + $0x40] sm:$0xff]
    %v3624 = vld [vmem:[%s7 + $0x48] sm:$0xff]
    %v3625 = vld [vmem:[%s7 + $0x50] sm:$0xff]
    %v3626 = vld [vmem:[%s7 + $0x58] sm:$0xff]
    %v3627 = vld [vmem:[%s7 + $0x60] sm:$0xff]
    %v3628 = vld [vmem:[%s7 + $0x68] sm:$0xff]
    %v3629 = vld [vmem:[%s7 + $0x70] sm:$0xff]
    %v3630 = vld [vmem:[%s7 + $0x78] sm:$0xff]
    %v3631 = vld [vmem:[%s7 + $0x80] sm:$0xff]
    %v3632 = vld [vmem:[%s7 + $0x88] sm:$0xff]
    %v3633 = vld [vmem:[%s7 + $0x90] sm:$0xff]
    %v3634 = vld [vmem:[%s7 + $0x98] sm:$0xff]
    %v3635 = vld [vmem:[%s7 + $0xa0] sm:$0xff]
    %v3636 = vld [vmem:[%s7 + $0xa8] sm:$0xff]
    %v3637 = vld [vmem:[%s7 + $0xb0] sm:$0xff]
    %v3638 = vld [vmem:[%s7 + $0xb8] sm:$0xff]
    %v3639 = vld [vmem:[%s7 + $0xc0] sm:$0xff]
    %v3640 = vld [vmem:[%s7 + $0xc8] sm:$0xff]
    %v3641 = vld [vmem:[%s7 + $0xd0] sm:$0xff]
    %v3642 = vld [vmem:[%s7 + $0xd8] sm:$0xff]
    %v3643 = vld [vmem:[%s7 + $0xe0] sm:$0xff]
    %v3644 = vld [vmem:[%s7 + $0xe8] sm:$0xff]
    %v3645 = vld [vmem:[%s7 + $0xf0] sm:$0xff]
    %v3646 = vld [vmem:[%s7 + $0xf8] sm:$0xff]
    %v3647 = vld [vmem:[%s7 + $0x100] sm:$0xff]
    %v3648 = vld [vmem:[%s7 + $0x108] sm:$0xff]
    %v3649 = vld [vmem:[%s7 + $0x110] sm:$0xff]
    %v3650 = vld [vmem:[%s7 + $0x118] sm:$0xff]
    %v3651 = vld [vmem:[%s7 + $0x120] sm:$0xff]
    %v3652 = vld [vmem:[%s7 + $0x128] sm:$0xff]
    %v3653 = vld [vmem:[%s7 + $0x130] sm:$0xff]
    %v3654 = vld [vmem:[%s7 + $0x138] sm:$0xff]
    %v3655 = vld [vmem:[%s7 + $0x140] sm:$0xff]
    %v3656 = vld [vmem:[%s7 + $0x148] sm:$0xff]
    %v3657 = vld [vmem:[%s7 + $0x150] sm:$0xff]
    %v3658 = vld [vmem:[%s7 + $0x158] sm:$0xff]
    %v3659 = vld [vmem:[%s7 + $0x160] sm:$0xff]
    %v3660 = vld [vmem:[%s7 + $0x168] sm:$0xff]
    %v3661 = vld [vmem:[%s7 + $0x170] sm:$0xff]
    %v3662 = vld [vmem:[%s7 + $0x178] sm:$0xff]
    %v3663 = vld [vmem:[%s8] sm:$0x1]
    %v3665 = vperm.slane %v3663, 0
    %3667 = vmatpush.msra.mxu0 %v3630
    %3668 = vmatpush.msra.mxu0 %v3629
    %3669 = vmatpush.msra.mxu0 %v3628
    %3670 = vmatpush.msra.mxu0 %v3627
    %3671 = vmatpush.msra.mxu0 %v3626
    %3672 = vmatpush.msra.mxu0 %v3625
    %3673 = vmatpush.msra.mxu0 %v3624
    %3674 = vmatpush.msra.mxu0 %v3623
    %3675 = vmatpush.msra.mxu0 %v3622
    %3676 = vmatpush.msra.mxu0 %v3621
    %3677 = vmatpush.msra.mxu0 %v3620
    %3678 = vmatpush.msra.mxu0 %v3619
    %3679 = vmatpush.msra.mxu0 %v3618
    %3680 = vmatpush.msra.mxu0 %v3617
    %3681 = vmatpush.msra.mxu0 %v3616
    %3682 = vmatpush.msra.mxu0 %v3615
    %3683 = vmatmul.f32.gmra.mxu0 %v3507
    %v3684 = vpop.f32.mrf.mxu0
    %v3685 = vadd.f32 %v3665, %v3684
    %3686 = vdwg.mxu0
    %3687 = vmatpush.msra.mxu0 %v3646
    %3688 = vmatpush.msra.mxu0 %v3645
    %3689 = vmatpush.msra.mxu0 %v3644
    %3690 = vmatpush.msra.mxu0 %v3643
    %3691 = vmatpush.msra.mxu0 %v3642
    %3692 = vmatpush.msra.mxu0 %v3641
    %3693 = vmatpush.msra.mxu0 %v3640
    %3694 = vmatpush.msra.mxu0 %v3639
    %3695 = vmatpush.msra.mxu0 %v3638
    %3696 = vmatpush.msra.mxu0 %v3637
    %3697 = vmatpush.msra.mxu0 %v3636
    %3698 = vmatpush.msra.mxu0 %v3635
    %3699 = vmatpush.msra.mxu0 %v3634
    %3700 = vmatpush.msra.mxu0 %v3633
    %3701 = vmatpush.msra.mxu0 %v3632
    %3702 = vmatpush.msra.mxu0 %v3631
    %3703 = vmatmul.f32.gmra.mxu0 %v3614
    %v3704 = vpop.f32.mrf.mxu0
    %v3705 = vadd.f32 %v3685, %v3704
    %3706 = vdwg.mxu0
    %3707 = vmatpush.msra.mxu0 %v3662
    %3708 = vmatpush.msra.mxu0 %v3661
    %3709 = vmatpush.msra.mxu0 %v3660
    %3710 = vmatpush.msra.mxu0 %v3659
    %3711 = vmatpush.msra.mxu0 %v3658
    %3712 = vmatpush.msra.mxu0 %v3657
    %3713 = vmatpush.msra.mxu0 %v3656
    %3714 = vmatpush.msra.mxu0 %v3655
    %3715 = vmatpush.msra.mxu0 %v3654
    %3716 = vmatpush.msra.mxu0 %v3653
    %3717 = vmatpush.msra.mxu0 %v3652
    %3718 = vmatpush.msra.mxu0 %v3651
    %3719 = vmatpush.msra.mxu0 %v3650
    %3720 = vmatpush.msra.mxu0 %v3649
    %3721 = vmatpush.msra.mxu0 %v3648
    %3722 = vmatpush.msra.mxu0 %v3647
    %3723 = vmatmul.f32.gmra.mxu0 %v3146
    %v3724 = vpop.f32.mrf.mxu0
    %v3725 = vadd.f32 %v3705, %v3724
    %3726 = vdwg.mxu0
    %s3727 = scalar_lea.vmem [#allocation8], 16
    %3728 = vst [vmem:[%s3727] sm:$0xff] %v3725
    %3729 = vmax.xlane.f32.xlu0 %v3725
    %v3730 = vpop.xlane.xlu0 %3729
    %vm3731 = vcmp.eq.f32.partialorder %v3725, %v3730
    %v3732 = vsel %vm3731, %v2426, 128
    %v3733 = vand.u32 %v3732, 65535
    %v3734 = vshra.s32 %v3732, 16
    %v3735 = vcvt.s32.f32 %v3733
    %v3736 = vcvt.s32.f32 %v3734
    %3737 = vmin.xlane.f32.xlu0 %v3736
    %v3738 = vpop.xlane.xlu0 %3737
    %vm3739 = vcmp.eq.f32.partialorder %v3736, %v3738
    %v3740 = vsel %vm3739, %v3735, inf
    %3741 = vmin.xlane.f32.xlu0 %v3740
    %v3742 = vpop.xlane.xlu0 %3741
    %v3743 = vcvt.f32.s32 %v3742
    %v3744 = vcvt.f32.s32 %v3738
    %v3745 = vshll.u32 %v3744, 16
    %v3746 = vadd.s32 %v3745, %v3743
    %vm3747 = vcmp.eq.s32.totalorder %v2426, %v3746
    %v3748 = vsel %vm3747, 1, 0
    %v3749 = vcvt.s32.f32 %v3748
    %s3750 = sld [smem:[#allocation4 + $0x3]]
    %p3751 = scmp.ne.s32.totalorder %s3750, 0
    %s3752 = scalar_select %p3751, 1, 0
    %s3753 = scvt.s32.f32 %s3752
    %v3754 = vld [vmem:[%s4] sm:$0xff]
    %v3755 = vld [vmem:[%s4 + $0x8] sm:$0xff]
    %v3756 = vld [vmem:[%s4 + $0x10] sm:$0xff]
    %v3757 = vld [vmem:[%s4 + $0x18] sm:$0xff]
    %v3758 = vld [vmem:[%s4 + $0x20] sm:$0xff]
    %v3759 = vld [vmem:[%s4 + $0x28] sm:$0xff]
    %v3760 = vld [vmem:[%s4 + $0x30] sm:$0xff]
    %v3761 = vld [vmem:[%s4 + $0x38] sm:$0xff]
    %v3762 = vld [vmem:[%s4 + $0x40] sm:$0xff]
    %v3763 = vld [vmem:[%s4 + $0x48] sm:$0xff]
    %v3764 = vld [vmem:[%s4 + $0x50] sm:$0xff]
    %v3765 = vld [vmem:[%s4 + $0x58] sm:$0xff]
    %v3766 = vld [vmem:[%s4 + $0x60] sm:$0xff]
    %v3767 = vld [vmem:[%s4 + $0x68] sm:$0xff]
    %v3768 = vld [vmem:[%s4 + $0x70] sm:$0xff]
    %v3769 = vld [vmem:[%s4 + $0x78] sm:$0xff]
    %3770 = vmatpush.msra.mxu0 %v3769
    %3771 = vmatpush.msra.mxu0 %v3768
    %3772 = vmatpush.msra.mxu0 %v3767
    %3773 = vmatpush.msra.mxu0 %v3766
    %3774 = vmatpush.msra.mxu0 %v3765
    %3775 = vmatpush.msra.mxu0 %v3764
    %3776 = vmatpush.msra.mxu0 %v3763
    %3777 = vmatpush.msra.mxu0 %v3762
    %3778 = vmatpush.msra.mxu0 %v3761
    %3779 = vmatpush.msra.mxu0 %v3760
    %3780 = vmatpush.msra.mxu0 %v3759
    %3781 = vmatpush.msra.mxu0 %v3758
    %3782 = vmatpush.msra.mxu0 %v3757
    %3783 = vmatpush.msra.mxu0 %v3756
    %3784 = vmatpush.msra.mxu0 %v3755
    %3785 = vmatpush.msra.mxu0 %v3754
    %3786 = vmatmul.f32.gmra.mxu0 %v3749
    %v3787 = vpop.f32.mrf.mxu0
    %v3788 = vadd.f32 0.0, %v3787
    %3789 = vdwg.mxu0
    %s3790 = scalar_lea.vmem %s3, 24
    %v3791 = vld [vmem:[%s3790] sm:$0xff]
    %v3792 = vstv %s3753
    %v3793 = vmul.f32 %v3792, %v3791
    %s3794 = ssub.f32 1.0, %s3753
    %v3795 = vstv %s3794
    %v3796 = vmul.f32 %v3795, %v3788
    %v3797 = vadd.f32 %v3793, %v3796
    %v3798 = vld [vmem:[#allocation5] sm:$0xff]
    %v3799 = vld [vmem:[#allocation5 + $0x8] sm:$0xff]
    %v3800 = vld [vmem:[#allocation5 + $0x10] sm:$0xff]
    %v3801 = vld [vmem:[#allocation5 + $0x18] sm:$0xff]
    %v3802 = vld [vmem:[#allocation5 + $0x20] sm:$0xff]
    %v3803 = vld [vmem:[#allocation5 + $0x28] sm:$0xff]
    %v3804 = vld [vmem:[#allocation5 + $0x30] sm:$0xff]
    %v3805 = vld [vmem:[#allocation5 + $0x38] sm:$0xff]
    %v3806 = vld [vmem:[#allocation5 + $0x40] sm:$0xff]
    %v3807 = vld [vmem:[#allocation5 + $0x48] sm:$0xff]
    %v3808 = vld [vmem:[#allocation5 + $0x50] sm:$0xff]
    %v3809 = vld [vmem:[#allocation5 + $0x58] sm:$0xff]
    %v3810 = vld [vmem:[#allocation5 + $0x60] sm:$0xff]
    %v3811 = vld [vmem:[#allocation5 + $0x68] sm:$0xff]
    %v3812 = vld [vmem:[#allocation5 + $0x70] sm:$0xff]
    %v3813 = vld [vmem:[#allocation5 + $0x78] sm:$0xff]
    %v3814 = vld [vmem:[#allocation5 + $0x80] sm:$0xff]
    %v3815 = vld [vmem:[#allocation5 + $0x88] sm:$0xff]
    %v3816 = vld [vmem:[#allocation5 + $0x90] sm:$0xff]
    %v3817 = vld [vmem:[#allocation5 + $0x98] sm:$0xff]
    %v3818 = vld [vmem:[#allocation5 + $0xa0] sm:$0xff]
    %v3819 = vld [vmem:[#allocation5 + $0xa8] sm:$0xff]
    %v3820 = vld [vmem:[#allocation5 + $0xb0] sm:$0xff]
    %v3821 = vld [vmem:[#allocation5 + $0xb8] sm:$0xff]
    %v3822 = vld [vmem:[#allocation5 + $0xc0] sm:$0xff]
    %v3823 = vld [vmem:[#allocation5 + $0xc8] sm:$0xff]
    %v3824 = vld [vmem:[#allocation5 + $0xd0] sm:$0xff]
    %v3825 = vld [vmem:[#allocation5 + $0xd8] sm:$0xff]
    %v3826 = vld [vmem:[#allocation5 + $0xe0] sm:$0xff]
    %v3827 = vld [vmem:[#allocation5 + $0xe8] sm:$0xff]
    %v3828 = vld [vmem:[#allocation5 + $0xf0] sm:$0xff]
    %v3829 = vld [vmem:[#allocation5 + $0xf8] sm:$0xff]
    %v3830 = vld [vmem:[#allocation5 + $0x100] sm:$0xff]
    %v3831 = vld [vmem:[#allocation5 + $0x108] sm:$0xff]
    %v3832 = vld [vmem:[#allocation5 + $0x110] sm:$0xff]
    %v3833 = vld [vmem:[#allocation5 + $0x118] sm:$0xff]
    %v3834 = vld [vmem:[#allocation5 + $0x120] sm:$0xff]
    %v3835 = vld [vmem:[#allocation5 + $0x128] sm:$0xff]
    %v3836 = vld [vmem:[#allocation5 + $0x130] sm:$0xff]
    %v3837 = vld [vmem:[#allocation5 + $0x138] sm:$0xff]
    %v3838 = vld [vmem:[#allocation5 + $0x140] sm:$0xff]
    %v3839 = vld [vmem:[#allocation5 + $0x148] sm:$0xff]
    %v3840 = vld [vmem:[#allocation5 + $0x150] sm:$0xff]
    %v3841 = vld [vmem:[#allocation5 + $0x158] sm:$0xff]
    %v3842 = vld [vmem:[#allocation5 + $0x160] sm:$0xff]
    %v3843 = vld [vmem:[#allocation5 + $0x168] sm:$0xff]
    %v3844 = vld [vmem:[#allocation5 + $0x170] sm:$0xff]
    %v3845 = vld [vmem:[#allocation5 + $0x178] sm:$0xff]
    %v3846 = vld [vmem:[#allocation5 + $0x180] sm:$0xff]
    %v3847 = vld [vmem:[#allocation5 + $0x188] sm:$0xff]
    %v3848 = vld [vmem:[#allocation5 + $0x190] sm:$0xff]
    %v3849 = vld [vmem:[#allocation5 + $0x198] sm:$0xff]
    %v3850 = vld [vmem:[#allocation5 + $0x1a0] sm:$0xff]
    %v3851 = vld [vmem:[#allocation5 + $0x1a8] sm:$0xff]
    %v3852 = vld [vmem:[#allocation5 + $0x1b0] sm:$0xff]
    %v3853 = vld [vmem:[#allocation5 + $0x1b8] sm:$0xff]
    %v3854 = vld [vmem:[#allocation5 + $0x1c0] sm:$0xff]
    %v3855 = vld [vmem:[#allocation5 + $0x1c8] sm:$0xff]
    %v3856 = vld [vmem:[#allocation5 + $0x1d0] sm:$0xff]
    %v3857 = vld [vmem:[#allocation5 + $0x1d8] sm:$0xff]
    %v3858 = vld [vmem:[#allocation5 + $0x1e0] sm:$0xff]
    %v3859 = vld [vmem:[#allocation5 + $0x1e8] sm:$0xff]
    %v3860 = vld [vmem:[#allocation5 + $0x1f0] sm:$0xff]
    %v3861 = vld [vmem:[#allocation5 + $0x1f8] sm:$0xff]
    %v3862 = vld [vmem:[#allocation5 + $0x200] sm:$0xff]
    %v3863 = vld [vmem:[#allocation5 + $0x208] sm:$0xff]
    %v3864 = vld [vmem:[#allocation5 + $0x210] sm:$0xff]
    %v3865 = vld [vmem:[#allocation5 + $0x218] sm:$0xff]
    %v3866 = vld [vmem:[#allocation5 + $0x220] sm:$0xff]
    %v3867 = vld [vmem:[#allocation5 + $0x228] sm:$0xff]
    %v3868 = vld [vmem:[#allocation5 + $0x230] sm:$0xff]
    %v3869 = vld [vmem:[#allocation5 + $0x238] sm:$0xff]
    %v3870 = vld [vmem:[#allocation5 + $0x240] sm:$0xff]
    %v3871 = vld [vmem:[#allocation5 + $0x248] sm:$0xff]
    %v3872 = vld [vmem:[#allocation5 + $0x250] sm:$0xff]
    %v3873 = vld [vmem:[#allocation5 + $0x258] sm:$0xff]
    %v3874 = vld [vmem:[#allocation5 + $0x260] sm:$0xff]
    %v3875 = vld [vmem:[#allocation5 + $0x268] sm:$0xff]
    %v3876 = vld [vmem:[#allocation5 + $0x270] sm:$0xff]
    %v3877 = vld [vmem:[#allocation5 + $0x278] sm:$0xff]
    %v3878 = vld [vmem:[#allocation5 + $0x280] sm:$0xff]
    %v3879 = vld [vmem:[#allocation5 + $0x288] sm:$0xff]
    %v3880 = vld [vmem:[#allocation5 + $0x290] sm:$0xff]
    %v3881 = vld [vmem:[#allocation5 + $0x298] sm:$0xff]
    %v3882 = vld [vmem:[#allocation5 + $0x2a0] sm:$0xff]
    %v3883 = vld [vmem:[#allocation5 + $0x2a8] sm:$0xff]
    %v3884 = vld [vmem:[#allocation5 + $0x2b0] sm:$0xff]
    %v3885 = vld [vmem:[#allocation5 + $0x2b8] sm:$0xff]
    %v3886 = vld [vmem:[#allocation5 + $0x2c0] sm:$0xff]
    %v3887 = vld [vmem:[#allocation5 + $0x2c8] sm:$0xff]
    %v3888 = vld [vmem:[#allocation5 + $0x2d0] sm:$0xff]
    %v3889 = vld [vmem:[#allocation5 + $0x2d8] sm:$0xff]
    %v3890 = vld [vmem:[#allocation5 + $0x2e0] sm:$0xff]
    %v3891 = vld [vmem:[#allocation5 + $0x2e8] sm:$0xff]
    %v3892 = vld [vmem:[#allocation5 + $0x2f0] sm:$0xff]
    %v3893 = vld [vmem:[#allocation5 + $0x2f8] sm:$0xff]
    %v3894 = vld [vmem:[#allocation5 + $0x300] sm:$0xff]
    %v3895 = vld [vmem:[#allocation5 + $0x308] sm:$0xff]
    %v3896 = vld [vmem:[#allocation5 + $0x310] sm:$0xff]
    %v3897 = vld [vmem:[#allocation5 + $0x318] sm:$0xff]
    %v3898 = vld [vmem:[#allocation5 + $0x320] sm:$0xff]
    %v3899 = vld [vmem:[#allocation5 + $0x328] sm:$0xff]
    %v3900 = vld [vmem:[#allocation5 + $0x330] sm:$0xff]
    %v3901 = vld [vmem:[#allocation5 + $0x338] sm:$0xff]
    %v3902 = vld [vmem:[#allocation5 + $0x340] sm:$0xff]
    %v3903 = vld [vmem:[#allocation5 + $0x348] sm:$0xff]
    %v3904 = vld [vmem:[#allocation5 + $0x350] sm:$0xff]
    %v3905 = vld [vmem:[#allocation5 + $0x358] sm:$0xff]
    %v3906 = vld [vmem:[#allocation5 + $0x360] sm:$0xff]
    %v3907 = vld [vmem:[#allocation5 + $0x368] sm:$0xff]
    %v3908 = vld [vmem:[#allocation5 + $0x370] sm:$0xff]
    %v3909 = vld [vmem:[#allocation5 + $0x378] sm:$0xff]
    %v3910 = vld [vmem:[#allocation5 + $0x380] sm:$0xff]
    %v3911 = vld [vmem:[#allocation5 + $0x388] sm:$0xff]
    %v3912 = vld [vmem:[#allocation5 + $0x390] sm:$0xff]
    %v3913 = vld [vmem:[#allocation5 + $0x398] sm:$0xff]
    %v3914 = vld [vmem:[#allocation5 + $0x3a0] sm:$0xff]
    %v3915 = vld [vmem:[#allocation5 + $0x3a8] sm:$0xff]
    %v3916 = vld [vmem:[#allocation5 + $0x3b0] sm:$0xff]
    %v3917 = vld [vmem:[#allocation5 + $0x3b8] sm:$0xff]
    %v3918 = vld [vmem:[#allocation5 + $0x3c0] sm:$0xff]
    %v3919 = vld [vmem:[#allocation5 + $0x3c8] sm:$0xff]
    %v3920 = vld [vmem:[#allocation5 + $0x3d0] sm:$0xff]
    %v3921 = vld [vmem:[#allocation5 + $0x3d8] sm:$0xff]
    %v3922 = vld [vmem:[#allocation5 + $0x3e0] sm:$0xff]
    %v3923 = vld [vmem:[#allocation5 + $0x3e8] sm:$0xff]
    %v3924 = vld [vmem:[#allocation5 + $0x3f0] sm:$0xff]
    %v3925 = vld [vmem:[#allocation5 + $0x3f8] sm:$0xff]
    %v3926 = vld [vmem:[%s6] sm:$0xf]
    %v3928 = vperm.slane %v3926, 0
    %v3929 = vperm.slane %v3926, 1
    %v3930 = vperm.slane %v3926, 2
    %v3931 = vperm.slane %v3926, 3
    %3936 = vmatpush.msra.mxu0 %v3858
    %3937 = vmatpush.msra.mxu0 %v3854
    %3938 = vmatpush.msra.mxu0 %v3850
    %3939 = vmatpush.msra.mxu0 %v3846
    %3940 = vmatpush.msra.mxu0 %v3842
    %3941 = vmatpush.msra.mxu0 %v3838
    %3942 = vmatpush.msra.mxu0 %v3834
    %3943 = vmatpush.msra.mxu0 %v3830
    %3944 = vmatpush.msra.mxu0 %v3826
    %3945 = vmatpush.msra.mxu0 %v3822
    %3946 = vmatpush.msra.mxu0 %v3818
    %3947 = vmatpush.msra.mxu0 %v3814
    %3948 = vmatpush.msra.mxu0 %v3810
    %3949 = vmatpush.msra.mxu0 %v3806
    %3950 = vmatpush.msra.mxu0 %v3802
    %3951 = vmatpush.msra.mxu0 %v3798
    %3952 = vmatmul.f32.gmra.mxu0 %v3797
    %v3953 = vpop.f32.mrf.mxu0
    %v3954 = vadd.f32 %v3928, %v3953
    %3955 = vdwg.mxu0
    %3956 = vmatpush.msra.mxu0 %v3922
    %3957 = vmatpush.msra.mxu0 %v3918
    %3958 = vmatpush.msra.mxu0 %v3914
    %3959 = vmatpush.msra.mxu0 %v3910
    %3960 = vmatpush.msra.mxu0 %v3906
    %3961 = vmatpush.msra.mxu0 %v3902
    %3962 = vmatpush.msra.mxu0 %v3898
    %3963 = vmatpush.msra.mxu0 %v3894
    %3964 = vmatpush.msra.mxu0 %v3890
    %3965 = vmatpush.msra.mxu0 %v3886
    %3966 = vmatpush.msra.mxu0 %v3882
    %3967 = vmatpush.msra.mxu0 %v3878
    %3968 = vmatpush.msra.mxu0 %v3874
    %3969 = vmatpush.msra.mxu0 %v3870
    %3970 = vmatpush.msra.mxu0 %v3866
    %3971 = vmatpush.msra.mxu0 %v3862
    %3972 = vmatmul.f32.gmra.mxu0 %v3507
    %v3973 = vpop.f32.mrf.mxu0
    %v3974 = vadd.f32 %v3954, %v3973
    %3975 = vdwg.mxu0
    %3976 = vmatpush.msra.mxu0 %v3859
    %3977 = vmatpush.msra.mxu0 %v3855
    %3978 = vmatpush.msra.mxu0 %v3851
    %3979 = vmatpush.msra.mxu0 %v3847
    %3980 = vmatpush.msra.mxu0 %v3843
    %3981 = vmatpush.msra.mxu0 %v3839
    %3982 = vmatpush.msra.mxu0 %v3835
    %3983 = vmatpush.msra.mxu0 %v3831
    %3984 = vmatpush.msra.mxu0 %v3827
    %3985 = vmatpush.msra.mxu0 %v3823
    %3986 = vmatpush.msra.mxu0 %v3819
    %3987 = vmatpush.msra.mxu0 %v3815
    %3988 = vmatpush.msra.mxu0 %v3811
    %3989 = vmatpush.msra.mxu0 %v3807
    %3990 = vmatpush.msra.mxu0 %v3803
    %3991 = vmatpush.msra.mxu0 %v3799
    %3992 = vmatmul.f32.gmra.mxu0 %v3797
    %v3993 = vpop.f32.mrf.mxu0
    %v3994 = vadd.f32 %v3929, %v3993
    %3995 = vdwg.mxu0
    %3996 = vmatpush.msra.mxu0 %v3923
    %3997 = vmatpush.msra.mxu0 %v3919
    %3998 = vmatpush.msra.mxu0 %v3915
    %3999 = vmatpush.msra.mxu0 %v3911
    %4000 = vmatpush.msra.mxu0 %v3907
    %4001 = vmatpush.msra.mxu0 %v3903
    %4002 = vmatpush.msra.mxu0 %v3899
    %4003 = vmatpush.msra.mxu0 %v3895
    %4004 = vmatpush.msra.mxu0 %v3891
    %4005 = vmatpush.msra.mxu0 %v3887
    %4006 = vmatpush.msra.mxu0 %v3883
    %4007 = vmatpush.msra.mxu0 %v3879
    %4008 = vmatpush.msra.mxu0 %v3875
    %4009 = vmatpush.msra.mxu0 %v3871
    %4010 = vmatpush.msra.mxu0 %v3867
    %4011 = vmatpush.msra.mxu0 %v3863
    %4012 = vmatmul.f32.gmra.mxu0 %v3507
    %v4013 = vpop.f32.mrf.mxu0
    %v4014 = vadd.f32 %v3994, %v4013
    %4015 = vdwg.mxu0
    %4016 = vmatpush.msra.mxu0 %v3860
    %4017 = vmatpush.msra.mxu0 %v3856
    %4018 = vmatpush.msra.mxu0 %v3852
    %4019 = vmatpush.msra.mxu0 %v3848
    %4020 = vmatpush.msra.mxu0 %v3844
    %4021 = vmatpush.msra.mxu0 %v3840
    %4022 = vmatpush.msra.mxu0 %v3836
    %4023 = vmatpush.msra.mxu0 %v3832
    %4024 = vmatpush.msra.mxu0 %v3828
    %4025 = vmatpush.msra.mxu0 %v3824
    %4026 = vmatpush.msra.mxu0 %v3820
    %4027 = vmatpush.msra.mxu0 %v3816
    %4028 = vmatpush.msra.mxu0 %v3812
    %4029 = vmatpush.msra.mxu0 %v3808
    %4030 = vmatpush.msra.mxu0 %v3804
    %4031 = vmatpush.msra.mxu0 %v3800
    %4032 = vmatmul.f32.gmra.mxu0 %v3797
    %v4033 = vpop.f32.mrf.mxu0
    %v4034 = vadd.f32 %v3930, %v4033
    %4035 = vdwg.mxu0
    %4036 = vmatpush.msra.mxu0 %v3924
    %4037 = vmatpush.msra.mxu0 %v3920
    %4038 = vmatpush.msra.mxu0 %v3916
    %4039 = vmatpush.msra.mxu0 %v3912
    %4040 = vmatpush.msra.mxu0 %v3908
    %4041 = vmatpush.msra.mxu0 %v3904
    %4042 = vmatpush.msra.mxu0 %v3900
    %4043 = vmatpush.msra.mxu0 %v3896
    %4044 = vmatpush.msra.mxu0 %v3892
    %4045 = vmatpush.msra.mxu0 %v3888
    %4046 = vmatpush.msra.mxu0 %v3884
    %4047 = vmatpush.msra.mxu0 %v3880
    %4048 = vmatpush.msra.mxu0 %v3876
    %4049 = vmatpush.msra.mxu0 %v3872
    %4050 = vmatpush.msra.mxu0 %v3868
    %4051 = vmatpush.msra.mxu0 %v3864
    %4052 = vmatmul.f32.gmra.mxu0 %v3507
    %v4053 = vpop.f32.mrf.mxu0
    %v4054 = vadd.f32 %v4034, %v4053
    %4055 = vdwg.mxu0
    %4056 = vmatpush.msra.mxu0 %v3861
    %4057 = vmatpush.msra.mxu0 %v3857
    %4058 = vmatpush.msra.mxu0 %v3853
    %4059 = vmatpush.msra.mxu0 %v3849
    %4060 = vmatpush.msra.mxu0 %v3845
    %4061 = vmatpush.msra.mxu0 %v3841
    %4062 = vmatpush.msra.mxu0 %v3837
    %4063 = vmatpush.msra.mxu0 %v3833
    %4064 = vmatpush.msra.mxu0 %v3829
    %4065 = vmatpush.msra.mxu0 %v3825
    %4066 = vmatpush.msra.mxu0 %v3821
    %4067 = vmatpush.msra.mxu0 %v3817
    %4068 = vmatpush.msra.mxu0 %v3813
    %4069 = vmatpush.msra.mxu0 %v3809
    %4070 = vmatpush.msra.mxu0 %v3805
    %4071 = vmatpush.msra.mxu0 %v3801
    %4072 = vmatmul.f32.gmra.mxu0 %v3797
    %v4073 = vpop.f32.mrf.mxu0
    %v4074 = vadd.f32 %v3931, %v4073
    %4075 = vdwg.mxu0
    %4076 = vmatpush.msra.mxu0 %v3925
    %4077 = vmatpush.msra.mxu0 %v3921
    %4078 = vmatpush.msra.mxu0 %v3917
    %4079 = vmatpush.msra.mxu0 %v3913
    %4080 = vmatpush.msra.mxu0 %v3909
    %4081 = vmatpush.msra.mxu0 %v3905
    %4082 = vmatpush.msra.mxu0 %v3901
    %4083 = vmatpush.msra.mxu0 %v3897
    %4084 = vmatpush.msra.mxu0 %v3893
    %4085 = vmatpush.msra.mxu0 %v3889
    %4086 = vmatpush.msra.mxu0 %v3885
    %4087 = vmatpush.msra.mxu0 %v3881
    %4088 = vmatpush.msra.mxu0 %v3877
    %4089 = vmatpush.msra.mxu0 %v3873
    %4090 = vmatpush.msra.mxu0 %v3869
    %4091 = vmatpush.msra.mxu0 %v3865
    %4092 = vmatmul.f32.gmra.mxu0 %v3507
    %v4093 = vpop.f32.mrf.mxu0
    %v4094 = vadd.f32 %v4074, %v4093
    %4095 = vdwg.mxu0
    %v4096 = vxor.u32 %v3974, 2147483648
    %v4097 = vmul.f32 %v4096, 1.442695
    %v4098 = vpow.pop %v4097
    %v4099 = vadd.f32 %v4098, 1.0
    %v4100 = vrcp.pop %v4099
    %v4101 = vmul.f32 %v4099, %v4100
    %v4102 = vsub.f32 1.0, %v4101
    %v4103 = vmul.f32 %v4100, %v4102
    %v4104 = vadd.f32 %v4100, %v4103
    %vm4105 = vweird.f32 %v4099
    %vm4106 = vweird.f32 %v4100
    %vm4107 = vmor %vm4105, %vm4106
    %v4108 = vsel %vm4107, %v4100, %v4104
    %v4109 = vand.u32 2147483647, %v4099
    %vm4110 = vcmp.eq.f32.partialorder %v4109, 8.507059e+37
    %v4111 = vand.u32 %v4099, 2147483648
    %v4112 = vor.u32 1.1754944e-38, %v4111
    %v4113 = vsel %vm4110, %v4112, %v4108
    %v4114 = vmul.f32 1.0, %v4113
    %v4115 = vxor.u32 %v4014, 2147483648
    %v4116 = vmul.f32 %v4115, 1.442695
    %v4117 = vpow.pop %v4116
    %v4118 = vadd.f32 %v4117, 1.0
    %v4119 = vrcp.pop %v4118
    %v4120 = vmul.f32 %v4118, %v4119
    %v4121 = vsub.f32 1.0, %v4120
    %v4122 = vmul.f32 %v4119, %v4121
    %v4123 = vadd.f32 %v4119, %v4122
    %vm4124 = vweird.f32 %v4118
    %vm4125 = vweird.f32 %v4119
    %vm4126 = vmor %vm4124, %vm4125
    %v4127 = vsel %vm4126, %v4119, %v4123
    %v4128 = vand.u32 2147483647, %v4118
    %vm4129 = vcmp.eq.f32.partialorder %v4128, 8.507059e+37
    %v4130 = vand.u32 %v4118, 2147483648
    %v4131 = vor.u32 1.1754944e-38, %v4130
    %v4132 = vsel %vm4129, %v4131, %v4127
    %v4133 = vmul.f32 1.0, %v4132
    %v4134 = vtanh.pop %v4054
    %v4135 = vxor.u32 %v4094, 2147483648
    %v4136 = vmul.f32 %v4135, 1.442695
    %v4137 = vpow.pop %v4136
    %v4138 = vadd.f32 %v4137, 1.0
    %v4139 = vrcp.pop %v4138
    %v4140 = vmul.f32 %v4138, %v4139
    %v4141 = vsub.f32 1.0, %v4140
    %v4142 = vmul.f32 %v4139, %v4141
    %v4143 = vadd.f32 %v4139, %v4142
    %vm4144 = vweird.f32 %v4138
    %vm4145 = vweird.f32 %v4139
    %vm4146 = vmor %vm4144, %vm4145
    %v4147 = vsel %vm4146, %v4139, %v4143
    %v4148 = vand.u32 2147483647, %v4138
    %vm4149 = vcmp.eq.f32.partialorder %v4148, 8.507059e+37
    %v4150 = vand.u32 %v4138, 2147483648
    %v4151 = vor.u32 1.1754944e-38, %v4150
    %v4152 = vsel %vm4149, %v4151, %v4147
    %v4153 = vmul.f32 1.0, %v4152
    %v4154 = vmul.f32 %v4133, %v3505
    %v4155 = vmul.f32 %v4114, %v4134
    %v4156 = vadd.f32 %v4154, %v4155
    %v4157 = vtanh.pop %v4156
    %v4158 = vmul.f32 %v4153, %v4157
    %v4159 = vld [vmem:[#allocation2] sm:$0xff]
    %v4160 = vld [vmem:[#allocation2 + $0x8] sm:$0xff]
    %v4161 = vld [vmem:[#allocation2 + $0x10] sm:$0xff]
    %v4162 = vld [vmem:[#allocation2 + $0x18] sm:$0xff]
    %v4163 = vld [vmem:[#allocation2 + $0x20] sm:$0xff]
    %v4164 = vld [vmem:[#allocation2 + $0x28] sm:$0xff]
    %v4165 = vld [vmem:[#allocation2 + $0x30] sm:$0xff]
    %v4166 = vld [vmem:[#allocation2 + $0x38] sm:$0xff]
    %v4167 = vmul.f32 %v4159, %v4158
    %v4168 = vmul.f32 %v4160, %v4158
    %v4169 = vmul.f32 %v4161, %v4158
    %v4170 = vmul.f32 %v4162, %v4158
    %v4171 = vmul.f32 %v4163, %v4158
    %v4172 = vmul.f32 %v4164, %v4158
    %v4173 = vmul.f32 %v4165, %v4158
    %v4174 = vmul.f32 %v4166, %v4158
    %4175 = vadd.xlane.f32.xlu0 %v4167
    %v4176 = vpop.xlane.xlu0 %4175
    %4177 = vadd.xlane.f32.xlu0 %v4168
    %v4178 = vpop.xlane.xlu0 %4177
    %4179 = vadd.xlane.f32.xlu0 %v4169
    %v4180 = vpop.xlane.xlu0 %4179
    %4181 = vadd.xlane.f32.xlu0 %v4170
    %v4182 = vpop.xlane.xlu0 %4181
    %4183 = vadd.xlane.f32.xlu0 %v4171
    %v4184 = vpop.xlane.xlu0 %4183
    %4185 = vadd.xlane.f32.xlu0 %v4172
    %v4186 = vpop.xlane.xlu0 %4185
    %4187 = vadd.xlane.f32.xlu0 %v4173
    %v4188 = vpop.xlane.xlu0 %4187
    %4189 = vadd.xlane.f32.xlu0 %v4174
    %v4190 = vpop.xlane.xlu0 %4189
    %v4191 = vmax.f32 %v4176, %v4184
    %v4192 = vmax.f32 %v4178, %v4186
    %v4193 = vmax.f32 %v4180, %v4188
    %v4194 = vmax.f32 %v4182, %v4190
    %v4195 = vmax.f32 %v4191, %v4192
    %v4196 = vmax.f32 %v4193, %v4194
    %v4197 = vmax.f32 %v4195, %v4196
    %v4198 = vsub.f32 %v4176, %v4197
    %v4199 = vsub.f32 %v4178, %v4197
    %v4200 = vsub.f32 %v4180, %v4197
    %v4201 = vsub.f32 %v4182, %v4197
    %v4202 = vsub.f32 %v4184, %v4197
    %v4203 = vsub.f32 %v4186, %v4197
    %v4204 = vsub.f32 %v4188, %v4197
    %v4205 = vsub.f32 %v4190, %v4197
    %v4206 = vmul.f32 %v4198, 1.442695
    %v4207 = vpow.pop %v4206
    %v4208 = vmul.f32 %v4199, 1.442695
    %v4209 = vpow.pop %v4208
    %v4210 = vmul.f32 %v4200, 1.442695
    %v4211 = vpow.pop %v4210
    %v4212 = vmul.f32 %v4201, 1.442695
    %v4213 = vpow.pop %v4212
    %v4214 = vmul.f32 %v4202, 1.442695
    %v4215 = vpow.pop %v4214
    %v4216 = vmul.f32 %v4203, 1.442695
    %v4217 = vpow.pop %v4216
    %v4218 = vmul.f32 %v4204, 1.442695
    %v4219 = vpow.pop %v4218
    %v4220 = vmul.f32 %v4205, 1.442695
    %v4221 = vpow.pop %v4220
    %v4222 = vadd.f32 %v4207, %v4209
    %v4223 = vadd.f32 %v4222, %v4211
    %v4224 = vadd.f32 %v4223, %v4213
    %v4225 = vadd.f32 %v4224, %v4215
    %v4226 = vadd.f32 %v4225, %v4217
    %v4227 = vadd.f32 %v4226, %v4219
    %v4228 = vadd.f32 %v4227, %v4221
    %v4229 = vrcp.pop %v4228
    %v4230 = vmul.f32 %v4228, %v4229
    %v4231 = vsub.f32 1.0, %v4230
    %v4232 = vmul.f32 %v4229, %v4231
    %v4233 = vadd.f32 %v4229, %v4232
    %vm4234 = vweird.f32 %v4228
    %vm4235 = vweird.f32 %v4229
    %vm4236 = vmor %vm4234, %vm4235
    %v4237 = vsel %vm4236, %v4229, %v4233
    %v4238 = vand.u32 2147483647, %v4228
    %vm4239 = vcmp.eq.f32.partialorder %v4238, 8.507059e+37
    %v4240 = vand.u32 %v4228, 2147483648
    %v4241 = vor.u32 1.1754944e-38, %v4240
    %v4242 = vsel %vm4239, %v4241, %v4237
    %v4243 = vmul.f32 %v4207, %v4242
    %v4244 = vmul.f32 %v4209, %v4242
    %v4245 = vmul.f32 %v4211, %v4242
    %v4246 = vmul.f32 %v4213, %v4242
    %v4247 = vmul.f32 %v4215, %v4242
    %v4248 = vmul.f32 %v4217, %v4242
    %v4249 = vmul.f32 %v4219, %v4242
    %v4250 = vmul.f32 %v4221, %v4242
    %v4251 = vmul.f32 %v4159, %v4243
    %v4252 = vmul.f32 %v4160, %v4244
    %v4253 = vmul.f32 %v4161, %v4245
    %v4254 = vmul.f32 %v4162, %v4246
    %v4255 = vmul.f32 %v4163, %v4247
    %v4256 = vmul.f32 %v4164, %v4248
    %v4257 = vmul.f32 %v4165, %v4249
    %v4258 = vmul.f32 %v4166, %v4250
    %v4259 = vadd.f32 %v4251, %v4252
    %v4260 = vadd.f32 %v4259, %v4253
    %v4261 = vadd.f32 %v4260, %v4254
    %v4262 = vadd.f32 %v4261, %v4255
    %v4263 = vadd.f32 %v4262, %v4256
    %v4264 = vadd.f32 %v4263, %v4257
    %v4265 = vadd.f32 %v4264, %v4258
    %v4266 = vld [vmem:[%s7] sm:$0xff]
    %v4267 = vld [vmem:[%s7 + $0x8] sm:$0xff]
    %v4268 = vld [vmem:[%s7 + $0x10] sm:$0xff]
    %v4269 = vld [vmem:[%s7 + $0x18] sm:$0xff]
    %v4270 = vld [vmem:[%s7 + $0x20] sm:$0xff]
    %v4271 = vld [vmem:[%s7 + $0x28] sm:$0xff]
    %v4272 = vld [vmem:[%s7 + $0x30] sm:$0xff]
    %v4273 = vld [vmem:[%s7 + $0x38] sm:$0xff]
    %v4274 = vld [vmem:[%s7 + $0x40] sm:$0xff]
    %v4275 = vld [vmem:[%s7 + $0x48] sm:$0xff]
    %v4276 = vld [vmem:[%s7 + $0x50] sm:$0xff]
    %v4277 = vld [vmem:[%s7 + $0x58] sm:$0xff]
    %v4278 = vld [vmem:[%s7 + $0x60] sm:$0xff]
    %v4279 = vld [vmem:[%s7 + $0x68] sm:$0xff]
    %v4280 = vld [vmem:[%s7 + $0x70] sm:$0xff]
    %v4281 = vld [vmem:[%s7 + $0x78] sm:$0xff]
    %v4282 = vld [vmem:[%s7 + $0x80] sm:$0xff]
    %v4283 = vld [vmem:[%s7 + $0x88] sm:$0xff]
    %v4284 = vld [vmem:[%s7 + $0x90] sm:$0xff]
    %v4285 = vld [vmem:[%s7 + $0x98] sm:$0xff]
    %v4286 = vld [vmem:[%s7 + $0xa0] sm:$0xff]
    %v4287 = vld [vmem:[%s7 + $0xa8] sm:$0xff]
    %v4288 = vld [vmem:[%s7 + $0xb0] sm:$0xff]
    %v4289 = vld [vmem:[%s7 + $0xb8] sm:$0xff]
    %v4290 = vld [vmem:[%s7 + $0xc0] sm:$0xff]
    %v4291 = vld [vmem:[%s7 + $0xc8] sm:$0xff]
    %v4292 = vld [vmem:[%s7 + $0xd0] sm:$0xff]
    %v4293 = vld [vmem:[%s7 + $0xd8] sm:$0xff]
    %v4294 = vld [vmem:[%s7 + $0xe0] sm:$0xff]
    %v4295 = vld [vmem:[%s7 + $0xe8] sm:$0xff]
    %v4296 = vld [vmem:[%s7 + $0xf0] sm:$0xff]
    %v4297 = vld [vmem:[%s7 + $0xf8] sm:$0xff]
    %v4298 = vld [vmem:[%s7 + $0x100] sm:$0xff]
    %v4299 = vld [vmem:[%s7 + $0x108] sm:$0xff]
    %v4300 = vld [vmem:[%s7 + $0x110] sm:$0xff]
    %v4301 = vld [vmem:[%s7 + $0x118] sm:$0xff]
    %v4302 = vld [vmem:[%s7 + $0x120] sm:$0xff]
    %v4303 = vld [vmem:[%s7 + $0x128] sm:$0xff]
    %v4304 = vld [vmem:[%s7 + $0x130] sm:$0xff]
    %v4305 = vld [vmem:[%s7 + $0x138] sm:$0xff]
    %v4306 = vld [vmem:[%s7 + $0x140] sm:$0xff]
    %v4307 = vld [vmem:[%s7 + $0x148] sm:$0xff]
    %v4308 = vld [vmem:[%s7 + $0x150] sm:$0xff]
    %v4309 = vld [vmem:[%s7 + $0x158] sm:$0xff]
    %v4310 = vld [vmem:[%s7 + $0x160] sm:$0xff]
    %v4311 = vld [vmem:[%s7 + $0x168] sm:$0xff]
    %v4312 = vld [vmem:[%s7 + $0x170] sm:$0xff]
    %v4313 = vld [vmem:[%s7 + $0x178] sm:$0xff]
    %v4314 = vld [vmem:[%s8] sm:$0x1]
    %v4316 = vperm.slane %v4314, 0
    %4318 = vmatpush.msra.mxu0 %v4281
    %4319 = vmatpush.msra.mxu0 %v4280
    %4320 = vmatpush.msra.mxu0 %v4279
    %4321 = vmatpush.msra.mxu0 %v4278
    %4322 = vmatpush.msra.mxu0 %v4277
    %4323 = vmatpush.msra.mxu0 %v4276
    %4324 = vmatpush.msra.mxu0 %v4275
    %4325 = vmatpush.msra.mxu0 %v4274
    %4326 = vmatpush.msra.mxu0 %v4273
    %4327 = vmatpush.msra.mxu0 %v4272
    %4328 = vmatpush.msra.mxu0 %v4271
    %4329 = vmatpush.msra.mxu0 %v4270
    %4330 = vmatpush.msra.mxu0 %v4269
    %4331 = vmatpush.msra.mxu0 %v4268
    %4332 = vmatpush.msra.mxu0 %v4267
    %4333 = vmatpush.msra.mxu0 %v4266
    %4334 = vmatmul.f32.gmra.mxu0 %v4158
    %v4335 = vpop.f32.mrf.mxu0
    %v4336 = vadd.f32 %v4316, %v4335
    %4337 = vdwg.mxu0
    %4338 = vmatpush.msra.mxu0 %v4297
    %4339 = vmatpush.msra.mxu0 %v4296
    %4340 = vmatpush.msra.mxu0 %v4295
    %4341 = vmatpush.msra.mxu0 %v4294
    %4342 = vmatpush.msra.mxu0 %v4293
    %4343 = vmatpush.msra.mxu0 %v4292
    %4344 = vmatpush.msra.mxu0 %v4291
    %4345 = vmatpush.msra.mxu0 %v4290
    %4346 = vmatpush.msra.mxu0 %v4289
    %4347 = vmatpush.msra.mxu0 %v4288
    %4348 = vmatpush.msra.mxu0 %v4287
    %4349 = vmatpush.msra.mxu0 %v4286
    %4350 = vmatpush.msra.mxu0 %v4285
    %4351 = vmatpush.msra.mxu0 %v4284
    %4352 = vmatpush.msra.mxu0 %v4283
    %4353 = vmatpush.msra.mxu0 %v4282
    %4354 = vmatmul.f32.gmra.mxu0 %v4265
    %v4355 = vpop.f32.mrf.mxu0
    %v4356 = vadd.f32 %v4336, %v4355
    %4357 = vdwg.mxu0
    %4358 = vmatpush.msra.mxu0 %v4313
    %4359 = vmatpush.msra.mxu0 %v4312
    %4360 = vmatpush.msra.mxu0 %v4311
    %4361 = vmatpush.msra.mxu0 %v4310
    %4362 = vmatpush.msra.mxu0 %v4309
    %4363 = vmatpush.msra.mxu0 %v4308
    %4364 = vmatpush.msra.mxu0 %v4307
    %4365 = vmatpush.msra.mxu0 %v4306
    %4366 = vmatpush.msra.mxu0 %v4305
    %4367 = vmatpush.msra.mxu0 %v4304
    %4368 = vmatpush.msra.mxu0 %v4303
    %4369 = vmatpush.msra.mxu0 %v4302
    %4370 = vmatpush.msra.mxu0 %v4301
    %4371 = vmatpush.msra.mxu0 %v4300
    %4372 = vmatpush.msra.mxu0 %v4299
    %4373 = vmatpush.msra.mxu0 %v4298
    %4374 = vmatmul.f32.gmra.mxu0 %v3797
    %v4375 = vpop.f32.mrf.mxu0
    %v4376 = vadd.f32 %v4356, %v4375
    %4377 = vdwg.mxu0
    %s4378 = scalar_lea.vmem [#allocation8], 24
    %4379 = vst [vmem:[%s4378] sm:$0xff] %v4376
    %4380 = vmax.xlane.f32.xlu0 %v4376
    %v4381 = vpop.xlane.xlu0 %4380
    %vm4382 = vcmp.eq.f32.partialorder %v4376, %v4381
    %v4383 = vsel %vm4382, %v2426, 128
    %v4384 = vand.u32 %v4383, 65535
    %v4385 = vshra.s32 %v4383, 16
    %v4386 = vcvt.s32.f32 %v4384
    %v4387 = vcvt.s32.f32 %v4385
    %4388 = vmin.xlane.f32.xlu0 %v4387
    %v4389 = vpop.xlane.xlu0 %4388
    %vm4390 = vcmp.eq.f32.partialorder %v4387, %v4389
    %v4391 = vsel %vm4390, %v4386, inf
    %4392 = vmin.xlane.f32.xlu0 %v4391
    %v4393 = vpop.xlane.xlu0 %4392
    %v4394 = vcvt.f32.s32 %v4393
    %v4395 = vcvt.f32.s32 %v4389
    %v4396 = vshll.u32 %v4395, 16
    %v4397 = vadd.s32 %v4396, %v4394
    %vm4398 = vcmp.eq.s32.totalorder %v2426, %v4397
    %v4399 = vsel %vm4398, 1, 0
    %v4400 = vcvt.s32.f32 %v4399
    %s4401 = sld [smem:[#allocation4 + $0x4]]
    %p4402 = scmp.ne.s32.totalorder %s4401, 0
    %s4403 = scalar_select %p4402, 1, 0
    %s4404 = scvt.s32.f32 %s4403
    %v4405 = vld [vmem:[%s4] sm:$0xff]
    %v4406 = vld [vmem:[%s4 + $0x8] sm:$0xff]
    %v4407 = vld [vmem:[%s4 + $0x10] sm:$0xff]
    %v4408 = vld [vmem:[%s4 + $0x18] sm:$0xff]
    %v4409 = vld [vmem:[%s4 + $0x20] sm:$0xff]
    %v4410 = vld [vmem:[%s4 + $0x28] sm:$0xff]
    %v4411 = vld [vmem:[%s4 + $0x30] sm:$0xff]
    %v4412 = vld [vmem:[%s4 + $0x38] sm:$0xff]
    %v4413 = vld [vmem:[%s4 + $0x40] sm:$0xff]
    %v4414 = vld [vmem:[%s4 + $0x48] sm:$0xff]
    %v4415 = vld [vmem:[%s4 + $0x50] sm:$0xff]
    %v4416 = vld [vmem:[%s4 + $0x58] sm:$0xff]
    %v4417 = vld [vmem:[%s4 + $0x60] sm:$0xff]
    %v4418 = vld [vmem:[%s4 + $0x68] sm:$0xff]
    %v4419 = vld [vmem:[%s4 + $0x70] sm:$0xff]
    %v4420 = vld [vmem:[%s4 + $0x78] sm:$0xff]
    %4421 = vmatpush.msra.mxu0 %v4420
    %4422 = vmatpush.msra.mxu0 %v4419
    %4423 = vmatpush.msra.mxu0 %v4418
    %4424 = vmatpush.msra.mxu0 %v4417
    %4425 = vmatpush.msra.mxu0 %v4416
    %4426 = vmatpush.msra.mxu0 %v4415
    %4427 = vmatpush.msra.mxu0 %v4414
    %4428 = vmatpush.msra.mxu0 %v4413
    %4429 = vmatpush.msra.mxu0 %v4412
    %4430 = vmatpush.msra.mxu0 %v4411
    %4431 = vmatpush.msra.mxu0 %v4410
    %4432 = vmatpush.msra.mxu0 %v4409
    %4433 = vmatpush.msra.mxu0 %v4408
    %4434 = vmatpush.msra.mxu0 %v4407
    %4435 = vmatpush.msra.mxu0 %v4406
    %4436 = vmatpush.msra.mxu0 %v4405
    %4437 = vmatmul.f32.gmra.mxu0 %v4400
    %v4438 = vpop.f32.mrf.mxu0
    %v4439 = vadd.f32 0.0, %v4438
    %4440 = vdwg.mxu0
    %s4441 = scalar_lea.vmem %s3, 32
    %v4442 = vld [vmem:[%s4441] sm:$0xff]
    %v4443 = vstv %s4404
    %v4444 = vmul.f32 %v4443, %v4442
    %s4445 = ssub.f32 1.0, %s4404
    %v4446 = vstv %s4445
    %v4447 = vmul.f32 %v4446, %v4439
    %v4448 = vadd.f32 %v4444, %v4447
    %v4449 = vld [vmem:[#allocation5] sm:$0xff]
    %v4450 = vld [vmem:[#allocation5 + $0x8] sm:$0xff]
    %v4451 = vld [vmem:[#allocation5 + $0x10] sm:$0xff]
    %v4452 = vld [vmem:[#allocation5 + $0x18] sm:$0xff]
    %v4453 = vld [vmem:[#allocation5 + $0x20] sm:$0xff]
    %v4454 = vld [vmem:[#allocation5 + $0x28] sm:$0xff]
    %v4455 = vld [vmem:[#allocation5 + $0x30] sm:$0xff]
    %v4456 = vld [vmem:[#allocation5 + $0x38] sm:$0xff]
    %v4457 = vld [vmem:[#allocation5 + $0x40] sm:$0xff]
    %v4458 = vld [vmem:[#allocation5 + $0x48] sm:$0xff]
    %v4459 = vld [vmem:[#allocation5 + $0x50] sm:$0xff]
    %v4460 = vld [vmem:[#allocation5 + $0x58] sm:$0xff]
    %v4461 = vld [vmem:[#allocation5 + $0x60] sm:$0xff]
    %v4462 = vld [vmem:[#allocation5 + $0x68] sm:$0xff]
    %v4463 = vld [vmem:[#allocation5 + $0x70] sm:$0xff]
    %v4464 = vld [vmem:[#allocation5 + $0x78] sm:$0xff]
    %v4465 = vld [vmem:[#allocation5 + $0x80] sm:$0xff]
    %v4466 = vld [vmem:[#allocation5 + $0x88] sm:$0xff]
    %v4467 = vld [vmem:[#allocation5 + $0x90] sm:$0xff]
    %v4468 = vld [vmem:[#allocation5 + $0x98] sm:$0xff]
    %v4469 = vld [vmem:[#allocation5 + $0xa0] sm:$0xff]
    %v4470 = vld [vmem:[#allocation5 + $0xa8] sm:$0xff]
    %v4471 = vld [vmem:[#allocation5 + $0xb0] sm:$0xff]
    %v4472 = vld [vmem:[#allocation5 + $0xb8] sm:$0xff]
    %v4473 = vld [vmem:[#allocation5 + $0xc0] sm:$0xff]
    %v4474 = vld [vmem:[#allocation5 + $0xc8] sm:$0xff]
    %v4475 = vld [vmem:[#allocation5 + $0xd0] sm:$0xff]
    %v4476 = vld [vmem:[#allocation5 + $0xd8] sm:$0xff]
    %v4477 = vld [vmem:[#allocation5 + $0xe0] sm:$0xff]
    %v4478 = vld [vmem:[#allocation5 + $0xe8] sm:$0xff]
    %v4479 = vld [vmem:[#allocation5 + $0xf0] sm:$0xff]
    %v4480 = vld [vmem:[#allocation5 + $0xf8] sm:$0xff]
    %v4481 = vld [vmem:[#allocation5 + $0x100] sm:$0xff]
    %v4482 = vld [vmem:[#allocation5 + $0x108] sm:$0xff]
    %v4483 = vld [vmem:[#allocation5 + $0x110] sm:$0xff]
    %v4484 = vld [vmem:[#allocation5 + $0x118] sm:$0xff]
    %v4485 = vld [vmem:[#allocation5 + $0x120] sm:$0xff]
    %v4486 = vld [vmem:[#allocation5 + $0x128] sm:$0xff]
    %v4487 = vld [vmem:[#allocation5 + $0x130] sm:$0xff]
    %v4488 = vld [vmem:[#allocation5 + $0x138] sm:$0xff]
    %v4489 = vld [vmem:[#allocation5 + $0x140] sm:$0xff]
    %v4490 = vld [vmem:[#allocation5 + $0x148] sm:$0xff]
    %v4491 = vld [vmem:[#allocation5 + $0x150] sm:$0xff]
    %v4492 = vld [vmem:[#allocation5 + $0x158] sm:$0xff]
    %v4493 = vld [vmem:[#allocation5 + $0x160] sm:$0xff]
    %v4494 = vld [vmem:[#allocation5 + $0x168] sm:$0xff]
    %v4495 = vld [vmem:[#allocation5 + $0x170] sm:$0xff]
    %v4496 = vld [vmem:[#allocation5 + $0x178] sm:$0xff]
    %v4497 = vld [vmem:[#allocation5 + $0x180] sm:$0xff]
    %v4498 = vld [vmem:[#allocation5 + $0x188] sm:$0xff]
    %v4499 = vld [vmem:[#allocation5 + $0x190] sm:$0xff]
    %v4500 = vld [vmem:[#allocation5 + $0x198] sm:$0xff]
    %v4501 = vld [vmem:[#allocation5 + $0x1a0] sm:$0xff]
    %v4502 = vld [vmem:[#allocation5 + $0x1a8] sm:$0xff]
    %v4503 = vld [vmem:[#allocation5 + $0x1b0] sm:$0xff]
    %v4504 = vld [vmem:[#allocation5 + $0x1b8] sm:$0xff]
    %v4505 = vld [vmem:[#allocation5 + $0x1c0] sm:$0xff]
    %v4506 = vld [vmem:[#allocation5 + $0x1c8] sm:$0xff]
    %v4507 = vld [vmem:[#allocation5 + $0x1d0] sm:$0xff]
    %v4508 = vld [vmem:[#allocation5 + $0x1d8] sm:$0xff]
    %v4509 = vld [vmem:[#allocation5 + $0x1e0] sm:$0xff]
    %v4510 = vld [vmem:[#allocation5 + $0x1e8] sm:$0xff]
    %v4511 = vld [vmem:[#allocation5 + $0x1f0] sm:$0xff]
    %v4512 = vld [vmem:[#allocation5 + $0x1f8] sm:$0xff]
    %v4513 = vld [vmem:[#allocation5 + $0x200] sm:$0xff]
    %v4514 = vld [vmem:[#allocation5 + $0x208] sm:$0xff]
    %v4515 = vld [vmem:[#allocation5 + $0x210] sm:$0xff]
    %v4516 = vld [vmem:[#allocation5 + $0x218] sm:$0xff]
    %v4517 = vld [vmem:[#allocation5 + $0x220] sm:$0xff]
    %v4518 = vld [vmem:[#allocation5 + $0x228] sm:$0xff]
    %v4519 = vld [vmem:[#allocation5 + $0x230] sm:$0xff]
    %v4520 = vld [vmem:[#allocation5 + $0x238] sm:$0xff]
    %v4521 = vld [vmem:[#allocation5 + $0x240] sm:$0xff]
    %v4522 = vld [vmem:[#allocation5 + $0x248] sm:$0xff]
    %v4523 = vld [vmem:[#allocation5 + $0x250] sm:$0xff]
    %v4524 = vld [vmem:[#allocation5 + $0x258] sm:$0xff]
    %v4525 = vld [vmem:[#allocation5 + $0x260] sm:$0xff]
    %v4526 = vld [vmem:[#allocation5 + $0x268] sm:$0xff]
    %v4527 = vld [vmem:[#allocation5 + $0x270] sm:$0xff]
    %v4528 = vld [vmem:[#allocation5 + $0x278] sm:$0xff]
    %v4529 = vld [vmem:[#allocation5 + $0x280] sm:$0xff]
    %v4530 = vld [vmem:[#allocation5 + $0x288] sm:$0xff]
    %v4531 = vld [vmem:[#allocation5 + $0x290] sm:$0xff]
    %v4532 = vld [vmem:[#allocation5 + $0x298] sm:$0xff]
    %v4533 = vld [vmem:[#allocation5 + $0x2a0] sm:$0xff]
    %v4534 = vld [vmem:[#allocation5 + $0x2a8] sm:$0xff]
    %v4535 = vld [vmem:[#allocation5 + $0x2b0] sm:$0xff]
    %v4536 = vld [vmem:[#allocation5 + $0x2b8] sm:$0xff]
    %v4537 = vld [vmem:[#allocation5 + $0x2c0] sm:$0xff]
    %v4538 = vld [vmem:[#allocation5 + $0x2c8] sm:$0xff]
    %v4539 = vld [vmem:[#allocation5 + $0x2d0] sm:$0xff]
    %v4540 = vld [vmem:[#allocation5 + $0x2d8] sm:$0xff]
    %v4541 = vld [vmem:[#allocation5 + $0x2e0] sm:$0xff]
    %v4542 = vld [vmem:[#allocation5 + $0x2e8] sm:$0xff]
    %v4543 = vld [vmem:[#allocation5 + $0x2f0] sm:$0xff]
    %v4544 = vld [vmem:[#allocation5 + $0x2f8] sm:$0xff]
    %v4545 = vld [vmem:[#allocation5 + $0x300] sm:$0xff]
    %v4546 = vld [vmem:[#allocation5 + $0x308] sm:$0xff]
    %v4547 = vld [vmem:[#allocation5 + $0x310] sm:$0xff]
    %v4548 = vld [vmem:[#allocation5 + $0x318] sm:$0xff]
    %v4549 = vld [vmem:[#allocation5 + $0x320] sm:$0xff]
    %v4550 = vld [vmem:[#allocation5 + $0x328] sm:$0xff]
    %v4551 = vld [vmem:[#allocation5 + $0x330] sm:$0xff]
    %v4552 = vld [vmem:[#allocation5 + $0x338] sm:$0xff]
    %v4553 = vld [vmem:[#allocation5 + $0x340] sm:$0xff]
    %v4554 = vld [vmem:[#allocation5 + $0x348] sm:$0xff]
    %v4555 = vld [vmem:[#allocation5 + $0x350] sm:$0xff]
    %v4556 = vld [vmem:[#allocation5 + $0x358] sm:$0xff]
    %v4557 = vld [vmem:[#allocation5 + $0x360] sm:$0xff]
    %v4558 = vld [vmem:[#allocation5 + $0x368] sm:$0xff]
    %v4559 = vld [vmem:[#allocation5 + $0x370] sm:$0xff]
    %v4560 = vld [vmem:[#allocation5 + $0x378] sm:$0xff]
    %v4561 = vld [vmem:[#allocation5 + $0x380] sm:$0xff]
    %v4562 = vld [vmem:[#allocation5 + $0x388] sm:$0xff]
    %v4563 = vld [vmem:[#allocation5 + $0x390] sm:$0xff]
    %v4564 = vld [vmem:[#allocation5 + $0x398] sm:$0xff]
    %v4565 = vld [vmem:[#allocation5 + $0x3a0] sm:$0xff]
    %v4566 = vld [vmem:[#allocation5 + $0x3a8] sm:$0xff]
    %v4567 = vld [vmem:[#allocation5 + $0x3b0] sm:$0xff]
    %v4568 = vld [vmem:[#allocation5 + $0x3b8] sm:$0xff]
    %v4569 = vld [vmem:[#allocation5 + $0x3c0] sm:$0xff]
    %v4570 = vld [vmem:[#allocation5 + $0x3c8] sm:$0xff]
    %v4571 = vld [vmem:[#allocation5 + $0x3d0] sm:$0xff]
    %v4572 = vld [vmem:[#allocation5 + $0x3d8] sm:$0xff]
    %v4573 = vld [vmem:[#allocation5 + $0x3e0] sm:$0xff]
    %v4574 = vld [vmem:[#allocation5 + $0x3e8] sm:$0xff]
    %v4575 = vld [vmem:[#allocation5 + $0x3f0] sm:$0xff]
    %v4576 = vld [vmem:[#allocation5 + $0x3f8] sm:$0xff]
    %v4577 = vld [vmem:[%s6] sm:$0xf]
    %v4579 = vperm.slane %v4577, 0
    %v4580 = vperm.slane %v4577, 1
    %v4581 = vperm.slane %v4577, 2
    %v4582 = vperm.slane %v4577, 3
    %4587 = vmatpush.msra.mxu0 %v4509
    %4588 = vmatpush.msra.mxu0 %v4505
    %4589 = vmatpush.msra.mxu0 %v4501
    %4590 = vmatpush.msra.mxu0 %v4497
    %4591 = vmatpush.msra.mxu0 %v4493
    %4592 = vmatpush.msra.mxu0 %v4489
    %4593 = vmatpush.msra.mxu0 %v4485
    %4594 = vmatpush.msra.mxu0 %v4481
    %4595 = vmatpush.msra.mxu0 %v4477
    %4596 = vmatpush.msra.mxu0 %v4473
    %4597 = vmatpush.msra.mxu0 %v4469
    %4598 = vmatpush.msra.mxu0 %v4465
    %4599 = vmatpush.msra.mxu0 %v4461
    %4600 = vmatpush.msra.mxu0 %v4457
    %4601 = vmatpush.msra.mxu0 %v4453
    %4602 = vmatpush.msra.mxu0 %v4449
    %4603 = vmatmul.f32.gmra.mxu0 %v4448
    %v4604 = vpop.f32.mrf.mxu0
    %v4605 = vadd.f32 %v4579, %v4604
    %4606 = vdwg.mxu0
    %4607 = vmatpush.msra.mxu0 %v4573
    %4608 = vmatpush.msra.mxu0 %v4569
    %4609 = vmatpush.msra.mxu0 %v4565
    %4610 = vmatpush.msra.mxu0 %v4561
    %4611 = vmatpush.msra.mxu0 %v4557
    %4612 = vmatpush.msra.mxu0 %v4553
    %4613 = vmatpush.msra.mxu0 %v4549
    %4614 = vmatpush.msra.mxu0 %v4545
    %4615 = vmatpush.msra.mxu0 %v4541
    %4616 = vmatpush.msra.mxu0 %v4537
    %4617 = vmatpush.msra.mxu0 %v4533
    %4618 = vmatpush.msra.mxu0 %v4529
    %4619 = vmatpush.msra.mxu0 %v4525
    %4620 = vmatpush.msra.mxu0 %v4521
    %4621 = vmatpush.msra.mxu0 %v4517
    %4622 = vmatpush.msra.mxu0 %v4513
    %4623 = vmatmul.f32.gmra.mxu0 %v4158
    %v4624 = vpop.f32.mrf.mxu0
    %v4625 = vadd.f32 %v4605, %v4624
    %4626 = vdwg.mxu0
    %4627 = vmatpush.msra.mxu0 %v4510
    %4628 = vmatpush.msra.mxu0 %v4506
    %4629 = vmatpush.msra.mxu0 %v4502
    %4630 = vmatpush.msra.mxu0 %v4498
    %4631 = vmatpush.msra.mxu0 %v4494
    %4632 = vmatpush.msra.mxu0 %v4490
    %4633 = vmatpush.msra.mxu0 %v4486
    %4634 = vmatpush.msra.mxu0 %v4482
    %4635 = vmatpush.msra.mxu0 %v4478
    %4636 = vmatpush.msra.mxu0 %v4474
    %4637 = vmatpush.msra.mxu0 %v4470
    %4638 = vmatpush.msra.mxu0 %v4466
    %4639 = vmatpush.msra.mxu0 %v4462
    %4640 = vmatpush.msra.mxu0 %v4458
    %4641 = vmatpush.msra.mxu0 %v4454
    %4642 = vmatpush.msra.mxu0 %v4450
    %4643 = vmatmul.f32.gmra.mxu0 %v4448
    %v4644 = vpop.f32.mrf.mxu0
    %v4645 = vadd.f32 %v4580, %v4644
    %4646 = vdwg.mxu0
    %4647 = vmatpush.msra.mxu0 %v4574
    %4648 = vmatpush.msra.mxu0 %v4570
    %4649 = vmatpush.msra.mxu0 %v4566
    %4650 = vmatpush.msra.mxu0 %v4562
    %4651 = vmatpush.msra.mxu0 %v4558
    %4652 = vmatpush.msra.mxu0 %v4554
    %4653 = vmatpush.msra.mxu0 %v4550
    %4654 = vmatpush.msra.mxu0 %v4546
    %4655 = vmatpush.msra.mxu0 %v4542
    %4656 = vmatpush.msra.mxu0 %v4538
    %4657 = vmatpush.msra.mxu0 %v4534
    %4658 = vmatpush.msra.mxu0 %v4530
    %4659 = vmatpush.msra.mxu0 %v4526
    %4660 = vmatpush.msra.mxu0 %v4522
    %4661 = vmatpush.msra.mxu0 %v4518
    %4662 = vmatpush.msra.mxu0 %v4514
    %4663 = vmatmul.f32.gmra.mxu0 %v4158
    %v4664 = vpop.f32.mrf.mxu0
    %v4665 = vadd.f32 %v4645, %v4664
    %4666 = vdwg.mxu0
    %4667 = vmatpush.msra.mxu0 %v4511
    %4668 = vmatpush.msra.mxu0 %v4507
    %4669 = vmatpush.msra.mxu0 %v4503
    %4670 = vmatpush.msra.mxu0 %v4499
    %4671 = vmatpush.msra.mxu0 %v4495
    %4672 = vmatpush.msra.mxu0 %v4491
    %4673 = vmatpush.msra.mxu0 %v4487
    %4674 = vmatpush.msra.mxu0 %v4483
    %4675 = vmatpush.msra.mxu0 %v4479
    %4676 = vmatpush.msra.mxu0 %v4475
    %4677 = vmatpush.msra.mxu0 %v4471
    %4678 = vmatpush.msra.mxu0 %v4467
    %4679 = vmatpush.msra.mxu0 %v4463
    %4680 = vmatpush.msra.mxu0 %v4459
    %4681 = vmatpush.msra.mxu0 %v4455
    %4682 = vmatpush.msra.mxu0 %v4451
    %4683 = vmatmul.f32.gmra.mxu0 %v4448
    %v4684 = vpop.f32.mrf.mxu0
    %v4685 = vadd.f32 %v4581, %v4684
    %4686 = vdwg.mxu0
    %4687 = vmatpush.msra.mxu0 %v4575
    %4688 = vmatpush.msra.mxu0 %v4571
    %4689 = vmatpush.msra.mxu0 %v4567
    %4690 = vmatpush.msra.mxu0 %v4563
    %4691 = vmatpush.msra.mxu0 %v4559
    %4692 = vmatpush.msra.mxu0 %v4555
    %4693 = vmatpush.msra.mxu0 %v4551
    %4694 = vmatpush.msra.mxu0 %v4547
    %4695 = vmatpush.msra.mxu0 %v4543
    %4696 = vmatpush.msra.mxu0 %v4539
    %4697 = vmatpush.msra.mxu0 %v4535
    %4698 = vmatpush.msra.mxu0 %v4531
    %4699 = vmatpush.msra.mxu0 %v4527
    %4700 = vmatpush.msra.mxu0 %v4523
    %4701 = vmatpush.msra.mxu0 %v4519
    %4702 = vmatpush.msra.mxu0 %v4515
    %4703 = vmatmul.f32.gmra.mxu0 %v4158
    %v4704 = vpop.f32.mrf.mxu0
    %v4705 = vadd.f32 %v4685, %v4704
    %4706 = vdwg.mxu0
    %4707 = vmatpush.msra.mxu0 %v4512
    %4708 = vmatpush.msra.mxu0 %v4508
    %4709 = vmatpush.msra.mxu0 %v4504
    %4710 = vmatpush.msra.mxu0 %v4500
    %4711 = vmatpush.msra.mxu0 %v4496
    %4712 = vmatpush.msra.mxu0 %v4492
    %4713 = vmatpush.msra.mxu0 %v4488
    %4714 = vmatpush.msra.mxu0 %v4484
    %4715 = vmatpush.msra.mxu0 %v4480
    %4716 = vmatpush.msra.mxu0 %v4476
    %4717 = vmatpush.msra.mxu0 %v4472
    %4718 = vmatpush.msra.mxu0 %v4468
    %4719 = vmatpush.msra.mxu0 %v4464
    %4720 = vmatpush.msra.mxu0 %v4460
    %4721 = vmatpush.msra.mxu0 %v4456
    %4722 = vmatpush.msra.mxu0 %v4452
    %4723 = vmatmul.f32.gmra.mxu0 %v4448
    %v4724 = vpop.f32.mrf.mxu0
    %v4725 = vadd.f32 %v4582, %v4724
    %4726 = vdwg.mxu0
    %4727 = vmatpush.msra.mxu0 %v4576
    %4728 = vmatpush.msra.mxu0 %v4572
    %4729 = vmatpush.msra.mxu0 %v4568
    %4730 = vmatpush.msra.mxu0 %v4564
    %4731 = vmatpush.msra.mxu0 %v4560
    %4732 = vmatpush.msra.mxu0 %v4556
    %4733 = vmatpush.msra.mxu0 %v4552
    %4734 = vmatpush.msra.mxu0 %v4548
    %4735 = vmatpush.msra.mxu0 %v4544
    %4736 = vmatpush.msra.mxu0 %v4540
    %4737 = vmatpush.msra.mxu0 %v4536
    %4738 = vmatpush.msra.mxu0 %v4532
    %4739 = vmatpush.msra.mxu0 %v4528
    %4740 = vmatpush.msra.mxu0 %v4524
    %4741 = vmatpush.msra.mxu0 %v4520
    %4742 = vmatpush.msra.mxu0 %v4516
    %4743 = vmatmul.f32.gmra.mxu0 %v4158
    %v4744 = vpop.f32.mrf.mxu0
    %v4745 = vadd.f32 %v4725, %v4744
    %4746 = vdwg.mxu0
    %v4747 = vxor.u32 %v4625, 2147483648
    %v4748 = vmul.f32 %v4747, 1.442695
    %v4749 = vpow.pop %v4748
    %v4750 = vadd.f32 %v4749, 1.0
    %v4751 = vrcp.pop %v4750
    %v4752 = vmul.f32 %v4750, %v4751
    %v4753 = vsub.f32 1.0, %v4752
    %v4754 = vmul.f32 %v4751, %v4753
    %v4755 = vadd.f32 %v4751, %v4754
    %vm4756 = vweird.f32 %v4750
    %vm4757 = vweird.f32 %v4751
    %vm4758 = vmor %vm4756, %vm4757
    %v4759 = vsel %vm4758, %v4751, %v4755
    %v4760 = vand.u32 2147483647, %v4750
    %vm4761 = vcmp.eq.f32.partialorder %v4760, 8.507059e+37
    %v4762 = vand.u32 %v4750, 2147483648
    %v4763 = vor.u32 1.1754944e-38, %v4762
    %v4764 = vsel %vm4761, %v4763, %v4759
    %v4765 = vmul.f32 1.0, %v4764
    %v4766 = vxor.u32 %v4665, 2147483648
    %v4767 = vmul.f32 %v4766, 1.442695
    %v4768 = vpow.pop %v4767
    %v4769 = vadd.f32 %v4768, 1.0
    %v4770 = vrcp.pop %v4769
    %v4771 = vmul.f32 %v4769, %v4770
    %v4772 = vsub.f32 1.0, %v4771
    %v4773 = vmul.f32 %v4770, %v4772
    %v4774 = vadd.f32 %v4770, %v4773
    %vm4775 = vweird.f32 %v4769
    %vm4776 = vweird.f32 %v4770
    %vm4777 = vmor %vm4775, %vm4776
    %v4778 = vsel %vm4777, %v4770, %v4774
    %v4779 = vand.u32 2147483647, %v4769
    %vm4780 = vcmp.eq.f32.partialorder %v4779, 8.507059e+37
    %v4781 = vand.u32 %v4769, 2147483648
    %v4782 = vor.u32 1.1754944e-38, %v4781
    %v4783 = vsel %vm4780, %v4782, %v4778
    %v4784 = vmul.f32 1.0, %v4783
    %v4785 = vtanh.pop %v4705
    %v4786 = vxor.u32 %v4745, 2147483648
    %v4787 = vmul.f32 %v4786, 1.442695
    %v4788 = vpow.pop %v4787
    %v4789 = vadd.f32 %v4788, 1.0
    %v4790 = vrcp.pop %v4789
    %v4791 = vmul.f32 %v4789, %v4790
    %v4792 = vsub.f32 1.0, %v4791
    %v4793 = vmul.f32 %v4790, %v4792
    %v4794 = vadd.f32 %v4790, %v4793
    %vm4795 = vweird.f32 %v4789
    %vm4796 = vweird.f32 %v4790
    %vm4797 = vmor %vm4795, %vm4796
    %v4798 = vsel %vm4797, %v4790, %v4794
    %v4799 = vand.u32 2147483647, %v4789
    %vm4800 = vcmp.eq.f32.partialorder %v4799, 8.507059e+37
    %v4801 = vand.u32 %v4789, 2147483648
    %v4802 = vor.u32 1.1754944e-38, %v4801
    %v4803 = vsel %vm4800, %v4802, %v4798
    %v4804 = vmul.f32 1.0, %v4803
    %v4805 = vmul.f32 %v4784, %v4156
    %v4806 = vmul.f32 %v4765, %v4785
    %v4807 = vadd.f32 %v4805, %v4806
    %v4808 = vtanh.pop %v4807
    %v4809 = vmul.f32 %v4804, %v4808
    %v4810 = vld [vmem:[#allocation2] sm:$0xff]
    %v4811 = vld [vmem:[#allocation2 + $0x8] sm:$0xff]
    %v4812 = vld [vmem:[#allocation2 + $0x10] sm:$0xff]
    %v4813 = vld [vmem:[#allocation2 + $0x18] sm:$0xff]
    %v4814 = vld [vmem:[#allocation2 + $0x20] sm:$0xff]
    %v4815 = vld [vmem:[#allocation2 + $0x28] sm:$0xff]
    %v4816 = vld [vmem:[#allocation2 + $0x30] sm:$0xff]
    %v4817 = vld [vmem:[#allocation2 + $0x38] sm:$0xff]
    %v4818 = vmul.f32 %v4810, %v4809
    %v4819 = vmul.f32 %v4811, %v4809
    %v4820 = vmul.f32 %v4812, %v4809
    %v4821 = vmul.f32 %v4813, %v4809
    %v4822 = vmul.f32 %v4814, %v4809
    %v4823 = vmul.f32 %v4815, %v4809
    %v4824 = vmul.f32 %v4816, %v4809
    %v4825 = vmul.f32 %v4817, %v4809
    %4826 = vadd.xlane.f32.xlu0 %v4818
    %v4827 = vpop.xlane.xlu0 %4826
    %4828 = vadd.xlane.f32.xlu0 %v4819
    %v4829 = vpop.xlane.xlu0 %4828
    %4830 = vadd.xlane.f32.xlu0 %v4820
    %v4831 = vpop.xlane.xlu0 %4830
    %4832 = vadd.xlane.f32.xlu0 %v4821
    %v4833 = vpop.xlane.xlu0 %4832
    %4834 = vadd.xlane.f32.xlu0 %v4822
    %v4835 = vpop.xlane.xlu0 %4834
    %4836 = vadd.xlane.f32.xlu0 %v4823
    %v4837 = vpop.xlane.xlu0 %4836
    %4838 = vadd.xlane.f32.xlu0 %v4824
    %v4839 = vpop.xlane.xlu0 %4838
    %4840 = vadd.xlane.f32.xlu0 %v4825
    %v4841 = vpop.xlane.xlu0 %4840
    %v4842 = vmax.f32 %v4827, %v4835
    %v4843 = vmax.f32 %v4829, %v4837
    %v4844 = vmax.f32 %v4831, %v4839
    %v4845 = vmax.f32 %v4833, %v4841
    %v4846 = vmax.f32 %v4842, %v4843
    %v4847 = vmax.f32 %v4844, %v4845
    %v4848 = vmax.f32 %v4846, %v4847
    %v4849 = vsub.f32 %v4827, %v4848
    %v4850 = vsub.f32 %v4829, %v4848
    %v4851 = vsub.f32 %v4831, %v4848
    %v4852 = vsub.f32 %v4833, %v4848
    %v4853 = vsub.f32 %v4835, %v4848
    %v4854 = vsub.f32 %v4837, %v4848
    %v4855 = vsub.f32 %v4839, %v4848
    %v4856 = vsub.f32 %v4841, %v4848
    %v4857 = vmul.f32 %v4849, 1.442695
    %v4858 = vpow.pop %v4857
    %v4859 = vmul.f32 %v4850, 1.442695
    %v4860 = vpow.pop %v4859
    %v4861 = vmul.f32 %v4851, 1.442695
    %v4862 = vpow.pop %v4861
    %v4863 = vmul.f32 %v4852, 1.442695
    %v4864 = vpow.pop %v4863
    %v4865 = vmul.f32 %v4853, 1.442695
    %v4866 = vpow.pop %v4865
    %v4867 = vmul.f32 %v4854, 1.442695
    %v4868 = vpow.pop %v4867
    %v4869 = vmul.f32 %v4855, 1.442695
    %v4870 = vpow.pop %v4869
    %v4871 = vmul.f32 %v4856, 1.442695
    %v4872 = vpow.pop %v4871
    %v4873 = vadd.f32 %v4858, %v4860
    %v4874 = vadd.f32 %v4873, %v4862
    %v4875 = vadd.f32 %v4874, %v4864
    %v4876 = vadd.f32 %v4875, %v4866
    %v4877 = vadd.f32 %v4876, %v4868
    %v4878 = vadd.f32 %v4877, %v4870
    %v4879 = vadd.f32 %v4878, %v4872
    %v4880 = vrcp.pop %v4879
    %v4881 = vmul.f32 %v4879, %v4880
    %v4882 = vsub.f32 1.0, %v4881
    %v4883 = vmul.f32 %v4880, %v4882
    %v4884 = vadd.f32 %v4880, %v4883
    %vm4885 = vweird.f32 %v4879
    %vm4886 = vweird.f32 %v4880
    %vm4887 = vmor %vm4885, %vm4886
    %v4888 = vsel %vm4887, %v4880, %v4884
    %v4889 = vand.u32 2147483647, %v4879
    %vm4890 = vcmp.eq.f32.partialorder %v4889, 8.507059e+37
    %v4891 = vand.u32 %v4879, 2147483648
    %v4892 = vor.u32 1.1754944e-38, %v4891
    %v4893 = vsel %vm4890, %v4892, %v4888
    %v4894 = vmul.f32 %v4858, %v4893
    %v4895 = vmul.f32 %v4860, %v4893
    %v4896 = vmul.f32 %v4862, %v4893
    %v4897 = vmul.f32 %v4864, %v4893
    %v4898 = vmul.f32 %v4866, %v4893
    %v4899 = vmul.f32 %v4868, %v4893
    %v4900 = vmul.f32 %v4870, %v4893
    %v4901 = vmul.f32 %v4872, %v4893
    %v4902 = vmul.f32 %v4810, %v4894
    %v4903 = vmul.f32 %v4811, %v4895
    %v4904 = vmul.f32 %v4812, %v4896
    %v4905 = vmul.f32 %v4813, %v4897
    %v4906 = vmul.f32 %v4814, %v4898
    %v4907 = vmul.f32 %v4815, %v4899
    %v4908 = vmul.f32 %v4816, %v4900
    %v4909 = vmul.f32 %v4817, %v4901
    %v4910 = vadd.f32 %v4902, %v4903
    %v4911 = vadd.f32 %v4910, %v4904
    %v4912 = vadd.f32 %v4911, %v4905
    %v4913 = vadd.f32 %v4912, %v4906
    %v4914 = vadd.f32 %v4913, %v4907
    %v4915 = vadd.f32 %v4914, %v4908
    %v4916 = vadd.f32 %v4915, %v4909
    %v4917 = vld [vmem:[%s7] sm:$0xff]
    %v4918 = vld [vmem:[%s7 + $0x8] sm:$0xff]
    %v4919 = vld [vmem:[%s7 + $0x10] sm:$0xff]
    %v4920 = vld [vmem:[%s7 + $0x18] sm:$0xff]
    %v4921 = vld [vmem:[%s7 + $0x20] sm:$0xff]
    %v4922 = vld [vmem:[%s7 + $0x28] sm:$0xff]
    %v4923 = vld [vmem:[%s7 + $0x30] sm:$0xff]
    %v4924 = vld [vmem:[%s7 + $0x38] sm:$0xff]
    %v4925 = vld [vmem:[%s7 + $0x40] sm:$0xff]
    %v4926 = vld [vmem:[%s7 + $0x48] sm:$0xff]
    %v4927 = vld [vmem:[%s7 + $0x50] sm:$0xff]
    %v4928 = vld [vmem:[%s7 + $0x58] sm:$0xff]
    %v4929 = vld [vmem:[%s7 + $0x60] sm:$0xff]
    %v4930 = vld [vmem:[%s7 + $0x68] sm:$0xff]
    %v4931 = vld [vmem:[%s7 + $0x70] sm:$0xff]
    %v4932 = vld [vmem:[%s7 + $0x78] sm:$0xff]
    %v4933 = vld [vmem:[%s7 + $0x80] sm:$0xff]
    %v4934 = vld [vmem:[%s7 + $0x88] sm:$0xff]
    %v4935 = vld [vmem:[%s7 + $0x90] sm:$0xff]
    %v4936 = vld [vmem:[%s7 + $0x98] sm:$0xff]
    %v4937 = vld [vmem:[%s7 + $0xa0] sm:$0xff]
    %v4938 = vld [vmem:[%s7 + $0xa8] sm:$0xff]
    %v4939 = vld [vmem:[%s7 + $0xb0] sm:$0xff]
    %v4940 = vld [vmem:[%s7 + $0xb8] sm:$0xff]
    %v4941 = vld [vmem:[%s7 + $0xc0] sm:$0xff]
    %v4942 = vld [vmem:[%s7 + $0xc8] sm:$0xff]
    %v4943 = vld [vmem:[%s7 + $0xd0] sm:$0xff]
    %v4944 = vld [vmem:[%s7 + $0xd8] sm:$0xff]
    %v4945 = vld [vmem:[%s7 + $0xe0] sm:$0xff]
    %v4946 = vld [vmem:[%s7 + $0xe8] sm:$0xff]
    %v4947 = vld [vmem:[%s7 + $0xf0] sm:$0xff]
    %v4948 = vld [vmem:[%s7 + $0xf8] sm:$0xff]
    %v4949 = vld [vmem:[%s7 + $0x100] sm:$0xff]
    %v4950 = vld [vmem:[%s7 + $0x108] sm:$0xff]
    %v4951 = vld [vmem:[%s7 + $0x110] sm:$0xff]
    %v4952 = vld [vmem:[%s7 + $0x118] sm:$0xff]
    %v4953 = vld [vmem:[%s7 + $0x120] sm:$0xff]
    %v4954 = vld [vmem:[%s7 + $0x128] sm:$0xff]
    %v4955 = vld [vmem:[%s7 + $0x130] sm:$0xff]
    %v4956 = vld [vmem:[%s7 + $0x138] sm:$0xff]
    %v4957 = vld [vmem:[%s7 + $0x140] sm:$0xff]
    %v4958 = vld [vmem:[%s7 + $0x148] sm:$0xff]
    %v4959 = vld [vmem:[%s7 + $0x150] sm:$0xff]
    %v4960 = vld [vmem:[%s7 + $0x158] sm:$0xff]
    %v4961 = vld [vmem:[%s7 + $0x160] sm:$0xff]
    %v4962 = vld [vmem:[%s7 + $0x168] sm:$0xff]
    %v4963 = vld [vmem:[%s7 + $0x170] sm:$0xff]
    %v4964 = vld [vmem:[%s7 + $0x178] sm:$0xff]
    %v4965 = vld [vmem:[%s8] sm:$0x1]
    %v4967 = vperm.slane %v4965, 0
    %4969 = vmatpush.msra.mxu0 %v4932
    %4970 = vmatpush.msra.mxu0 %v4931
    %4971 = vmatpush.msra.mxu0 %v4930
    %4972 = vmatpush.msra.mxu0 %v4929
    %4973 = vmatpush.msra.mxu0 %v4928
    %4974 = vmatpush.msra.mxu0 %v4927
    %4975 = vmatpush.msra.mxu0 %v4926
    %4976 = vmatpush.msra.mxu0 %v4925
    %4977 = vmatpush.msra.mxu0 %v4924
    %4978 = vmatpush.msra.mxu0 %v4923
    %4979 = vmatpush.msra.mxu0 %v4922
    %4980 = vmatpush.msra.mxu0 %v4921
    %4981 = vmatpush.msra.mxu0 %v4920
    %4982 = vmatpush.msra.mxu0 %v4919
    %4983 = vmatpush.msra.mxu0 %v4918
    %4984 = vmatpush.msra.mxu0 %v4917
    %4985 = vmatmul.f32.gmra.mxu0 %v4809
    %v4986 = vpop.f32.mrf.mxu0
    %v4987 = vadd.f32 %v4967, %v4986
    %4988 = vdwg.mxu0
    %4989 = vmatpush.msra.mxu0 %v4948
    %4990 = vmatpush.msra.mxu0 %v4947
    %4991 = vmatpush.msra.mxu0 %v4946
    %4992 = vmatpush.msra.mxu0 %v4945
    %4993 = vmatpush.msra.mxu0 %v4944
    %4994 = vmatpush.msra.mxu0 %v4943
    %4995 = vmatpush.msra.mxu0 %v4942
    %4996 = vmatpush.msra.mxu0 %v4941
    %4997 = vmatpush.msra.mxu0 %v4940
    %4998 = vmatpush.msra.mxu0 %v4939
    %4999 = vmatpush.msra.mxu0 %v4938
    %5000 = vmatpush.msra.mxu0 %v4937
    %5001 = vmatpush.msra.mxu0 %v4936
    %5002 = vmatpush.msra.mxu0 %v4935
    %5003 = vmatpush.msra.mxu0 %v4934
    %5004 = vmatpush.msra.mxu0 %v4933
    %5005 = vmatmul.f32.gmra.mxu0 %v4916
    %v5006 = vpop.f32.mrf.mxu0
    %v5007 = vadd.f32 %v4987, %v5006
    %5008 = vdwg.mxu0
    %5009 = vmatpush.msra.mxu0 %v4964
    %5010 = vmatpush.msra.mxu0 %v4963
    %5011 = vmatpush.msra.mxu0 %v4962
    %5012 = vmatpush.msra.mxu0 %v4961
    %5013 = vmatpush.msra.mxu0 %v4960
    %5014 = vmatpush.msra.mxu0 %v4959
    %5015 = vmatpush.msra.mxu0 %v4958
    %5016 = vmatpush.msra.mxu0 %v4957
    %5017 = vmatpush.msra.mxu0 %v4956
    %5018 = vmatpush.msra.mxu0 %v4955
    %5019 = vmatpush.msra.mxu0 %v4954
    %5020 = vmatpush.msra.mxu0 %v4953
    %5021 = vmatpush.msra.mxu0 %v4952
    %5022 = vmatpush.msra.mxu0 %v4951
    %5023 = vmatpush.msra.mxu0 %v4950
    %5024 = vmatpush.msra.mxu0 %v4949
    %5025 = vmatmul.f32.gmra.mxu0 %v4448
    %v5026 = vpop.f32.mrf.mxu0
    %v5027 = vadd.f32 %v5007, %v5026
    %5028 = vdwg.mxu0
    %s5029 = scalar_lea.vmem [#allocation8], 32
    %5030 = vst [vmem:[%s5029] sm:$0xff] %v5027
    // Predicated region
    $region38: #{_seq2seq_forward.1} parent=1 // pred_check
      _
    $region39: #{_seq2seq_forward.1} parent=1 // pred_check_branch
      %5032 = sbr.rel (0) target = $region41
    $region40: #{_seq2seq_forward.1} parent=1 // pred_region
      %5034 = vsyncadd [#allocation7], 0
      %s5035 = sshll.u32 [#allocation8], 4
      %s5036 = int_to_ptr.vmem [resolvable:$true] %s5035
      %s5037 = sshll.u32 %s9, 4
      %s5038 = int_to_ptr.hbm [resolvable:$true] %s5037
      %5043 = dma.vmem_to_hbm [thread:$0]  %s5036, 640, %s5038, [#allocation7], 128, 128, 8
    $region41: #{_seq2seq_forward.1} parent=1 // pred_fallthru
      _
    // Predicated region
    $region42: #{_seq2seq_forward.1} parent=1 // pred_check
      _
    $region43: #{_seq2seq_forward.1} parent=1 // pred_check_branch
      %5045 = sbr.rel (0) target = $region45
    $region44: #{_seq2seq_forward.1} parent=1 // pred_region
      %5047 = dma.done [#allocation7], 640
    $region45: #{_seq2seq_forward.1} parent=1 // pred_fallthru
      _
    %5048 = vsyncpa [#allocation6], 1
    %5049 = vsyncpa [#allocation7], 1

</llo_original>
